<compile_context>
chip_gen: v5e
topology: v5e:2x2
jax: 0.10.0
libtpu: 0.0.40
codegen_flags: <defaults>
</compile_context>

<pallas_src>
import functools

import jax
import jax.numpy as jnp
from jax.experimental import pallas as pl
from jax.experimental.pallas import tpu as pltpu

LEAK = 0.2
BN_EPS = 1e-5
MAX_TM = 512          # max output-row tile


# ----------------------------------------------------------------------------
# Pallas kernels
# ----------------------------------------------------------------------------
def _conv_block_kernel(z_ref, w_ref, scale_ref, shift_ref, o_ref, *,
                       wo, tm, n_m_tiles):
    """Fused conv (two shifted matmuls) + folded bias/BN + LeakyReLU(0.2).

    z_ref:     (R, K2)        bf16  paired space-to-depth rows (whole image)
    w_ref:     (2, K2, Cout)  bf16  weights for the dh=0 / dh=1 row shifts
    scale_ref: (1, Cout)      f32   folded BN scale (ones when no BN)
    shift_ref: (1, Cout)      f32   folded conv-bias + BN shift
    o_ref:     (tm, Cout)     bf16  output rows for this grid step
    """
    if n_m_tiles == 1:
        r0 = 0                                        # static slices
    else:
        r0 = pl.multiple_of(pl.program_id(1) * tm, 8)
    z0 = z_ref[pl.ds(r0, tm), :]                      # rows r      (dh = 0)
    z1 = z_ref[pl.ds(r0 + wo, tm), :]                 # rows r + Wo (dh = 1)
    acc = jnp.dot(z0, w_ref[0], preferred_element_type=jnp.float32)
    acc = acc + jnp.dot(z1, w_ref[1], preferred_element_type=jnp.float32)
    acc = acc * scale_ref[...] + shift_ref[...]       # bias + BN (eval mode)
    o_ref[...] = jnp.where(acc >= 0.0, acc, LEAK * acc).astype(o_ref.dtype)


def _head_kernel(f_ref, w_ref, b_ref, o_ref):
    # f_ref: (N, H*W, C) bf16; w_ref: (C, 1) f32; b_ref: (1, 1) f32
    pooled = jnp.mean(f_ref[...].astype(jnp.float32), axis=1)   # GAP
    o_ref[...] = (jnp.dot(pooled, w_ref[...],
                          preferred_element_type=jnp.float32) + b_ref[...])


# ----------------------------------------------------------------------------
# Wrappers calling pallas_call
# ----------------------------------------------------------------------------
def conv_block(z2d, w2, scale, shift, *, m_pad, tm, wo):
    """z2d: (N, R, K2) bf16 -> (N, m_pad, Cout) bf16."""
    N, R, K2 = z2d.shape
    cout = w2.shape[2]
    n_m_tiles = m_pad // tm
    kernel = functools.partial(_conv_block_kernel, wo=wo, tm=tm,
                               n_m_tiles=n_m_tiles)
    return pl.pallas_call(
        kernel,
        out_shape=jax.ShapeDtypeStruct((N, m_pad, cout), jnp.bfloat16),
        grid_spec=pltpu.PrefetchScalarGridSpec(
            num_scalar_prefetch=0,
            grid=(N, n_m_tiles),
            in_specs=[
                # Whole image resident across the inner m loop.
                pl.BlockSpec((None, R, K2), lambda n, i: (n, 0, 0)),
                # Constant index maps -> fetched once, stay resident.
                pl.BlockSpec((2, K2, cout), lambda n, i: (0, 0, 0)),
                pl.BlockSpec((1, cout), lambda n, i: (0, 0)),
                pl.BlockSpec((1, cout), lambda n, i: (0, 0)),
            ],
            out_specs=pl.BlockSpec((None, tm, cout), lambda n, i: (n, i, 0)),
        ),
        compiler_params=pltpu.CompilerParams(
            dimension_semantics=("parallel", "arbitrary")),
    )(z2d, w2, scale, shift)


def gap_linear(features_nhwc, w_col, b_row):
    """features: (N, H, W, C) bf16; w_col: (C, 1); b_row: (1, 1) -> (N, 1)."""
    N, H, W, C = features_nhwc.shape
    f = features_nhwc.reshape(N, H * W, C)
    return pl.pallas_call(
        _head_kernel,
        out_shape=jax.ShapeDtypeStruct((N, 1), jnp.float32),
        grid=(1,),
        in_specs=[
            pl.BlockSpec((N, H * W, C), lambda i: (0, 0, 0)),
            pl.BlockSpec((C, 1), lambda i: (0, 0)),
            pl.BlockSpec((1, 1), lambda i: (0, 0)),
        ],
        out_specs=pl.BlockSpec((N, 1), lambda i: (0, 0)),
    )(f, w_col, b_row)


# ----------------------------------------------------------------------------
# Host-side glue: conv rewrite, parameter folding, forward
# ----------------------------------------------------------------------------
def _space_to_depth_pairs(x, tm):
    """x: (N, H, W, C) bf16 -> z2d: (N, m_pad + Wo, 8C) + geometry.

    Rewrites the 4x4 / stride-2 / pad-1 conv as a 2x2 stride-1 conv over the
    space-to-depth'd padded input, then pairs adjacent macro-columns so the
    remaining in-kernel work is two row-shifted matmuls (rows r and r + Wo).
    """
    N, H, W, C = x.shape
    Ho, Wo = H // 2, W // 2
    M = Ho * Wo
    m_pad = pl.cdiv(M, tm) * tm
    xp = jnp.pad(x, ((0, 0), (1, 1), (1, 1), (0, 0)))            # pad = 1
    y = xp.reshape(N, Ho + 1, 2, Wo + 1, 2, C)
    y = y.transpose(0, 1, 3, 2, 4, 5).reshape(N, Ho + 1, Wo + 1, 4 * C)
    z = jnp.concatenate([y[:, :, :Wo, :], y[:, :, 1:, :]], axis=-1)
    z2d = z.reshape(N, (Ho + 1) * Wo, 8 * C)
    rows_needed = m_pad + Wo
    if z2d.shape[1] < rows_needed:
        z2d = jnp.pad(z2d, ((0, 0), (0, rows_needed - z2d.shape[1]), (0, 0)))
    return z2d, Ho, Wo, M, m_pad


def _rearrange_weight(w, cout_pad):
    """(Cout, Cin, 4, 4) f32 -> (2, 8*Cin, cout_pad) bf16 matching z2d order."""
    cout, cin = w.shape[:2]
    w6 = w.reshape(cout, cin, 2, 2, 2, 2)            # [co, ci, dh, dr, dw, dc]
    w6 = jnp.transpose(w6, (2, 4, 3, 5, 1, 0))       # [dh, dw, dr, dc, ci, co]
    w2 = w6.reshape(2, 8 * cin, cout)
    if cout_pad > cout:
        w2 = jnp.pad(w2, ((0, 0), (0, 0), (0, cout_pad - cout)))
    return w2.astype(jnp.bfloat16)


def _fold_affine(layer, cout_pad):
    """Fold conv bias + eval-mode BatchNorm into one (scale, shift) pair."""
    cout = layer["w"].shape[0]
    b = layer["b"]
    if layer["bn"] is not None:
        bn = layer["bn"]
        s = bn["gamma"] / jnp.sqrt(bn["var"] + BN_EPS)
        scale = s
        shift = (b - bn["mean"]) * s + bn["beta"]
    else:
        scale = jnp.ones((cout,), jnp.float32)
        shift = b
    if cout_pad > cout:
        scale = jnp.pad(scale, (0, cout_pad - cout), constant_values=1.0)
        shift = jnp.pad(shift, (0, cout_pad - cout))
    return scale.reshape(1, cout_pad), shift.reshape(1, cout_pad)


def init_params(key, n_channels=3):
    # Deterministic PyTorch-style uniform fan-in init. BatchNorm stats are
    # fresh-init running stats (mean=0, var=1, gamma=1, beta=0).
    specs = [(n_channels, 64, False), (64, 128, True),
             (128, 256, True), (256, 512, True)]
    params = []
    for cin, cout, norm in specs:
        key, kw, kb = jax.random.split(key, 3)
        bound = 1.0 / float(jnp.sqrt(cin * 16.0))
        w = jax.random.uniform(kw, (cout, cin, 4, 4), jnp.float32, -bound, bound)
        b = jax.random.uniform(kb, (cout,), jnp.float32, -bound, bound)
        bn = None
        if norm:
            bn = dict(gamma=jnp.ones((cout,), jnp.float32),
                      beta=jnp.zeros((cout,), jnp.float32),
                      mean=jnp.zeros((cout,), jnp.float32),
                      var=jnp.ones((cout,), jnp.float32))
        params.append(dict(w=w, b=b, bn=bn))
    key, kw, kb = jax.random.split(key, 3)
    bound = 1.0 / float(jnp.sqrt(512.0))
    lin_w = jax.random.uniform(kw, (1, 512), jnp.float32, -bound, bound)
    lin_b = jax.random.uniform(kb, (1,), jnp.float32, -bound, bound)
    return params, lin_w, lin_b


def discriminator_forward(x_nchw, params, lin_w, lin_b):
    # TODO(synk): BatchNorm uses eval-mode running stats (fresh init mean=0,
    # var=1); training-mode batch statistics and the `feature_maps` forward
    # hook (stateful side effect, does not change the returned validity) are
    # not reproduced.
    x = jnp.transpose(x_nchw, (0, 2, 3, 1)).astype(jnp.bfloat16)  # NCHW->NHWC
    for layer in params:
        N = x.shape[0]
        cout = layer["w"].shape[0]
        cout_pad = max(cout, 128)                  # lane-dense output stores
        tm = min(MAX_TM, ((x.shape[1] // 2) * (x.shape[2] // 2) + 7) // 8 * 8)
        z2d, Ho, Wo, M, m_pad = _space_to_depth_pairs(x, tm)
        w2 = _rearrange_weight(layer["w"], cout_pad)
        scale, shift = _fold_affine(layer, cout_pad)
        out = conv_block(z2d, w2, scale, shift, m_pad=m_pad, tm=tm, wo=Wo)
        x = out[:, :M, :cout].reshape(N, Ho, Wo, cout)
    return gap_linear(x, lin_w.T, lin_b.reshape(1, 1))


def reference_forward(x_nchw, params, lin_w, lin_b):
    x = jnp.transpose(x_nchw, (0, 2, 3, 1)).astype(jnp.float32)
    for layer in params:
        w = jnp.transpose(layer["w"], (2, 3, 1, 0))  # HWIO
        x = jax.lax.conv_general_dilated(
            x, w, window_strides=(2, 2), padding=[(1, 1), (1, 1)],
            dimension_numbers=("NHWC", "HWIO", "NHWC"))
        x = x + layer["b"]
        if layer["bn"] is not None:
            bn = layer["bn"]
            x = (x - bn["mean"]) / jnp.sqrt(bn["var"] + BN_EPS) * bn["gamma"] + bn["beta"]
        x = jnp.where(x >= 0, x, LEAK * x)
    pooled = jnp.mean(x, axis=(1, 2))
    return pooled @ lin_w.T + lin_b


if __name__ == "__main__":
    key = jax.random.PRNGKey(0)
    kx, kp = jax.random.split(key)
    # NCHW, n_channels=3; 16x16 spatial -> 8 -> 4 -> 2 -> 1 through the four
    # stride-2 blocks, matching the module's downsampling structure.
    x = jax.random.normal(kx, (2, 3, 16, 16), jnp.float32)
    params, lin_w, lin_b = init_params(kp, n_channels=3)

    fwd = jax.jit(discriminator_forward)
    validity = jax.block_until_ready(fwd(x, params, lin_w, lin_b))

    ref = reference_forward(x, params, lin_w, lin_b)
    assert validity.shape == (2, 1), validity.shape
    # bf16 matmul operands (f32 accumulation) -> slightly looser tolerance.
    assert jnp.allclose(validity, ref, atol=2e-2, rtol=2e-2), (validity, ref)
    print("KERNEL_OK")
</pallas_src>

<mosaic_0001>
module attributes {stable_mosaic.version = 11 : i64} {
  func.func @_conv_block_kernel(%arg0: i32, %arg1: i32, %arg2: memref<1x72x24xbf16, #tpu.memory_space<vmem>>, %arg3: memref<2x24x128xbf16, #tpu.memory_space<vmem>>, %arg4: memref<1x128xf32, #tpu.memory_space<vmem>>, %arg5: memref<1x128xf32, #tpu.memory_space<vmem>>, %arg6: memref<1x64x128xbf16, #tpu.memory_space<vmem>>) attributes {dimension_semantics = [#tpu.dimension_semantics<parallel>, #tpu.dimension_semantics<arbitrary>], iteration_bounds = array<i64: 2, 1>, scalar_prefetch = 0 : i64, scratch_operands = 0 : i64, tpu.core_type = #tpu.core_type<tc>, window_params = [{transform_indices = @transform_0, window_bounds = array<i64: 1, 72, 24>}, {pipeline_mode = #tpu.pipeline_mode<synchronous>, transform_indices = @transform_1, window_bounds = array<i64: 2, 24, 128>}, {pipeline_mode = #tpu.pipeline_mode<synchronous>, transform_indices = @transform_2, window_bounds = array<i64: 1, 128>}, {pipeline_mode = #tpu.pipeline_mode<synchronous>, transform_indices = @transform_3, window_bounds = array<i64: 1, 128>}, {transform_indices = @transform_4, window_bounds = array<i64: 1, 64, 128>}]} {
    %c0 = arith.constant 0 : index
    %c0_0 = arith.constant 0 : index
    %c0_1 = arith.constant 0 : index
    %0 = vector.load %arg2[%c0, %c0_0, %c0_1] : memref<1x72x24xbf16, #tpu.memory_space<vmem>>, vector<1x64x24xbf16>
    %1 = vector.shape_cast %0 : vector<1x64x24xbf16> to vector<64x24xbf16>
    %c0_2 = arith.constant 0 : index
    %c8 = arith.constant 8 : index
    %c0_3 = arith.constant 0 : index
    %2 = vector.load %arg2[%c0_2, %c8, %c0_3] : memref<1x72x24xbf16, #tpu.memory_space<vmem>>, vector<1x64x24xbf16>
    %3 = vector.shape_cast %2 : vector<1x64x24xbf16> to vector<64x24xbf16>
    %c0_4 = arith.constant 0 : index
    %c0_5 = arith.constant 0 : index
    %c0_6 = arith.constant 0 : index
    %4 = vector.load %arg3[%c0_4, %c0_5, %c0_6] : memref<2x24x128xbf16, #tpu.memory_space<vmem>>, vector<1x24x128xbf16>
    %5 = vector.shape_cast %4 : vector<1x24x128xbf16> to vector<24x128xbf16>
    %cst = arith.constant dense<0.000000e+00> : vector<64x128xf32>
    %6 = tpu.matmul %1, %5, %cst {dimension_numbers = #tpu.dot_dimension_numbers<[1], [0], [0], [1], [0, 0, 1, 1], [], []>} : vector<64x24xbf16>, vector<24x128xbf16>, vector<64x128xf32> -> vector<64x128xf32>
    %c1 = arith.constant 1 : index
    %c0_7 = arith.constant 0 : index
    %c0_8 = arith.constant 0 : index
    %7 = vector.load %arg3[%c1, %c0_7, %c0_8] : memref<2x24x128xbf16, #tpu.memory_space<vmem>>, vector<1x24x128xbf16>
    %8 = vector.shape_cast %7 : vector<1x24x128xbf16> to vector<24x128xbf16>
    %cst_9 = arith.constant dense<0.000000e+00> : vector<64x128xf32>
    %9 = tpu.matmul %3, %8, %cst_9 {dimension_numbers = #tpu.dot_dimension_numbers<[1], [0], [0], [1], [0, 0, 1, 1], [], []>} : vector<64x24xbf16>, vector<24x128xbf16>, vector<64x128xf32> -> vector<64x128xf32>
    %10 = arith.addf %6, %9 : vector<64x128xf32>
    %c0_10 = arith.constant 0 : index
    %c0_11 = arith.constant 0 : index
    %11 = vector.load %arg4[%c0_10, %c0_11] : memref<1x128xf32, #tpu.memory_space<vmem>>, vector<1x128xf32>
    %12 = vector.broadcast %11 : vector<1x128xf32> to vector<64x128xf32>
    %13 = arith.mulf %10, %12 : vector<64x128xf32>
    %c0_12 = arith.constant 0 : index
    %c0_13 = arith.constant 0 : index
    %14 = vector.load %arg5[%c0_12, %c0_13] : memref<1x128xf32, #tpu.memory_space<vmem>>, vector<1x128xf32>
    %15 = vector.broadcast %14 : vector<1x128xf32> to vector<64x128xf32>
    %16 = arith.addf %13, %15 : vector<64x128xf32>
    %cst_14 = arith.constant 0.000000e+00 : f32
    %17 = vector.broadcast %cst_14 : f32 to vector<64x128xf32>
    %18 = arith.cmpf oge, %16, %17 : vector<64x128xf32>
    %cst_15 = arith.constant 2.000000e-01 : f32
    %19 = vector.broadcast %cst_15 : f32 to vector<64x128xf32>
    %20 = arith.mulf %19, %16 : vector<64x128xf32>
    %21 = arith.select %18, %16, %20 : vector<64x128xi1>, vector<64x128xf32>
    %22 = arith.truncf %21 : vector<64x128xf32> to vector<64x128xbf16>
    %c0_16 = arith.constant 0 : index
    %c0_17 = arith.constant 0 : index
    %c0_18 = arith.constant 0 : index
    %23 = vector.load %arg6[%c0_16, %c0_17, %c0_18] : memref<1x64x128xbf16, #tpu.memory_space<vmem>>, vector<1x64x128xbf16>
    %24 = vector.shape_cast %23 : vector<1x64x128xbf16> to vector<64x128xbf16>
    %25 = vector.shape_cast %22 : vector<64x128xbf16> to vector<1x64x128xbf16>
    tpu.vector_store %arg6[%c0_16, %c0_17, %c0_18], %25 {strides = array<i32>} : memref<1x64x128xbf16, #tpu.memory_space<vmem>>, vector<1x64x128xbf16>,
    return
  }
  func.func @transform_0(%arg0: i32, %arg1: i32) -> (i32, i32, i32) {
    %c0_i32 = arith.constant 0 : i32
    %c0_i32_0 = arith.constant 0 : i32
    %c0_i32_1 = arith.constant 0 : i32
    return %arg0, %c0_i32, %c0_i32_0 : i32, i32, i32
  }
  func.func @transform_1(%arg0: i32, %arg1: i32) -> (i32, i32, i32) {
    %c0_i32 = arith.constant 0 : i32
    %c0_i32_0 = arith.constant 0 : i32
    %c0_i32_1 = arith.constant 0 : i32
    %c0_i32_2 = arith.constant 0 : i32
    return %c0_i32, %c0_i32_0, %c0_i32_1 : i32, i32, i32
  }
  func.func @transform_2(%arg0: i32, %arg1: i32) -> (i32, i32) {
    %c0_i32 = arith.constant 0 : i32
    %c0_i32_0 = arith.constant 0 : i32
    %c0_i32_1 = arith.constant 0 : i32
    return %c0_i32, %c0_i32_0 : i32, i32
  }
  func.func @transform_3(%arg0: i32, %arg1: i32) -> (i32, i32) {
    %c0_i32 = arith.constant 0 : i32
    %c0_i32_0 = arith.constant 0 : i32
    %c0_i32_1 = arith.constant 0 : i32
    return %c0_i32, %c0_i32_0 : i32, i32
  }
  func.func @transform_4(%arg0: i32, %arg1: i32) -> (i32, i32, i32) {
    %c0_i32 = arith.constant 0 : i32
    %c0_i32_0 = arith.constant 0 : i32
    return %arg0, %arg1, %c0_i32 : i32, i32, i32
  }
}

module attributes {stable_mosaic.version = 11 : i64} {
  func.func @_conv_block_kernel(%arg0: i32, %arg1: i32, %arg2: memref<1x20x512xbf16, #tpu.memory_space<vmem>>, %arg3: memref<2x512x128xbf16, #tpu.memory_space<vmem>>, %arg4: memref<1x128xf32, #tpu.memory_space<vmem>>, %arg5: memref<1x128xf32, #tpu.memory_space<vmem>>, %arg6: memref<1x16x128xbf16, #tpu.memory_space<vmem>>) attributes {dimension_semantics = [#tpu.dimension_semantics<parallel>, #tpu.dimension_semantics<arbitrary>], iteration_bounds = array<i64: 2, 1>, scalar_prefetch = 0 : i64, scratch_operands = 0 : i64, tpu.core_type = #tpu.core_type<tc>, window_params = [{transform_indices = @transform_0, window_bounds = array<i64: 1, 20, 512>}, {pipeline_mode = #tpu.pipeline_mode<synchronous>, transform_indices = @transform_1, window_bounds = array<i64: 2, 512, 128>}, {pipeline_mode = #tpu.pipeline_mode<synchronous>, transform_indices = @transform_2, window_bounds = array<i64: 1, 128>}, {pipeline_mode = #tpu.pipeline_mode<synchronous>, transform_indices = @transform_3, window_bounds = array<i64: 1, 128>}, {transform_indices = @transform_4, window_bounds = array<i64: 1, 16, 128>}]} {
    %c0 = arith.constant 0 : index
    %c0_0 = arith.constant 0 : index
    %c0_1 = arith.constant 0 : index
    %0 = vector.load %arg2[%c0, %c0_0, %c0_1] : memref<1x20x512xbf16, #tpu.memory_space<vmem>>, vector<1x16x512xbf16>
    %1 = vector.shape_cast %0 : vector<1x16x512xbf16> to vector<16x512xbf16>
    %c0_2 = arith.constant 0 : index
    %c4 = arith.constant 4 : index
    %c0_3 = arith.constant 0 : index
    %2 = vector.load %arg2[%c0_2, %c4, %c0_3] : memref<1x20x512xbf16, #tpu.memory_space<vmem>>, vector<1x16x512xbf16>
    %3 = vector.shape_cast %2 : vector<1x16x512xbf16> to vector<16x512xbf16>
    %c0_4 = arith.constant 0 : index
    %c0_5 = arith.constant 0 : index
    %c0_6 = arith.constant 0 : index
    %4 = vector.load %arg3[%c0_4, %c0_5, %c0_6] : memref<2x512x128xbf16, #tpu.memory_space<vmem>>, vector<1x512x128xbf16>
    %5 = vector.shape_cast %4 : vector<1x512x128xbf16> to vector<512x128xbf16>
    %cst = arith.constant dense<0.000000e+00> : vector<16x128xf32>
    %6 = tpu.matmul %1, %5, %cst {dimension_numbers = #tpu.dot_dimension_numbers<[1], [0], [0], [1], [0, 0, 1, 1], [], []>} : vector<16x512xbf16>, vector<512x128xbf16>, vector<16x128xf32> -> vector<16x128xf32>
    %c1 = arith.constant 1 : index
    %c0_7 = arith.constant 0 : index
    %c0_8 = arith.constant 0 : index
    %7 = vector.load %arg3[%c1, %c0_7, %c0_8] : memref<2x512x128xbf16, #tpu.memory_space<vmem>>, vector<1x512x128xbf16>
    %8 = vector.shape_cast %7 : vector<1x512x128xbf16> to vector<512x128xbf16>
    %cst_9 = arith.constant dense<0.000000e+00> : vector<16x128xf32>
    %9 = tpu.matmul %3, %8, %cst_9 {dimension_numbers = #tpu.dot_dimension_numbers<[1], [0], [0], [1], [0, 0, 1, 1], [], []>} : vector<16x512xbf16>, vector<512x128xbf16>, vector<16x128xf32> -> vector<16x128xf32>
    %10 = arith.addf %6, %9 : vector<16x128xf32>
    %c0_10 = arith.constant 0 : index
    %c0_11 = arith.constant 0 : index
    %11 = vector.load %arg4[%c0_10, %c0_11] : memref<1x128xf32, #tpu.memory_space<vmem>>, vector<1x128xf32>
    %12 = vector.broadcast %11 : vector<1x128xf32> to vector<16x128xf32>
    %13 = arith.mulf %10, %12 : vector<16x128xf32>
    %c0_12 = arith.constant 0 : index
    %c0_13 = arith.constant 0 : index
    %14 = vector.load %arg5[%c0_12, %c0_13] : memref<1x128xf32, #tpu.memory_space<vmem>>, vector<1x128xf32>
    %15 = vector.broadcast %14 : vector<1x128xf32> to vector<16x128xf32>
    %16 = arith.addf %13, %15 : vector<16x128xf32>
    %cst_14 = arith.constant 0.000000e+00 : f32
    %17 = vector.broadcast %cst_14 : f32 to vector<16x128xf32>
    %18 = arith.cmpf oge, %16, %17 : vector<16x128xf32>
    %cst_15 = arith.constant 2.000000e-01 : f32
    %19 = vector.broadcast %cst_15 : f32 to vector<16x128xf32>
    %20 = arith.mulf %19, %16 : vector<16x128xf32>
    %21 = arith.select %18, %16, %20 : vector<16x128xi1>, vector<16x128xf32>
    %22 = arith.truncf %21 : vector<16x128xf32> to vector<16x128xbf16>
    %c0_16 = arith.constant 0 : index
    %c0_17 = arith.constant 0 : index
    %c0_18 = arith.constant 0 : index
    %23 = vector.load %arg6[%c0_16, %c0_17, %c0_18] : memref<1x16x128xbf16, #tpu.memory_space<vmem>>, vector<1x16x128xbf16>
    %24 = vector.shape_cast %23 : vector<1x16x128xbf16> to vector<16x128xbf16>
    %25 = vector.shape_cast %22 : vector<16x128xbf16> to vector<1x16x128xbf16>
    tpu.vector_store %arg6[%c0_16, %c0_17, %c0_18], %25 {strides = array<i32>} : memref<1x16x128xbf16, #tpu.memory_space<vmem>>, vector<1x16x128xbf16>,
    return
  }
  func.func @transform_0(%arg0: i32, %arg1: i32) -> (i32, i32, i32) {
    %c0_i32 = arith.constant 0 : i32
    %c0_i32_0 = arith.constant 0 : i32
    %c0_i32_1 = arith.constant 0 : i32
    return %arg0, %c0_i32, %c0_i32_0 : i32, i32, i32
  }
  func.func @transform_1(%arg0: i32, %arg1: i32) -> (i32, i32, i32) {
    %c0_i32 = arith.constant 0 : i32
    %c0_i32_0 = arith.constant 0 : i32
    %c0_i32_1 = arith.constant 0 : i32
    %c0_i32_2 = arith.constant 0 : i32
    return %c0_i32, %c0_i32_0, %c0_i32_1 : i32, i32, i32
  }
  func.func @transform_2(%arg0: i32, %arg1: i32) -> (i32, i32) {
    %c0_i32 = arith.constant 0 : i32
    %c0_i32_0 = arith.constant 0 : i32
    %c0_i32_1 = arith.constant 0 : i32
    return %c0_i32, %c0_i32_0 : i32, i32
  }
  func.func @transform_3(%arg0: i32, %arg1: i32) -> (i32, i32) {
    %c0_i32 = arith.constant 0 : i32
    %c0_i32_0 = arith.constant 0 : i32
    %c0_i32_1 = arith.constant 0 : i32
    return %c0_i32, %c0_i32_0 : i32, i32
  }
  func.func @transform_4(%arg0: i32, %arg1: i32) -> (i32, i32, i32) {
    %c0_i32 = arith.constant 0 : i32
    %c0_i32_0 = arith.constant 0 : i32
    return %arg0, %arg1, %c0_i32 : i32, i32, i32
  }
}

module attributes {stable_mosaic.version = 11 : i64} {
  func.func @_conv_block_kernel(%arg0: i32, %arg1: i32, %arg2: memref<1x10x1024xbf16, #tpu.memory_space<vmem>>, %arg3: memref<2x1024x256xbf16, #tpu.memory_space<vmem>>, %arg4: memref<1x256xf32, #tpu.memory_space<vmem>>, %arg5: memref<1x256xf32, #tpu.memory_space<vmem>>, %arg6: memref<1x8x256xbf16, #tpu.memory_space<vmem>>) attributes {dimension_semantics = [#tpu.dimension_semantics<parallel>, #tpu.dimension_semantics<arbitrary>], iteration_bounds = array<i64: 2, 1>, scalar_prefetch = 0 : i64, scratch_operands = 0 : i64, tpu.core_type = #tpu.core_type<tc>, window_params = [{transform_indices = @transform_0, window_bounds = array<i64: 1, 10, 1024>}, {pipeline_mode = #tpu.pipeline_mode<synchronous>, transform_indices = @transform_1, window_bounds = array<i64: 2, 1024, 256>}, {pipeline_mode = #tpu.pipeline_mode<synchronous>, transform_indices = @transform_2, window_bounds = array<i64: 1, 256>}, {pipeline_mode = #tpu.pipeline_mode<synchronous>, transform_indices = @transform_3, window_bounds = array<i64: 1, 256>}, {transform_indices = @transform_4, window_bounds = array<i64: 1, 8, 256>}]} {
    %c0 = arith.constant 0 : index
    %c0_0 = arith.constant 0 : index
    %c0_1 = arith.constant 0 : index
    %0 = vector.load %arg2[%c0, %c0_0, %c0_1] : memref<1x10x1024xbf16, #tpu.memory_space<vmem>>, vector<1x8x1024xbf16>
    %1 = vector.shape_cast %0 : vector<1x8x1024xbf16> to vector<8x1024xbf16>
    %c0_2 = arith.constant 0 : index
    %c2 = arith.constant 2 : index
    %c0_3 = arith.constant 0 : index
    %2 = vector.load %arg2[%c0_2, %c2, %c0_3] : memref<1x10x1024xbf16, #tpu.memory_space<vmem>>, vector<1x8x1024xbf16>
    %3 = vector.shape_cast %2 : vector<1x8x1024xbf16> to vector<8x1024xbf16>
    %c0_4 = arith.constant 0 : index
    %c0_5 = arith.constant 0 : index
    %c0_6 = arith.constant 0 : index
    %4 = vector.load %arg3[%c0_4, %c0_5, %c0_6] : memref<2x1024x256xbf16, #tpu.memory_space<vmem>>, vector<1x1024x256xbf16>
    %5 = vector.shape_cast %4 : vector<1x1024x256xbf16> to vector<1024x256xbf16>
    %cst = arith.constant dense<0.000000e+00> : vector<8x256xf32>
    %6 = tpu.matmul %1, %5, %cst {dimension_numbers = #tpu.dot_dimension_numbers<[1], [0], [0], [1], [0, 0, 1, 1], [], []>} : vector<8x1024xbf16>, vector<1024x256xbf16>, vector<8x256xf32> -> vector<8x256xf32>
    %c1 = arith.constant 1 : index
    %c0_7 = arith.constant 0 : index
    %c0_8 = arith.constant 0 : index
    %7 = vector.load %arg3[%c1, %c0_7, %c0_8] : memref<2x1024x256xbf16, #tpu.memory_space<vmem>>, vector<1x1024x256xbf16>
    %8 = vector.shape_cast %7 : vector<1x1024x256xbf16> to vector<1024x256xbf16>
    %cst_9 = arith.constant dense<0.000000e+00> : vector<8x256xf32>
    %9 = tpu.matmul %3, %8, %cst_9 {dimension_numbers = #tpu.dot_dimension_numbers<[1], [0], [0], [1], [0, 0, 1, 1], [], []>} : vector<8x1024xbf16>, vector<1024x256xbf16>, vector<8x256xf32> -> vector<8x256xf32>
    %10 = arith.addf %6, %9 : vector<8x256xf32>
    %c0_10 = arith.constant 0 : index
    %c0_11 = arith.constant 0 : index
    %11 = vector.load %arg4[%c0_10, %c0_11] : memref<1x256xf32, #tpu.memory_space<vmem>>, vector<1x256xf32>
    %12 = vector.broadcast %11 : vector<1x256xf32> to vector<8x256xf32>
    %13 = arith.mulf %10, %12 : vector<8x256xf32>
    %c0_12 = arith.constant 0 : index
    %c0_13 = arith.constant 0 : index
    %14 = vector.load %arg5[%c0_12, %c0_13] : memref<1x256xf32, #tpu.memory_space<vmem>>, vector<1x256xf32>
    %15 = vector.broadcast %14 : vector<1x256xf32> to vector<8x256xf32>
    %16 = arith.addf %13, %15 : vector<8x256xf32>
    %cst_14 = arith.constant 0.000000e+00 : f32
    %17 = vector.broadcast %cst_14 : f32 to vector<8x256xf32>
    %18 = arith.cmpf oge, %16, %17 : vector<8x256xf32>
    %cst_15 = arith.constant 2.000000e-01 : f32
    %19 = vector.broadcast %cst_15 : f32 to vector<8x256xf32>
    %20 = arith.mulf %19, %16 : vector<8x256xf32>
    %21 = arith.select %18, %16, %20 : vector<8x256xi1>, vector<8x256xf32>
    %22 = arith.truncf %21 : vector<8x256xf32> to vector<8x256xbf16>
    %c0_16 = arith.constant 0 : index
    %c0_17 = arith.constant 0 : index
    %c0_18 = arith.constant 0 : index
    %23 = vector.load %arg6[%c0_16, %c0_17, %c0_18] : memref<1x8x256xbf16, #tpu.memory_space<vmem>>, vector<1x8x256xbf16>
    %24 = vector.shape_cast %23 : vector<1x8x256xbf16> to vector<8x256xbf16>
    %25 = vector.shape_cast %22 : vector<8x256xbf16> to vector<1x8x256xbf16>
    tpu.vector_store %arg6[%c0_16, %c0_17, %c0_18], %25 {strides = array<i32>} : memref<1x8x256xbf16, #tpu.memory_space<vmem>>, vector<1x8x256xbf16>,
    return
  }
  func.func @transform_0(%arg0: i32, %arg1: i32) -> (i32, i32, i32) {
    %c0_i32 = arith.constant 0 : i32
    %c0_i32_0 = arith.constant 0 : i32
    %c0_i32_1 = arith.constant 0 : i32
    return %arg0, %c0_i32, %c0_i32_0 : i32, i32, i32
  }
  func.func @transform_1(%arg0: i32, %arg1: i32) -> (i32, i32, i32) {
    %c0_i32 = arith.constant 0 : i32
    %c0_i32_0 = arith.constant 0 : i32
    %c0_i32_1 = arith.constant 0 : i32
    %c0_i32_2 = arith.constant 0 : i32
    return %c0_i32, %c0_i32_0, %c0_i32_1 : i32, i32, i32
  }
  func.func @transform_2(%arg0: i32, %arg1: i32) -> (i32, i32) {
    %c0_i32 = arith.constant 0 : i32
    %c0_i32_0 = arith.constant 0 : i32
    %c0_i32_1 = arith.constant 0 : i32
    return %c0_i32, %c0_i32_0 : i32, i32
  }
  func.func @transform_3(%arg0: i32, %arg1: i32) -> (i32, i32) {
    %c0_i32 = arith.constant 0 : i32
    %c0_i32_0 = arith.constant 0 : i32
    %c0_i32_1 = arith.constant 0 : i32
    return %c0_i32, %c0_i32_0 : i32, i32
  }
  func.func @transform_4(%arg0: i32, %arg1: i32) -> (i32, i32, i32) {
    %c0_i32 = arith.constant 0 : i32
    %c0_i32_0 = arith.constant 0 : i32
    return %arg0, %arg1, %c0_i32 : i32, i32, i32
  }
}

module attributes {stable_mosaic.version = 11 : i64} {
  func.func @_conv_block_kernel(%arg0: i32, %arg1: i32, %arg2: memref<1x9x2048xbf16, #tpu.memory_space<vmem>>, %arg3: memref<2x2048x512xbf16, #tpu.memory_space<vmem>>, %arg4: memref<1x512xf32, #tpu.memory_space<vmem>>, %arg5: memref<1x512xf32, #tpu.memory_space<vmem>>, %arg6: memref<1x8x512xbf16, #tpu.memory_space<vmem>>) attributes {dimension_semantics = [#tpu.dimension_semantics<parallel>, #tpu.dimension_semantics<arbitrary>], iteration_bounds = array<i64: 2, 1>, scalar_prefetch = 0 : i64, scratch_operands = 0 : i64, tpu.core_type = #tpu.core_type<tc>, window_params = [{transform_indices = @transform_0, window_bounds = array<i64: 1, 9, 2048>}, {pipeline_mode = #tpu.pipeline_mode<synchronous>, transform_indices = @transform_1, window_bounds = array<i64: 2, 2048, 512>}, {pipeline_mode = #tpu.pipeline_mode<synchronous>, transform_indices = @transform_2, window_bounds = array<i64: 1, 512>}, {pipeline_mode = #tpu.pipeline_mode<synchronous>, transform_indices = @transform_3, window_bounds = array<i64: 1, 512>}, {transform_indices = @transform_4, window_bounds = array<i64: 1, 8, 512>}]} {
    %c0 = arith.constant 0 : index
    %c0_0 = arith.constant 0 : index
    %c0_1 = arith.constant 0 : index
    %0 = vector.load %arg2[%c0, %c0_0, %c0_1] : memref<1x9x2048xbf16, #tpu.memory_space<vmem>>, vector<1x8x2048xbf16>
    %1 = vector.shape_cast %0 : vector<1x8x2048xbf16> to vector<8x2048xbf16>
    %c0_2 = arith.constant 0 : index
    %c1 = arith.constant 1 : index
    %c0_3 = arith.constant 0 : index
    %2 = vector.load %arg2[%c0_2, %c1, %c0_3] : memref<1x9x2048xbf16, #tpu.memory_space<vmem>>, vector<1x8x2048xbf16>
    %3 = vector.shape_cast %2 : vector<1x8x2048xbf16> to vector<8x2048xbf16>
    %c0_4 = arith.constant 0 : index
    %c0_5 = arith.constant 0 : index
    %c0_6 = arith.constant 0 : index
    %4 = vector.load %arg3[%c0_4, %c0_5, %c0_6] : memref<2x2048x512xbf16, #tpu.memory_space<vmem>>, vector<1x2048x512xbf16>
    %5 = vector.shape_cast %4 : vector<1x2048x512xbf16> to vector<2048x512xbf16>
    %cst = arith.constant dense<0.000000e+00> : vector<8x512xf32>
    %6 = tpu.matmul %1, %5, %cst {dimension_numbers = #tpu.dot_dimension_numbers<[1], [0], [0], [1], [0, 0, 1, 1], [], []>} : vector<8x2048xbf16>, vector<2048x512xbf16>, vector<8x512xf32> -> vector<8x512xf32>
    %c1_7 = arith.constant 1 : index
    %c0_8 = arith.constant 0 : index
    %c0_9 = arith.constant 0 : index
    %7 = vector.load %arg3[%c1_7, %c0_8, %c0_9] : memref<2x2048x512xbf16, #tpu.memory_space<vmem>>, vector<1x2048x512xbf16>
    %8 = vector.shape_cast %7 : vector<1x2048x512xbf16> to vector<2048x512xbf16>
    %cst_10 = arith.constant dense<0.000000e+00> : vector<8x512xf32>
    %9 = tpu.matmul %3, %8, %cst_10 {dimension_numbers = #tpu.dot_dimension_numbers<[1], [0], [0], [1], [0, 0, 1, 1], [], []>} : vector<8x2048xbf16>, vector<2048x512xbf16>, vector<8x512xf32> -> vector<8x512xf32>
    %10 = arith.addf %6, %9 : vector<8x512xf32>
    %c0_11 = arith.constant 0 : index
    %c0_12 = arith.constant 0 : index
    %11 = vector.load %arg4[%c0_11, %c0_12] : memref<1x512xf32, #tpu.memory_space<vmem>>, vector<1x512xf32>
    %12 = vector.broadcast %11 : vector<1x512xf32> to vector<8x512xf32>
    %13 = arith.mulf %10, %12 : vector<8x512xf32>
    %c0_13 = arith.constant 0 : index
    %c0_14 = arith.constant 0 : index
    %14 = vector.load %arg5[%c0_13, %c0_14] : memref<1x512xf32, #tpu.memory_space<vmem>>, vector<1x512xf32>
    %15 = vector.broadcast %14 : vector<1x512xf32> to vector<8x512xf32>
    %16 = arith.addf %13, %15 : vector<8x512xf32>
    %cst_15 = arith.constant 0.000000e+00 : f32
    %17 = vector.broadcast %cst_15 : f32 to vector<8x512xf32>
    %18 = arith.cmpf oge, %16, %17 : vector<8x512xf32>
    %cst_16 = arith.constant 2.000000e-01 : f32
    %19 = vector.broadcast %cst_16 : f32 to vector<8x512xf32>
    %20 = arith.mulf %19, %16 : vector<8x512xf32>
    %21 = arith.select %18, %16, %20 : vector<8x512xi1>, vector<8x512xf32>
    %22 = arith.truncf %21 : vector<8x512xf32> to vector<8x512xbf16>
    %c0_17 = arith.constant 0 : index
    %c0_18 = arith.constant 0 : index
    %c0_19 = arith.constant 0 : index
    %23 = vector.load %arg6[%c0_17, %c0_18, %c0_19] : memref<1x8x512xbf16, #tpu.memory_space<vmem>>, vector<1x8x512xbf16>
    %24 = vector.shape_cast %23 : vector<1x8x512xbf16> to vector<8x512xbf16>
    %25 = vector.shape_cast %22 : vector<8x512xbf16> to vector<1x8x512xbf16>
    tpu.vector_store %arg6[%c0_17, %c0_18, %c0_19], %25 {strides = array<i32>} : memref<1x8x512xbf16, #tpu.memory_space<vmem>>, vector<1x8x512xbf16>,
    return
  }
  func.func @transform_0(%arg0: i32, %arg1: i32) -> (i32, i32, i32) {
    %c0_i32 = arith.constant 0 : i32
    %c0_i32_0 = arith.constant 0 : i32
    %c0_i32_1 = arith.constant 0 : i32
    return %arg0, %c0_i32, %c0_i32_0 : i32, i32, i32
  }
  func.func @transform_1(%arg0: i32, %arg1: i32) -> (i32, i32, i32) {
    %c0_i32 = arith.constant 0 : i32
    %c0_i32_0 = arith.constant 0 : i32
    %c0_i32_1 = arith.constant 0 : i32
    %c0_i32_2 = arith.constant 0 : i32
    return %c0_i32, %c0_i32_0, %c0_i32_1 : i32, i32, i32
  }
  func.func @transform_2(%arg0: i32, %arg1: i32) -> (i32, i32) {
    %c0_i32 = arith.constant 0 : i32
    %c0_i32_0 = arith.constant 0 : i32
    %c0_i32_1 = arith.constant 0 : i32
    return %c0_i32, %c0_i32_0 : i32, i32
  }
  func.func @transform_3(%arg0: i32, %arg1: i32) -> (i32, i32) {
    %c0_i32 = arith.constant 0 : i32
    %c0_i32_0 = arith.constant 0 : i32
    %c0_i32_1 = arith.constant 0 : i32
    return %c0_i32, %c0_i32_0 : i32, i32
  }
  func.func @transform_4(%arg0: i32, %arg1: i32) -> (i32, i32, i32) {
    %c0_i32 = arith.constant 0 : i32
    %c0_i32_0 = arith.constant 0 : i32
    return %arg0, %arg1, %c0_i32 : i32, i32, i32
  }
}

module attributes {stable_mosaic.version = 11 : i64} {
  func.func @_head_kernel(%arg0: i32, %arg1: memref<2x1x512xbf16, #tpu.memory_space<vmem>>, %arg2: memref<512x1xf32, #tpu.memory_space<vmem>>, %arg3: memref<1x1xf32, #tpu.memory_space<vmem>>, %arg4: memref<2x1xf32, #tpu.memory_space<vmem>>) attributes {dimension_semantics = [#tpu.dimension_semantics<arbitrary>], iteration_bounds = array<i64: 1>, scalar_prefetch = 0 : i64, scratch_operands = 0 : i64, tpu.core_type = #tpu.core_type<tc>, window_params = [{pipeline_mode = #tpu.pipeline_mode<synchronous>, transform_indices = @transform_0, window_bounds = array<i64: 2, 1, 512>}, {pipeline_mode = #tpu.pipeline_mode<synchronous>, transform_indices = @transform_1, window_bounds = array<i64: 512, 1>}, {pipeline_mode = #tpu.pipeline_mode<synchronous>, transform_indices = @transform_2, window_bounds = array<i64: 1, 1>}, {pipeline_mode = #tpu.pipeline_mode<synchronous>, transform_indices = @transform_3, window_bounds = array<i64: 2, 1>}]} {
    %c0 = arith.constant 0 : index
    %c0_0 = arith.constant 0 : index
    %c0_1 = arith.constant 0 : index
    %0 = vector.load %arg1[%c0, %c0_0, %c0_1] : memref<2x1x512xbf16, #tpu.memory_space<vmem>>, vector<2x1x512xbf16>
    %1 = arith.extf %0 : vector<2x1x512xbf16> to vector<2x1x512xf32>
    %cst = arith.constant dense<0.000000e+00> : vector<2x512xf32>
    %2 = vector.multi_reduction <add>, %1, %cst [1] : vector<2x1x512xf32> to vector<2x512xf32>
    %cst_2 = arith.constant 1.000000e+00 : f32
    %3 = vector.broadcast %cst_2 : f32 to vector<2x512xf32>
    %4 = arith.divf %2, %3 : vector<2x512xf32>
    %c0_3 = arith.constant 0 : index
    %c0_4 = arith.constant 0 : index
    %5 = vector.load %arg2[%c0_3, %c0_4] : memref<512x1xf32, #tpu.memory_space<vmem>>, vector<512x1xf32>
    %cst_5 = arith.constant dense<0.000000e+00> : vector<2x1xf32>
    %6 = tpu.matmul %4, %5, %cst_5 {dimension_numbers = #tpu.dot_dimension_numbers<[1], [0], [0], [1], [0, 0, 1, 1], [], []>} : vector<2x512xf32>, vector<512x1xf32>, vector<2x1xf32> -> vector<2x1xf32>
    %c0_6 = arith.constant 0 : index
    %c0_7 = arith.constant 0 : index
    %7 = vector.load %arg3[%c0_6, %c0_7] : memref<1x1xf32, #tpu.memory_space<vmem>>, vector<1x1xf32>
    %8 = vector.broadcast %7 : vector<1x1xf32> to vector<2x1xf32>
    %9 = arith.addf %6, %8 : vector<2x1xf32>
    %c0_8 = arith.constant 0 : index
    %c0_9 = arith.constant 0 : index
    %10 = vector.load %arg4[%c0_8, %c0_9] : memref<2x1xf32, #tpu.memory_space<vmem>>, vector<2x1xf32>
    tpu.vector_store %arg4[%c0_8, %c0_9], %9 {strides = array<i32>} : memref<2x1xf32, #tpu.memory_space<vmem>>, vector<2x1xf32>,
    return
  }
  func.func @transform_0(%arg0: i32) -> (i32, i32, i32) {
    %c0_i32 = arith.constant 0 : i32
    %c0_i32_0 = arith.constant 0 : i32
    %c0_i32_1 = arith.constant 0 : i32
    %c0_i32_2 = arith.constant 0 : i32
    return %c0_i32, %c0_i32_0, %c0_i32_1 : i32, i32, i32
  }
  func.func @transform_1(%arg0: i32) -> (i32, i32) {
    %c0_i32 = arith.constant 0 : i32
    %c0_i32_0 = arith.constant 0 : i32
    %c0_i32_1 = arith.constant 0 : i32
    return %c0_i32, %c0_i32_0 : i32, i32
  }
  func.func @transform_2(%arg0: i32) -> (i32, i32) {
    %c0_i32 = arith.constant 0 : i32
    %c0_i32_0 = arith.constant 0 : i32
    %c0_i32_1 = arith.constant 0 : i32
    return %c0_i32, %c0_i32_0 : i32, i32
  }
  func.func @transform_3(%arg0: i32) -> (i32, i32) {
    %c0_i32 = arith.constant 0 : i32
    %c0_i32_0 = arith.constant 0 : i32
    %c0_i32_1 = arith.constant 0 : i32
    return %c0_i32, %c0_i32_0 : i32, i32
  }
}

</mosaic_0001>

<llo_original>
// kernel: discriminator_forward.5
$region0: #{discriminator_forward.5}
  #allocation0 [shape = 'u32[]', space=smem, size = 0x4, offset = 0x4, fixed_abs, tag = 'smem constant byte address 0x4 - core index']
  #allocation1 [shape = 'u32[72,128]{1,0:T(1,128)}', space=vmem, size = 0x9000, scoped, tag = 'internal scratch']
  %s0 = inlined_call_operand.vmem [shape: bf16[2,72,24], index: 0, kind: input, shape index: {}]
  %s1 = inlined_call_operand.vmem [shape: bf16[2,24,128], index: 1, kind: input, shape index: {}]
  %s2 = inlined_call_operand.vmem [shape: f32[1,128], index: 2, kind: input, shape index: {}]
  %s3 = inlined_call_operand.vmem [shape: f32[1,128], index: 3, kind: input, shape index: {}]
  %s4 = inlined_call_operand.vmem [shape: bf16[2,64,128], index: 4, kind: output, shape index: {}]
  %s5 = sld [smem:[#allocation0]]
  $region49: #{discriminator_forward.5} parent=0
    _
  %s7 = ssub.s32 1, %s5
  %s8 = scalar_select 0, %s7, %s5
  loop: start=0, step=1, limit=4
  $region2: #{discriminator_forward.5} parent=0 // loop_pre_header
    _
  $region3: #{discriminator_forward.5} parent=0 // loop_header
    %s10 = sphi 0, %s14
    %p11 = scmp.ge.s32.totalorder %s10, 4
    %s17 = sphi 0, %s29
    %s18 = sphi 0, %s25
    %s19 = sphi 0, %s17
    %s20 = sphi 0, %s18
    %s21 = sphi 0, %s19
    %s22 = sphi 0, %s20
    %s32 = sphi 0, %s34
    %s35 = sphi 0, %s32
    %s36 = sphi 0, %s35
    %s52 = sphi 0, %s36
    %s56 = sphi 0, %s56
    %s58 = sphi 0, %s56
    %s59 = sphi 0, %s58
    %s73 = sphi 0, %s59
    %s77 = sphi 0, %s77
    %s79 = sphi 0, %s77
    %s80 = sphi 0, %s79
    %s94 = sphi 0, %s80
    %s98 = sphi 0, %s98
    %s100 = sphi 0, %s98
    %s101 = sphi 0, %s100
    %s115 = sphi 0, %s101
    %s123 = sphi 0, %s125
    %s126 = sphi 0, %s123
    %s127 = sphi 0, %s126
    %s143 = sphi 0, %s127
  $region4: #{discriminator_forward.5} parent=0 // loop_header_branch
    %13 = sbr.rel (%p11) target = $region8
  $region5: #{discriminator_forward.5} parent=0 // loop_body
    %s15 = ssub.s32 %s10, 1
    %s16 = ssub.s32 %s10, 2
    %s23 = sadd.s32 1, %s18
    %p24 = scmp.ge.s32.totalorder %s23, 1
    %s25 = scalar_select %p24, 0, %s23
    %s26 = sadd.s32 1, %s17
    %s27 = scalar_select %p24, %s26, %s17
    %p28 = scmp.ge.s32.totalorder %s27, 2
    %s29 = scalar_select %p28, 0, %s27
    %s30 = ssub.s32 %s17, %s29
    %p31 = scmp.eq.s32.totalorder %s30, 0
    %s33 = sadd.s32 %s32, 1
    %s34 = scalar_select %p31, %s32, %s33
    %p37 = pneg %p31
    %p38 = scmp.eq.s32.totalorder %s10, 1
    %p39 = por %p37, %p38
    %p40 = scmp.ne.s32.totalorder %s32, %s35
    %p41 = scmp.eq.s32.totalorder %s10, 0
    %p42 = por %p40, %p41
    %p43 = scmp.ne.s32.totalorder %s32, %s35
    %p44 = scmp.eq.s32.totalorder %s15, 1
    %p45 = por %p43, %p44
    %p46 = scmp.ne.s32.totalorder %s35, %s36
    %p47 = scmp.eq.s32.totalorder %s15, 0
    %p48 = por %p46, %p47
    %p49 = scmp.ne.s32.totalorder %s35, %s36
    %p50 = scmp.eq.s32.totalorder %s16, 1
    %p51 = por %p49, %p50
    %p53 = scmp.ne.s32.totalorder %s36, %s52
    %p54 = scmp.eq.s32.totalorder %s16, 0
    %p55 = por %p53, %p54
    %s57 = sadd.s32 %s56, 1
    %p60 = scmp.eq.s32.totalorder %s10, 1
    %p61 = scmp.ne.s32.totalorder %s56, %s58
    %p62 = scmp.eq.s32.totalorder %s10, 0
    %p63 = por %p61, %p62
    %p64 = scmp.ne.s32.totalorder %s56, %s58
    %p65 = scmp.eq.s32.totalorder %s15, 1
    %p66 = por %p64, %p65
    %p67 = scmp.ne.s32.totalorder %s58, %s59
    %p68 = scmp.eq.s32.totalorder %s15, 0
    %p69 = por %p67, %p68
    %p70 = scmp.ne.s32.totalorder %s58, %s59
    %p71 = scmp.eq.s32.totalorder %s16, 1
    %p72 = por %p70, %p71
    %p74 = scmp.ne.s32.totalorder %s59, %s73
    %p75 = scmp.eq.s32.totalorder %s16, 0
    %p76 = por %p74, %p75
    %s78 = sadd.s32 %s77, 1
    %p81 = scmp.eq.s32.totalorder %s10, 1
    %p82 = scmp.ne.s32.totalorder %s77, %s79
    %p83 = scmp.eq.s32.totalorder %s10, 0
    %p84 = por %p82, %p83
    %p85 = scmp.ne.s32.totalorder %s77, %s79
    %p86 = scmp.eq.s32.totalorder %s15, 1
    %p87 = por %p85, %p86
    %p88 = scmp.ne.s32.totalorder %s79, %s80
    %p89 = scmp.eq.s32.totalorder %s15, 0
    %p90 = por %p88, %p89
    %p91 = scmp.ne.s32.totalorder %s79, %s80
    %p92 = scmp.eq.s32.totalorder %s16, 1
    %p93 = por %p91, %p92
    %p95 = scmp.ne.s32.totalorder %s80, %s94
    %p96 = scmp.eq.s32.totalorder %s16, 0
    %p97 = por %p95, %p96
    %s99 = sadd.s32 %s98, 1
    %p102 = scmp.eq.s32.totalorder %s10, 1
    %p103 = scmp.ne.s32.totalorder %s98, %s100
    %p104 = scmp.eq.s32.totalorder %s10, 0
    %p105 = por %p103, %p104
    %p106 = scmp.ne.s32.totalorder %s98, %s100
    %p107 = scmp.eq.s32.totalorder %s15, 1
    %p108 = por %p106, %p107
    %p109 = scmp.ne.s32.totalorder %s100, %s101
    %p110 = scmp.eq.s32.totalorder %s15, 0
    %p111 = por %p109, %p110
    %p112 = scmp.ne.s32.totalorder %s100, %s101
    %p113 = scmp.eq.s32.totalorder %s16, 1
    %p114 = por %p112, %p113
    %p116 = scmp.ne.s32.totalorder %s101, %s115
    %p117 = scmp.eq.s32.totalorder %s16, 0
    %p118 = por %p116, %p117
    %s119 = ssub.s32 %s17, %s29
    %s120 = ssub.s32 %s18, %s25
    %s121 = sor.u32 %s119, %s120
    %p122 = scmp.eq.s32.totalorder %s121, 0
    %s124 = sadd.s32 %s123, 1
    %s125 = scalar_select %p122, %s123, %s124
    %p128 = pneg %p122
    %p129 = scmp.eq.s32.totalorder %s10, 1
    %p130 = por %p128, %p129
    %p131 = scmp.ne.s32.totalorder %s123, %s126
    %p132 = scmp.eq.s32.totalorder %s10, 0
    %p133 = por %p131, %p132
    %p134 = scmp.ne.s32.totalorder %s123, %s126
    %p135 = scmp.eq.s32.totalorder %s15, 1
    %p136 = por %p134, %p135
    %p137 = scmp.ne.s32.totalorder %s126, %s127
    %p138 = scmp.eq.s32.totalorder %s15, 0
    %p139 = por %p137, %p138
    %p140 = scmp.ne.s32.totalorder %s126, %s127
    %p141 = scmp.eq.s32.totalorder %s16, 1
    %p142 = por %p140, %p141
    %p144 = scmp.ne.s32.totalorder %s127, %s143
    %p145 = scmp.eq.s32.totalorder %s16, 0
    %p146 = por %p144, %p145
    %p147 = scmp.le.s32.totalorder 1, %s10
    %p148 = scmp.lt.s32.totalorder %s10, 3
    %p149 = pnand %p147, %p148
    %p150 = pneg %p149
    // Predicated region
    $region9: #{discriminator_forward.5} parent=5 // pred_check
      _
    $region10: #{discriminator_forward.5} parent=5 // pred_check_branch
      %152 = sbr.rel (%p149) target = $region12
    $region11: #{discriminator_forward.5} parent=5 // pred_region
      %s153 = ssub.s32 %s10, 1
      // Predicated region
      $region13: #{discriminator_forward.5} parent=11 // pred_check
        %p154 = pneg %p69
      $region14: #{discriminator_forward.5} parent=11 // pred_check_branch
        %156 = sbr.rel (%p154) target = $region16
      $region15: #{discriminator_forward.5} parent=11 // pred_region
        _
      $region16: #{discriminator_forward.5} parent=11 // pred_fallthru
        _
      // Predicated region
      $region17: #{discriminator_forward.5} parent=11 // pred_check
        %p157 = pneg %p90
      $region18: #{discriminator_forward.5} parent=11 // pred_check_branch
        %159 = sbr.rel (%p157) target = $region20
      $region19: #{discriminator_forward.5} parent=11 // pred_region
        _
      $region20: #{discriminator_forward.5} parent=11 // pred_fallthru
        _
      // Predicated region
      $region21: #{discriminator_forward.5} parent=11 // pred_check
        %p160 = pneg %p111
      $region22: #{discriminator_forward.5} parent=11 // pred_check_branch
        %162 = sbr.rel (%p160) target = $region24
      $region23: #{discriminator_forward.5} parent=11 // pred_region
        _
      $region24: #{discriminator_forward.5} parent=11 // pred_fallthru
        _
    $region12: #{discriminator_forward.5} parent=5 // pred_fallthru
      _
    %p163 = scmp.lt.s32.totalorder %s10, 2
    // Predicated region
    $region25: #{discriminator_forward.5} parent=5 // pred_check
      %p164 = pneg %p163
    $region26: #{discriminator_forward.5} parent=5 // pred_check_branch
      %166 = sbr.rel (%p164) target = $region28
    $region27: #{discriminator_forward.5} parent=5 // pred_region
      // Predicated region
      $region29: #{discriminator_forward.5} parent=27 // pred_check
        %p167 = pneg %p42
      $region30: #{discriminator_forward.5} parent=27 // pred_check_branch
        %169 = sbr.rel (%p167) target = $region32
      $region31: #{discriminator_forward.5} parent=27 // pred_region
        %p170 = scmp.lt.s32.totalorder %s17, 1
        %s171 = scalar_select %p170, %s17, 1
        %s172 = smul.addr %s171, 9
        %s173 = smul.addr %s172, 4
        %s174 = scalar_lea.vmem %s0, %s173
      $region32: #{discriminator_forward.5} parent=27 // pred_fallthru
        _
    $region28: #{discriminator_forward.5} parent=5 // pred_fallthru
      _
    %p175 = scmp.le.s32.totalorder 1, %s10
    %p176 = scmp.lt.s32.totalorder %s10, 3
    %p177 = pnand %p175, %p176
    %p178 = pneg %p177
    // Predicated region
    $region33: #{discriminator_forward.5} parent=5 // pred_check
      _
    $region34: #{discriminator_forward.5} parent=5 // pred_check_branch
      %180 = sbr.rel (%p177) target = $region36
    $region35: #{discriminator_forward.5} parent=5 // pred_region
      %s181 = ssub.s32 %s10, 1
      %p182 = scmp.lt.s32.totalorder %s19, 1
      %s183 = scalar_select %p182, %s19, 1
      %s184 = smul.addr %s183, 9
      %s185 = smul.addr %s184, 4
      %s186 = scalar_lea.vmem %s0, %s185
      %p187 = pneg %p48
      %p188 = pneg %p45
      %p189 = pneg %p69
      %p190 = pneg %p66
      %p191 = pneg %p90
      %p192 = pneg %p87
      %p193 = pneg %p111
      %p194 = pneg %p108
      %p195 = pneg %p139
      %p196 = pneg %p136
      %s197 = smul.u32 8, %s20
      %p198 = scmp.lt.s32.totalorder %s19, 1
      %s199 = scalar_select %p198, %s19, 1
      %p200 = scmp.lt.s32.totalorder %s197, 7
      %s201 = scalar_select %p200, %s197, 7
      %s202 = smul.addr %s199, 8
      %s203 = sadd.s32 %s201, %s202
      %s204 = smul.addr %s203, 4
      %s205 = scalar_lea.vmem %s4, %s204
      %p206 = scmp.lt.s32.totalorder %s19, 1
      %s207 = scalar_select %p206, %s19, 1
      %s208 = smul.addr %s207, 9
      %s209 = smul.addr %s208, 4
      %s210 = scalar_lea.vmem %s0, %s209
      %s211 = smul.u32 8, %s20
      %p212 = scmp.lt.s32.totalorder %s19, 1
      %s213 = scalar_select %p212, %s19, 1
      %p214 = scmp.lt.s32.totalorder %s211, 7
      %s215 = scalar_select %p214, %s211, 7
      %s216 = smul.addr %s213, 8
      %s217 = sadd.s32 %s215, %s216
      %s218 = smul.addr %s217, 4
      %s219 = scalar_lea.vmem %s4, %s218
      %s220 = smul.u32 8, %s20
      %v222 = vld [vmem:[%s210] sm:$0xf]
      %v223 = vld [vmem:[%s210 + $0x4] sm:$0xf]
      %v224 = vld [vmem:[%s210 + $0x8] sm:$0xf]
      %v225 = vld [vmem:[%s210 + $0xc] sm:$0xf]
      %v226 = vld [vmem:[%s210 + $0x10] sm:$0xf]
      %v227 = vld [vmem:[%s210 + $0x14] sm:$0xf]
      %v228 = vld [vmem:[%s210 + $0x18] sm:$0xf]
      %v229 = vld [vmem:[%s210 + $0x1c] sm:$0xf]
      %v230 = vld [vmem:[%s210 + $0x20] sm:$0xf]
      %v231 = vld [vmem:[%s1] sm:$0xf]
      %v232 = vld [vmem:[%s1 + $0x4] sm:$0xf]
      %v233 = vld [vmem:[%s1 + $0x8] sm:$0xf]
      %s234 = scalar_lea.vmem %s1, 12
      %v235 = vld [vmem:[%s234] sm:$0xf]
      %v236 = vld [vmem:[%s234 + $0x4] sm:$0xf]
      %v237 = vld [vmem:[%s234 + $0x8] sm:$0xf]
      %v246 = vunpack.c.l.b16 %v223
      %v247 = vunpack.c.l.b16 %v224
      %v248 = vunpack.c.l.b16 %v225
      %v249 = vunpack.c.l.b16 %v226
      %v250 = vunpack.c.l.b16 %v227
      %v251 = vunpack.c.l.b16 %v228
      %v252 = vunpack.c.l.b16 %v229
      %v253 = vunpack.c.l.b16 %v230
      %v254 = vpack.c.b16 %v247, %v246
      %v255 = vpack.c.b16 %v249, %v248
      %v256 = vpack.c.b16 %v251, %v250
      %v257 = vpack.c.b16 %v253, %v252
      %v261 = vunpack.c.l.b16 %v235
      %v262 = vunpack.c.l.b16 %v236
      %v263 = vunpack.c.l.b16 %v237
      %v264 = vpack.c.b16 %v262, %v261
      %v265 = vpack.c.b16 %v263, %v263
      %vm267 = vcmask 195584
      %v269 = vsel %vm267, %v254, 0
      %v272 = vsel %vm267, %v255, 0
      %v275 = vsel %vm267, %v256, 0
      %v278 = vsel %vm267, %v257, 0
      %vm280 = vcmask 1043456
      %v282 = vsel %vm280, %v265, 0
      %284 = vmatpush.bf16.msra.mxu0 0
      %285 = vmatpush.bf16.msra.mxu0 0
      %286 = vmatpush.bf16.msra.mxu0 0
      %287 = vmatpush.bf16.msra.mxu0 0
      %288 = vmatpush.bf16.msra.mxu0 0
      %289 = vmatpush.bf16.msra.mxu0 0
      %290 = vmatpush.bf16.msra.mxu0 %v282
      %291 = vmatpush.bf16.msra.mxu0 %v264
      %292 = vmatmul.bf16.gmra.mxu0 %v269
      %v293 = vpop.f32.mrf.mxu0
      %v294 = vadd.f32 0.0, %v293
      %v295 = vpop.f32.mrf.mxu0
      %v296 = vadd.f32 0.0, %v295
      %297 = vmatmul.bf16.gmra.mxu0 %v272
      %v298 = vpop.f32.mrf.mxu0
      %v299 = vadd.f32 0.0, %v298
      %v300 = vpop.f32.mrf.mxu0
      %v301 = vadd.f32 0.0, %v300
      %302 = vmatmul.bf16.gmra.mxu0 %v275
      %v303 = vpop.f32.mrf.mxu0
      %v304 = vadd.f32 0.0, %v303
      %v305 = vpop.f32.mrf.mxu0
      %v306 = vadd.f32 0.0, %v305
      %307 = vmatmul.bf16.gmra.mxu0 %v278
      %v308 = vpop.f32.mrf.mxu0
      %v309 = vadd.f32 0.0, %v308
      %v310 = vpop.f32.mrf.mxu0
      %v311 = vadd.f32 0.0, %v310
      %312 = vdwg.mxu0
      %v314 = vunpack.c.l.b16 %v222
      %v315 = vpack.c.b16 %v246, %v314
      %v316 = vpack.c.b16 %v248, %v247
      %v317 = vpack.c.b16 %v250, %v249
      %v318 = vpack.c.b16 %v252, %v251
      %v322 = vunpack.c.l.b16 %v231
      %v323 = vunpack.c.l.b16 %v232
      %v324 = vunpack.c.l.b16 %v233
      %v325 = vpack.c.b16 %v323, %v322
      %v326 = vpack.c.b16 %v324, %v324
      %v329 = vsel %vm267, %v315, 0
      %v332 = vsel %vm267, %v316, 0
      %v335 = vsel %vm267, %v317, 0
      %v338 = vsel %vm267, %v318, 0
      %v341 = vsel %vm280, %v326, 0
      %343 = vmatpush.bf16.msra.mxu0 0
      %344 = vmatpush.bf16.msra.mxu0 0
      %345 = vmatpush.bf16.msra.mxu0 0
      %346 = vmatpush.bf16.msra.mxu0 0
      %347 = vmatpush.bf16.msra.mxu0 0
      %348 = vmatpush.bf16.msra.mxu0 0
      %349 = vmatpush.bf16.msra.mxu0 %v341
      %350 = vmatpush.bf16.msra.mxu0 %v325
      %351 = vmatmul.bf16.gmra.mxu0 %v329
      %v352 = vpop.f32.mrf.mxu0
      %v353 = vadd.f32 %v294, %v352
      %v354 = vpop.f32.mrf.mxu0
      %v355 = vadd.f32 %v296, %v354
      %356 = vmatmul.bf16.gmra.mxu0 %v332
      %v357 = vpop.f32.mrf.mxu0
      %v358 = vadd.f32 %v299, %v357
      %v359 = vpop.f32.mrf.mxu0
      %v360 = vadd.f32 %v301, %v359
      %361 = vmatmul.bf16.gmra.mxu0 %v335
      %v362 = vpop.f32.mrf.mxu0
      %v363 = vadd.f32 %v304, %v362
      %v364 = vpop.f32.mrf.mxu0
      %v365 = vadd.f32 %v306, %v364
      %366 = vmatmul.bf16.gmra.mxu0 %v338
      %v367 = vpop.f32.mrf.mxu0
      %v368 = vadd.f32 %v309, %v367
      %v369 = vpop.f32.mrf.mxu0
      %v370 = vadd.f32 %v311, %v369
      %371 = vdwg.mxu0
      %v372 = vld [vmem:[%s2] sm:$0x1]
      %v374 = vperm.slane %v372, 0
      %v376 = vmul.f32 %v353, %v374
      %v377 = vmul.f32 %v355, %v374
      %v378 = vmul.f32 %v358, %v374
      %v379 = vmul.f32 %v360, %v374
      %v380 = vmul.f32 %v363, %v374
      %v381 = vmul.f32 %v365, %v374
      %v382 = vmul.f32 %v368, %v374
      %v383 = vmul.f32 %v370, %v374
      %v384 = vld [vmem:[%s3] sm:$0x1]
      %v386 = vperm.slane %v384, 0
      %v388 = vadd.f32 %v376, %v386
      %v389 = vadd.f32 %v377, %v386
      %v390 = vadd.f32 %v378, %v386
      %v391 = vadd.f32 %v379, %v386
      %v392 = vadd.f32 %v380, %v386
      %v393 = vadd.f32 %v381, %v386
      %v394 = vadd.f32 %v382, %v386
      %v395 = vadd.f32 %v383, %v386
      %vm396 = vcmp.ge.f32.partialorder %v388, 0.0
      %vm397 = vcmp.ge.f32.partialorder %v389, 0.0
      %vm398 = vcmp.ge.f32.partialorder %v390, 0.0
      %vm399 = vcmp.ge.f32.partialorder %v391, 0.0
      %vm400 = vcmp.ge.f32.partialorder %v392, 0.0
      %vm401 = vcmp.ge.f32.partialorder %v393, 0.0
      %vm402 = vcmp.ge.f32.partialorder %v394, 0.0
      %vm403 = vcmp.ge.f32.partialorder %v395, 0.0
      %v404 = vmul.f32 %v388, 0.2
      %v405 = vmul.f32 %v389, 0.2
      %v406 = vmul.f32 %v390, 0.2
      %v407 = vmul.f32 %v391, 0.2
      %v408 = vmul.f32 %v392, 0.2
      %v409 = vmul.f32 %v393, 0.2
      %v410 = vmul.f32 %v394, 0.2
      %v411 = vmul.f32 %v395, 0.2
      %v412 = vsel %vm396, %v388, %v404
      %v413 = vsel %vm397, %v389, %v405
      %v414 = vsel %vm398, %v390, %v406
      %v415 = vsel %vm399, %v391, %v407
      %v416 = vsel %vm400, %v392, %v408
      %v417 = vsel %vm401, %v393, %v409
      %v418 = vsel %vm402, %v394, %v410
      %v419 = vsel %vm403, %v395, %v411
      %v420 = vpack.c.bf16 %v412, %v412
      %v421 = vpack.c.bf16 %v413, %v413
      %v422 = vpack.c.bf16 %v414, %v414
      %v423 = vpack.c.bf16 %v415, %v415
      %v424 = vpack.c.bf16 %v416, %v416
      %v425 = vpack.c.bf16 %v417, %v417
      %v426 = vpack.c.bf16 %v418, %v418
      %v427 = vpack.c.bf16 %v419, %v419
      %428 = vst [vmem:[%s219] sm:$0xf] %v420
      %429 = vst [vmem:[%s219 + $0x4] sm:$0xf] %v421
      %430 = vst [vmem:[%s219 + $0x8] sm:$0xf] %v422
      %431 = vst [vmem:[%s219 + $0xc] sm:$0xf] %v423
      %432 = vst [vmem:[%s219 + $0x10] sm:$0xf] %v424
      %433 = vst [vmem:[%s219 + $0x14] sm:$0xf] %v425
      %434 = vst [vmem:[%s219 + $0x18] sm:$0xf] %v426
      %435 = vst [vmem:[%s219 + $0x1c] sm:$0xf] %v427
      %s436 = smul.u32 8, %s20
      %p437 = scmp.lt.s32.totalorder %s19, 1
      %s438 = scalar_select %p437, %s19, 1
      %p439 = scmp.lt.s32.totalorder %s436, 7
      %s440 = scalar_select %p439, %s436, 7
      %s441 = smul.addr %s438, 8
      %s442 = sadd.s32 %s440, %s441
      %s443 = smul.addr %s442, 4
      %s444 = scalar_lea.vmem %s4, %s443
      // Predicated region
      $region37: #{discriminator_forward.5} parent=35 // pred_check
        %p445 = pneg %p136
      $region38: #{discriminator_forward.5} parent=35 // pred_check_branch
        %447 = sbr.rel (%p445) target = $region40
      $region39: #{discriminator_forward.5} parent=35 // pred_region
        %s448 = smul.u32 8, %s20
      $region40: #{discriminator_forward.5} parent=35 // pred_fallthru
        _
    $region36: #{discriminator_forward.5} parent=5 // pred_fallthru
      _
    %p449 = scmp.le.s32.totalorder 2, %s10
    // Predicated region
    $region41: #{discriminator_forward.5} parent=5 // pred_check
      %p450 = pneg %p449
    $region42: #{discriminator_forward.5} parent=5 // pred_check_branch
      %452 = sbr.rel (%p450) target = $region44
    $region43: #{discriminator_forward.5} parent=5 // pred_region
      %s453 = ssub.s32 %s10, 2
      // Predicated region
      $region45: #{discriminator_forward.5} parent=43 // pred_check
        %p454 = pneg %p142
      $region46: #{discriminator_forward.5} parent=43 // pred_check_branch
        %456 = sbr.rel (%p454) target = $region48
      $region47: #{discriminator_forward.5} parent=43 // pred_region
        %s457 = smul.u32 8, %s22
        %p458 = scmp.lt.s32.totalorder %s21, 1
        %s459 = scalar_select %p458, %s21, 1
        %p460 = scmp.lt.s32.totalorder %s457, 7
        %s461 = scalar_select %p460, %s457, 7
        %s462 = smul.addr %s459, 8
        %s463 = sadd.s32 %s461, %s462
        %s464 = smul.addr %s463, 4
        %s465 = scalar_lea.vmem %s4, %s464
      $region48: #{discriminator_forward.5} parent=43 // pred_fallthru
        _
    $region44: #{discriminator_forward.5} parent=5 // pred_fallthru
      _
  $region6: #{discriminator_forward.5} parent=0 // loop_footer
    %s14 = sadd.s32 1, %s10
  $region7: #{discriminator_forward.5} parent=0 // loop_footer_branch
    %9 = sbr.rel target = $region3
  $region8: #{discriminator_forward.5} parent=0 // loop_exit
    _

// kernel: discriminator_forward.6
$region0: #{discriminator_forward.6}
  #allocation0 [shape = 'u32[]', space=smem, size = 0x4, offset = 0x4, fixed_abs, tag = 'smem constant byte address 0x4 - core index']
  #allocation1 [shape = 'u32[72,128]{1,0:T(1,128)}', space=vmem, size = 0x9000, scoped, tag = 'internal scratch']
  %s0 = inlined_call_operand.vmem [shape: bf16[2,20,512], index: 0, kind: input, shape index: {}]
  %s1 = inlined_call_operand.vmem [shape: bf16[2,512,128], index: 1, kind: input, shape index: {}]
  %s2 = inlined_call_operand.vmem [shape: f32[1,128], index: 2, kind: input, shape index: {}]
  %s3 = inlined_call_operand.vmem [shape: f32[1,128], index: 3, kind: input, shape index: {}]
  %s4 = inlined_call_operand.vmem [shape: bf16[2,16,128], index: 4, kind: output, shape index: {}]
  %s5 = sld [smem:[#allocation0]]
  $region49: #{discriminator_forward.6} parent=0
    _
  %s7 = ssub.s32 1, %s5
  %s8 = scalar_select 0, %s7, %s5
  loop: start=0, step=1, limit=4
  $region2: #{discriminator_forward.6} parent=0 // loop_pre_header
    _
  $region3: #{discriminator_forward.6} parent=0 // loop_header
    %s10 = sphi 0, %s14
    %p11 = scmp.ge.s32.totalorder %s10, 4
    %s17 = sphi 0, %s29
    %s18 = sphi 0, %s25
    %s19 = sphi 0, %s17
    %s20 = sphi 0, %s18
    %s21 = sphi 0, %s19
    %s22 = sphi 0, %s20
    %s32 = sphi 0, %s34
    %s35 = sphi 0, %s32
    %s36 = sphi 0, %s35
    %s52 = sphi 0, %s36
    %s56 = sphi 0, %s56
    %s58 = sphi 0, %s56
    %s59 = sphi 0, %s58
    %s73 = sphi 0, %s59
    %s77 = sphi 0, %s77
    %s79 = sphi 0, %s77
    %s80 = sphi 0, %s79
    %s94 = sphi 0, %s80
    %s98 = sphi 0, %s98
    %s100 = sphi 0, %s98
    %s101 = sphi 0, %s100
    %s115 = sphi 0, %s101
    %s123 = sphi 0, %s125
    %s126 = sphi 0, %s123
    %s127 = sphi 0, %s126
    %s143 = sphi 0, %s127
  $region4: #{discriminator_forward.6} parent=0 // loop_header_branch
    %13 = sbr.rel (%p11) target = $region8
  $region5: #{discriminator_forward.6} parent=0 // loop_body
    %s15 = ssub.s32 %s10, 1
    %s16 = ssub.s32 %s10, 2
    %s23 = sadd.s32 1, %s18
    %p24 = scmp.ge.s32.totalorder %s23, 1
    %s25 = scalar_select %p24, 0, %s23
    %s26 = sadd.s32 1, %s17
    %s27 = scalar_select %p24, %s26, %s17
    %p28 = scmp.ge.s32.totalorder %s27, 2
    %s29 = scalar_select %p28, 0, %s27
    %s30 = ssub.s32 %s17, %s29
    %p31 = scmp.eq.s32.totalorder %s30, 0
    %s33 = sadd.s32 %s32, 1
    %s34 = scalar_select %p31, %s32, %s33
    %p37 = pneg %p31
    %p38 = scmp.eq.s32.totalorder %s10, 1
    %p39 = por %p37, %p38
    %p40 = scmp.ne.s32.totalorder %s32, %s35
    %p41 = scmp.eq.s32.totalorder %s10, 0
    %p42 = por %p40, %p41
    %p43 = scmp.ne.s32.totalorder %s32, %s35
    %p44 = scmp.eq.s32.totalorder %s15, 1
    %p45 = por %p43, %p44
    %p46 = scmp.ne.s32.totalorder %s35, %s36
    %p47 = scmp.eq.s32.totalorder %s15, 0
    %p48 = por %p46, %p47
    %p49 = scmp.ne.s32.totalorder %s35, %s36
    %p50 = scmp.eq.s32.totalorder %s16, 1
    %p51 = por %p49, %p50
    %p53 = scmp.ne.s32.totalorder %s36, %s52
    %p54 = scmp.eq.s32.totalorder %s16, 0
    %p55 = por %p53, %p54
    %s57 = sadd.s32 %s56, 1
    %p60 = scmp.eq.s32.totalorder %s10, 1
    %p61 = scmp.ne.s32.totalorder %s56, %s58
    %p62 = scmp.eq.s32.totalorder %s10, 0
    %p63 = por %p61, %p62
    %p64 = scmp.ne.s32.totalorder %s56, %s58
    %p65 = scmp.eq.s32.totalorder %s15, 1
    %p66 = por %p64, %p65
    %p67 = scmp.ne.s32.totalorder %s58, %s59
    %p68 = scmp.eq.s32.totalorder %s15, 0
    %p69 = por %p67, %p68
    %p70 = scmp.ne.s32.totalorder %s58, %s59
    %p71 = scmp.eq.s32.totalorder %s16, 1
    %p72 = por %p70, %p71
    %p74 = scmp.ne.s32.totalorder %s59, %s73
    %p75 = scmp.eq.s32.totalorder %s16, 0
    %p76 = por %p74, %p75
    %s78 = sadd.s32 %s77, 1
    %p81 = scmp.eq.s32.totalorder %s10, 1
    %p82 = scmp.ne.s32.totalorder %s77, %s79
    %p83 = scmp.eq.s32.totalorder %s10, 0
    %p84 = por %p82, %p83
    %p85 = scmp.ne.s32.totalorder %s77, %s79
    %p86 = scmp.eq.s32.totalorder %s15, 1
    %p87 = por %p85, %p86
    %p88 = scmp.ne.s32.totalorder %s79, %s80
    %p89 = scmp.eq.s32.totalorder %s15, 0
    %p90 = por %p88, %p89
    %p91 = scmp.ne.s32.totalorder %s79, %s80
    %p92 = scmp.eq.s32.totalorder %s16, 1
    %p93 = por %p91, %p92
    %p95 = scmp.ne.s32.totalorder %s80, %s94
    %p96 = scmp.eq.s32.totalorder %s16, 0
    %p97 = por %p95, %p96
    %s99 = sadd.s32 %s98, 1
    %p102 = scmp.eq.s32.totalorder %s10, 1
    %p103 = scmp.ne.s32.totalorder %s98, %s100
    %p104 = scmp.eq.s32.totalorder %s10, 0
    %p105 = por %p103, %p104
    %p106 = scmp.ne.s32.totalorder %s98, %s100
    %p107 = scmp.eq.s32.totalorder %s15, 1
    %p108 = por %p106, %p107
    %p109 = scmp.ne.s32.totalorder %s100, %s101
    %p110 = scmp.eq.s32.totalorder %s15, 0
    %p111 = por %p109, %p110
    %p112 = scmp.ne.s32.totalorder %s100, %s101
    %p113 = scmp.eq.s32.totalorder %s16, 1
    %p114 = por %p112, %p113
    %p116 = scmp.ne.s32.totalorder %s101, %s115
    %p117 = scmp.eq.s32.totalorder %s16, 0
    %p118 = por %p116, %p117
    %s119 = ssub.s32 %s17, %s29
    %s120 = ssub.s32 %s18, %s25
    %s121 = sor.u32 %s119, %s120
    %p122 = scmp.eq.s32.totalorder %s121, 0
    %s124 = sadd.s32 %s123, 1
    %s125 = scalar_select %p122, %s123, %s124
    %p128 = pneg %p122
    %p129 = scmp.eq.s32.totalorder %s10, 1
    %p130 = por %p128, %p129
    %p131 = scmp.ne.s32.totalorder %s123, %s126
    %p132 = scmp.eq.s32.totalorder %s10, 0
    %p133 = por %p131, %p132
    %p134 = scmp.ne.s32.totalorder %s123, %s126
    %p135 = scmp.eq.s32.totalorder %s15, 1
    %p136 = por %p134, %p135
    %p137 = scmp.ne.s32.totalorder %s126, %s127
    %p138 = scmp.eq.s32.totalorder %s15, 0
    %p139 = por %p137, %p138
    %p140 = scmp.ne.s32.totalorder %s126, %s127
    %p141 = scmp.eq.s32.totalorder %s16, 1
    %p142 = por %p140, %p141
    %p144 = scmp.ne.s32.totalorder %s127, %s143
    %p145 = scmp.eq.s32.totalorder %s16, 0
    %p146 = por %p144, %p145
    %p147 = scmp.le.s32.totalorder 1, %s10
    %p148 = scmp.lt.s32.totalorder %s10, 3
    %p149 = pnand %p147, %p148
    %p150 = pneg %p149
    // Predicated region
    $region9: #{discriminator_forward.6} parent=5 // pred_check
      _
    $region10: #{discriminator_forward.6} parent=5 // pred_check_branch
      %152 = sbr.rel (%p149) target = $region12
    $region11: #{discriminator_forward.6} parent=5 // pred_region
      %s153 = ssub.s32 %s10, 1
      // Predicated region
      $region13: #{discriminator_forward.6} parent=11 // pred_check
        %p154 = pneg %p69
      $region14: #{discriminator_forward.6} parent=11 // pred_check_branch
        %156 = sbr.rel (%p154) target = $region16
      $region15: #{discriminator_forward.6} parent=11 // pred_region
        _
      $region16: #{discriminator_forward.6} parent=11 // pred_fallthru
        _
      // Predicated region
      $region17: #{discriminator_forward.6} parent=11 // pred_check
        %p157 = pneg %p90
      $region18: #{discriminator_forward.6} parent=11 // pred_check_branch
        %159 = sbr.rel (%p157) target = $region20
      $region19: #{discriminator_forward.6} parent=11 // pred_region
        _
      $region20: #{discriminator_forward.6} parent=11 // pred_fallthru
        _
      // Predicated region
      $region21: #{discriminator_forward.6} parent=11 // pred_check
        %p160 = pneg %p111
      $region22: #{discriminator_forward.6} parent=11 // pred_check_branch
        %162 = sbr.rel (%p160) target = $region24
      $region23: #{discriminator_forward.6} parent=11 // pred_region
        _
      $region24: #{discriminator_forward.6} parent=11 // pred_fallthru
        _
    $region12: #{discriminator_forward.6} parent=5 // pred_fallthru
      _
    %p163 = scmp.lt.s32.totalorder %s10, 2
    // Predicated region
    $region25: #{discriminator_forward.6} parent=5 // pred_check
      %p164 = pneg %p163
    $region26: #{discriminator_forward.6} parent=5 // pred_check_branch
      %166 = sbr.rel (%p164) target = $region28
    $region27: #{discriminator_forward.6} parent=5 // pred_region
      // Predicated region
      $region29: #{discriminator_forward.6} parent=27 // pred_check
        %p167 = pneg %p42
      $region30: #{discriminator_forward.6} parent=27 // pred_check_branch
        %169 = sbr.rel (%p167) target = $region32
      $region31: #{discriminator_forward.6} parent=27 // pred_region
        %p170 = scmp.lt.s32.totalorder %s17, 1
        %s171 = scalar_select %p170, %s17, 1
        %s172 = smul.addr %s171, 12
        %s173 = smul.addr %s172, 4
        %s174 = scalar_lea.vmem %s0, %s173
      $region32: #{discriminator_forward.6} parent=27 // pred_fallthru
        _
    $region28: #{discriminator_forward.6} parent=5 // pred_fallthru
      _
    %p175 = scmp.le.s32.totalorder 1, %s10
    %p176 = scmp.lt.s32.totalorder %s10, 3
    %p177 = pnand %p175, %p176
    %p178 = pneg %p177
    // Predicated region
    $region33: #{discriminator_forward.6} parent=5 // pred_check
      _
    $region34: #{discriminator_forward.6} parent=5 // pred_check_branch
      %180 = sbr.rel (%p177) target = $region36
    $region35: #{discriminator_forward.6} parent=5 // pred_region
      %s181 = ssub.s32 %s10, 1
      %p182 = scmp.lt.s32.totalorder %s19, 1
      %s183 = scalar_select %p182, %s19, 1
      %s184 = smul.addr %s183, 12
      %s185 = smul.addr %s184, 4
      %s186 = scalar_lea.vmem %s0, %s185
      %p187 = pneg %p48
      %p188 = pneg %p45
      %p189 = pneg %p69
      %p190 = pneg %p66
      %p191 = pneg %p90
      %p192 = pneg %p87
      %p193 = pneg %p111
      %p194 = pneg %p108
      %p195 = pneg %p139
      %p196 = pneg %p136
      %s197 = smul.u32 2, %s20
      %p198 = scmp.lt.s32.totalorder %s19, 1
      %s199 = scalar_select %p198, %s19, 1
      %p200 = scmp.lt.s32.totalorder %s197, 1
      %s201 = scalar_select %p200, %s197, 1
      %s202 = smul.addr %s199, 2
      %s203 = sadd.s32 %s201, %s202
      %s204 = smul.addr %s203, 4
      %s205 = scalar_lea.vmem %s4, %s204
      %p206 = scmp.lt.s32.totalorder %s19, 1
      %s207 = scalar_select %p206, %s19, 1
      %s208 = smul.addr %s207, 12
      %s209 = smul.addr %s208, 4
      %s210 = scalar_lea.vmem %s0, %s209
      %s211 = smul.u32 2, %s20
      %p212 = scmp.lt.s32.totalorder %s19, 1
      %s213 = scalar_select %p212, %s19, 1
      %p214 = scmp.lt.s32.totalorder %s211, 1
      %s215 = scalar_select %p214, %s211, 1
      %s216 = smul.addr %s213, 2
      %s217 = sadd.s32 %s215, %s216
      %s218 = smul.addr %s217, 4
      %s219 = scalar_lea.vmem %s4, %s218
      %s220 = smul.u32 2, %s20
      %v221 = vld [vmem:[%s210] sm:$0xff]
      %v222 = vld [vmem:[%s210 + $0x8] sm:$0xff]
      %v223 = vld [vmem:[%s210 + $0x10] sm:$0xff]
      %v224 = vld [vmem:[%s210 + $0x18] sm:$0xff]
      %v225 = vld [vmem:[%s210] sm:$0xcc]
      %v226 = vld [vmem:[%s210 + $0x8] sm:$0xcc]
      %v227 = vld [vmem:[%s210 + $0x20] sm:$0x33]
      %v228 = vld [vmem:[%s210 + $0x28] sm:$0x33]
      %v229 = vld [vmem:[%s1] sm:$0xf]
      %v230 = vld [vmem:[%s1 + $0x4] sm:$0xf]
      %v231 = vld [vmem:[%s1 + $0x8] sm:$0xf]
      %v232 = vld [vmem:[%s1 + $0xc] sm:$0xf]
      %v233 = vld [vmem:[%s1 + $0x10] sm:$0xf]
      %v234 = vld [vmem:[%s1 + $0x14] sm:$0xf]
      %v235 = vld [vmem:[%s1 + $0x18] sm:$0xf]
      %v236 = vld [vmem:[%s1 + $0x1c] sm:$0xf]
      %v237 = vld [vmem:[%s1 + $0x20] sm:$0xf]
      %v238 = vld [vmem:[%s1 + $0x24] sm:$0xf]
      %v239 = vld [vmem:[%s1 + $0x28] sm:$0xf]
      %v240 = vld [vmem:[%s1 + $0x2c] sm:$0xf]
      %v241 = vld [vmem:[%s1 + $0x30] sm:$0xf]
      %v242 = vld [vmem:[%s1 + $0x34] sm:$0xf]
      %v243 = vld [vmem:[%s1 + $0x38] sm:$0xf]
      %v244 = vld [vmem:[%s1 + $0x3c] sm:$0xf]
      %v245 = vld [vmem:[%s1 + $0x40] sm:$0xf]
      %v246 = vld [vmem:[%s1 + $0x44] sm:$0xf]
      %v247 = vld [vmem:[%s1 + $0x48] sm:$0xf]
      %v248 = vld [vmem:[%s1 + $0x4c] sm:$0xf]
      %v249 = vld [vmem:[%s1 + $0x50] sm:$0xf]
      %v250 = vld [vmem:[%s1 + $0x54] sm:$0xf]
      %v251 = vld [vmem:[%s1 + $0x58] sm:$0xf]
      %v252 = vld [vmem:[%s1 + $0x5c] sm:$0xf]
      %v253 = vld [vmem:[%s1 + $0x60] sm:$0xf]
      %v254 = vld [vmem:[%s1 + $0x64] sm:$0xf]
      %v255 = vld [vmem:[%s1 + $0x68] sm:$0xf]
      %v256 = vld [vmem:[%s1 + $0x6c] sm:$0xf]
      %v257 = vld [vmem:[%s1 + $0x70] sm:$0xf]
      %v258 = vld [vmem:[%s1 + $0x74] sm:$0xf]
      %v259 = vld [vmem:[%s1 + $0x78] sm:$0xf]
      %v260 = vld [vmem:[%s1 + $0x7c] sm:$0xf]
      %v261 = vld [vmem:[%s1 + $0x80] sm:$0xf]
      %v262 = vld [vmem:[%s1 + $0x84] sm:$0xf]
      %v263 = vld [vmem:[%s1 + $0x88] sm:$0xf]
      %v264 = vld [vmem:[%s1 + $0x8c] sm:$0xf]
      %v265 = vld [vmem:[%s1 + $0x90] sm:$0xf]
      %v266 = vld [vmem:[%s1 + $0x94] sm:$0xf]
      %v267 = vld [vmem:[%s1 + $0x98] sm:$0xf]
      %v268 = vld [vmem:[%s1 + $0x9c] sm:$0xf]
      %v269 = vld [vmem:[%s1 + $0xa0] sm:$0xf]
      %v270 = vld [vmem:[%s1 + $0xa4] sm:$0xf]
      %v271 = vld [vmem:[%s1 + $0xa8] sm:$0xf]
      %v272 = vld [vmem:[%s1 + $0xac] sm:$0xf]
      %v273 = vld [vmem:[%s1 + $0xb0] sm:$0xf]
      %v274 = vld [vmem:[%s1 + $0xb4] sm:$0xf]
      %v275 = vld [vmem:[%s1 + $0xb8] sm:$0xf]
      %v276 = vld [vmem:[%s1 + $0xbc] sm:$0xf]
      %v277 = vld [vmem:[%s1 + $0xc0] sm:$0xf]
      %v278 = vld [vmem:[%s1 + $0xc4] sm:$0xf]
      %v279 = vld [vmem:[%s1 + $0xc8] sm:$0xf]
      %v280 = vld [vmem:[%s1 + $0xcc] sm:$0xf]
      %v281 = vld [vmem:[%s1 + $0xd0] sm:$0xf]
      %v282 = vld [vmem:[%s1 + $0xd4] sm:$0xf]
      %v283 = vld [vmem:[%s1 + $0xd8] sm:$0xf]
      %v284 = vld [vmem:[%s1 + $0xdc] sm:$0xf]
      %v285 = vld [vmem:[%s1 + $0xe0] sm:$0xf]
      %v286 = vld [vmem:[%s1 + $0xe4] sm:$0xf]
      %v287 = vld [vmem:[%s1 + $0xe8] sm:$0xf]
      %v288 = vld [vmem:[%s1 + $0xec] sm:$0xf]
      %v289 = vld [vmem:[%s1 + $0xf0] sm:$0xf]
      %v290 = vld [vmem:[%s1 + $0xf4] sm:$0xf]
      %v291 = vld [vmem:[%s1 + $0xf8] sm:$0xf]
      %v292 = vld [vmem:[%s1 + $0xfc] sm:$0xf]
      %s293 = scalar_lea.vmem %s1, 256
      %v294 = vld [vmem:[%s293] sm:$0xf]
      %v295 = vld [vmem:[%s293 + $0x4] sm:$0xf]
      %v296 = vld [vmem:[%s293 + $0x8] sm:$0xf]
      %v297 = vld [vmem:[%s293 + $0xc] sm:$0xf]
      %v298 = vld [vmem:[%s293 + $0x10] sm:$0xf]
      %v299 = vld [vmem:[%s293 + $0x14] sm:$0xf]
      %v300 = vld [vmem:[%s293 + $0x18] sm:$0xf]
      %v301 = vld [vmem:[%s293 + $0x1c] sm:$0xf]
      %v302 = vld [vmem:[%s293 + $0x20] sm:$0xf]
      %v303 = vld [vmem:[%s293 + $0x24] sm:$0xf]
      %v304 = vld [vmem:[%s293 + $0x28] sm:$0xf]
      %v305 = vld [vmem:[%s293 + $0x2c] sm:$0xf]
      %v306 = vld [vmem:[%s293 + $0x30] sm:$0xf]
      %v307 = vld [vmem:[%s293 + $0x34] sm:$0xf]
      %v308 = vld [vmem:[%s293 + $0x38] sm:$0xf]
      %v309 = vld [vmem:[%s293 + $0x3c] sm:$0xf]
      %v310 = vld [vmem:[%s293 + $0x40] sm:$0xf]
      %v311 = vld [vmem:[%s293 + $0x44] sm:$0xf]
      %v312 = vld [vmem:[%s293 + $0x48] sm:$0xf]
      %v313 = vld [vmem:[%s293 + $0x4c] sm:$0xf]
      %v314 = vld [vmem:[%s293 + $0x50] sm:$0xf]
      %v315 = vld [vmem:[%s293 + $0x54] sm:$0xf]
      %v316 = vld [vmem:[%s293 + $0x58] sm:$0xf]
      %v317 = vld [vmem:[%s293 + $0x5c] sm:$0xf]
      %v318 = vld [vmem:[%s293 + $0x60] sm:$0xf]
      %v319 = vld [vmem:[%s293 + $0x64] sm:$0xf]
      %v320 = vld [vmem:[%s293 + $0x68] sm:$0xf]
      %v321 = vld [vmem:[%s293 + $0x6c] sm:$0xf]
      %v322 = vld [vmem:[%s293 + $0x70] sm:$0xf]
      %v323 = vld [vmem:[%s293 + $0x74] sm:$0xf]
      %v324 = vld [vmem:[%s293 + $0x78] sm:$0xf]
      %v325 = vld [vmem:[%s293 + $0x7c] sm:$0xf]
      %v326 = vld [vmem:[%s293 + $0x80] sm:$0xf]
      %v327 = vld [vmem:[%s293 + $0x84] sm:$0xf]
      %v328 = vld [vmem:[%s293 + $0x88] sm:$0xf]
      %v329 = vld [vmem:[%s293 + $0x8c] sm:$0xf]
      %v330 = vld [vmem:[%s293 + $0x90] sm:$0xf]
      %v331 = vld [vmem:[%s293 + $0x94] sm:$0xf]
      %v332 = vld [vmem:[%s293 + $0x98] sm:$0xf]
      %v333 = vld [vmem:[%s293 + $0x9c] sm:$0xf]
      %v334 = vld [vmem:[%s293 + $0xa0] sm:$0xf]
      %v335 = vld [vmem:[%s293 + $0xa4] sm:$0xf]
      %v336 = vld [vmem:[%s293 + $0xa8] sm:$0xf]
      %v337 = vld [vmem:[%s293 + $0xac] sm:$0xf]
      %v338 = vld [vmem:[%s293 + $0xb0] sm:$0xf]
      %v339 = vld [vmem:[%s293 + $0xb4] sm:$0xf]
      %v340 = vld [vmem:[%s293 + $0xb8] sm:$0xf]
      %v341 = vld [vmem:[%s293 + $0xbc] sm:$0xf]
      %v342 = vld [vmem:[%s293 + $0xc0] sm:$0xf]
      %v343 = vld [vmem:[%s293 + $0xc4] sm:$0xf]
      %v344 = vld [vmem:[%s293 + $0xc8] sm:$0xf]
      %v345 = vld [vmem:[%s293 + $0xcc] sm:$0xf]
      %v346 = vld [vmem:[%s293 + $0xd0] sm:$0xf]
      %v347 = vld [vmem:[%s293 + $0xd4] sm:$0xf]
      %v348 = vld [vmem:[%s293 + $0xd8] sm:$0xf]
      %v349 = vld [vmem:[%s293 + $0xdc] sm:$0xf]
      %v350 = vld [vmem:[%s293 + $0xe0] sm:$0xf]
      %v351 = vld [vmem:[%s293 + $0xe4] sm:$0xf]
      %v352 = vld [vmem:[%s293 + $0xe8] sm:$0xf]
      %v353 = vld [vmem:[%s293 + $0xec] sm:$0xf]
      %v354 = vld [vmem:[%s293 + $0xf0] sm:$0xf]
      %v355 = vld [vmem:[%s293 + $0xf4] sm:$0xf]
      %v356 = vld [vmem:[%s293 + $0xf8] sm:$0xf]
      %v357 = vld [vmem:[%s293 + $0xfc] sm:$0xf]
      %v364 = vunpack.c.l.b16 %v225
      %v365 = vunpack.c.h.b16 %v225
      %v366 = vunpack.c.l.b16 %v226
      %v367 = vunpack.c.h.b16 %v226
      %v368 = vunpack.c.l.b16 %v223
      %v369 = vunpack.c.h.b16 %v223
      %v370 = vunpack.c.l.b16 %v224
      %v371 = vunpack.c.h.b16 %v224
      %v372 = vunpack.c.l.b16 %v227
      %v373 = vunpack.c.h.b16 %v227
      %v374 = vunpack.c.l.b16 %v228
      %v375 = vunpack.c.h.b16 %v228
      %v376 = vpack.c.b16 %v368, %v364
      %v377 = vpack.c.b16 %v369, %v365
      %v378 = vpack.c.b16 %v370, %v366
      %v379 = vpack.c.b16 %v371, %v367
      %v380 = vpack.c.b16 %v372, %v372
      %v381 = vpack.c.b16 %v373, %v373
      %v382 = vpack.c.b16 %v374, %v374
      %v383 = vpack.c.b16 %v375, %v375
      %vm384 = vcmask 1045504
      %v385 = vrot.slane %v376, 2
      %v386 = vrot.slane %v380, 2
      %v387 = vsel %vm384, %v385, %v386
      %v388 = vrot.slane %v377, 2
      %v389 = vrot.slane %v381, 2
      %v390 = vsel %vm384, %v388, %v389
      %v391 = vrot.slane %v378, 2
      %v392 = vrot.slane %v382, 2
      %v393 = vsel %vm384, %v391, %v392
      %v394 = vrot.slane %v379, 2
      %v395 = vrot.slane %v383, 2
      %v396 = vsel %vm384, %v394, %v395
      %v465 = vunpack.c.l.b16 %v294
      %v466 = vunpack.c.l.b16 %v295
      %v467 = vunpack.c.l.b16 %v296
      %v468 = vunpack.c.l.b16 %v297
      %v469 = vunpack.c.l.b16 %v298
      %v470 = vunpack.c.l.b16 %v299
      %v471 = vunpack.c.l.b16 %v300
      %v472 = vunpack.c.l.b16 %v301
      %v473 = vunpack.c.l.b16 %v302
      %v474 = vunpack.c.l.b16 %v303
      %v475 = vunpack.c.l.b16 %v304
      %v476 = vunpack.c.l.b16 %v305
      %v477 = vunpack.c.l.b16 %v306
      %v478 = vunpack.c.l.b16 %v307
      %v479 = vunpack.c.l.b16 %v308
      %v480 = vunpack.c.l.b16 %v309
      %v481 = vunpack.c.l.b16 %v310
      %v482 = vunpack.c.l.b16 %v311
      %v483 = vunpack.c.l.b16 %v312
      %v484 = vunpack.c.l.b16 %v313
      %v485 = vunpack.c.l.b16 %v314
      %v486 = vunpack.c.l.b16 %v315
      %v487 = vunpack.c.l.b16 %v316
      %v488 = vunpack.c.l.b16 %v317
      %v489 = vunpack.c.l.b16 %v318
      %v490 = vunpack.c.l.b16 %v319
      %v491 = vunpack.c.l.b16 %v320
      %v492 = vunpack.c.l.b16 %v321
      %v493 = vunpack.c.l.b16 %v322
      %v494 = vunpack.c.l.b16 %v323
      %v495 = vunpack.c.l.b16 %v324
      %v496 = vunpack.c.l.b16 %v325
      %v497 = vunpack.c.l.b16 %v326
      %v498 = vunpack.c.l.b16 %v327
      %v499 = vunpack.c.l.b16 %v328
      %v500 = vunpack.c.l.b16 %v329
      %v501 = vunpack.c.l.b16 %v330
      %v502 = vunpack.c.l.b16 %v331
      %v503 = vunpack.c.l.b16 %v332
      %v504 = vunpack.c.l.b16 %v333
      %v505 = vunpack.c.l.b16 %v334
      %v506 = vunpack.c.l.b16 %v335
      %v507 = vunpack.c.l.b16 %v336
      %v508 = vunpack.c.l.b16 %v337
      %v509 = vunpack.c.l.b16 %v338
      %v510 = vunpack.c.l.b16 %v339
      %v511 = vunpack.c.l.b16 %v340
      %v512 = vunpack.c.l.b16 %v341
      %v513 = vunpack.c.l.b16 %v342
      %v514 = vunpack.c.l.b16 %v343
      %v515 = vunpack.c.l.b16 %v344
      %v516 = vunpack.c.l.b16 %v345
      %v517 = vunpack.c.l.b16 %v346
      %v518 = vunpack.c.l.b16 %v347
      %v519 = vunpack.c.l.b16 %v348
      %v520 = vunpack.c.l.b16 %v349
      %v521 = vunpack.c.l.b16 %v350
      %v522 = vunpack.c.l.b16 %v351
      %v523 = vunpack.c.l.b16 %v352
      %v524 = vunpack.c.l.b16 %v353
      %v525 = vunpack.c.l.b16 %v354
      %v526 = vunpack.c.l.b16 %v355
      %v527 = vunpack.c.l.b16 %v356
      %v528 = vunpack.c.l.b16 %v357
      %v529 = vpack.c.b16 %v466, %v465
      %v530 = vpack.c.b16 %v468, %v467
      %v531 = vpack.c.b16 %v470, %v469
      %v532 = vpack.c.b16 %v472, %v471
      %v533 = vpack.c.b16 %v474, %v473
      %v534 = vpack.c.b16 %v476, %v475
      %v535 = vpack.c.b16 %v478, %v477
      %v536 = vpack.c.b16 %v480, %v479
      %v537 = vpack.c.b16 %v482, %v481
      %v538 = vpack.c.b16 %v484, %v483
      %v539 = vpack.c.b16 %v486, %v485
      %v540 = vpack.c.b16 %v488, %v487
      %v541 = vpack.c.b16 %v490, %v489
      %v542 = vpack.c.b16 %v492, %v491
      %v543 = vpack.c.b16 %v494, %v493
      %v544 = vpack.c.b16 %v496, %v495
      %v545 = vpack.c.b16 %v498, %v497
      %v546 = vpack.c.b16 %v500, %v499
      %v547 = vpack.c.b16 %v502, %v501
      %v548 = vpack.c.b16 %v504, %v503
      %v549 = vpack.c.b16 %v506, %v505
      %v550 = vpack.c.b16 %v508, %v507
      %v551 = vpack.c.b16 %v510, %v509
      %v552 = vpack.c.b16 %v512, %v511
      %v553 = vpack.c.b16 %v514, %v513
      %v554 = vpack.c.b16 %v516, %v515
      %v555 = vpack.c.b16 %v518, %v517
      %v556 = vpack.c.b16 %v520, %v519
      %v557 = vpack.c.b16 %v522, %v521
      %v558 = vpack.c.b16 %v524, %v523
      %v559 = vpack.c.b16 %v526, %v525
      %v560 = vpack.c.b16 %v528, %v527
      %593 = vmatpush.bf16.msra.mxu0 %v536
      %594 = vmatpush.bf16.msra.mxu0 %v535
      %595 = vmatpush.bf16.msra.mxu0 %v534
      %596 = vmatpush.bf16.msra.mxu0 %v533
      %597 = vmatpush.bf16.msra.mxu0 %v532
      %598 = vmatpush.bf16.msra.mxu0 %v531
      %599 = vmatpush.bf16.msra.mxu0 %v530
      %600 = vmatpush.bf16.msra.mxu0 %v529
      %601 = vmatmul.bf16.gmra.mxu0 %v387
      %v602 = vpop.f32.mrf.mxu0
      %v603 = vadd.f32 0.0, %v602
      %v604 = vpop.f32.mrf.mxu0
      %v605 = vadd.f32 0.0, %v604
      %606 = vdwg.mxu0
      %607 = vmatpush.bf16.msra.mxu0 %v544
      %608 = vmatpush.bf16.msra.mxu0 %v543
      %609 = vmatpush.bf16.msra.mxu0 %v542
      %610 = vmatpush.bf16.msra.mxu0 %v541
      %611 = vmatpush.bf16.msra.mxu0 %v540
      %612 = vmatpush.bf16.msra.mxu0 %v539
      %613 = vmatpush.bf16.msra.mxu0 %v538
      %614 = vmatpush.bf16.msra.mxu0 %v537
      %615 = vmatmul.bf16.gmra.mxu0 %v390
      %v616 = vpop.f32.mrf.mxu0
      %v617 = vadd.f32 %v603, %v616
      %v618 = vpop.f32.mrf.mxu0
      %v619 = vadd.f32 %v605, %v618
      %620 = vdwg.mxu0
      %621 = vmatpush.bf16.msra.mxu0 %v552
      %622 = vmatpush.bf16.msra.mxu0 %v551
      %623 = vmatpush.bf16.msra.mxu0 %v550
      %624 = vmatpush.bf16.msra.mxu0 %v549
      %625 = vmatpush.bf16.msra.mxu0 %v548
      %626 = vmatpush.bf16.msra.mxu0 %v547
      %627 = vmatpush.bf16.msra.mxu0 %v546
      %628 = vmatpush.bf16.msra.mxu0 %v545
      %629 = vmatmul.bf16.gmra.mxu0 %v393
      %v630 = vpop.f32.mrf.mxu0
      %v631 = vadd.f32 %v617, %v630
      %v632 = vpop.f32.mrf.mxu0
      %v633 = vadd.f32 %v619, %v632
      %634 = vdwg.mxu0
      %635 = vmatpush.bf16.msra.mxu0 %v560
      %636 = vmatpush.bf16.msra.mxu0 %v559
      %637 = vmatpush.bf16.msra.mxu0 %v558
      %638 = vmatpush.bf16.msra.mxu0 %v557
      %639 = vmatpush.bf16.msra.mxu0 %v556
      %640 = vmatpush.bf16.msra.mxu0 %v555
      %641 = vmatpush.bf16.msra.mxu0 %v554
      %642 = vmatpush.bf16.msra.mxu0 %v553
      %643 = vmatmul.bf16.gmra.mxu0 %v396
      %v644 = vpop.f32.mrf.mxu0
      %v645 = vadd.f32 %v631, %v644
      %v646 = vpop.f32.mrf.mxu0
      %v647 = vadd.f32 %v633, %v646
      %648 = vdwg.mxu0
      %v651 = vunpack.c.l.b16 %v221
      %v652 = vunpack.c.h.b16 %v221
      %v653 = vunpack.c.l.b16 %v222
      %v654 = vunpack.c.h.b16 %v222
      %v655 = vpack.c.b16 %v368, %v651
      %v656 = vpack.c.b16 %v369, %v652
      %v657 = vpack.c.b16 %v370, %v653
      %v658 = vpack.c.b16 %v371, %v654
      %v727 = vunpack.c.l.b16 %v229
      %v728 = vunpack.c.l.b16 %v230
      %v729 = vunpack.c.l.b16 %v231
      %v730 = vunpack.c.l.b16 %v232
      %v731 = vunpack.c.l.b16 %v233
      %v732 = vunpack.c.l.b16 %v234
      %v733 = vunpack.c.l.b16 %v235
      %v734 = vunpack.c.l.b16 %v236
      %v735 = vunpack.c.l.b16 %v237
      %v736 = vunpack.c.l.b16 %v238
      %v737 = vunpack.c.l.b16 %v239
      %v738 = vunpack.c.l.b16 %v240
      %v739 = vunpack.c.l.b16 %v241
      %v740 = vunpack.c.l.b16 %v242
      %v741 = vunpack.c.l.b16 %v243
      %v742 = vunpack.c.l.b16 %v244
      %v743 = vunpack.c.l.b16 %v245
      %v744 = vunpack.c.l.b16 %v246
      %v745 = vunpack.c.l.b16 %v247
      %v746 = vunpack.c.l.b16 %v248
      %v747 = vunpack.c.l.b16 %v249
      %v748 = vunpack.c.l.b16 %v250
      %v749 = vunpack.c.l.b16 %v251
      %v750 = vunpack.c.l.b16 %v252
      %v751 = vunpack.c.l.b16 %v253
      %v752 = vunpack.c.l.b16 %v254
      %v753 = vunpack.c.l.b16 %v255
      %v754 = vunpack.c.l.b16 %v256
      %v755 = vunpack.c.l.b16 %v257
      %v756 = vunpack.c.l.b16 %v258
      %v757 = vunpack.c.l.b16 %v259
      %v758 = vunpack.c.l.b16 %v260
      %v759 = vunpack.c.l.b16 %v261
      %v760 = vunpack.c.l.b16 %v262
      %v761 = vunpack.c.l.b16 %v263
      %v762 = vunpack.c.l.b16 %v264
      %v763 = vunpack.c.l.b16 %v265
      %v764 = vunpack.c.l.b16 %v266
      %v765 = vunpack.c.l.b16 %v267
      %v766 = vunpack.c.l.b16 %v268
      %v767 = vunpack.c.l.b16 %v269
      %v768 = vunpack.c.l.b16 %v270
      %v769 = vunpack.c.l.b16 %v271
      %v770 = vunpack.c.l.b16 %v272
      %v771 = vunpack.c.l.b16 %v273
      %v772 = vunpack.c.l.b16 %v274
      %v773 = vunpack.c.l.b16 %v275
      %v774 = vunpack.c.l.b16 %v276
      %v775 = vunpack.c.l.b16 %v277
      %v776 = vunpack.c.l.b16 %v278
      %v777 = vunpack.c.l.b16 %v279
      %v778 = vunpack.c.l.b16 %v280
      %v779 = vunpack.c.l.b16 %v281
      %v780 = vunpack.c.l.b16 %v282
      %v781 = vunpack.c.l.b16 %v283
      %v782 = vunpack.c.l.b16 %v284
      %v783 = vunpack.c.l.b16 %v285
      %v784 = vunpack.c.l.b16 %v286
      %v785 = vunpack.c.l.b16 %v287
      %v786 = vunpack.c.l.b16 %v288
      %v787 = vunpack.c.l.b16 %v289
      %v788 = vunpack.c.l.b16 %v290
      %v789 = vunpack.c.l.b16 %v291
      %v790 = vunpack.c.l.b16 %v292
      %v791 = vpack.c.b16 %v728, %v727
      %v792 = vpack.c.b16 %v730, %v729
      %v793 = vpack.c.b16 %v732, %v731
      %v794 = vpack.c.b16 %v734, %v733
      %v795 = vpack.c.b16 %v736, %v735
      %v796 = vpack.c.b16 %v738, %v737
      %v797 = vpack.c.b16 %v740, %v739
      %v798 = vpack.c.b16 %v742, %v741
      %v799 = vpack.c.b16 %v744, %v743
      %v800 = vpack.c.b16 %v746, %v745
      %v801 = vpack.c.b16 %v748, %v747
      %v802 = vpack.c.b16 %v750, %v749
      %v803 = vpack.c.b16 %v752, %v751
      %v804 = vpack.c.b16 %v754, %v753
      %v805 = vpack.c.b16 %v756, %v755
      %v806 = vpack.c.b16 %v758, %v757
      %v807 = vpack.c.b16 %v760, %v759
      %v808 = vpack.c.b16 %v762, %v761
      %v809 = vpack.c.b16 %v764, %v763
      %v810 = vpack.c.b16 %v766, %v765
      %v811 = vpack.c.b16 %v768, %v767
      %v812 = vpack.c.b16 %v770, %v769
      %v813 = vpack.c.b16 %v772, %v771
      %v814 = vpack.c.b16 %v774, %v773
      %v815 = vpack.c.b16 %v776, %v775
      %v816 = vpack.c.b16 %v778, %v777
      %v817 = vpack.c.b16 %v780, %v779
      %v818 = vpack.c.b16 %v782, %v781
      %v819 = vpack.c.b16 %v784, %v783
      %v820 = vpack.c.b16 %v786, %v785
      %v821 = vpack.c.b16 %v788, %v787
      %v822 = vpack.c.b16 %v790, %v789
      %855 = vmatpush.bf16.msra.mxu0 %v798
      %856 = vmatpush.bf16.msra.mxu0 %v797
      %857 = vmatpush.bf16.msra.mxu0 %v796
      %858 = vmatpush.bf16.msra.mxu0 %v795
      %859 = vmatpush.bf16.msra.mxu0 %v794
      %860 = vmatpush.bf16.msra.mxu0 %v793
      %861 = vmatpush.bf16.msra.mxu0 %v792
      %862 = vmatpush.bf16.msra.mxu0 %v791
      %863 = vmatmul.bf16.gmra.mxu0 %v655
      %v864 = vpop.f32.mrf.mxu0
      %v865 = vadd.f32 %v645, %v864
      %v866 = vpop.f32.mrf.mxu0
      %v867 = vadd.f32 %v647, %v866
      %868 = vdwg.mxu0
      %869 = vmatpush.bf16.msra.mxu0 %v806
      %870 = vmatpush.bf16.msra.mxu0 %v805
      %871 = vmatpush.bf16.msra.mxu0 %v804
      %872 = vmatpush.bf16.msra.mxu0 %v803
      %873 = vmatpush.bf16.msra.mxu0 %v802
      %874 = vmatpush.bf16.msra.mxu0 %v801
      %875 = vmatpush.bf16.msra.mxu0 %v800
      %876 = vmatpush.bf16.msra.mxu0 %v799
      %877 = vmatmul.bf16.gmra.mxu0 %v656
      %v878 = vpop.f32.mrf.mxu0
      %v879 = vadd.f32 %v865, %v878
      %v880 = vpop.f32.mrf.mxu0
      %v881 = vadd.f32 %v867, %v880
      %882 = vdwg.mxu0
      %883 = vmatpush.bf16.msra.mxu0 %v814
      %884 = vmatpush.bf16.msra.mxu0 %v813
      %885 = vmatpush.bf16.msra.mxu0 %v812
      %886 = vmatpush.bf16.msra.mxu0 %v811
      %887 = vmatpush.bf16.msra.mxu0 %v810
      %888 = vmatpush.bf16.msra.mxu0 %v809
      %889 = vmatpush.bf16.msra.mxu0 %v808
      %890 = vmatpush.bf16.msra.mxu0 %v807
      %891 = vmatmul.bf16.gmra.mxu0 %v657
      %v892 = vpop.f32.mrf.mxu0
      %v893 = vadd.f32 %v879, %v892
      %v894 = vpop.f32.mrf.mxu0
      %v895 = vadd.f32 %v881, %v894
      %896 = vdwg.mxu0
      %897 = vmatpush.bf16.msra.mxu0 %v822
      %898 = vmatpush.bf16.msra.mxu0 %v821
      %899 = vmatpush.bf16.msra.mxu0 %v820
      %900 = vmatpush.bf16.msra.mxu0 %v819
      %901 = vmatpush.bf16.msra.mxu0 %v818
      %902 = vmatpush.bf16.msra.mxu0 %v817
      %903 = vmatpush.bf16.msra.mxu0 %v816
      %904 = vmatpush.bf16.msra.mxu0 %v815
      %905 = vmatmul.bf16.gmra.mxu0 %v658
      %v906 = vpop.f32.mrf.mxu0
      %v907 = vadd.f32 %v893, %v906
      %v908 = vpop.f32.mrf.mxu0
      %v909 = vadd.f32 %v895, %v908
      %910 = vdwg.mxu0
      %v911 = vld [vmem:[%s2] sm:$0x1]
      %v913 = vperm.slane %v911, 0
      %v915 = vmul.f32 %v907, %v913
      %v916 = vmul.f32 %v909, %v913
      %v917 = vld [vmem:[%s3] sm:$0x1]
      %v919 = vperm.slane %v917, 0
      %v921 = vadd.f32 %v915, %v919
      %v922 = vadd.f32 %v916, %v919
      %vm923 = vcmp.ge.f32.partialorder %v921, 0.0
      %vm924 = vcmp.ge.f32.partialorder %v922, 0.0
      %v925 = vmul.f32 %v921, 0.2
      %v926 = vmul.f32 %v922, 0.2
      %v927 = vsel %vm923, %v921, %v925
      %v928 = vsel %vm924, %v922, %v926
      %v929 = vpack.c.bf16 %v927, %v927
      %v930 = vpack.c.bf16 %v928, %v928
      %931 = vst [vmem:[%s219] sm:$0xf] %v929
      %932 = vst [vmem:[%s219 + $0x4] sm:$0xf] %v930
      %s933 = smul.u32 2, %s20
      %p934 = scmp.lt.s32.totalorder %s19, 1
      %s935 = scalar_select %p934, %s19, 1
      %p936 = scmp.lt.s32.totalorder %s933, 1
      %s937 = scalar_select %p936, %s933, 1
      %s938 = smul.addr %s935, 2
      %s939 = sadd.s32 %s937, %s938
      %s940 = smul.addr %s939, 4
      %s941 = scalar_lea.vmem %s4, %s940
      // Predicated region
      $region37: #{discriminator_forward.6} parent=35 // pred_check
        %p942 = pneg %p136
      $region38: #{discriminator_forward.6} parent=35 // pred_check_branch
        %944 = sbr.rel (%p942) target = $region40
      $region39: #{discriminator_forward.6} parent=35 // pred_region
        %s945 = smul.u32 2, %s20
      $region40: #{discriminator_forward.6} parent=35 // pred_fallthru
        _
    $region36: #{discriminator_forward.6} parent=5 // pred_fallthru
      _
    %p946 = scmp.le.s32.totalorder 2, %s10
    // Predicated region
    $region41: #{discriminator_forward.6} parent=5 // pred_check
      %p947 = pneg %p946
    $region42: #{discriminator_forward.6} parent=5 // pred_check_branch
      %949 = sbr.rel (%p947) target = $region44
    $region43: #{discriminator_forward.6} parent=5 // pred_region
      %s950 = ssub.s32 %s10, 2
      // Predicated region
      $region45: #{discriminator_forward.6} parent=43 // pred_check
        %p951 = pneg %p142
      $region46: #{discriminator_forward.6} parent=43 // pred_check_branch
        %953 = sbr.rel (%p951) target = $region48
      $region47: #{discriminator_forward.6} parent=43 // pred_region
        %s954 = smul.u32 2, %s22
        %p955 = scmp.lt.s32.totalorder %s21, 1
        %s956 = scalar_select %p955, %s21, 1
        %p957 = scmp.lt.s32.totalorder %s954, 1
        %s958 = scalar_select %p957, %s954, 1
        %s959 = smul.addr %s956, 2
        %s960 = sadd.s32 %s958, %s959
        %s961 = smul.addr %s960, 4
        %s962 = scalar_lea.vmem %s4, %s961
      $region48: #{discriminator_forward.6} parent=43 // pred_fallthru
        _
    $region44: #{discriminator_forward.6} parent=5 // pred_fallthru
      _
  $region6: #{discriminator_forward.6} parent=0 // loop_footer
    %s14 = sadd.s32 1, %s10
  $region7: #{discriminator_forward.6} parent=0 // loop_footer_branch
    %9 = sbr.rel target = $region3
  $region8: #{discriminator_forward.6} parent=0 // loop_exit
    _

// kernel: discriminator_forward.7
$region0: #{discriminator_forward.7}
  #allocation0 [shape = 'u32[]', space=smem, size = 0x4, offset = 0x4, fixed_abs, tag = 'smem constant byte address 0x4 - core index']
  #allocation1 [shape = 'u32[72,128]{1,0:T(1,128)}', space=vmem, size = 0x9000, scoped, tag = 'internal scratch']
  %s0 = inlined_call_operand.vmem [shape: bf16[2,10,1024], index: 0, kind: input, shape index: {}]
  %s1 = inlined_call_operand.vmem [shape: bf16[2,1024,256], index: 1, kind: input, shape index: {}]
  %s2 = inlined_call_operand.vmem [shape: f32[1,256], index: 2, kind: input, shape index: {}]
  %s3 = inlined_call_operand.vmem [shape: f32[1,256], index: 3, kind: input, shape index: {}]
  %s4 = inlined_call_operand.vmem [shape: bf16[2,8,256], index: 4, kind: output, shape index: {}]
  %s5 = sld [smem:[#allocation0]]
  $region49: #{discriminator_forward.7} parent=0
    _
  %s7 = ssub.s32 1, %s5
  %s8 = scalar_select 0, %s7, %s5
  loop: start=0, step=1, limit=4
  $region2: #{discriminator_forward.7} parent=0 // loop_pre_header
    _
  $region3: #{discriminator_forward.7} parent=0 // loop_header
    %s10 = sphi 0, %s14
    %p11 = scmp.ge.s32.totalorder %s10, 4
    %s17 = sphi 0, %s29
    %s18 = sphi 0, %s25
    %s19 = sphi 0, %s17
    %s20 = sphi 0, %s18
    %s21 = sphi 0, %s19
    %s22 = sphi 0, %s20
    %s32 = sphi 0, %s34
    %s35 = sphi 0, %s32
    %s36 = sphi 0, %s35
    %s52 = sphi 0, %s36
    %s56 = sphi 0, %s56
    %s58 = sphi 0, %s56
    %s59 = sphi 0, %s58
    %s73 = sphi 0, %s59
    %s77 = sphi 0, %s77
    %s79 = sphi 0, %s77
    %s80 = sphi 0, %s79
    %s94 = sphi 0, %s80
    %s98 = sphi 0, %s98
    %s100 = sphi 0, %s98
    %s101 = sphi 0, %s100
    %s115 = sphi 0, %s101
    %s123 = sphi 0, %s125
    %s126 = sphi 0, %s123
    %s127 = sphi 0, %s126
    %s143 = sphi 0, %s127
  $region4: #{discriminator_forward.7} parent=0 // loop_header_branch
    %13 = sbr.rel (%p11) target = $region8
  $region5: #{discriminator_forward.7} parent=0 // loop_body
    %s15 = ssub.s32 %s10, 1
    %s16 = ssub.s32 %s10, 2
    %s23 = sadd.s32 1, %s18
    %p24 = scmp.ge.s32.totalorder %s23, 1
    %s25 = scalar_select %p24, 0, %s23
    %s26 = sadd.s32 1, %s17
    %s27 = scalar_select %p24, %s26, %s17
    %p28 = scmp.ge.s32.totalorder %s27, 2
    %s29 = scalar_select %p28, 0, %s27
    %s30 = ssub.s32 %s17, %s29
    %p31 = scmp.eq.s32.totalorder %s30, 0
    %s33 = sadd.s32 %s32, 1
    %s34 = scalar_select %p31, %s32, %s33
    %p37 = pneg %p31
    %p38 = scmp.eq.s32.totalorder %s10, 1
    %p39 = por %p37, %p38
    %p40 = scmp.ne.s32.totalorder %s32, %s35
    %p41 = scmp.eq.s32.totalorder %s10, 0
    %p42 = por %p40, %p41
    %p43 = scmp.ne.s32.totalorder %s32, %s35
    %p44 = scmp.eq.s32.totalorder %s15, 1
    %p45 = por %p43, %p44
    %p46 = scmp.ne.s32.totalorder %s35, %s36
    %p47 = scmp.eq.s32.totalorder %s15, 0
    %p48 = por %p46, %p47
    %p49 = scmp.ne.s32.totalorder %s35, %s36
    %p50 = scmp.eq.s32.totalorder %s16, 1
    %p51 = por %p49, %p50
    %p53 = scmp.ne.s32.totalorder %s36, %s52
    %p54 = scmp.eq.s32.totalorder %s16, 0
    %p55 = por %p53, %p54
    %s57 = sadd.s32 %s56, 1
    %p60 = scmp.eq.s32.totalorder %s10, 1
    %p61 = scmp.ne.s32.totalorder %s56, %s58
    %p62 = scmp.eq.s32.totalorder %s10, 0
    %p63 = por %p61, %p62
    %p64 = scmp.ne.s32.totalorder %s56, %s58
    %p65 = scmp.eq.s32.totalorder %s15, 1
    %p66 = por %p64, %p65
    %p67 = scmp.ne.s32.totalorder %s58, %s59
    %p68 = scmp.eq.s32.totalorder %s15, 0
    %p69 = por %p67, %p68
    %p70 = scmp.ne.s32.totalorder %s58, %s59
    %p71 = scmp.eq.s32.totalorder %s16, 1
    %p72 = por %p70, %p71
    %p74 = scmp.ne.s32.totalorder %s59, %s73
    %p75 = scmp.eq.s32.totalorder %s16, 0
    %p76 = por %p74, %p75
    %s78 = sadd.s32 %s77, 1
    %p81 = scmp.eq.s32.totalorder %s10, 1
    %p82 = scmp.ne.s32.totalorder %s77, %s79
    %p83 = scmp.eq.s32.totalorder %s10, 0
    %p84 = por %p82, %p83
    %p85 = scmp.ne.s32.totalorder %s77, %s79
    %p86 = scmp.eq.s32.totalorder %s15, 1
    %p87 = por %p85, %p86
    %p88 = scmp.ne.s32.totalorder %s79, %s80
    %p89 = scmp.eq.s32.totalorder %s15, 0
    %p90 = por %p88, %p89
    %p91 = scmp.ne.s32.totalorder %s79, %s80
    %p92 = scmp.eq.s32.totalorder %s16, 1
    %p93 = por %p91, %p92
    %p95 = scmp.ne.s32.totalorder %s80, %s94
    %p96 = scmp.eq.s32.totalorder %s16, 0
    %p97 = por %p95, %p96
    %s99 = sadd.s32 %s98, 1
    %p102 = scmp.eq.s32.totalorder %s10, 1
    %p103 = scmp.ne.s32.totalorder %s98, %s100
    %p104 = scmp.eq.s32.totalorder %s10, 0
    %p105 = por %p103, %p104
    %p106 = scmp.ne.s32.totalorder %s98, %s100
    %p107 = scmp.eq.s32.totalorder %s15, 1
    %p108 = por %p106, %p107
    %p109 = scmp.ne.s32.totalorder %s100, %s101
    %p110 = scmp.eq.s32.totalorder %s15, 0
    %p111 = por %p109, %p110
    %p112 = scmp.ne.s32.totalorder %s100, %s101
    %p113 = scmp.eq.s32.totalorder %s16, 1
    %p114 = por %p112, %p113
    %p116 = scmp.ne.s32.totalorder %s101, %s115
    %p117 = scmp.eq.s32.totalorder %s16, 0
    %p118 = por %p116, %p117
    %s119 = ssub.s32 %s17, %s29
    %s120 = ssub.s32 %s18, %s25
    %s121 = sor.u32 %s119, %s120
    %p122 = scmp.eq.s32.totalorder %s121, 0
    %s124 = sadd.s32 %s123, 1
    %s125 = scalar_select %p122, %s123, %s124
    %p128 = pneg %p122
    %p129 = scmp.eq.s32.totalorder %s10, 1
    %p130 = por %p128, %p129
    %p131 = scmp.ne.s32.totalorder %s123, %s126
    %p132 = scmp.eq.s32.totalorder %s10, 0
    %p133 = por %p131, %p132
    %p134 = scmp.ne.s32.totalorder %s123, %s126
    %p135 = scmp.eq.s32.totalorder %s15, 1
    %p136 = por %p134, %p135
    %p137 = scmp.ne.s32.totalorder %s126, %s127
    %p138 = scmp.eq.s32.totalorder %s15, 0
    %p139 = por %p137, %p138
    %p140 = scmp.ne.s32.totalorder %s126, %s127
    %p141 = scmp.eq.s32.totalorder %s16, 1
    %p142 = por %p140, %p141
    %p144 = scmp.ne.s32.totalorder %s127, %s143
    %p145 = scmp.eq.s32.totalorder %s16, 0
    %p146 = por %p144, %p145
    %p147 = scmp.le.s32.totalorder 1, %s10
    %p148 = scmp.lt.s32.totalorder %s10, 3
    %p149 = pnand %p147, %p148
    %p150 = pneg %p149
    // Predicated region
    $region9: #{discriminator_forward.7} parent=5 // pred_check
      _
    $region10: #{discriminator_forward.7} parent=5 // pred_check_branch
      %152 = sbr.rel (%p149) target = $region12
    $region11: #{discriminator_forward.7} parent=5 // pred_region
      %s153 = ssub.s32 %s10, 1
      // Predicated region
      $region13: #{discriminator_forward.7} parent=11 // pred_check
        %p154 = pneg %p69
      $region14: #{discriminator_forward.7} parent=11 // pred_check_branch
        %156 = sbr.rel (%p154) target = $region16
      $region15: #{discriminator_forward.7} parent=11 // pred_region
        _
      $region16: #{discriminator_forward.7} parent=11 // pred_fallthru
        _
      // Predicated region
      $region17: #{discriminator_forward.7} parent=11 // pred_check
        %p157 = pneg %p90
      $region18: #{discriminator_forward.7} parent=11 // pred_check_branch
        %159 = sbr.rel (%p157) target = $region20
      $region19: #{discriminator_forward.7} parent=11 // pred_region
        _
      $region20: #{discriminator_forward.7} parent=11 // pred_fallthru
        _
      // Predicated region
      $region21: #{discriminator_forward.7} parent=11 // pred_check
        %p160 = pneg %p111
      $region22: #{discriminator_forward.7} parent=11 // pred_check_branch
        %162 = sbr.rel (%p160) target = $region24
      $region23: #{discriminator_forward.7} parent=11 // pred_region
        _
      $region24: #{discriminator_forward.7} parent=11 // pred_fallthru
        _
    $region12: #{discriminator_forward.7} parent=5 // pred_fallthru
      _
    %p163 = scmp.lt.s32.totalorder %s10, 2
    // Predicated region
    $region25: #{discriminator_forward.7} parent=5 // pred_check
      %p164 = pneg %p163
    $region26: #{discriminator_forward.7} parent=5 // pred_check_branch
      %166 = sbr.rel (%p164) target = $region28
    $region27: #{discriminator_forward.7} parent=5 // pred_region
      // Predicated region
      $region29: #{discriminator_forward.7} parent=27 // pred_check
        %p167 = pneg %p42
      $region30: #{discriminator_forward.7} parent=27 // pred_check_branch
        %169 = sbr.rel (%p167) target = $region32
      $region31: #{discriminator_forward.7} parent=27 // pred_region
        %p170 = scmp.lt.s32.totalorder %s17, 1
        %s171 = scalar_select %p170, %s17, 1
        %s172 = smul.addr %s171, 16
        %s173 = smul.addr %s172, 4
        %s174 = scalar_lea.vmem %s0, %s173
      $region32: #{discriminator_forward.7} parent=27 // pred_fallthru
        _
    $region28: #{discriminator_forward.7} parent=5 // pred_fallthru
      _
    %p175 = scmp.le.s32.totalorder 1, %s10
    %p176 = scmp.lt.s32.totalorder %s10, 3
    %p177 = pnand %p175, %p176
    %p178 = pneg %p177
    // Predicated region
    $region33: #{discriminator_forward.7} parent=5 // pred_check
      _
    $region34: #{discriminator_forward.7} parent=5 // pred_check_branch
      %180 = sbr.rel (%p177) target = $region36
    $region35: #{discriminator_forward.7} parent=5 // pred_region
      %s181 = ssub.s32 %s10, 1
      %p182 = scmp.lt.s32.totalorder %s19, 1
      %s183 = scalar_select %p182, %s19, 1
      %s184 = smul.addr %s183, 16
      %s185 = smul.addr %s184, 4
      %s186 = scalar_lea.vmem %s0, %s185
      %p187 = pneg %p48
      %p188 = pneg %p45
      %p189 = pneg %p69
      %p190 = pneg %p66
      %p191 = pneg %p90
      %p192 = pneg %p87
      %p193 = pneg %p111
      %p194 = pneg %p108
      %p195 = pneg %p139
      %p196 = pneg %p136
      %p197 = scmp.lt.s32.totalorder %s19, 1
      %s198 = scalar_select %p197, %s19, 1
      %p199 = scmp.lt.s32.totalorder %s20, 0
      %s200 = scalar_select %p199, %s20, 0
      %s201 = smul.addr %s200, 2
      %s202 = smul.addr %s198, 2
      %s203 = sadd.s32 %s201, %s202
      %s204 = smul.addr %s203, 4
      %s205 = scalar_lea.vmem %s4, %s204
      %p206 = scmp.lt.s32.totalorder %s19, 1
      %s207 = scalar_select %p206, %s19, 1
      %s208 = smul.addr %s207, 16
      %s209 = smul.addr %s208, 4
      %s210 = scalar_lea.vmem %s0, %s209
      %p211 = scmp.lt.s32.totalorder %s19, 1
      %s212 = scalar_select %p211, %s19, 1
      %p213 = scmp.lt.s32.totalorder %s20, 0
      %s214 = scalar_select %p213, %s20, 0
      %s215 = smul.addr %s214, 2
      %s216 = smul.addr %s212, 2
      %s217 = sadd.s32 %s215, %s216
      %s218 = smul.addr %s217, 4
      %s219 = scalar_lea.vmem %s4, %s218
      %v220 = vld [vmem:[%s210] sm:$0xff]
      %v221 = vld [vmem:[%s210 + $0x8] sm:$0xff]
      %v222 = vld [vmem:[%s210 + $0x10] sm:$0xff]
      %v223 = vld [vmem:[%s210 + $0x18] sm:$0xff]
      %v224 = vld [vmem:[%s210] sm:$0xee]
      %v225 = vld [vmem:[%s210 + $0x8] sm:$0xee]
      %v226 = vld [vmem:[%s210 + $0x10] sm:$0xee]
      %v227 = vld [vmem:[%s210 + $0x18] sm:$0xee]
      %v228 = vld [vmem:[%s210 + $0x20] sm:$0x11]
      %v229 = vld [vmem:[%s210 + $0x28] sm:$0x11]
      %v230 = vld [vmem:[%s210 + $0x30] sm:$0x11]
      %v231 = vld [vmem:[%s210 + $0x38] sm:$0x11]
      %v232 = vld [vmem:[%s1] sm:$0xff]
      %v233 = vld [vmem:[%s1 + $0x8] sm:$0xff]
      %v234 = vld [vmem:[%s1 + $0x10] sm:$0xff]
      %v235 = vld [vmem:[%s1 + $0x18] sm:$0xff]
      %v236 = vld [vmem:[%s1 + $0x20] sm:$0xff]
      %v237 = vld [vmem:[%s1 + $0x28] sm:$0xff]
      %v238 = vld [vmem:[%s1 + $0x30] sm:$0xff]
      %v239 = vld [vmem:[%s1 + $0x38] sm:$0xff]
      %v240 = vld [vmem:[%s1 + $0x40] sm:$0xff]
      %v241 = vld [vmem:[%s1 + $0x48] sm:$0xff]
      %v242 = vld [vmem:[%s1 + $0x50] sm:$0xff]
      %v243 = vld [vmem:[%s1 + $0x58] sm:$0xff]
      %v244 = vld [vmem:[%s1 + $0x60] sm:$0xff]
      %v245 = vld [vmem:[%s1 + $0x68] sm:$0xff]
      %v246 = vld [vmem:[%s1 + $0x70] sm:$0xff]
      %v247 = vld [vmem:[%s1 + $0x78] sm:$0xff]
      %v248 = vld [vmem:[%s1 + $0x80] sm:$0xff]
      %v249 = vld [vmem:[%s1 + $0x88] sm:$0xff]
      %v250 = vld [vmem:[%s1 + $0x90] sm:$0xff]
      %v251 = vld [vmem:[%s1 + $0x98] sm:$0xff]
      %v252 = vld [vmem:[%s1 + $0xa0] sm:$0xff]
      %v253 = vld [vmem:[%s1 + $0xa8] sm:$0xff]
      %v254 = vld [vmem:[%s1 + $0xb0] sm:$0xff]
      %v255 = vld [vmem:[%s1 + $0xb8] sm:$0xff]
      %v256 = vld [vmem:[%s1 + $0xc0] sm:$0xff]
      %v257 = vld [vmem:[%s1 + $0xc8] sm:$0xff]
      %v258 = vld [vmem:[%s1 + $0xd0] sm:$0xff]
      %v259 = vld [vmem:[%s1 + $0xd8] sm:$0xff]
      %v260 = vld [vmem:[%s1 + $0xe0] sm:$0xff]
      %v261 = vld [vmem:[%s1 + $0xe8] sm:$0xff]
      %v262 = vld [vmem:[%s1 + $0xf0] sm:$0xff]
      %v263 = vld [vmem:[%s1 + $0xf8] sm:$0xff]
      %v264 = vld [vmem:[%s1 + $0x100] sm:$0xff]
      %v265 = vld [vmem:[%s1 + $0x108] sm:$0xff]
      %v266 = vld [vmem:[%s1 + $0x110] sm:$0xff]
      %v267 = vld [vmem:[%s1 + $0x118] sm:$0xff]
      %v268 = vld [vmem:[%s1 + $0x120] sm:$0xff]
      %v269 = vld [vmem:[%s1 + $0x128] sm:$0xff]
      %v270 = vld [vmem:[%s1 + $0x130] sm:$0xff]
      %v271 = vld [vmem:[%s1 + $0x138] sm:$0xff]
      %v272 = vld [vmem:[%s1 + $0x140] sm:$0xff]
      %v273 = vld [vmem:[%s1 + $0x148] sm:$0xff]
      %v274 = vld [vmem:[%s1 + $0x150] sm:$0xff]
      %v275 = vld [vmem:[%s1 + $0x158] sm:$0xff]
      %v276 = vld [vmem:[%s1 + $0x160] sm:$0xff]
      %v277 = vld [vmem:[%s1 + $0x168] sm:$0xff]
      %v278 = vld [vmem:[%s1 + $0x170] sm:$0xff]
      %v279 = vld [vmem:[%s1 + $0x178] sm:$0xff]
      %v280 = vld [vmem:[%s1 + $0x180] sm:$0xff]
      %v281 = vld [vmem:[%s1 + $0x188] sm:$0xff]
      %v282 = vld [vmem:[%s1 + $0x190] sm:$0xff]
      %v283 = vld [vmem:[%s1 + $0x198] sm:$0xff]
      %v284 = vld [vmem:[%s1 + $0x1a0] sm:$0xff]
      %v285 = vld [vmem:[%s1 + $0x1a8] sm:$0xff]
      %v286 = vld [vmem:[%s1 + $0x1b0] sm:$0xff]
      %v287 = vld [vmem:[%s1 + $0x1b8] sm:$0xff]
      %v288 = vld [vmem:[%s1 + $0x1c0] sm:$0xff]
      %v289 = vld [vmem:[%s1 + $0x1c8] sm:$0xff]
      %v290 = vld [vmem:[%s1 + $0x1d0] sm:$0xff]
      %v291 = vld [vmem:[%s1 + $0x1d8] sm:$0xff]
      %v292 = vld [vmem:[%s1 + $0x1e0] sm:$0xff]
      %v293 = vld [vmem:[%s1 + $0x1e8] sm:$0xff]
      %v294 = vld [vmem:[%s1 + $0x1f0] sm:$0xff]
      %v295 = vld [vmem:[%s1 + $0x1f8] sm:$0xff]
      %v296 = vld [vmem:[%s1 + $0x200] sm:$0xff]
      %v297 = vld [vmem:[%s1 + $0x208] sm:$0xff]
      %v298 = vld [vmem:[%s1 + $0x210] sm:$0xff]
      %v299 = vld [vmem:[%s1 + $0x218] sm:$0xff]
      %v300 = vld [vmem:[%s1 + $0x220] sm:$0xff]
      %v301 = vld [vmem:[%s1 + $0x228] sm:$0xff]
      %v302 = vld [vmem:[%s1 + $0x230] sm:$0xff]
      %v303 = vld [vmem:[%s1 + $0x238] sm:$0xff]
      %v304 = vld [vmem:[%s1 + $0x240] sm:$0xff]
      %v305 = vld [vmem:[%s1 + $0x248] sm:$0xff]
      %v306 = vld [vmem:[%s1 + $0x250] sm:$0xff]
      %v307 = vld [vmem:[%s1 + $0x258] sm:$0xff]
      %v308 = vld [vmem:[%s1 + $0x260] sm:$0xff]
      %v309 = vld [vmem:[%s1 + $0x268] sm:$0xff]
      %v310 = vld [vmem:[%s1 + $0x270] sm:$0xff]
      %v311 = vld [vmem:[%s1 + $0x278] sm:$0xff]
      %v312 = vld [vmem:[%s1 + $0x280] sm:$0xff]
      %v313 = vld [vmem:[%s1 + $0x288] sm:$0xff]
      %v314 = vld [vmem:[%s1 + $0x290] sm:$0xff]
      %v315 = vld [vmem:[%s1 + $0x298] sm:$0xff]
      %v316 = vld [vmem:[%s1 + $0x2a0] sm:$0xff]
      %v317 = vld [vmem:[%s1 + $0x2a8] sm:$0xff]
      %v318 = vld [vmem:[%s1 + $0x2b0] sm:$0xff]
      %v319 = vld [vmem:[%s1 + $0x2b8] sm:$0xff]
      %v320 = vld [vmem:[%s1 + $0x2c0] sm:$0xff]
      %v321 = vld [vmem:[%s1 + $0x2c8] sm:$0xff]
      %v322 = vld [vmem:[%s1 + $0x2d0] sm:$0xff]
      %v323 = vld [vmem:[%s1 + $0x2d8] sm:$0xff]
      %v324 = vld [vmem:[%s1 + $0x2e0] sm:$0xff]
      %v325 = vld [vmem:[%s1 + $0x2e8] sm:$0xff]
      %v326 = vld [vmem:[%s1 + $0x2f0] sm:$0xff]
      %v327 = vld [vmem:[%s1 + $0x2f8] sm:$0xff]
      %v328 = vld [vmem:[%s1 + $0x300] sm:$0xff]
      %v329 = vld [vmem:[%s1 + $0x308] sm:$0xff]
      %v330 = vld [vmem:[%s1 + $0x310] sm:$0xff]
      %v331 = vld [vmem:[%s1 + $0x318] sm:$0xff]
      %v332 = vld [vmem:[%s1 + $0x320] sm:$0xff]
      %v333 = vld [vmem:[%s1 + $0x328] sm:$0xff]
      %v334 = vld [vmem:[%s1 + $0x330] sm:$0xff]
      %v335 = vld [vmem:[%s1 + $0x338] sm:$0xff]
      %v336 = vld [vmem:[%s1 + $0x340] sm:$0xff]
      %v337 = vld [vmem:[%s1 + $0x348] sm:$0xff]
      %v338 = vld [vmem:[%s1 + $0x350] sm:$0xff]
      %v339 = vld [vmem:[%s1 + $0x358] sm:$0xff]
      %v340 = vld [vmem:[%s1 + $0x360] sm:$0xff]
      %v341 = vld [vmem:[%s1 + $0x368] sm:$0xff]
      %v342 = vld [vmem:[%s1 + $0x370] sm:$0xff]
      %v343 = vld [vmem:[%s1 + $0x378] sm:$0xff]
      %v344 = vld [vmem:[%s1 + $0x380] sm:$0xff]
      %v345 = vld [vmem:[%s1 + $0x388] sm:$0xff]
      %v346 = vld [vmem:[%s1 + $0x390] sm:$0xff]
      %v347 = vld [vmem:[%s1 + $0x398] sm:$0xff]
      %v348 = vld [vmem:[%s1 + $0x3a0] sm:$0xff]
      %v349 = vld [vmem:[%s1 + $0x3a8] sm:$0xff]
      %v350 = vld [vmem:[%s1 + $0x3b0] sm:$0xff]
      %v351 = vld [vmem:[%s1 + $0x3b8] sm:$0xff]
      %v352 = vld [vmem:[%s1 + $0x3c0] sm:$0xff]
      %v353 = vld [vmem:[%s1 + $0x3c8] sm:$0xff]
      %v354 = vld [vmem:[%s1 + $0x3d0] sm:$0xff]
      %v355 = vld [vmem:[%s1 + $0x3d8] sm:$0xff]
      %v356 = vld [vmem:[%s1 + $0x3e0] sm:$0xff]
      %v357 = vld [vmem:[%s1 + $0x3e8] sm:$0xff]
      %v358 = vld [vmem:[%s1 + $0x3f0] sm:$0xff]
      %v359 = vld [vmem:[%s1 + $0x3f8] sm:$0xff]
      %s360 = scalar_lea.vmem %s1, 1024
      %v361 = vld [vmem:[%s360] sm:$0xff]
      %v362 = vld [vmem:[%s360 + $0x8] sm:$0xff]
      %v363 = vld [vmem:[%s360 + $0x10] sm:$0xff]
      %v364 = vld [vmem:[%s360 + $0x18] sm:$0xff]
      %v365 = vld [vmem:[%s360 + $0x20] sm:$0xff]
      %v366 = vld [vmem:[%s360 + $0x28] sm:$0xff]
      %v367 = vld [vmem:[%s360 + $0x30] sm:$0xff]
      %v368 = vld [vmem:[%s360 + $0x38] sm:$0xff]
      %v369 = vld [vmem:[%s360 + $0x40] sm:$0xff]
      %v370 = vld [vmem:[%s360 + $0x48] sm:$0xff]
      %v371 = vld [vmem:[%s360 + $0x50] sm:$0xff]
      %v372 = vld [vmem:[%s360 + $0x58] sm:$0xff]
      %v373 = vld [vmem:[%s360 + $0x60] sm:$0xff]
      %v374 = vld [vmem:[%s360 + $0x68] sm:$0xff]
      %v375 = vld [vmem:[%s360 + $0x70] sm:$0xff]
      %v376 = vld [vmem:[%s360 + $0x78] sm:$0xff]
      %v377 = vld [vmem:[%s360 + $0x80] sm:$0xff]
      %v378 = vld [vmem:[%s360 + $0x88] sm:$0xff]
      %v379 = vld [vmem:[%s360 + $0x90] sm:$0xff]
      %v380 = vld [vmem:[%s360 + $0x98] sm:$0xff]
      %v381 = vld [vmem:[%s360 + $0xa0] sm:$0xff]
      %v382 = vld [vmem:[%s360 + $0xa8] sm:$0xff]
      %v383 = vld [vmem:[%s360 + $0xb0] sm:$0xff]
      %v384 = vld [vmem:[%s360 + $0xb8] sm:$0xff]
      %v385 = vld [vmem:[%s360 + $0xc0] sm:$0xff]
      %v386 = vld [vmem:[%s360 + $0xc8] sm:$0xff]
      %v387 = vld [vmem:[%s360 + $0xd0] sm:$0xff]
      %v388 = vld [vmem:[%s360 + $0xd8] sm:$0xff]
      %v389 = vld [vmem:[%s360 + $0xe0] sm:$0xff]
      %v390 = vld [vmem:[%s360 + $0xe8] sm:$0xff]
      %v391 = vld [vmem:[%s360 + $0xf0] sm:$0xff]
      %v392 = vld [vmem:[%s360 + $0xf8] sm:$0xff]
      %v393 = vld [vmem:[%s360 + $0x100] sm:$0xff]
      %v394 = vld [vmem:[%s360 + $0x108] sm:$0xff]
      %v395 = vld [vmem:[%s360 + $0x110] sm:$0xff]
      %v396 = vld [vmem:[%s360 + $0x118] sm:$0xff]
      %v397 = vld [vmem:[%s360 + $0x120] sm:$0xff]
      %v398 = vld [vmem:[%s360 + $0x128] sm:$0xff]
      %v399 = vld [vmem:[%s360 + $0x130] sm:$0xff]
      %v400 = vld [vmem:[%s360 + $0x138] sm:$0xff]
      %v401 = vld [vmem:[%s360 + $0x140] sm:$0xff]
      %v402 = vld [vmem:[%s360 + $0x148] sm:$0xff]
      %v403 = vld [vmem:[%s360 + $0x150] sm:$0xff]
      %v404 = vld [vmem:[%s360 + $0x158] sm:$0xff]
      %v405 = vld [vmem:[%s360 + $0x160] sm:$0xff]
      %v406 = vld [vmem:[%s360 + $0x168] sm:$0xff]
      %v407 = vld [vmem:[%s360 + $0x170] sm:$0xff]
      %v408 = vld [vmem:[%s360 + $0x178] sm:$0xff]
      %v409 = vld [vmem:[%s360 + $0x180] sm:$0xff]
      %v410 = vld [vmem:[%s360 + $0x188] sm:$0xff]
      %v411 = vld [vmem:[%s360 + $0x190] sm:$0xff]
      %v412 = vld [vmem:[%s360 + $0x198] sm:$0xff]
      %v413 = vld [vmem:[%s360 + $0x1a0] sm:$0xff]
      %v414 = vld [vmem:[%s360 + $0x1a8] sm:$0xff]
      %v415 = vld [vmem:[%s360 + $0x1b0] sm:$0xff]
      %v416 = vld [vmem:[%s360 + $0x1b8] sm:$0xff]
      %v417 = vld [vmem:[%s360 + $0x1c0] sm:$0xff]
      %v418 = vld [vmem:[%s360 + $0x1c8] sm:$0xff]
      %v419 = vld [vmem:[%s360 + $0x1d0] sm:$0xff]
      %v420 = vld [vmem:[%s360 + $0x1d8] sm:$0xff]
      %v421 = vld [vmem:[%s360 + $0x1e0] sm:$0xff]
      %v422 = vld [vmem:[%s360 + $0x1e8] sm:$0xff]
      %v423 = vld [vmem:[%s360 + $0x1f0] sm:$0xff]
      %v424 = vld [vmem:[%s360 + $0x1f8] sm:$0xff]
      %v425 = vld [vmem:[%s360 + $0x200] sm:$0xff]
      %v426 = vld [vmem:[%s360 + $0x208] sm:$0xff]
      %v427 = vld [vmem:[%s360 + $0x210] sm:$0xff]
      %v428 = vld [vmem:[%s360 + $0x218] sm:$0xff]
      %v429 = vld [vmem:[%s360 + $0x220] sm:$0xff]
      %v430 = vld [vmem:[%s360 + $0x228] sm:$0xff]
      %v431 = vld [vmem:[%s360 + $0x230] sm:$0xff]
      %v432 = vld [vmem:[%s360 + $0x238] sm:$0xff]
      %v433 = vld [vmem:[%s360 + $0x240] sm:$0xff]
      %v434 = vld [vmem:[%s360 + $0x248] sm:$0xff]
      %v435 = vld [vmem:[%s360 + $0x250] sm:$0xff]
      %v436 = vld [vmem:[%s360 + $0x258] sm:$0xff]
      %v437 = vld [vmem:[%s360 + $0x260] sm:$0xff]
      %v438 = vld [vmem:[%s360 + $0x268] sm:$0xff]
      %v439 = vld [vmem:[%s360 + $0x270] sm:$0xff]
      %v440 = vld [vmem:[%s360 + $0x278] sm:$0xff]
      %v441 = vld [vmem:[%s360 + $0x280] sm:$0xff]
      %v442 = vld [vmem:[%s360 + $0x288] sm:$0xff]
      %v443 = vld [vmem:[%s360 + $0x290] sm:$0xff]
      %v444 = vld [vmem:[%s360 + $0x298] sm:$0xff]
      %v445 = vld [vmem:[%s360 + $0x2a0] sm:$0xff]
      %v446 = vld [vmem:[%s360 + $0x2a8] sm:$0xff]
      %v447 = vld [vmem:[%s360 + $0x2b0] sm:$0xff]
      %v448 = vld [vmem:[%s360 + $0x2b8] sm:$0xff]
      %v449 = vld [vmem:[%s360 + $0x2c0] sm:$0xff]
      %v450 = vld [vmem:[%s360 + $0x2c8] sm:$0xff]
      %v451 = vld [vmem:[%s360 + $0x2d0] sm:$0xff]
      %v452 = vld [vmem:[%s360 + $0x2d8] sm:$0xff]
      %v453 = vld [vmem:[%s360 + $0x2e0] sm:$0xff]
      %v454 = vld [vmem:[%s360 + $0x2e8] sm:$0xff]
      %v455 = vld [vmem:[%s360 + $0x2f0] sm:$0xff]
      %v456 = vld [vmem:[%s360 + $0x2f8] sm:$0xff]
      %v457 = vld [vmem:[%s360 + $0x300] sm:$0xff]
      %v458 = vld [vmem:[%s360 + $0x308] sm:$0xff]
      %v459 = vld [vmem:[%s360 + $0x310] sm:$0xff]
      %v460 = vld [vmem:[%s360 + $0x318] sm:$0xff]
      %v461 = vld [vmem:[%s360 + $0x320] sm:$0xff]
      %v462 = vld [vmem:[%s360 + $0x328] sm:$0xff]
      %v463 = vld [vmem:[%s360 + $0x330] sm:$0xff]
      %v464 = vld [vmem:[%s360 + $0x338] sm:$0xff]
      %v465 = vld [vmem:[%s360 + $0x340] sm:$0xff]
      %v466 = vld [vmem:[%s360 + $0x348] sm:$0xff]
      %v467 = vld [vmem:[%s360 + $0x350] sm:$0xff]
      %v468 = vld [vmem:[%s360 + $0x358] sm:$0xff]
      %v469 = vld [vmem:[%s360 + $0x360] sm:$0xff]
      %v470 = vld [vmem:[%s360 + $0x368] sm:$0xff]
      %v471 = vld [vmem:[%s360 + $0x370] sm:$0xff]
      %v472 = vld [vmem:[%s360 + $0x378] sm:$0xff]
      %v473 = vld [vmem:[%s360 + $0x380] sm:$0xff]
      %v474 = vld [vmem:[%s360 + $0x388] sm:$0xff]
      %v475 = vld [vmem:[%s360 + $0x390] sm:$0xff]
      %v476 = vld [vmem:[%s360 + $0x398] sm:$0xff]
      %v477 = vld [vmem:[%s360 + $0x3a0] sm:$0xff]
      %v478 = vld [vmem:[%s360 + $0x3a8] sm:$0xff]
      %v479 = vld [vmem:[%s360 + $0x3b0] sm:$0xff]
      %v480 = vld [vmem:[%s360 + $0x3b8] sm:$0xff]
      %v481 = vld [vmem:[%s360 + $0x3c0] sm:$0xff]
      %v482 = vld [vmem:[%s360 + $0x3c8] sm:$0xff]
      %v483 = vld [vmem:[%s360 + $0x3d0] sm:$0xff]
      %v484 = vld [vmem:[%s360 + $0x3d8] sm:$0xff]
      %v485 = vld [vmem:[%s360 + $0x3e0] sm:$0xff]
      %v486 = vld [vmem:[%s360 + $0x3e8] sm:$0xff]
      %v487 = vld [vmem:[%s360 + $0x3f0] sm:$0xff]
      %v488 = vld [vmem:[%s360 + $0x3f8] sm:$0xff]
      %v497 = vunpack.c.l.b16 %v224
      %v498 = vunpack.c.h.b16 %v224
      %v499 = vunpack.c.l.b16 %v225
      %v500 = vunpack.c.h.b16 %v225
      %v501 = vunpack.c.l.b16 %v226
      %v502 = vunpack.c.h.b16 %v226
      %v503 = vunpack.c.l.b16 %v227
      %v504 = vunpack.c.h.b16 %v227
      %v505 = vunpack.c.l.b16 %v228
      %v506 = vunpack.c.h.b16 %v228
      %v507 = vunpack.c.l.b16 %v229
      %v508 = vunpack.c.h.b16 %v229
      %v509 = vunpack.c.l.b16 %v230
      %v510 = vunpack.c.h.b16 %v230
      %v511 = vunpack.c.l.b16 %v231
      %v512 = vunpack.c.h.b16 %v231
      %v513 = vpack.c.b16 %v505, %v497
      %v514 = vpack.c.b16 %v506, %v498
      %v515 = vpack.c.b16 %v507, %v499
      %v516 = vpack.c.b16 %v508, %v500
      %v517 = vpack.c.b16 %v509, %v501
      %v518 = vpack.c.b16 %v510, %v502
      %v519 = vpack.c.b16 %v511, %v503
      %v520 = vpack.c.b16 %v512, %v504
      %v521 = vrot.slane %v513, 1
      %v522 = vrot.slane %v514, 1
      %v523 = vrot.slane %v515, 1
      %v524 = vrot.slane %v516, 1
      %v525 = vrot.slane %v517, 1
      %v526 = vrot.slane %v518, 1
      %v527 = vrot.slane %v519, 1
      %v528 = vrot.slane %v520, 1
      %v665 = vunpack.c.l.b16 %v361
      %v666 = vunpack.c.h.b16 %v361
      %v667 = vunpack.c.l.b16 %v362
      %v668 = vunpack.c.h.b16 %v362
      %v669 = vunpack.c.l.b16 %v363
      %v670 = vunpack.c.h.b16 %v363
      %v671 = vunpack.c.l.b16 %v364
      %v672 = vunpack.c.h.b16 %v364
      %v673 = vunpack.c.l.b16 %v365
      %v674 = vunpack.c.h.b16 %v365
      %v675 = vunpack.c.l.b16 %v366
      %v676 = vunpack.c.h.b16 %v366
      %v677 = vunpack.c.l.b16 %v367
      %v678 = vunpack.c.h.b16 %v367
      %v679 = vunpack.c.l.b16 %v368
      %v680 = vunpack.c.h.b16 %v368
      %v681 = vunpack.c.l.b16 %v369
      %v682 = vunpack.c.h.b16 %v369
      %v683 = vunpack.c.l.b16 %v370
      %v684 = vunpack.c.h.b16 %v370
      %v685 = vunpack.c.l.b16 %v371
      %v686 = vunpack.c.h.b16 %v371
      %v687 = vunpack.c.l.b16 %v372
      %v688 = vunpack.c.h.b16 %v372
      %v689 = vunpack.c.l.b16 %v373
      %v690 = vunpack.c.h.b16 %v373
      %v691 = vunpack.c.l.b16 %v374
      %v692 = vunpack.c.h.b16 %v374
      %v693 = vunpack.c.l.b16 %v375
      %v694 = vunpack.c.h.b16 %v375
      %v695 = vunpack.c.l.b16 %v376
      %v696 = vunpack.c.h.b16 %v376
      %v697 = vunpack.c.l.b16 %v377
      %v698 = vunpack.c.h.b16 %v377
      %v699 = vunpack.c.l.b16 %v378
      %v700 = vunpack.c.h.b16 %v378
      %v701 = vunpack.c.l.b16 %v379
      %v702 = vunpack.c.h.b16 %v379
      %v703 = vunpack.c.l.b16 %v380
      %v704 = vunpack.c.h.b16 %v380
      %v705 = vunpack.c.l.b16 %v381
      %v706 = vunpack.c.h.b16 %v381
      %v707 = vunpack.c.l.b16 %v382
      %v708 = vunpack.c.h.b16 %v382
      %v709 = vunpack.c.l.b16 %v383
      %v710 = vunpack.c.h.b16 %v383
      %v711 = vunpack.c.l.b16 %v384
      %v712 = vunpack.c.h.b16 %v384
      %v713 = vunpack.c.l.b16 %v385
      %v714 = vunpack.c.h.b16 %v385
      %v715 = vunpack.c.l.b16 %v386
      %v716 = vunpack.c.h.b16 %v386
      %v717 = vunpack.c.l.b16 %v387
      %v718 = vunpack.c.h.b16 %v387
      %v719 = vunpack.c.l.b16 %v388
      %v720 = vunpack.c.h.b16 %v388
      %v721 = vunpack.c.l.b16 %v389
      %v722 = vunpack.c.h.b16 %v389
      %v723 = vunpack.c.l.b16 %v390
      %v724 = vunpack.c.h.b16 %v390
      %v725 = vunpack.c.l.b16 %v391
      %v726 = vunpack.c.h.b16 %v391
      %v727 = vunpack.c.l.b16 %v392
      %v728 = vunpack.c.h.b16 %v392
      %v729 = vunpack.c.l.b16 %v393
      %v730 = vunpack.c.h.b16 %v393
      %v731 = vunpack.c.l.b16 %v394
      %v732 = vunpack.c.h.b16 %v394
      %v733 = vunpack.c.l.b16 %v395
      %v734 = vunpack.c.h.b16 %v395
      %v735 = vunpack.c.l.b16 %v396
      %v736 = vunpack.c.h.b16 %v396
      %v737 = vunpack.c.l.b16 %v397
      %v738 = vunpack.c.h.b16 %v397
      %v739 = vunpack.c.l.b16 %v398
      %v740 = vunpack.c.h.b16 %v398
      %v741 = vunpack.c.l.b16 %v399
      %v742 = vunpack.c.h.b16 %v399
      %v743 = vunpack.c.l.b16 %v400
      %v744 = vunpack.c.h.b16 %v400
      %v745 = vunpack.c.l.b16 %v401
      %v746 = vunpack.c.h.b16 %v401
      %v747 = vunpack.c.l.b16 %v402
      %v748 = vunpack.c.h.b16 %v402
      %v749 = vunpack.c.l.b16 %v403
      %v750 = vunpack.c.h.b16 %v403
      %v751 = vunpack.c.l.b16 %v404
      %v752 = vunpack.c.h.b16 %v404
      %v753 = vunpack.c.l.b16 %v405
      %v754 = vunpack.c.h.b16 %v405
      %v755 = vunpack.c.l.b16 %v406
      %v756 = vunpack.c.h.b16 %v406
      %v757 = vunpack.c.l.b16 %v407
      %v758 = vunpack.c.h.b16 %v407
      %v759 = vunpack.c.l.b16 %v408
      %v760 = vunpack.c.h.b16 %v408
      %v761 = vunpack.c.l.b16 %v409
      %v762 = vunpack.c.h.b16 %v409
      %v763 = vunpack.c.l.b16 %v410
      %v764 = vunpack.c.h.b16 %v410
      %v765 = vunpack.c.l.b16 %v411
      %v766 = vunpack.c.h.b16 %v411
      %v767 = vunpack.c.l.b16 %v412
      %v768 = vunpack.c.h.b16 %v412
      %v769 = vunpack.c.l.b16 %v413
      %v770 = vunpack.c.h.b16 %v413
      %v771 = vunpack.c.l.b16 %v414
      %v772 = vunpack.c.h.b16 %v414
      %v773 = vunpack.c.l.b16 %v415
      %v774 = vunpack.c.h.b16 %v415
      %v775 = vunpack.c.l.b16 %v416
      %v776 = vunpack.c.h.b16 %v416
      %v777 = vunpack.c.l.b16 %v417
      %v778 = vunpack.c.h.b16 %v417
      %v779 = vunpack.c.l.b16 %v418
      %v780 = vunpack.c.h.b16 %v418
      %v781 = vunpack.c.l.b16 %v419
      %v782 = vunpack.c.h.b16 %v419
      %v783 = vunpack.c.l.b16 %v420
      %v784 = vunpack.c.h.b16 %v420
      %v785 = vunpack.c.l.b16 %v421
      %v786 = vunpack.c.h.b16 %v421
      %v787 = vunpack.c.l.b16 %v422
      %v788 = vunpack.c.h.b16 %v422
      %v789 = vunpack.c.l.b16 %v423
      %v790 = vunpack.c.h.b16 %v423
      %v791 = vunpack.c.l.b16 %v424
      %v792 = vunpack.c.h.b16 %v424
      %v793 = vunpack.c.l.b16 %v425
      %v794 = vunpack.c.h.b16 %v425
      %v795 = vunpack.c.l.b16 %v426
      %v796 = vunpack.c.h.b16 %v426
      %v797 = vunpack.c.l.b16 %v427
      %v798 = vunpack.c.h.b16 %v427
      %v799 = vunpack.c.l.b16 %v428
      %v800 = vunpack.c.h.b16 %v428
      %v801 = vunpack.c.l.b16 %v429
      %v802 = vunpack.c.h.b16 %v429
      %v803 = vunpack.c.l.b16 %v430
      %v804 = vunpack.c.h.b16 %v430
      %v805 = vunpack.c.l.b16 %v431
      %v806 = vunpack.c.h.b16 %v431
      %v807 = vunpack.c.l.b16 %v432
      %v808 = vunpack.c.h.b16 %v432
      %v809 = vunpack.c.l.b16 %v433
      %v810 = vunpack.c.h.b16 %v433
      %v811 = vunpack.c.l.b16 %v434
      %v812 = vunpack.c.h.b16 %v434
      %v813 = vunpack.c.l.b16 %v435
      %v814 = vunpack.c.h.b16 %v435
      %v815 = vunpack.c.l.b16 %v436
      %v816 = vunpack.c.h.b16 %v436
      %v817 = vunpack.c.l.b16 %v437
      %v818 = vunpack.c.h.b16 %v437
      %v819 = vunpack.c.l.b16 %v438
      %v820 = vunpack.c.h.b16 %v438
      %v821 = vunpack.c.l.b16 %v439
      %v822 = vunpack.c.h.b16 %v439
      %v823 = vunpack.c.l.b16 %v440
      %v824 = vunpack.c.h.b16 %v440
      %v825 = vunpack.c.l.b16 %v441
      %v826 = vunpack.c.h.b16 %v441
      %v827 = vunpack.c.l.b16 %v442
      %v828 = vunpack.c.h.b16 %v442
      %v829 = vunpack.c.l.b16 %v443
      %v830 = vunpack.c.h.b16 %v443
      %v831 = vunpack.c.l.b16 %v444
      %v832 = vunpack.c.h.b16 %v444
      %v833 = vunpack.c.l.b16 %v445
      %v834 = vunpack.c.h.b16 %v445
      %v835 = vunpack.c.l.b16 %v446
      %v836 = vunpack.c.h.b16 %v446
      %v837 = vunpack.c.l.b16 %v447
      %v838 = vunpack.c.h.b16 %v447
      %v839 = vunpack.c.l.b16 %v448
      %v840 = vunpack.c.h.b16 %v448
      %v841 = vunpack.c.l.b16 %v449
      %v842 = vunpack.c.h.b16 %v449
      %v843 = vunpack.c.l.b16 %v450
      %v844 = vunpack.c.h.b16 %v450
      %v845 = vunpack.c.l.b16 %v451
      %v846 = vunpack.c.h.b16 %v451
      %v847 = vunpack.c.l.b16 %v452
      %v848 = vunpack.c.h.b16 %v452
      %v849 = vunpack.c.l.b16 %v453
      %v850 = vunpack.c.h.b16 %v453
      %v851 = vunpack.c.l.b16 %v454
      %v852 = vunpack.c.h.b16 %v454
      %v853 = vunpack.c.l.b16 %v455
      %v854 = vunpack.c.h.b16 %v455
      %v855 = vunpack.c.l.b16 %v456
      %v856 = vunpack.c.h.b16 %v456
      %v857 = vunpack.c.l.b16 %v457
      %v858 = vunpack.c.h.b16 %v457
      %v859 = vunpack.c.l.b16 %v458
      %v860 = vunpack.c.h.b16 %v458
      %v861 = vunpack.c.l.b16 %v459
      %v862 = vunpack.c.h.b16 %v459
      %v863 = vunpack.c.l.b16 %v460
      %v864 = vunpack.c.h.b16 %v460
      %v865 = vunpack.c.l.b16 %v461
      %v866 = vunpack.c.h.b16 %v461
      %v867 = vunpack.c.l.b16 %v462
      %v868 = vunpack.c.h.b16 %v462
      %v869 = vunpack.c.l.b16 %v463
      %v870 = vunpack.c.h.b16 %v463
      %v871 = vunpack.c.l.b16 %v464
      %v872 = vunpack.c.h.b16 %v464
      %v873 = vunpack.c.l.b16 %v465
      %v874 = vunpack.c.h.b16 %v465
      %v875 = vunpack.c.l.b16 %v466
      %v876 = vunpack.c.h.b16 %v466
      %v877 = vunpack.c.l.b16 %v467
      %v878 = vunpack.c.h.b16 %v467
      %v879 = vunpack.c.l.b16 %v468
      %v880 = vunpack.c.h.b16 %v468
      %v881 = vunpack.c.l.b16 %v469
      %v882 = vunpack.c.h.b16 %v469
      %v883 = vunpack.c.l.b16 %v470
      %v884 = vunpack.c.h.b16 %v470
      %v885 = vunpack.c.l.b16 %v471
      %v886 = vunpack.c.h.b16 %v471
      %v887 = vunpack.c.l.b16 %v472
      %v888 = vunpack.c.h.b16 %v472
      %v889 = vunpack.c.l.b16 %v473
      %v890 = vunpack.c.h.b16 %v473
      %v891 = vunpack.c.l.b16 %v474
      %v892 = vunpack.c.h.b16 %v474
      %v893 = vunpack.c.l.b16 %v475
      %v894 = vunpack.c.h.b16 %v475
      %v895 = vunpack.c.l.b16 %v476
      %v896 = vunpack.c.h.b16 %v476
      %v897 = vunpack.c.l.b16 %v477
      %v898 = vunpack.c.h.b16 %v477
      %v899 = vunpack.c.l.b16 %v478
      %v900 = vunpack.c.h.b16 %v478
      %v901 = vunpack.c.l.b16 %v479
      %v902 = vunpack.c.h.b16 %v479
      %v903 = vunpack.c.l.b16 %v480
      %v904 = vunpack.c.h.b16 %v480
      %v905 = vunpack.c.l.b16 %v481
      %v906 = vunpack.c.h.b16 %v481
      %v907 = vunpack.c.l.b16 %v482
      %v908 = vunpack.c.h.b16 %v482
      %v909 = vunpack.c.l.b16 %v483
      %v910 = vunpack.c.h.b16 %v483
      %v911 = vunpack.c.l.b16 %v484
      %v912 = vunpack.c.h.b16 %v484
      %v913 = vunpack.c.l.b16 %v485
      %v914 = vunpack.c.h.b16 %v485
      %v915 = vunpack.c.l.b16 %v486
      %v916 = vunpack.c.h.b16 %v486
      %v917 = vunpack.c.l.b16 %v487
      %v918 = vunpack.c.h.b16 %v487
      %v919 = vunpack.c.l.b16 %v488
      %v920 = vunpack.c.h.b16 %v488
      %v921 = vpack.c.b16 %v667, %v665
      %v922 = vpack.c.b16 %v668, %v666
      %v923 = vpack.c.b16 %v671, %v669
      %v924 = vpack.c.b16 %v672, %v670
      %v925 = vpack.c.b16 %v675, %v673
      %v926 = vpack.c.b16 %v676, %v674
      %v927 = vpack.c.b16 %v679, %v677
      %v928 = vpack.c.b16 %v680, %v678
      %v929 = vpack.c.b16 %v683, %v681
      %v930 = vpack.c.b16 %v684, %v682
      %v931 = vpack.c.b16 %v687, %v685
      %v932 = vpack.c.b16 %v688, %v686
      %v933 = vpack.c.b16 %v691, %v689
      %v934 = vpack.c.b16 %v692, %v690
      %v935 = vpack.c.b16 %v695, %v693
      %v936 = vpack.c.b16 %v696, %v694
      %v937 = vpack.c.b16 %v699, %v697
      %v938 = vpack.c.b16 %v700, %v698
      %v939 = vpack.c.b16 %v703, %v701
      %v940 = vpack.c.b16 %v704, %v702
      %v941 = vpack.c.b16 %v707, %v705
      %v942 = vpack.c.b16 %v708, %v706
      %v943 = vpack.c.b16 %v711, %v709
      %v944 = vpack.c.b16 %v712, %v710
      %v945 = vpack.c.b16 %v715, %v713
      %v946 = vpack.c.b16 %v716, %v714
      %v947 = vpack.c.b16 %v719, %v717
      %v948 = vpack.c.b16 %v720, %v718
      %v949 = vpack.c.b16 %v723, %v721
      %v950 = vpack.c.b16 %v724, %v722
      %v951 = vpack.c.b16 %v727, %v725
      %v952 = vpack.c.b16 %v728, %v726
      %v953 = vpack.c.b16 %v731, %v729
      %v954 = vpack.c.b16 %v732, %v730
      %v955 = vpack.c.b16 %v735, %v733
      %v956 = vpack.c.b16 %v736, %v734
      %v957 = vpack.c.b16 %v739, %v737
      %v958 = vpack.c.b16 %v740, %v738
      %v959 = vpack.c.b16 %v743, %v741
      %v960 = vpack.c.b16 %v744, %v742
      %v961 = vpack.c.b16 %v747, %v745
      %v962 = vpack.c.b16 %v748, %v746
      %v963 = vpack.c.b16 %v751, %v749
      %v964 = vpack.c.b16 %v752, %v750
      %v965 = vpack.c.b16 %v755, %v753
      %v966 = vpack.c.b16 %v756, %v754
      %v967 = vpack.c.b16 %v759, %v757
      %v968 = vpack.c.b16 %v760, %v758
      %v969 = vpack.c.b16 %v763, %v761
      %v970 = vpack.c.b16 %v764, %v762
      %v971 = vpack.c.b16 %v767, %v765
      %v972 = vpack.c.b16 %v768, %v766
      %v973 = vpack.c.b16 %v771, %v769
      %v974 = vpack.c.b16 %v772, %v770
      %v975 = vpack.c.b16 %v775, %v773
      %v976 = vpack.c.b16 %v776, %v774
      %v977 = vpack.c.b16 %v779, %v777
      %v978 = vpack.c.b16 %v780, %v778
      %v979 = vpack.c.b16 %v783, %v781
      %v980 = vpack.c.b16 %v784, %v782
      %v981 = vpack.c.b16 %v787, %v785
      %v982 = vpack.c.b16 %v788, %v786
      %v983 = vpack.c.b16 %v791, %v789
      %v984 = vpack.c.b16 %v792, %v790
      %v985 = vpack.c.b16 %v795, %v793
      %v986 = vpack.c.b16 %v796, %v794
      %v987 = vpack.c.b16 %v799, %v797
      %v988 = vpack.c.b16 %v800, %v798
      %v989 = vpack.c.b16 %v803, %v801
      %v990 = vpack.c.b16 %v804, %v802
      %v991 = vpack.c.b16 %v807, %v805
      %v992 = vpack.c.b16 %v808, %v806
      %v993 = vpack.c.b16 %v811, %v809
      %v994 = vpack.c.b16 %v812, %v810
      %v995 = vpack.c.b16 %v815, %v813
      %v996 = vpack.c.b16 %v816, %v814
      %v997 = vpack.c.b16 %v819, %v817
      %v998 = vpack.c.b16 %v820, %v818
      %v999 = vpack.c.b16 %v823, %v821
      %v1000 = vpack.c.b16 %v824, %v822
      %v1001 = vpack.c.b16 %v827, %v825
      %v1002 = vpack.c.b16 %v828, %v826
      %v1003 = vpack.c.b16 %v831, %v829
      %v1004 = vpack.c.b16 %v832, %v830
      %v1005 = vpack.c.b16 %v835, %v833
      %v1006 = vpack.c.b16 %v836, %v834
      %v1007 = vpack.c.b16 %v839, %v837
      %v1008 = vpack.c.b16 %v840, %v838
      %v1009 = vpack.c.b16 %v843, %v841
      %v1010 = vpack.c.b16 %v844, %v842
      %v1011 = vpack.c.b16 %v847, %v845
      %v1012 = vpack.c.b16 %v848, %v846
      %v1013 = vpack.c.b16 %v851, %v849
      %v1014 = vpack.c.b16 %v852, %v850
      %v1015 = vpack.c.b16 %v855, %v853
      %v1016 = vpack.c.b16 %v856, %v854
      %v1017 = vpack.c.b16 %v859, %v857
      %v1018 = vpack.c.b16 %v860, %v858
      %v1019 = vpack.c.b16 %v863, %v861
      %v1020 = vpack.c.b16 %v864, %v862
      %v1021 = vpack.c.b16 %v867, %v865
      %v1022 = vpack.c.b16 %v868, %v866
      %v1023 = vpack.c.b16 %v871, %v869
      %v1024 = vpack.c.b16 %v872, %v870
      %v1025 = vpack.c.b16 %v875, %v873
      %v1026 = vpack.c.b16 %v876, %v874
      %v1027 = vpack.c.b16 %v879, %v877
      %v1028 = vpack.c.b16 %v880, %v878
      %v1029 = vpack.c.b16 %v883, %v881
      %v1030 = vpack.c.b16 %v884, %v882
      %v1031 = vpack.c.b16 %v887, %v885
      %v1032 = vpack.c.b16 %v888, %v886
      %v1033 = vpack.c.b16 %v891, %v889
      %v1034 = vpack.c.b16 %v892, %v890
      %v1035 = vpack.c.b16 %v895, %v893
      %v1036 = vpack.c.b16 %v896, %v894
      %v1037 = vpack.c.b16 %v899, %v897
      %v1038 = vpack.c.b16 %v900, %v898
      %v1039 = vpack.c.b16 %v903, %v901
      %v1040 = vpack.c.b16 %v904, %v902
      %v1041 = vpack.c.b16 %v907, %v905
      %v1042 = vpack.c.b16 %v908, %v906
      %v1043 = vpack.c.b16 %v911, %v909
      %v1044 = vpack.c.b16 %v912, %v910
      %v1045 = vpack.c.b16 %v915, %v913
      %v1046 = vpack.c.b16 %v916, %v914
      %v1047 = vpack.c.b16 %v919, %v917
      %v1048 = vpack.c.b16 %v920, %v918
      %1177 = vmatpush.bf16.msra.mxu0 %v935
      %1178 = vmatpush.bf16.msra.mxu0 %v933
      %1179 = vmatpush.bf16.msra.mxu0 %v931
      %1180 = vmatpush.bf16.msra.mxu0 %v929
      %1181 = vmatpush.bf16.msra.mxu0 %v927
      %1182 = vmatpush.bf16.msra.mxu0 %v925
      %1183 = vmatpush.bf16.msra.mxu0 %v923
      %1184 = vmatpush.bf16.msra.mxu0 %v921
      %1185 = vmatmul.bf16.gmra.mxu0 %v521
      %v1186 = vpop.f32.mrf.mxu0
      %v1187 = vadd.f32 0.0, %v1186
      %v1188 = vpop.f32.mrf.mxu0
      %1189 = vdwg.mxu0
      %1190 = vmatpush.bf16.msra.mxu0 %v951
      %1191 = vmatpush.bf16.msra.mxu0 %v949
      %1192 = vmatpush.bf16.msra.mxu0 %v947
      %1193 = vmatpush.bf16.msra.mxu0 %v945
      %1194 = vmatpush.bf16.msra.mxu0 %v943
      %1195 = vmatpush.bf16.msra.mxu0 %v941
      %1196 = vmatpush.bf16.msra.mxu0 %v939
      %1197 = vmatpush.bf16.msra.mxu0 %v937
      %1198 = vmatmul.bf16.gmra.mxu0 %v522
      %v1199 = vpop.f32.mrf.mxu0
      %v1200 = vadd.f32 %v1187, %v1199
      %v1201 = vpop.f32.mrf.mxu0
      %1202 = vdwg.mxu0
      %1203 = vmatpush.bf16.msra.mxu0 %v967
      %1204 = vmatpush.bf16.msra.mxu0 %v965
      %1205 = vmatpush.bf16.msra.mxu0 %v963
      %1206 = vmatpush.bf16.msra.mxu0 %v961
      %1207 = vmatpush.bf16.msra.mxu0 %v959
      %1208 = vmatpush.bf16.msra.mxu0 %v957
      %1209 = vmatpush.bf16.msra.mxu0 %v955
      %1210 = vmatpush.bf16.msra.mxu0 %v953
      %1211 = vmatmul.bf16.gmra.mxu0 %v523
      %v1212 = vpop.f32.mrf.mxu0
      %v1213 = vadd.f32 %v1200, %v1212
      %v1214 = vpop.f32.mrf.mxu0
      %1215 = vdwg.mxu0
      %1216 = vmatpush.bf16.msra.mxu0 %v983
      %1217 = vmatpush.bf16.msra.mxu0 %v981
      %1218 = vmatpush.bf16.msra.mxu0 %v979
      %1219 = vmatpush.bf16.msra.mxu0 %v977
      %1220 = vmatpush.bf16.msra.mxu0 %v975
      %1221 = vmatpush.bf16.msra.mxu0 %v973
      %1222 = vmatpush.bf16.msra.mxu0 %v971
      %1223 = vmatpush.bf16.msra.mxu0 %v969
      %1224 = vmatmul.bf16.gmra.mxu0 %v524
      %v1225 = vpop.f32.mrf.mxu0
      %v1226 = vadd.f32 %v1213, %v1225
      %v1227 = vpop.f32.mrf.mxu0
      %1228 = vdwg.mxu0
      %1229 = vmatpush.bf16.msra.mxu0 %v999
      %1230 = vmatpush.bf16.msra.mxu0 %v997
      %1231 = vmatpush.bf16.msra.mxu0 %v995
      %1232 = vmatpush.bf16.msra.mxu0 %v993
      %1233 = vmatpush.bf16.msra.mxu0 %v991
      %1234 = vmatpush.bf16.msra.mxu0 %v989
      %1235 = vmatpush.bf16.msra.mxu0 %v987
      %1236 = vmatpush.bf16.msra.mxu0 %v985
      %1237 = vmatmul.bf16.gmra.mxu0 %v525
      %v1238 = vpop.f32.mrf.mxu0
      %v1239 = vadd.f32 %v1226, %v1238
      %v1240 = vpop.f32.mrf.mxu0
      %1241 = vdwg.mxu0
      %1242 = vmatpush.bf16.msra.mxu0 %v1015
      %1243 = vmatpush.bf16.msra.mxu0 %v1013
      %1244 = vmatpush.bf16.msra.mxu0 %v1011
      %1245 = vmatpush.bf16.msra.mxu0 %v1009
      %1246 = vmatpush.bf16.msra.mxu0 %v1007
      %1247 = vmatpush.bf16.msra.mxu0 %v1005
      %1248 = vmatpush.bf16.msra.mxu0 %v1003
      %1249 = vmatpush.bf16.msra.mxu0 %v1001
      %1250 = vmatmul.bf16.gmra.mxu0 %v526
      %v1251 = vpop.f32.mrf.mxu0
      %v1252 = vadd.f32 %v1239, %v1251
      %v1253 = vpop.f32.mrf.mxu0
      %1254 = vdwg.mxu0
      %1255 = vmatpush.bf16.msra.mxu0 %v1031
      %1256 = vmatpush.bf16.msra.mxu0 %v1029
      %1257 = vmatpush.bf16.msra.mxu0 %v1027
      %1258 = vmatpush.bf16.msra.mxu0 %v1025
      %1259 = vmatpush.bf16.msra.mxu0 %v1023
      %1260 = vmatpush.bf16.msra.mxu0 %v1021
      %1261 = vmatpush.bf16.msra.mxu0 %v1019
      %1262 = vmatpush.bf16.msra.mxu0 %v1017
      %1263 = vmatmul.bf16.gmra.mxu0 %v527
      %v1264 = vpop.f32.mrf.mxu0
      %v1265 = vadd.f32 %v1252, %v1264
      %v1266 = vpop.f32.mrf.mxu0
      %1267 = vdwg.mxu0
      %1268 = vmatpush.bf16.msra.mxu0 %v1047
      %1269 = vmatpush.bf16.msra.mxu0 %v1045
      %1270 = vmatpush.bf16.msra.mxu0 %v1043
      %1271 = vmatpush.bf16.msra.mxu0 %v1041
      %1272 = vmatpush.bf16.msra.mxu0 %v1039
      %1273 = vmatpush.bf16.msra.mxu0 %v1037
      %1274 = vmatpush.bf16.msra.mxu0 %v1035
      %1275 = vmatpush.bf16.msra.mxu0 %v1033
      %1276 = vmatmul.bf16.gmra.mxu0 %v528
      %v1277 = vpop.f32.mrf.mxu0
      %v1278 = vadd.f32 %v1265, %v1277
      %v1279 = vpop.f32.mrf.mxu0
      %1280 = vdwg.mxu0
      %1281 = vmatpush.bf16.msra.mxu0 %v936
      %1282 = vmatpush.bf16.msra.mxu0 %v934
      %1283 = vmatpush.bf16.msra.mxu0 %v932
      %1284 = vmatpush.bf16.msra.mxu0 %v930
      %1285 = vmatpush.bf16.msra.mxu0 %v928
      %1286 = vmatpush.bf16.msra.mxu0 %v926
      %1287 = vmatpush.bf16.msra.mxu0 %v924
      %1288 = vmatpush.bf16.msra.mxu0 %v922
      %1289 = vmatmul.bf16.gmra.mxu0 %v521
      %v1290 = vpop.f32.mrf.mxu0
      %v1291 = vadd.f32 0.0, %v1290
      %v1292 = vpop.f32.mrf.mxu0
      %1293 = vdwg.mxu0
      %1294 = vmatpush.bf16.msra.mxu0 %v952
      %1295 = vmatpush.bf16.msra.mxu0 %v950
      %1296 = vmatpush.bf16.msra.mxu0 %v948
      %1297 = vmatpush.bf16.msra.mxu0 %v946
      %1298 = vmatpush.bf16.msra.mxu0 %v944
      %1299 = vmatpush.bf16.msra.mxu0 %v942
      %1300 = vmatpush.bf16.msra.mxu0 %v940
      %1301 = vmatpush.bf16.msra.mxu0 %v938
      %1302 = vmatmul.bf16.gmra.mxu0 %v522
      %v1303 = vpop.f32.mrf.mxu0
      %v1304 = vadd.f32 %v1291, %v1303
      %v1305 = vpop.f32.mrf.mxu0
      %1306 = vdwg.mxu0
      %1307 = vmatpush.bf16.msra.mxu0 %v968
      %1308 = vmatpush.bf16.msra.mxu0 %v966
      %1309 = vmatpush.bf16.msra.mxu0 %v964
      %1310 = vmatpush.bf16.msra.mxu0 %v962
      %1311 = vmatpush.bf16.msra.mxu0 %v960
      %1312 = vmatpush.bf16.msra.mxu0 %v958
      %1313 = vmatpush.bf16.msra.mxu0 %v956
      %1314 = vmatpush.bf16.msra.mxu0 %v954
      %1315 = vmatmul.bf16.gmra.mxu0 %v523
      %v1316 = vpop.f32.mrf.mxu0
      %v1317 = vadd.f32 %v1304, %v1316
      %v1318 = vpop.f32.mrf.mxu0
      %1319 = vdwg.mxu0
      %1320 = vmatpush.bf16.msra.mxu0 %v984
      %1321 = vmatpush.bf16.msra.mxu0 %v982
      %1322 = vmatpush.bf16.msra.mxu0 %v980
      %1323 = vmatpush.bf16.msra.mxu0 %v978
      %1324 = vmatpush.bf16.msra.mxu0 %v976
      %1325 = vmatpush.bf16.msra.mxu0 %v974
      %1326 = vmatpush.bf16.msra.mxu0 %v972
      %1327 = vmatpush.bf16.msra.mxu0 %v970
      %1328 = vmatmul.bf16.gmra.mxu0 %v524
      %v1329 = vpop.f32.mrf.mxu0
      %v1330 = vadd.f32 %v1317, %v1329
      %v1331 = vpop.f32.mrf.mxu0
      %1332 = vdwg.mxu0
      %1333 = vmatpush.bf16.msra.mxu0 %v1000
      %1334 = vmatpush.bf16.msra.mxu0 %v998
      %1335 = vmatpush.bf16.msra.mxu0 %v996
      %1336 = vmatpush.bf16.msra.mxu0 %v994
      %1337 = vmatpush.bf16.msra.mxu0 %v992
      %1338 = vmatpush.bf16.msra.mxu0 %v990
      %1339 = vmatpush.bf16.msra.mxu0 %v988
      %1340 = vmatpush.bf16.msra.mxu0 %v986
      %1341 = vmatmul.bf16.gmra.mxu0 %v525
      %v1342 = vpop.f32.mrf.mxu0
      %v1343 = vadd.f32 %v1330, %v1342
      %v1344 = vpop.f32.mrf.mxu0
      %1345 = vdwg.mxu0
      %1346 = vmatpush.bf16.msra.mxu0 %v1016
      %1347 = vmatpush.bf16.msra.mxu0 %v1014
      %1348 = vmatpush.bf16.msra.mxu0 %v1012
      %1349 = vmatpush.bf16.msra.mxu0 %v1010
      %1350 = vmatpush.bf16.msra.mxu0 %v1008
      %1351 = vmatpush.bf16.msra.mxu0 %v1006
      %1352 = vmatpush.bf16.msra.mxu0 %v1004
      %1353 = vmatpush.bf16.msra.mxu0 %v1002
      %1354 = vmatmul.bf16.gmra.mxu0 %v526
      %v1355 = vpop.f32.mrf.mxu0
      %v1356 = vadd.f32 %v1343, %v1355
      %v1357 = vpop.f32.mrf.mxu0
      %1358 = vdwg.mxu0
      %1359 = vmatpush.bf16.msra.mxu0 %v1032
      %1360 = vmatpush.bf16.msra.mxu0 %v1030
      %1361 = vmatpush.bf16.msra.mxu0 %v1028
      %1362 = vmatpush.bf16.msra.mxu0 %v1026
      %1363 = vmatpush.bf16.msra.mxu0 %v1024
      %1364 = vmatpush.bf16.msra.mxu0 %v1022
      %1365 = vmatpush.bf16.msra.mxu0 %v1020
      %1366 = vmatpush.bf16.msra.mxu0 %v1018
      %1367 = vmatmul.bf16.gmra.mxu0 %v527
      %v1368 = vpop.f32.mrf.mxu0
      %v1369 = vadd.f32 %v1356, %v1368
      %v1370 = vpop.f32.mrf.mxu0
      %1371 = vdwg.mxu0
      %1372 = vmatpush.bf16.msra.mxu0 %v1048
      %1373 = vmatpush.bf16.msra.mxu0 %v1046
      %1374 = vmatpush.bf16.msra.mxu0 %v1044
      %1375 = vmatpush.bf16.msra.mxu0 %v1042
      %1376 = vmatpush.bf16.msra.mxu0 %v1040
      %1377 = vmatpush.bf16.msra.mxu0 %v1038
      %1378 = vmatpush.bf16.msra.mxu0 %v1036
      %1379 = vmatpush.bf16.msra.mxu0 %v1034
      %1380 = vmatmul.bf16.gmra.mxu0 %v528
      %v1381 = vpop.f32.mrf.mxu0
      %v1382 = vadd.f32 %v1369, %v1381
      %v1383 = vpop.f32.mrf.mxu0
      %1384 = vdwg.mxu0
      %v1389 = vunpack.c.l.b16 %v220
      %v1390 = vunpack.c.h.b16 %v220
      %v1391 = vunpack.c.l.b16 %v221
      %v1392 = vunpack.c.h.b16 %v221
      %v1393 = vunpack.c.l.b16 %v222
      %v1394 = vunpack.c.h.b16 %v222
      %v1395 = vunpack.c.l.b16 %v223
      %v1396 = vunpack.c.h.b16 %v223
      %v1397 = vpack.c.b16 %v1389, %v1389
      %v1398 = vpack.c.b16 %v1390, %v1390
      %v1399 = vpack.c.b16 %v1391, %v1391
      %v1400 = vpack.c.b16 %v1392, %v1392
      %v1401 = vpack.c.b16 %v1393, %v1393
      %v1402 = vpack.c.b16 %v1394, %v1394
      %v1403 = vpack.c.b16 %v1395, %v1395
      %v1404 = vpack.c.b16 %v1396, %v1396
      %v1541 = vunpack.c.l.b16 %v232
      %v1542 = vunpack.c.h.b16 %v232
      %v1543 = vunpack.c.l.b16 %v233
      %v1544 = vunpack.c.h.b16 %v233
      %v1545 = vunpack.c.l.b16 %v234
      %v1546 = vunpack.c.h.b16 %v234
      %v1547 = vunpack.c.l.b16 %v235
      %v1548 = vunpack.c.h.b16 %v235
      %v1549 = vunpack.c.l.b16 %v236
      %v1550 = vunpack.c.h.b16 %v236
      %v1551 = vunpack.c.l.b16 %v237
      %v1552 = vunpack.c.h.b16 %v237
      %v1553 = vunpack.c.l.b16 %v238
      %v1554 = vunpack.c.h.b16 %v238
      %v1555 = vunpack.c.l.b16 %v239
      %v1556 = vunpack.c.h.b16 %v239
      %v1557 = vunpack.c.l.b16 %v240
      %v1558 = vunpack.c.h.b16 %v240
      %v1559 = vunpack.c.l.b16 %v241
      %v1560 = vunpack.c.h.b16 %v241
      %v1561 = vunpack.c.l.b16 %v242
      %v1562 = vunpack.c.h.b16 %v242
      %v1563 = vunpack.c.l.b16 %v243
      %v1564 = vunpack.c.h.b16 %v243
      %v1565 = vunpack.c.l.b16 %v244
      %v1566 = vunpack.c.h.b16 %v244
      %v1567 = vunpack.c.l.b16 %v245
      %v1568 = vunpack.c.h.b16 %v245
      %v1569 = vunpack.c.l.b16 %v246
      %v1570 = vunpack.c.h.b16 %v246
      %v1571 = vunpack.c.l.b16 %v247
      %v1572 = vunpack.c.h.b16 %v247
      %v1573 = vunpack.c.l.b16 %v248
      %v1574 = vunpack.c.h.b16 %v248
      %v1575 = vunpack.c.l.b16 %v249
      %v1576 = vunpack.c.h.b16 %v249
      %v1577 = vunpack.c.l.b16 %v250
      %v1578 = vunpack.c.h.b16 %v250
      %v1579 = vunpack.c.l.b16 %v251
      %v1580 = vunpack.c.h.b16 %v251
      %v1581 = vunpack.c.l.b16 %v252
      %v1582 = vunpack.c.h.b16 %v252
      %v1583 = vunpack.c.l.b16 %v253
      %v1584 = vunpack.c.h.b16 %v253
      %v1585 = vunpack.c.l.b16 %v254
      %v1586 = vunpack.c.h.b16 %v254
      %v1587 = vunpack.c.l.b16 %v255
      %v1588 = vunpack.c.h.b16 %v255
      %v1589 = vunpack.c.l.b16 %v256
      %v1590 = vunpack.c.h.b16 %v256
      %v1591 = vunpack.c.l.b16 %v257
      %v1592 = vunpack.c.h.b16 %v257
      %v1593 = vunpack.c.l.b16 %v258
      %v1594 = vunpack.c.h.b16 %v258
      %v1595 = vunpack.c.l.b16 %v259
      %v1596 = vunpack.c.h.b16 %v259
      %v1597 = vunpack.c.l.b16 %v260
      %v1598 = vunpack.c.h.b16 %v260
      %v1599 = vunpack.c.l.b16 %v261
      %v1600 = vunpack.c.h.b16 %v261
      %v1601 = vunpack.c.l.b16 %v262
      %v1602 = vunpack.c.h.b16 %v262
      %v1603 = vunpack.c.l.b16 %v263
      %v1604 = vunpack.c.h.b16 %v263
      %v1605 = vunpack.c.l.b16 %v264
      %v1606 = vunpack.c.h.b16 %v264
      %v1607 = vunpack.c.l.b16 %v265
      %v1608 = vunpack.c.h.b16 %v265
      %v1609 = vunpack.c.l.b16 %v266
      %v1610 = vunpack.c.h.b16 %v266
      %v1611 = vunpack.c.l.b16 %v267
      %v1612 = vunpack.c.h.b16 %v267
      %v1613 = vunpack.c.l.b16 %v268
      %v1614 = vunpack.c.h.b16 %v268
      %v1615 = vunpack.c.l.b16 %v269
      %v1616 = vunpack.c.h.b16 %v269
      %v1617 = vunpack.c.l.b16 %v270
      %v1618 = vunpack.c.h.b16 %v270
      %v1619 = vunpack.c.l.b16 %v271
      %v1620 = vunpack.c.h.b16 %v271
      %v1621 = vunpack.c.l.b16 %v272
      %v1622 = vunpack.c.h.b16 %v272
      %v1623 = vunpack.c.l.b16 %v273
      %v1624 = vunpack.c.h.b16 %v273
      %v1625 = vunpack.c.l.b16 %v274
      %v1626 = vunpack.c.h.b16 %v274
      %v1627 = vunpack.c.l.b16 %v275
      %v1628 = vunpack.c.h.b16 %v275
      %v1629 = vunpack.c.l.b16 %v276
      %v1630 = vunpack.c.h.b16 %v276
      %v1631 = vunpack.c.l.b16 %v277
      %v1632 = vunpack.c.h.b16 %v277
      %v1633 = vunpack.c.l.b16 %v278
      %v1634 = vunpack.c.h.b16 %v278
      %v1635 = vunpack.c.l.b16 %v279
      %v1636 = vunpack.c.h.b16 %v279
      %v1637 = vunpack.c.l.b16 %v280
      %v1638 = vunpack.c.h.b16 %v280
      %v1639 = vunpack.c.l.b16 %v281
      %v1640 = vunpack.c.h.b16 %v281
      %v1641 = vunpack.c.l.b16 %v282
      %v1642 = vunpack.c.h.b16 %v282
      %v1643 = vunpack.c.l.b16 %v283
      %v1644 = vunpack.c.h.b16 %v283
      %v1645 = vunpack.c.l.b16 %v284
      %v1646 = vunpack.c.h.b16 %v284
      %v1647 = vunpack.c.l.b16 %v285
      %v1648 = vunpack.c.h.b16 %v285
      %v1649 = vunpack.c.l.b16 %v286
      %v1650 = vunpack.c.h.b16 %v286
      %v1651 = vunpack.c.l.b16 %v287
      %v1652 = vunpack.c.h.b16 %v287
      %v1653 = vunpack.c.l.b16 %v288
      %v1654 = vunpack.c.h.b16 %v288
      %v1655 = vunpack.c.l.b16 %v289
      %v1656 = vunpack.c.h.b16 %v289
      %v1657 = vunpack.c.l.b16 %v290
      %v1658 = vunpack.c.h.b16 %v290
      %v1659 = vunpack.c.l.b16 %v291
      %v1660 = vunpack.c.h.b16 %v291
      %v1661 = vunpack.c.l.b16 %v292
      %v1662 = vunpack.c.h.b16 %v292
      %v1663 = vunpack.c.l.b16 %v293
      %v1664 = vunpack.c.h.b16 %v293
      %v1665 = vunpack.c.l.b16 %v294
      %v1666 = vunpack.c.h.b16 %v294
      %v1667 = vunpack.c.l.b16 %v295
      %v1668 = vunpack.c.h.b16 %v295
      %v1669 = vunpack.c.l.b16 %v296
      %v1670 = vunpack.c.h.b16 %v296
      %v1671 = vunpack.c.l.b16 %v297
      %v1672 = vunpack.c.h.b16 %v297
      %v1673 = vunpack.c.l.b16 %v298
      %v1674 = vunpack.c.h.b16 %v298
      %v1675 = vunpack.c.l.b16 %v299
      %v1676 = vunpack.c.h.b16 %v299
      %v1677 = vunpack.c.l.b16 %v300
      %v1678 = vunpack.c.h.b16 %v300
      %v1679 = vunpack.c.l.b16 %v301
      %v1680 = vunpack.c.h.b16 %v301
      %v1681 = vunpack.c.l.b16 %v302
      %v1682 = vunpack.c.h.b16 %v302
      %v1683 = vunpack.c.l.b16 %v303
      %v1684 = vunpack.c.h.b16 %v303
      %v1685 = vunpack.c.l.b16 %v304
      %v1686 = vunpack.c.h.b16 %v304
      %v1687 = vunpack.c.l.b16 %v305
      %v1688 = vunpack.c.h.b16 %v305
      %v1689 = vunpack.c.l.b16 %v306
      %v1690 = vunpack.c.h.b16 %v306
      %v1691 = vunpack.c.l.b16 %v307
      %v1692 = vunpack.c.h.b16 %v307
      %v1693 = vunpack.c.l.b16 %v308
      %v1694 = vunpack.c.h.b16 %v308
      %v1695 = vunpack.c.l.b16 %v309
      %v1696 = vunpack.c.h.b16 %v309
      %v1697 = vunpack.c.l.b16 %v310
      %v1698 = vunpack.c.h.b16 %v310
      %v1699 = vunpack.c.l.b16 %v311
      %v1700 = vunpack.c.h.b16 %v311
      %v1701 = vunpack.c.l.b16 %v312
      %v1702 = vunpack.c.h.b16 %v312
      %v1703 = vunpack.c.l.b16 %v313
      %v1704 = vunpack.c.h.b16 %v313
      %v1705 = vunpack.c.l.b16 %v314
      %v1706 = vunpack.c.h.b16 %v314
      %v1707 = vunpack.c.l.b16 %v315
      %v1708 = vunpack.c.h.b16 %v315
      %v1709 = vunpack.c.l.b16 %v316
      %v1710 = vunpack.c.h.b16 %v316
      %v1711 = vunpack.c.l.b16 %v317
      %v1712 = vunpack.c.h.b16 %v317
      %v1713 = vunpack.c.l.b16 %v318
      %v1714 = vunpack.c.h.b16 %v318
      %v1715 = vunpack.c.l.b16 %v319
      %v1716 = vunpack.c.h.b16 %v319
      %v1717 = vunpack.c.l.b16 %v320
      %v1718 = vunpack.c.h.b16 %v320
      %v1719 = vunpack.c.l.b16 %v321
      %v1720 = vunpack.c.h.b16 %v321
      %v1721 = vunpack.c.l.b16 %v322
      %v1722 = vunpack.c.h.b16 %v322
      %v1723 = vunpack.c.l.b16 %v323
      %v1724 = vunpack.c.h.b16 %v323
      %v1725 = vunpack.c.l.b16 %v324
      %v1726 = vunpack.c.h.b16 %v324
      %v1727 = vunpack.c.l.b16 %v325
      %v1728 = vunpack.c.h.b16 %v325
      %v1729 = vunpack.c.l.b16 %v326
      %v1730 = vunpack.c.h.b16 %v326
      %v1731 = vunpack.c.l.b16 %v327
      %v1732 = vunpack.c.h.b16 %v327
      %v1733 = vunpack.c.l.b16 %v328
      %v1734 = vunpack.c.h.b16 %v328
      %v1735 = vunpack.c.l.b16 %v329
      %v1736 = vunpack.c.h.b16 %v329
      %v1737 = vunpack.c.l.b16 %v330
      %v1738 = vunpack.c.h.b16 %v330
      %v1739 = vunpack.c.l.b16 %v331
      %v1740 = vunpack.c.h.b16 %v331
      %v1741 = vunpack.c.l.b16 %v332
      %v1742 = vunpack.c.h.b16 %v332
      %v1743 = vunpack.c.l.b16 %v333
      %v1744 = vunpack.c.h.b16 %v333
      %v1745 = vunpack.c.l.b16 %v334
      %v1746 = vunpack.c.h.b16 %v334
      %v1747 = vunpack.c.l.b16 %v335
      %v1748 = vunpack.c.h.b16 %v335
      %v1749 = vunpack.c.l.b16 %v336
      %v1750 = vunpack.c.h.b16 %v336
      %v1751 = vunpack.c.l.b16 %v337
      %v1752 = vunpack.c.h.b16 %v337
      %v1753 = vunpack.c.l.b16 %v338
      %v1754 = vunpack.c.h.b16 %v338
      %v1755 = vunpack.c.l.b16 %v339
      %v1756 = vunpack.c.h.b16 %v339
      %v1757 = vunpack.c.l.b16 %v340
      %v1758 = vunpack.c.h.b16 %v340
      %v1759 = vunpack.c.l.b16 %v341
      %v1760 = vunpack.c.h.b16 %v341
      %v1761 = vunpack.c.l.b16 %v342
      %v1762 = vunpack.c.h.b16 %v342
      %v1763 = vunpack.c.l.b16 %v343
      %v1764 = vunpack.c.h.b16 %v343
      %v1765 = vunpack.c.l.b16 %v344
      %v1766 = vunpack.c.h.b16 %v344
      %v1767 = vunpack.c.l.b16 %v345
      %v1768 = vunpack.c.h.b16 %v345
      %v1769 = vunpack.c.l.b16 %v346
      %v1770 = vunpack.c.h.b16 %v346
      %v1771 = vunpack.c.l.b16 %v347
      %v1772 = vunpack.c.h.b16 %v347
      %v1773 = vunpack.c.l.b16 %v348
      %v1774 = vunpack.c.h.b16 %v348
      %v1775 = vunpack.c.l.b16 %v349
      %v1776 = vunpack.c.h.b16 %v349
      %v1777 = vunpack.c.l.b16 %v350
      %v1778 = vunpack.c.h.b16 %v350
      %v1779 = vunpack.c.l.b16 %v351
      %v1780 = vunpack.c.h.b16 %v351
      %v1781 = vunpack.c.l.b16 %v352
      %v1782 = vunpack.c.h.b16 %v352
      %v1783 = vunpack.c.l.b16 %v353
      %v1784 = vunpack.c.h.b16 %v353
      %v1785 = vunpack.c.l.b16 %v354
      %v1786 = vunpack.c.h.b16 %v354
      %v1787 = vunpack.c.l.b16 %v355
      %v1788 = vunpack.c.h.b16 %v355
      %v1789 = vunpack.c.l.b16 %v356
      %v1790 = vunpack.c.h.b16 %v356
      %v1791 = vunpack.c.l.b16 %v357
      %v1792 = vunpack.c.h.b16 %v357
      %v1793 = vunpack.c.l.b16 %v358
      %v1794 = vunpack.c.h.b16 %v358
      %v1795 = vunpack.c.l.b16 %v359
      %v1796 = vunpack.c.h.b16 %v359
      %v1797 = vpack.c.b16 %v1543, %v1541
      %v1798 = vpack.c.b16 %v1544, %v1542
      %v1799 = vpack.c.b16 %v1547, %v1545
      %v1800 = vpack.c.b16 %v1548, %v1546
      %v1801 = vpack.c.b16 %v1551, %v1549
      %v1802 = vpack.c.b16 %v1552, %v1550
      %v1803 = vpack.c.b16 %v1555, %v1553
      %v1804 = vpack.c.b16 %v1556, %v1554
      %v1805 = vpack.c.b16 %v1559, %v1557
      %v1806 = vpack.c.b16 %v1560, %v1558
      %v1807 = vpack.c.b16 %v1563, %v1561
      %v1808 = vpack.c.b16 %v1564, %v1562
      %v1809 = vpack.c.b16 %v1567, %v1565
      %v1810 = vpack.c.b16 %v1568, %v1566
      %v1811 = vpack.c.b16 %v1571, %v1569
      %v1812 = vpack.c.b16 %v1572, %v1570
      %v1813 = vpack.c.b16 %v1575, %v1573
      %v1814 = vpack.c.b16 %v1576, %v1574
      %v1815 = vpack.c.b16 %v1579, %v1577
      %v1816 = vpack.c.b16 %v1580, %v1578
      %v1817 = vpack.c.b16 %v1583, %v1581
      %v1818 = vpack.c.b16 %v1584, %v1582
      %v1819 = vpack.c.b16 %v1587, %v1585
      %v1820 = vpack.c.b16 %v1588, %v1586
      %v1821 = vpack.c.b16 %v1591, %v1589
      %v1822 = vpack.c.b16 %v1592, %v1590
      %v1823 = vpack.c.b16 %v1595, %v1593
      %v1824 = vpack.c.b16 %v1596, %v1594
      %v1825 = vpack.c.b16 %v1599, %v1597
      %v1826 = vpack.c.b16 %v1600, %v1598
      %v1827 = vpack.c.b16 %v1603, %v1601
      %v1828 = vpack.c.b16 %v1604, %v1602
      %v1829 = vpack.c.b16 %v1607, %v1605
      %v1830 = vpack.c.b16 %v1608, %v1606
      %v1831 = vpack.c.b16 %v1611, %v1609
      %v1832 = vpack.c.b16 %v1612, %v1610
      %v1833 = vpack.c.b16 %v1615, %v1613
      %v1834 = vpack.c.b16 %v1616, %v1614
      %v1835 = vpack.c.b16 %v1619, %v1617
      %v1836 = vpack.c.b16 %v1620, %v1618
      %v1837 = vpack.c.b16 %v1623, %v1621
      %v1838 = vpack.c.b16 %v1624, %v1622
      %v1839 = vpack.c.b16 %v1627, %v1625
      %v1840 = vpack.c.b16 %v1628, %v1626
      %v1841 = vpack.c.b16 %v1631, %v1629
      %v1842 = vpack.c.b16 %v1632, %v1630
      %v1843 = vpack.c.b16 %v1635, %v1633
      %v1844 = vpack.c.b16 %v1636, %v1634
      %v1845 = vpack.c.b16 %v1639, %v1637
      %v1846 = vpack.c.b16 %v1640, %v1638
      %v1847 = vpack.c.b16 %v1643, %v1641
      %v1848 = vpack.c.b16 %v1644, %v1642
      %v1849 = vpack.c.b16 %v1647, %v1645
      %v1850 = vpack.c.b16 %v1648, %v1646
      %v1851 = vpack.c.b16 %v1651, %v1649
      %v1852 = vpack.c.b16 %v1652, %v1650
      %v1853 = vpack.c.b16 %v1655, %v1653
      %v1854 = vpack.c.b16 %v1656, %v1654
      %v1855 = vpack.c.b16 %v1659, %v1657
      %v1856 = vpack.c.b16 %v1660, %v1658
      %v1857 = vpack.c.b16 %v1663, %v1661
      %v1858 = vpack.c.b16 %v1664, %v1662
      %v1859 = vpack.c.b16 %v1667, %v1665
      %v1860 = vpack.c.b16 %v1668, %v1666
      %v1861 = vpack.c.b16 %v1671, %v1669
      %v1862 = vpack.c.b16 %v1672, %v1670
      %v1863 = vpack.c.b16 %v1675, %v1673
      %v1864 = vpack.c.b16 %v1676, %v1674
      %v1865 = vpack.c.b16 %v1679, %v1677
      %v1866 = vpack.c.b16 %v1680, %v1678
      %v1867 = vpack.c.b16 %v1683, %v1681
      %v1868 = vpack.c.b16 %v1684, %v1682
      %v1869 = vpack.c.b16 %v1687, %v1685
      %v1870 = vpack.c.b16 %v1688, %v1686
      %v1871 = vpack.c.b16 %v1691, %v1689
      %v1872 = vpack.c.b16 %v1692, %v1690
      %v1873 = vpack.c.b16 %v1695, %v1693
      %v1874 = vpack.c.b16 %v1696, %v1694
      %v1875 = vpack.c.b16 %v1699, %v1697
      %v1876 = vpack.c.b16 %v1700, %v1698
      %v1877 = vpack.c.b16 %v1703, %v1701
      %v1878 = vpack.c.b16 %v1704, %v1702
      %v1879 = vpack.c.b16 %v1707, %v1705
      %v1880 = vpack.c.b16 %v1708, %v1706
      %v1881 = vpack.c.b16 %v1711, %v1709
      %v1882 = vpack.c.b16 %v1712, %v1710
      %v1883 = vpack.c.b16 %v1715, %v1713
      %v1884 = vpack.c.b16 %v1716, %v1714
      %v1885 = vpack.c.b16 %v1719, %v1717
      %v1886 = vpack.c.b16 %v1720, %v1718
      %v1887 = vpack.c.b16 %v1723, %v1721
      %v1888 = vpack.c.b16 %v1724, %v1722
      %v1889 = vpack.c.b16 %v1727, %v1725
      %v1890 = vpack.c.b16 %v1728, %v1726
      %v1891 = vpack.c.b16 %v1731, %v1729
      %v1892 = vpack.c.b16 %v1732, %v1730
      %v1893 = vpack.c.b16 %v1735, %v1733
      %v1894 = vpack.c.b16 %v1736, %v1734
      %v1895 = vpack.c.b16 %v1739, %v1737
      %v1896 = vpack.c.b16 %v1740, %v1738
      %v1897 = vpack.c.b16 %v1743, %v1741
      %v1898 = vpack.c.b16 %v1744, %v1742
      %v1899 = vpack.c.b16 %v1747, %v1745
      %v1900 = vpack.c.b16 %v1748, %v1746
      %v1901 = vpack.c.b16 %v1751, %v1749
      %v1902 = vpack.c.b16 %v1752, %v1750
      %v1903 = vpack.c.b16 %v1755, %v1753
      %v1904 = vpack.c.b16 %v1756, %v1754
      %v1905 = vpack.c.b16 %v1759, %v1757
      %v1906 = vpack.c.b16 %v1760, %v1758
      %v1907 = vpack.c.b16 %v1763, %v1761
      %v1908 = vpack.c.b16 %v1764, %v1762
      %v1909 = vpack.c.b16 %v1767, %v1765
      %v1910 = vpack.c.b16 %v1768, %v1766
      %v1911 = vpack.c.b16 %v1771, %v1769
      %v1912 = vpack.c.b16 %v1772, %v1770
      %v1913 = vpack.c.b16 %v1775, %v1773
      %v1914 = vpack.c.b16 %v1776, %v1774
      %v1915 = vpack.c.b16 %v1779, %v1777
      %v1916 = vpack.c.b16 %v1780, %v1778
      %v1917 = vpack.c.b16 %v1783, %v1781
      %v1918 = vpack.c.b16 %v1784, %v1782
      %v1919 = vpack.c.b16 %v1787, %v1785
      %v1920 = vpack.c.b16 %v1788, %v1786
      %v1921 = vpack.c.b16 %v1791, %v1789
      %v1922 = vpack.c.b16 %v1792, %v1790
      %v1923 = vpack.c.b16 %v1795, %v1793
      %v1924 = vpack.c.b16 %v1796, %v1794
      %2053 = vmatpush.bf16.msra.mxu0 %v1811
      %2054 = vmatpush.bf16.msra.mxu0 %v1809
      %2055 = vmatpush.bf16.msra.mxu0 %v1807
      %2056 = vmatpush.bf16.msra.mxu0 %v1805
      %2057 = vmatpush.bf16.msra.mxu0 %v1803
      %2058 = vmatpush.bf16.msra.mxu0 %v1801
      %2059 = vmatpush.bf16.msra.mxu0 %v1799
      %2060 = vmatpush.bf16.msra.mxu0 %v1797
      %2061 = vmatmul.bf16.gmra.mxu0 %v1397
      %v2062 = vpop.f32.mrf.mxu0
      %v2063 = vadd.f32 %v1278, %v2062
      %v2064 = vpop.f32.mrf.mxu0
      %2065 = vdwg.mxu0
      %2066 = vmatpush.bf16.msra.mxu0 %v1827
      %2067 = vmatpush.bf16.msra.mxu0 %v1825
      %2068 = vmatpush.bf16.msra.mxu0 %v1823
      %2069 = vmatpush.bf16.msra.mxu0 %v1821
      %2070 = vmatpush.bf16.msra.mxu0 %v1819
      %2071 = vmatpush.bf16.msra.mxu0 %v1817
      %2072 = vmatpush.bf16.msra.mxu0 %v1815
      %2073 = vmatpush.bf16.msra.mxu0 %v1813
      %2074 = vmatmul.bf16.gmra.mxu0 %v1398
      %v2075 = vpop.f32.mrf.mxu0
      %v2076 = vadd.f32 %v2063, %v2075
      %v2077 = vpop.f32.mrf.mxu0
      %2078 = vdwg.mxu0
      %2079 = vmatpush.bf16.msra.mxu0 %v1843
      %2080 = vmatpush.bf16.msra.mxu0 %v1841
      %2081 = vmatpush.bf16.msra.mxu0 %v1839
      %2082 = vmatpush.bf16.msra.mxu0 %v1837
      %2083 = vmatpush.bf16.msra.mxu0 %v1835
      %2084 = vmatpush.bf16.msra.mxu0 %v1833
      %2085 = vmatpush.bf16.msra.mxu0 %v1831
      %2086 = vmatpush.bf16.msra.mxu0 %v1829
      %2087 = vmatmul.bf16.gmra.mxu0 %v1399
      %v2088 = vpop.f32.mrf.mxu0
      %v2089 = vadd.f32 %v2076, %v2088
      %v2090 = vpop.f32.mrf.mxu0
      %2091 = vdwg.mxu0
      %2092 = vmatpush.bf16.msra.mxu0 %v1859
      %2093 = vmatpush.bf16.msra.mxu0 %v1857
      %2094 = vmatpush.bf16.msra.mxu0 %v1855
      %2095 = vmatpush.bf16.msra.mxu0 %v1853
      %2096 = vmatpush.bf16.msra.mxu0 %v1851
      %2097 = vmatpush.bf16.msra.mxu0 %v1849
      %2098 = vmatpush.bf16.msra.mxu0 %v1847
      %2099 = vmatpush.bf16.msra.mxu0 %v1845
      %2100 = vmatmul.bf16.gmra.mxu0 %v1400
      %v2101 = vpop.f32.mrf.mxu0
      %v2102 = vadd.f32 %v2089, %v2101
      %v2103 = vpop.f32.mrf.mxu0
      %2104 = vdwg.mxu0
      %2105 = vmatpush.bf16.msra.mxu0 %v1875
      %2106 = vmatpush.bf16.msra.mxu0 %v1873
      %2107 = vmatpush.bf16.msra.mxu0 %v1871
      %2108 = vmatpush.bf16.msra.mxu0 %v1869
      %2109 = vmatpush.bf16.msra.mxu0 %v1867
      %2110 = vmatpush.bf16.msra.mxu0 %v1865
      %2111 = vmatpush.bf16.msra.mxu0 %v1863
      %2112 = vmatpush.bf16.msra.mxu0 %v1861
      %2113 = vmatmul.bf16.gmra.mxu0 %v1401
      %v2114 = vpop.f32.mrf.mxu0
      %v2115 = vadd.f32 %v2102, %v2114
      %v2116 = vpop.f32.mrf.mxu0
      %2117 = vdwg.mxu0
      %2118 = vmatpush.bf16.msra.mxu0 %v1891
      %2119 = vmatpush.bf16.msra.mxu0 %v1889
      %2120 = vmatpush.bf16.msra.mxu0 %v1887
      %2121 = vmatpush.bf16.msra.mxu0 %v1885
      %2122 = vmatpush.bf16.msra.mxu0 %v1883
      %2123 = vmatpush.bf16.msra.mxu0 %v1881
      %2124 = vmatpush.bf16.msra.mxu0 %v1879
      %2125 = vmatpush.bf16.msra.mxu0 %v1877
      %2126 = vmatmul.bf16.gmra.mxu0 %v1402
      %v2127 = vpop.f32.mrf.mxu0
      %v2128 = vadd.f32 %v2115, %v2127
      %v2129 = vpop.f32.mrf.mxu0
      %2130 = vdwg.mxu0
      %2131 = vmatpush.bf16.msra.mxu0 %v1907
      %2132 = vmatpush.bf16.msra.mxu0 %v1905
      %2133 = vmatpush.bf16.msra.mxu0 %v1903
      %2134 = vmatpush.bf16.msra.mxu0 %v1901
      %2135 = vmatpush.bf16.msra.mxu0 %v1899
      %2136 = vmatpush.bf16.msra.mxu0 %v1897
      %2137 = vmatpush.bf16.msra.mxu0 %v1895
      %2138 = vmatpush.bf16.msra.mxu0 %v1893
      %2139 = vmatmul.bf16.gmra.mxu0 %v1403
      %v2140 = vpop.f32.mrf.mxu0
      %v2141 = vadd.f32 %v2128, %v2140
      %v2142 = vpop.f32.mrf.mxu0
      %2143 = vdwg.mxu0
      %2144 = vmatpush.bf16.msra.mxu0 %v1923
      %2145 = vmatpush.bf16.msra.mxu0 %v1921
      %2146 = vmatpush.bf16.msra.mxu0 %v1919
      %2147 = vmatpush.bf16.msra.mxu0 %v1917
      %2148 = vmatpush.bf16.msra.mxu0 %v1915
      %2149 = vmatpush.bf16.msra.mxu0 %v1913
      %2150 = vmatpush.bf16.msra.mxu0 %v1911
      %2151 = vmatpush.bf16.msra.mxu0 %v1909
      %2152 = vmatmul.bf16.gmra.mxu0 %v1404
      %v2153 = vpop.f32.mrf.mxu0
      %v2154 = vadd.f32 %v2141, %v2153
      %v2155 = vpop.f32.mrf.mxu0
      %2156 = vdwg.mxu0
      %2157 = vmatpush.bf16.msra.mxu0 %v1812
      %2158 = vmatpush.bf16.msra.mxu0 %v1810
      %2159 = vmatpush.bf16.msra.mxu0 %v1808
      %2160 = vmatpush.bf16.msra.mxu0 %v1806
      %2161 = vmatpush.bf16.msra.mxu0 %v1804
      %2162 = vmatpush.bf16.msra.mxu0 %v1802
      %2163 = vmatpush.bf16.msra.mxu0 %v1800
      %2164 = vmatpush.bf16.msra.mxu0 %v1798
      %2165 = vmatmul.bf16.gmra.mxu0 %v1397
      %v2166 = vpop.f32.mrf.mxu0
      %v2167 = vadd.f32 %v1382, %v2166
      %v2168 = vpop.f32.mrf.mxu0
      %2169 = vdwg.mxu0
      %2170 = vmatpush.bf16.msra.mxu0 %v1828
      %2171 = vmatpush.bf16.msra.mxu0 %v1826
      %2172 = vmatpush.bf16.msra.mxu0 %v1824
      %2173 = vmatpush.bf16.msra.mxu0 %v1822
      %2174 = vmatpush.bf16.msra.mxu0 %v1820
      %2175 = vmatpush.bf16.msra.mxu0 %v1818
      %2176 = vmatpush.bf16.msra.mxu0 %v1816
      %2177 = vmatpush.bf16.msra.mxu0 %v1814
      %2178 = vmatmul.bf16.gmra.mxu0 %v1398
      %v2179 = vpop.f32.mrf.mxu0
      %v2180 = vadd.f32 %v2167, %v2179
      %v2181 = vpop.f32.mrf.mxu0
      %2182 = vdwg.mxu0
      %2183 = vmatpush.bf16.msra.mxu0 %v1844
      %2184 = vmatpush.bf16.msra.mxu0 %v1842
      %2185 = vmatpush.bf16.msra.mxu0 %v1840
      %2186 = vmatpush.bf16.msra.mxu0 %v1838
      %2187 = vmatpush.bf16.msra.mxu0 %v1836
      %2188 = vmatpush.bf16.msra.mxu0 %v1834
      %2189 = vmatpush.bf16.msra.mxu0 %v1832
      %2190 = vmatpush.bf16.msra.mxu0 %v1830
      %2191 = vmatmul.bf16.gmra.mxu0 %v1399
      %v2192 = vpop.f32.mrf.mxu0
      %v2193 = vadd.f32 %v2180, %v2192
      %v2194 = vpop.f32.mrf.mxu0
      %2195 = vdwg.mxu0
      %2196 = vmatpush.bf16.msra.mxu0 %v1860
      %2197 = vmatpush.bf16.msra.mxu0 %v1858
      %2198 = vmatpush.bf16.msra.mxu0 %v1856
      %2199 = vmatpush.bf16.msra.mxu0 %v1854
      %2200 = vmatpush.bf16.msra.mxu0 %v1852
      %2201 = vmatpush.bf16.msra.mxu0 %v1850
      %2202 = vmatpush.bf16.msra.mxu0 %v1848
      %2203 = vmatpush.bf16.msra.mxu0 %v1846
      %2204 = vmatmul.bf16.gmra.mxu0 %v1400
      %v2205 = vpop.f32.mrf.mxu0
      %v2206 = vadd.f32 %v2193, %v2205
      %v2207 = vpop.f32.mrf.mxu0
      %2208 = vdwg.mxu0
      %2209 = vmatpush.bf16.msra.mxu0 %v1876
      %2210 = vmatpush.bf16.msra.mxu0 %v1874
      %2211 = vmatpush.bf16.msra.mxu0 %v1872
      %2212 = vmatpush.bf16.msra.mxu0 %v1870
      %2213 = vmatpush.bf16.msra.mxu0 %v1868
      %2214 = vmatpush.bf16.msra.mxu0 %v1866
      %2215 = vmatpush.bf16.msra.mxu0 %v1864
      %2216 = vmatpush.bf16.msra.mxu0 %v1862
      %2217 = vmatmul.bf16.gmra.mxu0 %v1401
      %v2218 = vpop.f32.mrf.mxu0
      %v2219 = vadd.f32 %v2206, %v2218
      %v2220 = vpop.f32.mrf.mxu0
      %2221 = vdwg.mxu0
      %2222 = vmatpush.bf16.msra.mxu0 %v1892
      %2223 = vmatpush.bf16.msra.mxu0 %v1890
      %2224 = vmatpush.bf16.msra.mxu0 %v1888
      %2225 = vmatpush.bf16.msra.mxu0 %v1886
      %2226 = vmatpush.bf16.msra.mxu0 %v1884
      %2227 = vmatpush.bf16.msra.mxu0 %v1882
      %2228 = vmatpush.bf16.msra.mxu0 %v1880
      %2229 = vmatpush.bf16.msra.mxu0 %v1878
      %2230 = vmatmul.bf16.gmra.mxu0 %v1402
      %v2231 = vpop.f32.mrf.mxu0
      %v2232 = vadd.f32 %v2219, %v2231
      %v2233 = vpop.f32.mrf.mxu0
      %2234 = vdwg.mxu0
      %2235 = vmatpush.bf16.msra.mxu0 %v1908
      %2236 = vmatpush.bf16.msra.mxu0 %v1906
      %2237 = vmatpush.bf16.msra.mxu0 %v1904
      %2238 = vmatpush.bf16.msra.mxu0 %v1902
      %2239 = vmatpush.bf16.msra.mxu0 %v1900
      %2240 = vmatpush.bf16.msra.mxu0 %v1898
      %2241 = vmatpush.bf16.msra.mxu0 %v1896
      %2242 = vmatpush.bf16.msra.mxu0 %v1894
      %2243 = vmatmul.bf16.gmra.mxu0 %v1403
      %v2244 = vpop.f32.mrf.mxu0
      %v2245 = vadd.f32 %v2232, %v2244
      %v2246 = vpop.f32.mrf.mxu0
      %2247 = vdwg.mxu0
      %2248 = vmatpush.bf16.msra.mxu0 %v1924
      %2249 = vmatpush.bf16.msra.mxu0 %v1922
      %2250 = vmatpush.bf16.msra.mxu0 %v1920
      %2251 = vmatpush.bf16.msra.mxu0 %v1918
      %2252 = vmatpush.bf16.msra.mxu0 %v1916
      %2253 = vmatpush.bf16.msra.mxu0 %v1914
      %2254 = vmatpush.bf16.msra.mxu0 %v1912
      %2255 = vmatpush.bf16.msra.mxu0 %v1910
      %2256 = vmatmul.bf16.gmra.mxu0 %v1404
      %v2257 = vpop.f32.mrf.mxu0
      %v2258 = vadd.f32 %v2245, %v2257
      %v2259 = vpop.f32.mrf.mxu0
      %2260 = vdwg.mxu0
      %v2261 = vld [vmem:[%s2] sm:$0x3]
      %v2263 = vperm.slane %v2261, 0
      %v2264 = vperm.slane %v2261, 1
      %v2267 = vmul.f32 %v2154, %v2263
      %v2268 = vmul.f32 %v2258, %v2264
      %v2269 = vld [vmem:[%s3] sm:$0x3]
      %v2271 = vperm.slane %v2269, 0
      %v2272 = vperm.slane %v2269, 1
      %v2275 = vadd.f32 %v2267, %v2271
      %v2276 = vadd.f32 %v2268, %v2272
      %vm2277 = vcmp.ge.f32.partialorder %v2275, 0.0
      %vm2278 = vcmp.ge.f32.partialorder %v2276, 0.0
      %v2279 = vmul.f32 %v2275, 0.2
      %v2280 = vmul.f32 %v2276, 0.2
      %v2281 = vsel %vm2277, %v2275, %v2279
      %v2282 = vsel %vm2278, %v2276, %v2280
      %v2283 = vpack.c.bf16 %v2282, %v2281
      %2284 = vst [vmem:[%s219] sm:$0xff] %v2283
      %p2285 = scmp.lt.s32.totalorder %s19, 1
      %s2286 = scalar_select %p2285, %s19, 1
      %p2287 = scmp.lt.s32.totalorder %s20, 0
      %s2288 = scalar_select %p2287, %s20, 0
      %s2289 = smul.addr %s2288, 2
      %s2290 = smul.addr %s2286, 2
      %s2291 = sadd.s32 %s2289, %s2290
      %s2292 = smul.addr %s2291, 4
      %s2293 = scalar_lea.vmem %s4, %s2292
      // Predicated region
      $region37: #{discriminator_forward.7} parent=35 // pred_check
        %p2294 = pneg %p136
      $region38: #{discriminator_forward.7} parent=35 // pred_check_branch
        %2296 = sbr.rel (%p2294) target = $region40
      $region39: #{discriminator_forward.7} parent=35 // pred_region
        _
      $region40: #{discriminator_forward.7} parent=35 // pred_fallthru
        _
    $region36: #{discriminator_forward.7} parent=5 // pred_fallthru
      _
    %p2297 = scmp.le.s32.totalorder 2, %s10
    // Predicated region
    $region41: #{discriminator_forward.7} parent=5 // pred_check
      %p2298 = pneg %p2297
    $region42: #{discriminator_forward.7} parent=5 // pred_check_branch
      %2300 = sbr.rel (%p2298) target = $region44
    $region43: #{discriminator_forward.7} parent=5 // pred_region
      %s2301 = ssub.s32 %s10, 2
      // Predicated region
      $region45: #{discriminator_forward.7} parent=43 // pred_check
        %p2302 = pneg %p142
      $region46: #{discriminator_forward.7} parent=43 // pred_check_branch
        %2304 = sbr.rel (%p2302) target = $region48
      $region47: #{discriminator_forward.7} parent=43 // pred_region
        %p2305 = scmp.lt.s32.totalorder %s21, 1
        %s2306 = scalar_select %p2305, %s21, 1
        %p2307 = scmp.lt.s32.totalorder %s22, 0
        %s2308 = scalar_select %p2307, %s22, 0
        %s2309 = smul.addr %s2308, 2
        %s2310 = smul.addr %s2306, 2
        %s2311 = sadd.s32 %s2309, %s2310
        %s2312 = smul.addr %s2311, 4
        %s2313 = scalar_lea.vmem %s4, %s2312
      $region48: #{discriminator_forward.7} parent=43 // pred_fallthru
        _
    $region44: #{discriminator_forward.7} parent=5 // pred_fallthru
      _
  $region6: #{discriminator_forward.7} parent=0 // loop_footer
    %s14 = sadd.s32 1, %s10
  $region7: #{discriminator_forward.7} parent=0 // loop_footer_branch
    %9 = sbr.rel target = $region3
  $region8: #{discriminator_forward.7} parent=0 // loop_exit
    _

// kernel: discriminator_forward.9
$region0: #{discriminator_forward.9}
  #allocation0 [shape = 'u32[]', space=smem, size = 0x4, offset = 0x4, fixed_abs, tag = 'smem constant byte address 0x4 - core index']
  #allocation1 [shape = 'u32[72,128]{1,0:T(1,128)}', space=vmem, size = 0x9000, scoped, tag = 'internal scratch']
  #allocation2 [shape = 'f32[1,1]{1,0:T(1,128)S(1)}', space=vmem, size = 0x200, scoped, tag = 'scoped memory for discriminator_forward.9']
  %s0 = inlined_call_operand.vmem [shape: bf16[2,1,512], index: 0, kind: input, shape index: {}]
  %s1 = inlined_call_operand.vmem [shape: f32[512,1], index: 1, kind: input, shape index: {}]
  %s2 = inlined_call_operand.<no memory space> [shape: f32[1,1], index: 2, kind: input, shape index: {}]
  %s3 = inlined_call_operand.vmem [shape: f32[2,1], index: 3, kind: output, shape index: {}]
  %s4 = sld [smem:[#allocation0]]
  $region22: #{discriminator_forward.9} parent=0
    _
  %s6 = ssub.s32 1, %s4
  %s7 = scalar_select 0, %s6, %s4
  %v8 = vstv %s2
  %9 = vst [vmem:[#allocation2] sm:$0x1] %v8
  // Predicated region
  $region2: #{discriminator_forward.9} parent=0 // pred_check
    _
  $region3: #{discriminator_forward.9} parent=0 // pred_check_branch
    %11 = sbr.rel (0) target = $region5
  $region4: #{discriminator_forward.9} parent=0 // pred_region
    _
  $region5: #{discriminator_forward.9} parent=0 // pred_fallthru
    _
  // Predicated region
  $region6: #{discriminator_forward.9} parent=0 // pred_check
    _
  $region7: #{discriminator_forward.9} parent=0 // pred_check_branch
    %13 = sbr.rel (0) target = $region9
  $region8: #{discriminator_forward.9} parent=0 // pred_region
    _
  $region9: #{discriminator_forward.9} parent=0 // pred_fallthru
    _
  // Predicated region
  $region10: #{discriminator_forward.9} parent=0 // pred_check
    _
  $region11: #{discriminator_forward.9} parent=0 // pred_check_branch
    %15 = sbr.rel (0) target = $region13
  $region12: #{discriminator_forward.9} parent=0 // pred_region
    _
  $region13: #{discriminator_forward.9} parent=0 // pred_fallthru
    _
  %v16 = vld [vmem:[%s0] sm:$0xf]
  %v17 = vld [vmem:[%s0 + $0x4] sm:$0xf]
  %v18 = vunpack.c.l.bf16 %v16
  %v19 = vunpack.c.l.bf16 %v17
  %v20 = vadd.f32 %v18, 0.0
  %v21 = vadd.f32 %v19, 0.0
  %v22 = vld [vmem:[%s1] sm:$0xff]
  %v23 = vld [vmem:[%s1 + $0x8] sm:$0xff]
  %v24 = vld [vmem:[%s1 + $0x10] sm:$0xff]
  %v25 = vld [vmem:[%s1 + $0x18] sm:$0xff]
  %v26 = vld [vmem:[%s1 + $0x20] sm:$0xff]
  %v27 = vld [vmem:[%s1 + $0x28] sm:$0xff]
  %v28 = vld [vmem:[%s1 + $0x30] sm:$0xff]
  %v29 = vld [vmem:[%s1 + $0x38] sm:$0xff]
  %v30 = vld [vmem:[%s1 + $0x40] sm:$0xff]
  %v31 = vld [vmem:[%s1 + $0x48] sm:$0xff]
  %v32 = vld [vmem:[%s1 + $0x50] sm:$0xff]
  %v33 = vld [vmem:[%s1 + $0x58] sm:$0xff]
  %v34 = vld [vmem:[%s1 + $0x60] sm:$0xff]
  %v35 = vld [vmem:[%s1 + $0x68] sm:$0xff]
  %v36 = vld [vmem:[%s1 + $0x70] sm:$0xff]
  %v37 = vld [vmem:[%s1 + $0x78] sm:$0xff]
  %v38 = vld [vmem:[%s1 + $0x80] sm:$0xff]
  %v39 = vld [vmem:[%s1 + $0x88] sm:$0xff]
  %v40 = vld [vmem:[%s1 + $0x90] sm:$0xff]
  %v41 = vld [vmem:[%s1 + $0x98] sm:$0xff]
  %v42 = vld [vmem:[%s1 + $0xa0] sm:$0xff]
  %v43 = vld [vmem:[%s1 + $0xa8] sm:$0xff]
  %v44 = vld [vmem:[%s1 + $0xb0] sm:$0xff]
  %v45 = vld [vmem:[%s1 + $0xb8] sm:$0xff]
  %v46 = vld [vmem:[%s1 + $0xc0] sm:$0xff]
  %v47 = vld [vmem:[%s1 + $0xc8] sm:$0xff]
  %v48 = vld [vmem:[%s1 + $0xd0] sm:$0xff]
  %v49 = vld [vmem:[%s1 + $0xd8] sm:$0xff]
  %v50 = vld [vmem:[%s1 + $0xe0] sm:$0xff]
  %v51 = vld [vmem:[%s1 + $0xe8] sm:$0xff]
  %v52 = vld [vmem:[%s1 + $0xf0] sm:$0xff]
  %v53 = vld [vmem:[%s1 + $0xf8] sm:$0xff]
  %v54 = vld [vmem:[%s1 + $0x100] sm:$0xff]
  %v55 = vld [vmem:[%s1 + $0x108] sm:$0xff]
  %v56 = vld [vmem:[%s1 + $0x110] sm:$0xff]
  %v57 = vld [vmem:[%s1 + $0x118] sm:$0xff]
  %v58 = vld [vmem:[%s1 + $0x120] sm:$0xff]
  %v59 = vld [vmem:[%s1 + $0x128] sm:$0xff]
  %v60 = vld [vmem:[%s1 + $0x130] sm:$0xff]
  %v61 = vld [vmem:[%s1 + $0x138] sm:$0xff]
  %v62 = vld [vmem:[%s1 + $0x140] sm:$0xff]
  %v63 = vld [vmem:[%s1 + $0x148] sm:$0xff]
  %v64 = vld [vmem:[%s1 + $0x150] sm:$0xff]
  %v65 = vld [vmem:[%s1 + $0x158] sm:$0xff]
  %v66 = vld [vmem:[%s1 + $0x160] sm:$0xff]
  %v67 = vld [vmem:[%s1 + $0x168] sm:$0xff]
  %v68 = vld [vmem:[%s1 + $0x170] sm:$0xff]
  %v69 = vld [vmem:[%s1 + $0x178] sm:$0xff]
  %v70 = vld [vmem:[%s1 + $0x180] sm:$0xff]
  %v71 = vld [vmem:[%s1 + $0x188] sm:$0xff]
  %v72 = vld [vmem:[%s1 + $0x190] sm:$0xff]
  %v73 = vld [vmem:[%s1 + $0x198] sm:$0xff]
  %v74 = vld [vmem:[%s1 + $0x1a0] sm:$0xff]
  %v75 = vld [vmem:[%s1 + $0x1a8] sm:$0xff]
  %v76 = vld [vmem:[%s1 + $0x1b0] sm:$0xff]
  %v77 = vld [vmem:[%s1 + $0x1b8] sm:$0xff]
  %v78 = vld [vmem:[%s1 + $0x1c0] sm:$0xff]
  %v79 = vld [vmem:[%s1 + $0x1c8] sm:$0xff]
  %v80 = vld [vmem:[%s1 + $0x1d0] sm:$0xff]
  %v81 = vld [vmem:[%s1 + $0x1d8] sm:$0xff]
  %v82 = vld [vmem:[%s1 + $0x1e0] sm:$0xff]
  %v83 = vld [vmem:[%s1 + $0x1e8] sm:$0xff]
  %v84 = vld [vmem:[%s1 + $0x1f0] sm:$0xff]
  %v85 = vld [vmem:[%s1 + $0x1f8] sm:$0xff]
  %v86 = vld [vmem:[#allocation2] sm:$0x1]
  %v88 = vperm.slane %v86, 0
  %v92 = vperm.slane %v20, 0
  %v93 = vperm.slane %v20, 2
  %v94 = vperm.slane %v20, 4
  %v95 = vperm.slane %v20, 6
  %v96 = vperm.slane %v21, 0
  %v97 = vperm.slane %v21, 2
  %v98 = vperm.slane %v21, 4
  %v99 = vperm.slane %v21, 6
  %vm100 = vcmask 1041409
  %v101 = vsel %vm100, %v96, %v92
  %v102 = vsel %vm100, %v97, %v93
  %v103 = vsel %vm100, %v98, %v94
  %v104 = vsel %vm100, %v99, %v95
  %109 = vmatpush.msra.mxu0 %v37
  %110 = vmatpush.msra.mxu0 %v36
  %111 = vmatpush.msra.mxu0 %v35
  %112 = vmatpush.msra.mxu0 %v34
  %113 = vmatpush.msra.mxu0 %v33
  %114 = vmatpush.msra.mxu0 %v32
  %115 = vmatpush.msra.mxu0 %v31
  %116 = vmatpush.msra.mxu0 %v30
  %117 = vmatpush.msra.mxu0 %v29
  %118 = vmatpush.msra.mxu0 %v28
  %119 = vmatpush.msra.mxu0 %v27
  %120 = vmatpush.msra.mxu0 %v26
  %121 = vmatpush.msra.mxu0 %v25
  %122 = vmatpush.msra.mxu0 %v24
  %123 = vmatpush.msra.mxu0 %v23
  %124 = vmatpush.msra.mxu0 %v22
  %125 = vmatmul.f32.gmra.mxu0 %v101
  %v126 = vpop.f32.mrf.mxu0
  %v127 = vadd.f32 %v88, %v126
  %128 = vdwg.mxu0
  %129 = vmatpush.msra.mxu0 %v53
  %130 = vmatpush.msra.mxu0 %v52
  %131 = vmatpush.msra.mxu0 %v51
  %132 = vmatpush.msra.mxu0 %v50
  %133 = vmatpush.msra.mxu0 %v49
  %134 = vmatpush.msra.mxu0 %v48
  %135 = vmatpush.msra.mxu0 %v47
  %136 = vmatpush.msra.mxu0 %v46
  %137 = vmatpush.msra.mxu0 %v45
  %138 = vmatpush.msra.mxu0 %v44
  %139 = vmatpush.msra.mxu0 %v43
  %140 = vmatpush.msra.mxu0 %v42
  %141 = vmatpush.msra.mxu0 %v41
  %142 = vmatpush.msra.mxu0 %v40
  %143 = vmatpush.msra.mxu0 %v39
  %144 = vmatpush.msra.mxu0 %v38
  %145 = vmatmul.f32.gmra.mxu0 %v102
  %v146 = vpop.f32.mrf.mxu0
  %v147 = vadd.f32 %v127, %v146
  %148 = vdwg.mxu0
  %149 = vmatpush.msra.mxu0 %v69
  %150 = vmatpush.msra.mxu0 %v68
  %151 = vmatpush.msra.mxu0 %v67
  %152 = vmatpush.msra.mxu0 %v66
  %153 = vmatpush.msra.mxu0 %v65
  %154 = vmatpush.msra.mxu0 %v64
  %155 = vmatpush.msra.mxu0 %v63
  %156 = vmatpush.msra.mxu0 %v62
  %157 = vmatpush.msra.mxu0 %v61
  %158 = vmatpush.msra.mxu0 %v60
  %159 = vmatpush.msra.mxu0 %v59
  %160 = vmatpush.msra.mxu0 %v58
  %161 = vmatpush.msra.mxu0 %v57
  %162 = vmatpush.msra.mxu0 %v56
  %163 = vmatpush.msra.mxu0 %v55
  %164 = vmatpush.msra.mxu0 %v54
  %165 = vmatmul.f32.gmra.mxu0 %v103
  %v166 = vpop.f32.mrf.mxu0
  %v167 = vadd.f32 %v147, %v166
  %168 = vdwg.mxu0
  %169 = vmatpush.msra.mxu0 %v85
  %170 = vmatpush.msra.mxu0 %v84
  %171 = vmatpush.msra.mxu0 %v83
  %172 = vmatpush.msra.mxu0 %v82
  %173 = vmatpush.msra.mxu0 %v81
  %174 = vmatpush.msra.mxu0 %v80
  %175 = vmatpush.msra.mxu0 %v79
  %176 = vmatpush.msra.mxu0 %v78
  %177 = vmatpush.msra.mxu0 %v77
  %178 = vmatpush.msra.mxu0 %v76
  %179 = vmatpush.msra.mxu0 %v75
  %180 = vmatpush.msra.mxu0 %v74
  %181 = vmatpush.msra.mxu0 %v73
  %182 = vmatpush.msra.mxu0 %v72
  %183 = vmatpush.msra.mxu0 %v71
  %184 = vmatpush.msra.mxu0 %v70
  %185 = vmatmul.f32.gmra.mxu0 %v104
  %v186 = vpop.f32.mrf.mxu0
  %v187 = vadd.f32 %v167, %v186
  %188 = vdwg.mxu0
  %vm189 = vcmask 1024
  %190 = vst.msk [vmem:[%s3] sm:$0x3] %vm189, %v187
  // Predicated region
  $region14: #{discriminator_forward.9} parent=0 // pred_check
    _
  $region15: #{discriminator_forward.9} parent=0 // pred_check_branch
    %192 = sbr.rel (0) target = $region17
  $region16: #{discriminator_forward.9} parent=0 // pred_region
    _
  $region17: #{discriminator_forward.9} parent=0 // pred_fallthru
    _
  // Predicated region
  $region18: #{discriminator_forward.9} parent=0 // pred_check
    _
  $region19: #{discriminator_forward.9} parent=0 // pred_check_branch
    %194 = sbr.rel (0) target = $region21
  $region20: #{discriminator_forward.9} parent=0 // pred_region
    _
  $region21: #{discriminator_forward.9} parent=0 // pred_fallthru
    _

// kernel: discriminator_forward.8
$region0: #{discriminator_forward.8}
  #allocation0 [shape = 'u32[]', space=smem, size = 0x4, offset = 0x4, fixed_abs, tag = 'smem constant byte address 0x4 - core index']
  #allocation1 [shape = 'u32[72,128]{1,0:T(1,128)}', space=vmem, size = 0x9000, scoped, tag = 'internal scratch']
  %s0 = inlined_call_operand.vmem [shape: bf16[2,9,2048], index: 0, kind: input, shape index: {}]
  %s1 = inlined_call_operand.vmem [shape: bf16[2,2048,512], index: 1, kind: input, shape index: {}]
  %s2 = inlined_call_operand.vmem [shape: f32[1,512], index: 2, kind: input, shape index: {}]
  %s3 = inlined_call_operand.vmem [shape: f32[1,512], index: 3, kind: input, shape index: {}]
  %s4 = inlined_call_operand.vmem [shape: bf16[2,8,512], index: 4, kind: output, shape index: {}]
  %s5 = sld [smem:[#allocation0]]
  $region49: #{discriminator_forward.8} parent=0
    _
  %s7 = ssub.s32 1, %s5
  %s8 = scalar_select 0, %s7, %s5
  loop: start=0, step=1, limit=4
  $region2: #{discriminator_forward.8} parent=0 // loop_pre_header
    _
  $region3: #{discriminator_forward.8} parent=0 // loop_header
    %s10 = sphi 0, %s14
    %p11 = scmp.ge.s32.totalorder %s10, 4
    %s17 = sphi 0, %s29
    %s18 = sphi 0, %s25
    %s19 = sphi 0, %s17
    %s20 = sphi 0, %s18
    %s21 = sphi 0, %s19
    %s22 = sphi 0, %s20
    %s32 = sphi 0, %s34
    %s35 = sphi 0, %s32
    %s36 = sphi 0, %s35
    %s52 = sphi 0, %s36
    %s56 = sphi 0, %s56
    %s58 = sphi 0, %s56
    %s59 = sphi 0, %s58
    %s73 = sphi 0, %s59
    %s77 = sphi 0, %s77
    %s79 = sphi 0, %s77
    %s80 = sphi 0, %s79
    %s94 = sphi 0, %s80
    %s98 = sphi 0, %s98
    %s100 = sphi 0, %s98
    %s101 = sphi 0, %s100
    %s115 = sphi 0, %s101
    %s123 = sphi 0, %s125
    %s126 = sphi 0, %s123
    %s127 = sphi 0, %s126
    %s143 = sphi 0, %s127
  $region4: #{discriminator_forward.8} parent=0 // loop_header_branch
    %13 = sbr.rel (%p11) target = $region8
  $region5: #{discriminator_forward.8} parent=0 // loop_body
    %s15 = ssub.s32 %s10, 1
    %s16 = ssub.s32 %s10, 2
    %s23 = sadd.s32 1, %s18
    %p24 = scmp.ge.s32.totalorder %s23, 1
    %s25 = scalar_select %p24, 0, %s23
    %s26 = sadd.s32 1, %s17
    %s27 = scalar_select %p24, %s26, %s17
    %p28 = scmp.ge.s32.totalorder %s27, 2
    %s29 = scalar_select %p28, 0, %s27
    %s30 = ssub.s32 %s17, %s29
    %p31 = scmp.eq.s32.totalorder %s30, 0
    %s33 = sadd.s32 %s32, 1
    %s34 = scalar_select %p31, %s32, %s33
    %p37 = pneg %p31
    %p38 = scmp.eq.s32.totalorder %s10, 1
    %p39 = por %p37, %p38
    %p40 = scmp.ne.s32.totalorder %s32, %s35
    %p41 = scmp.eq.s32.totalorder %s10, 0
    %p42 = por %p40, %p41
    %p43 = scmp.ne.s32.totalorder %s32, %s35
    %p44 = scmp.eq.s32.totalorder %s15, 1
    %p45 = por %p43, %p44
    %p46 = scmp.ne.s32.totalorder %s35, %s36
    %p47 = scmp.eq.s32.totalorder %s15, 0
    %p48 = por %p46, %p47
    %p49 = scmp.ne.s32.totalorder %s35, %s36
    %p50 = scmp.eq.s32.totalorder %s16, 1
    %p51 = por %p49, %p50
    %p53 = scmp.ne.s32.totalorder %s36, %s52
    %p54 = scmp.eq.s32.totalorder %s16, 0
    %p55 = por %p53, %p54
    %s57 = sadd.s32 %s56, 1
    %p60 = scmp.eq.s32.totalorder %s10, 1
    %p61 = scmp.ne.s32.totalorder %s56, %s58
    %p62 = scmp.eq.s32.totalorder %s10, 0
    %p63 = por %p61, %p62
    %p64 = scmp.ne.s32.totalorder %s56, %s58
    %p65 = scmp.eq.s32.totalorder %s15, 1
    %p66 = por %p64, %p65
    %p67 = scmp.ne.s32.totalorder %s58, %s59
    %p68 = scmp.eq.s32.totalorder %s15, 0
    %p69 = por %p67, %p68
    %p70 = scmp.ne.s32.totalorder %s58, %s59
    %p71 = scmp.eq.s32.totalorder %s16, 1
    %p72 = por %p70, %p71
    %p74 = scmp.ne.s32.totalorder %s59, %s73
    %p75 = scmp.eq.s32.totalorder %s16, 0
    %p76 = por %p74, %p75
    %s78 = sadd.s32 %s77, 1
    %p81 = scmp.eq.s32.totalorder %s10, 1
    %p82 = scmp.ne.s32.totalorder %s77, %s79
    %p83 = scmp.eq.s32.totalorder %s10, 0
    %p84 = por %p82, %p83
    %p85 = scmp.ne.s32.totalorder %s77, %s79
    %p86 = scmp.eq.s32.totalorder %s15, 1
    %p87 = por %p85, %p86
    %p88 = scmp.ne.s32.totalorder %s79, %s80
    %p89 = scmp.eq.s32.totalorder %s15, 0
    %p90 = por %p88, %p89
    %p91 = scmp.ne.s32.totalorder %s79, %s80
    %p92 = scmp.eq.s32.totalorder %s16, 1
    %p93 = por %p91, %p92
    %p95 = scmp.ne.s32.totalorder %s80, %s94
    %p96 = scmp.eq.s32.totalorder %s16, 0
    %p97 = por %p95, %p96
    %s99 = sadd.s32 %s98, 1
    %p102 = scmp.eq.s32.totalorder %s10, 1
    %p103 = scmp.ne.s32.totalorder %s98, %s100
    %p104 = scmp.eq.s32.totalorder %s10, 0
    %p105 = por %p103, %p104
    %p106 = scmp.ne.s32.totalorder %s98, %s100
    %p107 = scmp.eq.s32.totalorder %s15, 1
    %p108 = por %p106, %p107
    %p109 = scmp.ne.s32.totalorder %s100, %s101
    %p110 = scmp.eq.s32.totalorder %s15, 0
    %p111 = por %p109, %p110
    %p112 = scmp.ne.s32.totalorder %s100, %s101
    %p113 = scmp.eq.s32.totalorder %s16, 1
    %p114 = por %p112, %p113
    %p116 = scmp.ne.s32.totalorder %s101, %s115
    %p117 = scmp.eq.s32.totalorder %s16, 0
    %p118 = por %p116, %p117
    %s119 = ssub.s32 %s17, %s29
    %s120 = ssub.s32 %s18, %s25
    %s121 = sor.u32 %s119, %s120
    %p122 = scmp.eq.s32.totalorder %s121, 0
    %s124 = sadd.s32 %s123, 1
    %s125 = scalar_select %p122, %s123, %s124
    %p128 = pneg %p122
    %p129 = scmp.eq.s32.totalorder %s10, 1
    %p130 = por %p128, %p129
    %p131 = scmp.ne.s32.totalorder %s123, %s126
    %p132 = scmp.eq.s32.totalorder %s10, 0
    %p133 = por %p131, %p132
    %p134 = scmp.ne.s32.totalorder %s123, %s126
    %p135 = scmp.eq.s32.totalorder %s15, 1
    %p136 = por %p134, %p135
    %p137 = scmp.ne.s32.totalorder %s126, %s127
    %p138 = scmp.eq.s32.totalorder %s15, 0
    %p139 = por %p137, %p138
    %p140 = scmp.ne.s32.totalorder %s126, %s127
    %p141 = scmp.eq.s32.totalorder %s16, 1
    %p142 = por %p140, %p141
    %p144 = scmp.ne.s32.totalorder %s127, %s143
    %p145 = scmp.eq.s32.totalorder %s16, 0
    %p146 = por %p144, %p145
    %p147 = scmp.le.s32.totalorder 1, %s10
    %p148 = scmp.lt.s32.totalorder %s10, 3
    %p149 = pnand %p147, %p148
    %p150 = pneg %p149
    // Predicated region
    $region9: #{discriminator_forward.8} parent=5 // pred_check
      _
    $region10: #{discriminator_forward.8} parent=5 // pred_check_branch
      %152 = sbr.rel (%p149) target = $region12
    $region11: #{discriminator_forward.8} parent=5 // pred_region
      %s153 = ssub.s32 %s10, 1
      // Predicated region
      $region13: #{discriminator_forward.8} parent=11 // pred_check
        %p154 = pneg %p69
      $region14: #{discriminator_forward.8} parent=11 // pred_check_branch
        %156 = sbr.rel (%p154) target = $region16
      $region15: #{discriminator_forward.8} parent=11 // pred_region
        _
      $region16: #{discriminator_forward.8} parent=11 // pred_fallthru
        _
      // Predicated region
      $region17: #{discriminator_forward.8} parent=11 // pred_check
        %p157 = pneg %p90
      $region18: #{discriminator_forward.8} parent=11 // pred_check_branch
        %159 = sbr.rel (%p157) target = $region20
      $region19: #{discriminator_forward.8} parent=11 // pred_region
        _
      $region20: #{discriminator_forward.8} parent=11 // pred_fallthru
        _
      // Predicated region
      $region21: #{discriminator_forward.8} parent=11 // pred_check
        %p160 = pneg %p111
      $region22: #{discriminator_forward.8} parent=11 // pred_check_branch
        %162 = sbr.rel (%p160) target = $region24
      $region23: #{discriminator_forward.8} parent=11 // pred_region
        _
      $region24: #{discriminator_forward.8} parent=11 // pred_fallthru
        _
    $region12: #{discriminator_forward.8} parent=5 // pred_fallthru
      _
    %p163 = scmp.lt.s32.totalorder %s10, 2
    // Predicated region
    $region25: #{discriminator_forward.8} parent=5 // pred_check
      %p164 = pneg %p163
    $region26: #{discriminator_forward.8} parent=5 // pred_check_branch
      %166 = sbr.rel (%p164) target = $region28
    $region27: #{discriminator_forward.8} parent=5 // pred_region
      // Predicated region
      $region29: #{discriminator_forward.8} parent=27 // pred_check
        %p167 = pneg %p42
      $region30: #{discriminator_forward.8} parent=27 // pred_check_branch
        %169 = sbr.rel (%p167) target = $region32
      $region31: #{discriminator_forward.8} parent=27 // pred_region
        %p170 = scmp.lt.s32.totalorder %s17, 1
        %s171 = scalar_select %p170, %s17, 1
        %s172 = smul.addr %s171, 32
        %s173 = smul.addr %s172, 4
        %s174 = scalar_lea.vmem %s0, %s173
      $region32: #{discriminator_forward.8} parent=27 // pred_fallthru
        _
    $region28: #{discriminator_forward.8} parent=5 // pred_fallthru
      _
    %p175 = scmp.le.s32.totalorder 1, %s10
    %p176 = scmp.lt.s32.totalorder %s10, 3
    %p177 = pnand %p175, %p176
    %p178 = pneg %p177
    // Predicated region
    $region33: #{discriminator_forward.8} parent=5 // pred_check
      _
    $region34: #{discriminator_forward.8} parent=5 // pred_check_branch
      %180 = sbr.rel (%p177) target = $region36
    $region35: #{discriminator_forward.8} parent=5 // pred_region
      %s181 = ssub.s32 %s10, 1
      %p182 = scmp.lt.s32.totalorder %s19, 1
      %s183 = scalar_select %p182, %s19, 1
      %s184 = smul.addr %s183, 32
      %s185 = smul.addr %s184, 4
      %s186 = scalar_lea.vmem %s0, %s185
      %p187 = pneg %p48
      %p188 = pneg %p45
      %p189 = pneg %p69
      %p190 = pneg %p66
      %p191 = pneg %p90
      %p192 = pneg %p87
      %p193 = pneg %p111
      %p194 = pneg %p108
      %p195 = pneg %p139
      %p196 = pneg %p136
      %p197 = scmp.lt.s32.totalorder %s19, 1
      %s198 = scalar_select %p197, %s19, 1
      %p199 = scmp.lt.s32.totalorder %s20, 0
      %s200 = scalar_select %p199, %s20, 0
      %s201 = smul.addr %s200, 4
      %s202 = smul.addr %s198, 4
      %s203 = sadd.s32 %s201, %s202
      %s204 = smul.addr %s203, 4
      %s205 = scalar_lea.vmem %s4, %s204
      %p206 = scmp.lt.s32.totalorder %s19, 1
      %s207 = scalar_select %p206, %s19, 1
      %s208 = smul.addr %s207, 32
      %s209 = smul.addr %s208, 4
      %s210 = scalar_lea.vmem %s0, %s209
      %p211 = scmp.lt.s32.totalorder %s19, 1
      %s212 = scalar_select %p211, %s19, 1
      %p213 = scmp.lt.s32.totalorder %s20, 0
      %s214 = scalar_select %p213, %s20, 0
      %s215 = smul.addr %s214, 4
      %s216 = smul.addr %s212, 4
      %s217 = sadd.s32 %s215, %s216
      %s218 = smul.addr %s217, 4
      %s219 = scalar_lea.vmem %s4, %s218
      %v220 = vld [vmem:[%s210] sm:$0xff]
      %v221 = vld [vmem:[%s210 + $0x8] sm:$0xff]
      %v222 = vld [vmem:[%s210 + $0x10] sm:$0xff]
      %v223 = vld [vmem:[%s210 + $0x18] sm:$0xff]
      %v224 = vld [vmem:[%s210 + $0x20] sm:$0xff]
      %v225 = vld [vmem:[%s210 + $0x28] sm:$0xff]
      %v226 = vld [vmem:[%s210 + $0x30] sm:$0xff]
      %v227 = vld [vmem:[%s210 + $0x38] sm:$0xff]
      %v228 = vld [vmem:[%s210 + $0x40] sm:$0x11]
      %v229 = vld [vmem:[%s210 + $0x48] sm:$0x11]
      %v230 = vld [vmem:[%s210 + $0x50] sm:$0x11]
      %v231 = vld [vmem:[%s210 + $0x58] sm:$0x11]
      %v232 = vld [vmem:[%s210 + $0x60] sm:$0x11]
      %v233 = vld [vmem:[%s210 + $0x68] sm:$0x11]
      %v234 = vld [vmem:[%s210 + $0x70] sm:$0x11]
      %v235 = vld [vmem:[%s210 + $0x78] sm:$0x11]
      %v236 = vld [vmem:[%s1] sm:$0xff]
      %v237 = vld [vmem:[%s1 + $0x8] sm:$0xff]
      %v238 = vld [vmem:[%s1 + $0x10] sm:$0xff]
      %v239 = vld [vmem:[%s1 + $0x18] sm:$0xff]
      %v240 = vld [vmem:[%s1 + $0x20] sm:$0xff]
      %v241 = vld [vmem:[%s1 + $0x28] sm:$0xff]
      %v242 = vld [vmem:[%s1 + $0x30] sm:$0xff]
      %v243 = vld [vmem:[%s1 + $0x38] sm:$0xff]
      %v244 = vld [vmem:[%s1 + $0x40] sm:$0xff]
      %v245 = vld [vmem:[%s1 + $0x48] sm:$0xff]
      %v246 = vld [vmem:[%s1 + $0x50] sm:$0xff]
      %v247 = vld [vmem:[%s1 + $0x58] sm:$0xff]
      %v248 = vld [vmem:[%s1 + $0x60] sm:$0xff]
      %v249 = vld [vmem:[%s1 + $0x68] sm:$0xff]
      %v250 = vld [vmem:[%s1 + $0x70] sm:$0xff]
      %v251 = vld [vmem:[%s1 + $0x78] sm:$0xff]
      %v252 = vld [vmem:[%s1 + $0x80] sm:$0xff]
      %v253 = vld [vmem:[%s1 + $0x88] sm:$0xff]
      %v254 = vld [vmem:[%s1 + $0x90] sm:$0xff]
      %v255 = vld [vmem:[%s1 + $0x98] sm:$0xff]
      %v256 = vld [vmem:[%s1 + $0xa0] sm:$0xff]
      %v257 = vld [vmem:[%s1 + $0xa8] sm:$0xff]
      %v258 = vld [vmem:[%s1 + $0xb0] sm:$0xff]
      %v259 = vld [vmem:[%s1 + $0xb8] sm:$0xff]
      %v260 = vld [vmem:[%s1 + $0xc0] sm:$0xff]
      %v261 = vld [vmem:[%s1 + $0xc8] sm:$0xff]
      %v262 = vld [vmem:[%s1 + $0xd0] sm:$0xff]
      %v263 = vld [vmem:[%s1 + $0xd8] sm:$0xff]
      %v264 = vld [vmem:[%s1 + $0xe0] sm:$0xff]
      %v265 = vld [vmem:[%s1 + $0xe8] sm:$0xff]
      %v266 = vld [vmem:[%s1 + $0xf0] sm:$0xff]
      %v267 = vld [vmem:[%s1 + $0xf8] sm:$0xff]
      %v268 = vld [vmem:[%s1 + $0x100] sm:$0xff]
      %v269 = vld [vmem:[%s1 + $0x108] sm:$0xff]
      %v270 = vld [vmem:[%s1 + $0x110] sm:$0xff]
      %v271 = vld [vmem:[%s1 + $0x118] sm:$0xff]
      %v272 = vld [vmem:[%s1 + $0x120] sm:$0xff]
      %v273 = vld [vmem:[%s1 + $0x128] sm:$0xff]
      %v274 = vld [vmem:[%s1 + $0x130] sm:$0xff]
      %v275 = vld [vmem:[%s1 + $0x138] sm:$0xff]
      %v276 = vld [vmem:[%s1 + $0x140] sm:$0xff]
      %v277 = vld [vmem:[%s1 + $0x148] sm:$0xff]
      %v278 = vld [vmem:[%s1 + $0x150] sm:$0xff]
      %v279 = vld [vmem:[%s1 + $0x158] sm:$0xff]
      %v280 = vld [vmem:[%s1 + $0x160] sm:$0xff]
      %v281 = vld [vmem:[%s1 + $0x168] sm:$0xff]
      %v282 = vld [vmem:[%s1 + $0x170] sm:$0xff]
      %v283 = vld [vmem:[%s1 + $0x178] sm:$0xff]
      %v284 = vld [vmem:[%s1 + $0x180] sm:$0xff]
      %v285 = vld [vmem:[%s1 + $0x188] sm:$0xff]
      %v286 = vld [vmem:[%s1 + $0x190] sm:$0xff]
      %v287 = vld [vmem:[%s1 + $0x198] sm:$0xff]
      %v288 = vld [vmem:[%s1 + $0x1a0] sm:$0xff]
      %v289 = vld [vmem:[%s1 + $0x1a8] sm:$0xff]
      %v290 = vld [vmem:[%s1 + $0x1b0] sm:$0xff]
      %v291 = vld [vmem:[%s1 + $0x1b8] sm:$0xff]
      %v292 = vld [vmem:[%s1 + $0x1c0] sm:$0xff]
      %v293 = vld [vmem:[%s1 + $0x1c8] sm:$0xff]
      %v294 = vld [vmem:[%s1 + $0x1d0] sm:$0xff]
      %v295 = vld [vmem:[%s1 + $0x1d8] sm:$0xff]
      %v296 = vld [vmem:[%s1 + $0x1e0] sm:$0xff]
      %v297 = vld [vmem:[%s1 + $0x1e8] sm:$0xff]
      %v298 = vld [vmem:[%s1 + $0x1f0] sm:$0xff]
      %v299 = vld [vmem:[%s1 + $0x1f8] sm:$0xff]
      %v300 = vld [vmem:[%s1 + $0x200] sm:$0xff]
      %v301 = vld [vmem:[%s1 + $0x208] sm:$0xff]
      %v302 = vld [vmem:[%s1 + $0x210] sm:$0xff]
      %v303 = vld [vmem:[%s1 + $0x218] sm:$0xff]
      %v304 = vld [vmem:[%s1 + $0x220] sm:$0xff]
      %v305 = vld [vmem:[%s1 + $0x228] sm:$0xff]
      %v306 = vld [vmem:[%s1 + $0x230] sm:$0xff]
      %v307 = vld [vmem:[%s1 + $0x238] sm:$0xff]
      %v308 = vld [vmem:[%s1 + $0x240] sm:$0xff]
      %v309 = vld [vmem:[%s1 + $0x248] sm:$0xff]
      %v310 = vld [vmem:[%s1 + $0x250] sm:$0xff]
      %v311 = vld [vmem:[%s1 + $0x258] sm:$0xff]
      %v312 = vld [vmem:[%s1 + $0x260] sm:$0xff]
      %v313 = vld [vmem:[%s1 + $0x268] sm:$0xff]
      %v314 = vld [vmem:[%s1 + $0x270] sm:$0xff]
      %v315 = vld [vmem:[%s1 + $0x278] sm:$0xff]
      %v316 = vld [vmem:[%s1 + $0x280] sm:$0xff]
      %v317 = vld [vmem:[%s1 + $0x288] sm:$0xff]
      %v318 = vld [vmem:[%s1 + $0x290] sm:$0xff]
      %v319 = vld [vmem:[%s1 + $0x298] sm:$0xff]
      %v320 = vld [vmem:[%s1 + $0x2a0] sm:$0xff]
      %v321 = vld [vmem:[%s1 + $0x2a8] sm:$0xff]
      %v322 = vld [vmem:[%s1 + $0x2b0] sm:$0xff]
      %v323 = vld [vmem:[%s1 + $0x2b8] sm:$0xff]
      %v324 = vld [vmem:[%s1 + $0x2c0] sm:$0xff]
      %v325 = vld [vmem:[%s1 + $0x2c8] sm:$0xff]
      %v326 = vld [vmem:[%s1 + $0x2d0] sm:$0xff]
      %v327 = vld [vmem:[%s1 + $0x2d8] sm:$0xff]
      %v328 = vld [vmem:[%s1 + $0x2e0] sm:$0xff]
      %v329 = vld [vmem:[%s1 + $0x2e8] sm:$0xff]
      %v330 = vld [vmem:[%s1 + $0x2f0] sm:$0xff]
      %v331 = vld [vmem:[%s1 + $0x2f8] sm:$0xff]
      %v332 = vld [vmem:[%s1 + $0x300] sm:$0xff]
      %v333 = vld [vmem:[%s1 + $0x308] sm:$0xff]
      %v334 = vld [vmem:[%s1 + $0x310] sm:$0xff]
      %v335 = vld [vmem:[%s1 + $0x318] sm:$0xff]
      %v336 = vld [vmem:[%s1 + $0x320] sm:$0xff]
      %v337 = vld [vmem:[%s1 + $0x328] sm:$0xff]
      %v338 = vld [vmem:[%s1 + $0x330] sm:$0xff]
      %v339 = vld [vmem:[%s1 + $0x338] sm:$0xff]
      %v340 = vld [vmem:[%s1 + $0x340] sm:$0xff]
      %v341 = vld [vmem:[%s1 + $0x348] sm:$0xff]
      %v342 = vld [vmem:[%s1 + $0x350] sm:$0xff]
      %v343 = vld [vmem:[%s1 + $0x358] sm:$0xff]
      %v344 = vld [vmem:[%s1 + $0x360] sm:$0xff]
      %v345 = vld [vmem:[%s1 + $0x368] sm:$0xff]
      %v346 = vld [vmem:[%s1 + $0x370] sm:$0xff]
      %v347 = vld [vmem:[%s1 + $0x378] sm:$0xff]
      %v348 = vld [vmem:[%s1 + $0x380] sm:$0xff]
      %v349 = vld [vmem:[%s1 + $0x388] sm:$0xff]
      %v350 = vld [vmem:[%s1 + $0x390] sm:$0xff]
      %v351 = vld [vmem:[%s1 + $0x398] sm:$0xff]
      %v352 = vld [vmem:[%s1 + $0x3a0] sm:$0xff]
      %v353 = vld [vmem:[%s1 + $0x3a8] sm:$0xff]
      %v354 = vld [vmem:[%s1 + $0x3b0] sm:$0xff]
      %v355 = vld [vmem:[%s1 + $0x3b8] sm:$0xff]
      %v356 = vld [vmem:[%s1 + $0x3c0] sm:$0xff]
      %v357 = vld [vmem:[%s1 + $0x3c8] sm:$0xff]
      %v358 = vld [vmem:[%s1 + $0x3d0] sm:$0xff]
      %v359 = vld [vmem:[%s1 + $0x3d8] sm:$0xff]
      %v360 = vld [vmem:[%s1 + $0x3e0] sm:$0xff]
      %v361 = vld [vmem:[%s1 + $0x3e8] sm:$0xff]
      %v362 = vld [vmem:[%s1 + $0x3f0] sm:$0xff]
      %v363 = vld [vmem:[%s1 + $0x3f8] sm:$0xff]
      %v364 = vld [vmem:[%s1 + $0x400] sm:$0xff]
      %v365 = vld [vmem:[%s1 + $0x408] sm:$0xff]
      %v366 = vld [vmem:[%s1 + $0x410] sm:$0xff]
      %v367 = vld [vmem:[%s1 + $0x418] sm:$0xff]
      %v368 = vld [vmem:[%s1 + $0x420] sm:$0xff]
      %v369 = vld [vmem:[%s1 + $0x428] sm:$0xff]
      %v370 = vld [vmem:[%s1 + $0x430] sm:$0xff]
      %v371 = vld [vmem:[%s1 + $0x438] sm:$0xff]
      %v372 = vld [vmem:[%s1 + $0x440] sm:$0xff]
      %v373 = vld [vmem:[%s1 + $0x448] sm:$0xff]
      %v374 = vld [vmem:[%s1 + $0x450] sm:$0xff]
      %v375 = vld [vmem:[%s1 + $0x458] sm:$0xff]
      %v376 = vld [vmem:[%s1 + $0x460] sm:$0xff]
      %v377 = vld [vmem:[%s1 + $0x468] sm:$0xff]
      %v378 = vld [vmem:[%s1 + $0x470] sm:$0xff]
      %v379 = vld [vmem:[%s1 + $0x478] sm:$0xff]
      %v380 = vld [vmem:[%s1 + $0x480] sm:$0xff]
      %v381 = vld [vmem:[%s1 + $0x488] sm:$0xff]
      %v382 = vld [vmem:[%s1 + $0x490] sm:$0xff]
      %v383 = vld [vmem:[%s1 + $0x498] sm:$0xff]
      %v384 = vld [vmem:[%s1 + $0x4a0] sm:$0xff]
      %v385 = vld [vmem:[%s1 + $0x4a8] sm:$0xff]
      %v386 = vld [vmem:[%s1 + $0x4b0] sm:$0xff]
      %v387 = vld [vmem:[%s1 + $0x4b8] sm:$0xff]
      %v388 = vld [vmem:[%s1 + $0x4c0] sm:$0xff]
      %v389 = vld [vmem:[%s1 + $0x4c8] sm:$0xff]
      %v390 = vld [vmem:[%s1 + $0x4d0] sm:$0xff]
      %v391 = vld [vmem:[%s1 + $0x4d8] sm:$0xff]
      %v392 = vld [vmem:[%s1 + $0x4e0] sm:$0xff]
      %v393 = vld [vmem:[%s1 + $0x4e8] sm:$0xff]
      %v394 = vld [vmem:[%s1 + $0x4f0] sm:$0xff]
      %v395 = vld [vmem:[%s1 + $0x4f8] sm:$0xff]
      %v396 = vld [vmem:[%s1 + $0x500] sm:$0xff]
      %v397 = vld [vmem:[%s1 + $0x508] sm:$0xff]
      %v398 = vld [vmem:[%s1 + $0x510] sm:$0xff]
      %v399 = vld [vmem:[%s1 + $0x518] sm:$0xff]
      %v400 = vld [vmem:[%s1 + $0x520] sm:$0xff]
      %v401 = vld [vmem:[%s1 + $0x528] sm:$0xff]
      %v402 = vld [vmem:[%s1 + $0x530] sm:$0xff]
      %v403 = vld [vmem:[%s1 + $0x538] sm:$0xff]
      %v404 = vld [vmem:[%s1 + $0x540] sm:$0xff]
      %v405 = vld [vmem:[%s1 + $0x548] sm:$0xff]
      %v406 = vld [vmem:[%s1 + $0x550] sm:$0xff]
      %v407 = vld [vmem:[%s1 + $0x558] sm:$0xff]
      %v408 = vld [vmem:[%s1 + $0x560] sm:$0xff]
      %v409 = vld [vmem:[%s1 + $0x568] sm:$0xff]
      %v410 = vld [vmem:[%s1 + $0x570] sm:$0xff]
      %v411 = vld [vmem:[%s1 + $0x578] sm:$0xff]
      %v412 = vld [vmem:[%s1 + $0x580] sm:$0xff]
      %v413 = vld [vmem:[%s1 + $0x588] sm:$0xff]
      %v414 = vld [vmem:[%s1 + $0x590] sm:$0xff]
      %v415 = vld [vmem:[%s1 + $0x598] sm:$0xff]
      %v416 = vld [vmem:[%s1 + $0x5a0] sm:$0xff]
      %v417 = vld [vmem:[%s1 + $0x5a8] sm:$0xff]
      %v418 = vld [vmem:[%s1 + $0x5b0] sm:$0xff]
      %v419 = vld [vmem:[%s1 + $0x5b8] sm:$0xff]
      %v420 = vld [vmem:[%s1 + $0x5c0] sm:$0xff]
      %v421 = vld [vmem:[%s1 + $0x5c8] sm:$0xff]
      %v422 = vld [vmem:[%s1 + $0x5d0] sm:$0xff]
      %v423 = vld [vmem:[%s1 + $0x5d8] sm:$0xff]
      %v424 = vld [vmem:[%s1 + $0x5e0] sm:$0xff]
      %v425 = vld [vmem:[%s1 + $0x5e8] sm:$0xff]
      %v426 = vld [vmem:[%s1 + $0x5f0] sm:$0xff]
      %v427 = vld [vmem:[%s1 + $0x5f8] sm:$0xff]
      %v428 = vld [vmem:[%s1 + $0x600] sm:$0xff]
      %v429 = vld [vmem:[%s1 + $0x608] sm:$0xff]
      %v430 = vld [vmem:[%s1 + $0x610] sm:$0xff]
      %v431 = vld [vmem:[%s1 + $0x618] sm:$0xff]
      %v432 = vld [vmem:[%s1 + $0x620] sm:$0xff]
      %v433 = vld [vmem:[%s1 + $0x628] sm:$0xff]
      %v434 = vld [vmem:[%s1 + $0x630] sm:$0xff]
      %v435 = vld [vmem:[%s1 + $0x638] sm:$0xff]
      %v436 = vld [vmem:[%s1 + $0x640] sm:$0xff]
      %v437 = vld [vmem:[%s1 + $0x648] sm:$0xff]
      %v438 = vld [vmem:[%s1 + $0x650] sm:$0xff]
      %v439 = vld [vmem:[%s1 + $0x658] sm:$0xff]
      %v440 = vld [vmem:[%s1 + $0x660] sm:$0xff]
      %v441 = vld [vmem:[%s1 + $0x668] sm:$0xff]
      %v442 = vld [vmem:[%s1 + $0x670] sm:$0xff]
      %v443 = vld [vmem:[%s1 + $0x678] sm:$0xff]
      %v444 = vld [vmem:[%s1 + $0x680] sm:$0xff]
      %v445 = vld [vmem:[%s1 + $0x688] sm:$0xff]
      %v446 = vld [vmem:[%s1 + $0x690] sm:$0xff]
      %v447 = vld [vmem:[%s1 + $0x698] sm:$0xff]
      %v448 = vld [vmem:[%s1 + $0x6a0] sm:$0xff]
      %v449 = vld [vmem:[%s1 + $0x6a8] sm:$0xff]
      %v450 = vld [vmem:[%s1 + $0x6b0] sm:$0xff]
      %v451 = vld [vmem:[%s1 + $0x6b8] sm:$0xff]
      %v452 = vld [vmem:[%s1 + $0x6c0] sm:$0xff]
      %v453 = vld [vmem:[%s1 + $0x6c8] sm:$0xff]
      %v454 = vld [vmem:[%s1 + $0x6d0] sm:$0xff]
      %v455 = vld [vmem:[%s1 + $0x6d8] sm:$0xff]
      %v456 = vld [vmem:[%s1 + $0x6e0] sm:$0xff]
      %v457 = vld [vmem:[%s1 + $0x6e8] sm:$0xff]
      %v458 = vld [vmem:[%s1 + $0x6f0] sm:$0xff]
      %v459 = vld [vmem:[%s1 + $0x6f8] sm:$0xff]
      %v460 = vld [vmem:[%s1 + $0x700] sm:$0xff]
      %v461 = vld [vmem:[%s1 + $0x708] sm:$0xff]
      %v462 = vld [vmem:[%s1 + $0x710] sm:$0xff]
      %v463 = vld [vmem:[%s1 + $0x718] sm:$0xff]
      %v464 = vld [vmem:[%s1 + $0x720] sm:$0xff]
      %v465 = vld [vmem:[%s1 + $0x728] sm:$0xff]
      %v466 = vld [vmem:[%s1 + $0x730] sm:$0xff]
      %v467 = vld [vmem:[%s1 + $0x738] sm:$0xff]
      %v468 = vld [vmem:[%s1 + $0x740] sm:$0xff]
      %v469 = vld [vmem:[%s1 + $0x748] sm:$0xff]
      %v470 = vld [vmem:[%s1 + $0x750] sm:$0xff]
      %v471 = vld [vmem:[%s1 + $0x758] sm:$0xff]
      %v472 = vld [vmem:[%s1 + $0x760] sm:$0xff]
      %v473 = vld [vmem:[%s1 + $0x768] sm:$0xff]
      %v474 = vld [vmem:[%s1 + $0x770] sm:$0xff]
      %v475 = vld [vmem:[%s1 + $0x778] sm:$0xff]
      %v476 = vld [vmem:[%s1 + $0x780] sm:$0xff]
      %v477 = vld [vmem:[%s1 + $0x788] sm:$0xff]
      %v478 = vld [vmem:[%s1 + $0x790] sm:$0xff]
      %v479 = vld [vmem:[%s1 + $0x798] sm:$0xff]
      %v480 = vld [vmem:[%s1 + $0x7a0] sm:$0xff]
      %v481 = vld [vmem:[%s1 + $0x7a8] sm:$0xff]
      %v482 = vld [vmem:[%s1 + $0x7b0] sm:$0xff]
      %v483 = vld [vmem:[%s1 + $0x7b8] sm:$0xff]
      %v484 = vld [vmem:[%s1 + $0x7c0] sm:$0xff]
      %v485 = vld [vmem:[%s1 + $0x7c8] sm:$0xff]
      %v486 = vld [vmem:[%s1 + $0x7d0] sm:$0xff]
      %v487 = vld [vmem:[%s1 + $0x7d8] sm:$0xff]
      %v488 = vld [vmem:[%s1 + $0x7e0] sm:$0xff]
      %v489 = vld [vmem:[%s1 + $0x7e8] sm:$0xff]
      %v490 = vld [vmem:[%s1 + $0x7f0] sm:$0xff]
      %v491 = vld [vmem:[%s1 + $0x7f8] sm:$0xff]
      %v492 = vld [vmem:[%s1 + $0x800] sm:$0xff]
      %v493 = vld [vmem:[%s1 + $0x808] sm:$0xff]
      %v494 = vld [vmem:[%s1 + $0x810] sm:$0xff]
      %v495 = vld [vmem:[%s1 + $0x818] sm:$0xff]
      %v496 = vld [vmem:[%s1 + $0x820] sm:$0xff]
      %v497 = vld [vmem:[%s1 + $0x828] sm:$0xff]
      %v498 = vld [vmem:[%s1 + $0x830] sm:$0xff]
      %v499 = vld [vmem:[%s1 + $0x838] sm:$0xff]
      %v500 = vld [vmem:[%s1 + $0x840] sm:$0xff]
      %v501 = vld [vmem:[%s1 + $0x848] sm:$0xff]
      %v502 = vld [vmem:[%s1 + $0x850] sm:$0xff]
      %v503 = vld [vmem:[%s1 + $0x858] sm:$0xff]
      %v504 = vld [vmem:[%s1 + $0x860] sm:$0xff]
      %v505 = vld [vmem:[%s1 + $0x868] sm:$0xff]
      %v506 = vld [vmem:[%s1 + $0x870] sm:$0xff]
      %v507 = vld [vmem:[%s1 + $0x878] sm:$0xff]
      %v508 = vld [vmem:[%s1 + $0x880] sm:$0xff]
      %v509 = vld [vmem:[%s1 + $0x888] sm:$0xff]
      %v510 = vld [vmem:[%s1 + $0x890] sm:$0xff]
      %v511 = vld [vmem:[%s1 + $0x898] sm:$0xff]
      %v512 = vld [vmem:[%s1 + $0x8a0] sm:$0xff]
      %v513 = vld [vmem:[%s1 + $0x8a8] sm:$0xff]
      %v514 = vld [vmem:[%s1 + $0x8b0] sm:$0xff]
      %v515 = vld [vmem:[%s1 + $0x8b8] sm:$0xff]
      %v516 = vld [vmem:[%s1 + $0x8c0] sm:$0xff]
      %v517 = vld [vmem:[%s1 + $0x8c8] sm:$0xff]
      %v518 = vld [vmem:[%s1 + $0x8d0] sm:$0xff]
      %v519 = vld [vmem:[%s1 + $0x8d8] sm:$0xff]
      %v520 = vld [vmem:[%s1 + $0x8e0] sm:$0xff]
      %v521 = vld [vmem:[%s1 + $0x8e8] sm:$0xff]
      %v522 = vld [vmem:[%s1 + $0x8f0] sm:$0xff]
      %v523 = vld [vmem:[%s1 + $0x8f8] sm:$0xff]
      %v524 = vld [vmem:[%s1 + $0x900] sm:$0xff]
      %v525 = vld [vmem:[%s1 + $0x908] sm:$0xff]
      %v526 = vld [vmem:[%s1 + $0x910] sm:$0xff]
      %v527 = vld [vmem:[%s1 + $0x918] sm:$0xff]
      %v528 = vld [vmem:[%s1 + $0x920] sm:$0xff]
      %v529 = vld [vmem:[%s1 + $0x928] sm:$0xff]
      %v530 = vld [vmem:[%s1 + $0x930] sm:$0xff]
      %v531 = vld [vmem:[%s1 + $0x938] sm:$0xff]
      %v532 = vld [vmem:[%s1 + $0x940] sm:$0xff]
      %v533 = vld [vmem:[%s1 + $0x948] sm:$0xff]
      %v534 = vld [vmem:[%s1 + $0x950] sm:$0xff]
      %v535 = vld [vmem:[%s1 + $0x958] sm:$0xff]
      %v536 = vld [vmem:[%s1 + $0x960] sm:$0xff]
      %v537 = vld [vmem:[%s1 + $0x968] sm:$0xff]
      %v538 = vld [vmem:[%s1 + $0x970] sm:$0xff]
      %v539 = vld [vmem:[%s1 + $0x978] sm:$0xff]
      %v540 = vld [vmem:[%s1 + $0x980] sm:$0xff]
      %v541 = vld [vmem:[%s1 + $0x988] sm:$0xff]
      %v542 = vld [vmem:[%s1 + $0x990] sm:$0xff]
      %v543 = vld [vmem:[%s1 + $0x998] sm:$0xff]
      %v544 = vld [vmem:[%s1 + $0x9a0] sm:$0xff]
      %v545 = vld [vmem:[%s1 + $0x9a8] sm:$0xff]
      %v546 = vld [vmem:[%s1 + $0x9b0] sm:$0xff]
      %v547 = vld [vmem:[%s1 + $0x9b8] sm:$0xff]
      %v548 = vld [vmem:[%s1 + $0x9c0] sm:$0xff]
      %v549 = vld [vmem:[%s1 + $0x9c8] sm:$0xff]
      %v550 = vld [vmem:[%s1 + $0x9d0] sm:$0xff]
      %v551 = vld [vmem:[%s1 + $0x9d8] sm:$0xff]
      %v552 = vld [vmem:[%s1 + $0x9e0] sm:$0xff]
      %v553 = vld [vmem:[%s1 + $0x9e8] sm:$0xff]
      %v554 = vld [vmem:[%s1 + $0x9f0] sm:$0xff]
      %v555 = vld [vmem:[%s1 + $0x9f8] sm:$0xff]
      %v556 = vld [vmem:[%s1 + $0xa00] sm:$0xff]
      %v557 = vld [vmem:[%s1 + $0xa08] sm:$0xff]
      %v558 = vld [vmem:[%s1 + $0xa10] sm:$0xff]
      %v559 = vld [vmem:[%s1 + $0xa18] sm:$0xff]
      %v560 = vld [vmem:[%s1 + $0xa20] sm:$0xff]
      %v561 = vld [vmem:[%s1 + $0xa28] sm:$0xff]
      %v562 = vld [vmem:[%s1 + $0xa30] sm:$0xff]
      %v563 = vld [vmem:[%s1 + $0xa38] sm:$0xff]
      %v564 = vld [vmem:[%s1 + $0xa40] sm:$0xff]
      %v565 = vld [vmem:[%s1 + $0xa48] sm:$0xff]
      %v566 = vld [vmem:[%s1 + $0xa50] sm:$0xff]
      %v567 = vld [vmem:[%s1 + $0xa58] sm:$0xff]
      %v568 = vld [vmem:[%s1 + $0xa60] sm:$0xff]
      %v569 = vld [vmem:[%s1 + $0xa68] sm:$0xff]
      %v570 = vld [vmem:[%s1 + $0xa70] sm:$0xff]
      %v571 = vld [vmem:[%s1 + $0xa78] sm:$0xff]
      %v572 = vld [vmem:[%s1 + $0xa80] sm:$0xff]
      %v573 = vld [vmem:[%s1 + $0xa88] sm:$0xff]
      %v574 = vld [vmem:[%s1 + $0xa90] sm:$0xff]
      %v575 = vld [vmem:[%s1 + $0xa98] sm:$0xff]
      %v576 = vld [vmem:[%s1 + $0xaa0] sm:$0xff]
      %v577 = vld [vmem:[%s1 + $0xaa8] sm:$0xff]
      %v578 = vld [vmem:[%s1 + $0xab0] sm:$0xff]
      %v579 = vld [vmem:[%s1 + $0xab8] sm:$0xff]
      %v580 = vld [vmem:[%s1 + $0xac0] sm:$0xff]
      %v581 = vld [vmem:[%s1 + $0xac8] sm:$0xff]
      %v582 = vld [vmem:[%s1 + $0xad0] sm:$0xff]
      %v583 = vld [vmem:[%s1 + $0xad8] sm:$0xff]
      %v584 = vld [vmem:[%s1 + $0xae0] sm:$0xff]
      %v585 = vld [vmem:[%s1 + $0xae8] sm:$0xff]
      %v586 = vld [vmem:[%s1 + $0xaf0] sm:$0xff]
      %v587 = vld [vmem:[%s1 + $0xaf8] sm:$0xff]
      %v588 = vld [vmem:[%s1 + $0xb00] sm:$0xff]
      %v589 = vld [vmem:[%s1 + $0xb08] sm:$0xff]
      %v590 = vld [vmem:[%s1 + $0xb10] sm:$0xff]
      %v591 = vld [vmem:[%s1 + $0xb18] sm:$0xff]
      %v592 = vld [vmem:[%s1 + $0xb20] sm:$0xff]
      %v593 = vld [vmem:[%s1 + $0xb28] sm:$0xff]
      %v594 = vld [vmem:[%s1 + $0xb30] sm:$0xff]
      %v595 = vld [vmem:[%s1 + $0xb38] sm:$0xff]
      %v596 = vld [vmem:[%s1 + $0xb40] sm:$0xff]
      %v597 = vld [vmem:[%s1 + $0xb48] sm:$0xff]
      %v598 = vld [vmem:[%s1 + $0xb50] sm:$0xff]
      %v599 = vld [vmem:[%s1 + $0xb58] sm:$0xff]
      %v600 = vld [vmem:[%s1 + $0xb60] sm:$0xff]
      %v601 = vld [vmem:[%s1 + $0xb68] sm:$0xff]
      %v602 = vld [vmem:[%s1 + $0xb70] sm:$0xff]
      %v603 = vld [vmem:[%s1 + $0xb78] sm:$0xff]
      %v604 = vld [vmem:[%s1 + $0xb80] sm:$0xff]
      %v605 = vld [vmem:[%s1 + $0xb88] sm:$0xff]
      %v606 = vld [vmem:[%s1 + $0xb90] sm:$0xff]
      %v607 = vld [vmem:[%s1 + $0xb98] sm:$0xff]
      %v608 = vld [vmem:[%s1 + $0xba0] sm:$0xff]
      %v609 = vld [vmem:[%s1 + $0xba8] sm:$0xff]
      %v610 = vld [vmem:[%s1 + $0xbb0] sm:$0xff]
      %v611 = vld [vmem:[%s1 + $0xbb8] sm:$0xff]
      %v612 = vld [vmem:[%s1 + $0xbc0] sm:$0xff]
      %v613 = vld [vmem:[%s1 + $0xbc8] sm:$0xff]
      %v614 = vld [vmem:[%s1 + $0xbd0] sm:$0xff]
      %v615 = vld [vmem:[%s1 + $0xbd8] sm:$0xff]
      %v616 = vld [vmem:[%s1 + $0xbe0] sm:$0xff]
      %v617 = vld [vmem:[%s1 + $0xbe8] sm:$0xff]
      %v618 = vld [vmem:[%s1 + $0xbf0] sm:$0xff]
      %v619 = vld [vmem:[%s1 + $0xbf8] sm:$0xff]
      %v620 = vld [vmem:[%s1 + $0xc00] sm:$0xff]
      %v621 = vld [vmem:[%s1 + $0xc08] sm:$0xff]
      %v622 = vld [vmem:[%s1 + $0xc10] sm:$0xff]
      %v623 = vld [vmem:[%s1 + $0xc18] sm:$0xff]
      %v624 = vld [vmem:[%s1 + $0xc20] sm:$0xff]
      %v625 = vld [vmem:[%s1 + $0xc28] sm:$0xff]
      %v626 = vld [vmem:[%s1 + $0xc30] sm:$0xff]
      %v627 = vld [vmem:[%s1 + $0xc38] sm:$0xff]
      %v628 = vld [vmem:[%s1 + $0xc40] sm:$0xff]
      %v629 = vld [vmem:[%s1 + $0xc48] sm:$0xff]
      %v630 = vld [vmem:[%s1 + $0xc50] sm:$0xff]
      %v631 = vld [vmem:[%s1 + $0xc58] sm:$0xff]
      %v632 = vld [vmem:[%s1 + $0xc60] sm:$0xff]
      %v633 = vld [vmem:[%s1 + $0xc68] sm:$0xff]
      %v634 = vld [vmem:[%s1 + $0xc70] sm:$0xff]
      %v635 = vld [vmem:[%s1 + $0xc78] sm:$0xff]
      %v636 = vld [vmem:[%s1 + $0xc80] sm:$0xff]
      %v637 = vld [vmem:[%s1 + $0xc88] sm:$0xff]
      %v638 = vld [vmem:[%s1 + $0xc90] sm:$0xff]
      %v639 = vld [vmem:[%s1 + $0xc98] sm:$0xff]
      %v640 = vld [vmem:[%s1 + $0xca0] sm:$0xff]
      %v641 = vld [vmem:[%s1 + $0xca8] sm:$0xff]
      %v642 = vld [vmem:[%s1 + $0xcb0] sm:$0xff]
      %v643 = vld [vmem:[%s1 + $0xcb8] sm:$0xff]
      %v644 = vld [vmem:[%s1 + $0xcc0] sm:$0xff]
      %v645 = vld [vmem:[%s1 + $0xcc8] sm:$0xff]
      %v646 = vld [vmem:[%s1 + $0xcd0] sm:$0xff]
      %v647 = vld [vmem:[%s1 + $0xcd8] sm:$0xff]
      %v648 = vld [vmem:[%s1 + $0xce0] sm:$0xff]
      %v649 = vld [vmem:[%s1 + $0xce8] sm:$0xff]
      %v650 = vld [vmem:[%s1 + $0xcf0] sm:$0xff]
      %v651 = vld [vmem:[%s1 + $0xcf8] sm:$0xff]
      %v652 = vld [vmem:[%s1 + $0xd00] sm:$0xff]
      %v653 = vld [vmem:[%s1 + $0xd08] sm:$0xff]
      %v654 = vld [vmem:[%s1 + $0xd10] sm:$0xff]
      %v655 = vld [vmem:[%s1 + $0xd18] sm:$0xff]
      %v656 = vld [vmem:[%s1 + $0xd20] sm:$0xff]
      %v657 = vld [vmem:[%s1 + $0xd28] sm:$0xff]
      %v658 = vld [vmem:[%s1 + $0xd30] sm:$0xff]
      %v659 = vld [vmem:[%s1 + $0xd38] sm:$0xff]
      %v660 = vld [vmem:[%s1 + $0xd40] sm:$0xff]
      %v661 = vld [vmem:[%s1 + $0xd48] sm:$0xff]
      %v662 = vld [vmem:[%s1 + $0xd50] sm:$0xff]
      %v663 = vld [vmem:[%s1 + $0xd58] sm:$0xff]
      %v664 = vld [vmem:[%s1 + $0xd60] sm:$0xff]
      %v665 = vld [vmem:[%s1 + $0xd68] sm:$0xff]
      %v666 = vld [vmem:[%s1 + $0xd70] sm:$0xff]
      %v667 = vld [vmem:[%s1 + $0xd78] sm:$0xff]
      %v668 = vld [vmem:[%s1 + $0xd80] sm:$0xff]
      %v669 = vld [vmem:[%s1 + $0xd88] sm:$0xff]
      %v670 = vld [vmem:[%s1 + $0xd90] sm:$0xff]
      %v671 = vld [vmem:[%s1 + $0xd98] sm:$0xff]
      %v672 = vld [vmem:[%s1 + $0xda0] sm:$0xff]
      %v673 = vld [vmem:[%s1 + $0xda8] sm:$0xff]
      %v674 = vld [vmem:[%s1 + $0xdb0] sm:$0xff]
      %v675 = vld [vmem:[%s1 + $0xdb8] sm:$0xff]
      %v676 = vld [vmem:[%s1 + $0xdc0] sm:$0xff]
      %v677 = vld [vmem:[%s1 + $0xdc8] sm:$0xff]
      %v678 = vld [vmem:[%s1 + $0xdd0] sm:$0xff]
      %v679 = vld [vmem:[%s1 + $0xdd8] sm:$0xff]
      %v680 = vld [vmem:[%s1 + $0xde0] sm:$0xff]
      %v681 = vld [vmem:[%s1 + $0xde8] sm:$0xff]
      %v682 = vld [vmem:[%s1 + $0xdf0] sm:$0xff]
      %v683 = vld [vmem:[%s1 + $0xdf8] sm:$0xff]
      %v684 = vld [vmem:[%s1 + $0xe00] sm:$0xff]
      %v685 = vld [vmem:[%s1 + $0xe08] sm:$0xff]
      %v686 = vld [vmem:[%s1 + $0xe10] sm:$0xff]
      %v687 = vld [vmem:[%s1 + $0xe18] sm:$0xff]
      %v688 = vld [vmem:[%s1 + $0xe20] sm:$0xff]
      %v689 = vld [vmem:[%s1 + $0xe28] sm:$0xff]
      %v690 = vld [vmem:[%s1 + $0xe30] sm:$0xff]
      %v691 = vld [vmem:[%s1 + $0xe38] sm:$0xff]
      %v692 = vld [vmem:[%s1 + $0xe40] sm:$0xff]
      %v693 = vld [vmem:[%s1 + $0xe48] sm:$0xff]
      %v694 = vld [vmem:[%s1 + $0xe50] sm:$0xff]
      %v695 = vld [vmem:[%s1 + $0xe58] sm:$0xff]
      %v696 = vld [vmem:[%s1 + $0xe60] sm:$0xff]
      %v697 = vld [vmem:[%s1 + $0xe68] sm:$0xff]
      %v698 = vld [vmem:[%s1 + $0xe70] sm:$0xff]
      %v699 = vld [vmem:[%s1 + $0xe78] sm:$0xff]
      %v700 = vld [vmem:[%s1 + $0xe80] sm:$0xff]
      %v701 = vld [vmem:[%s1 + $0xe88] sm:$0xff]
      %v702 = vld [vmem:[%s1 + $0xe90] sm:$0xff]
      %v703 = vld [vmem:[%s1 + $0xe98] sm:$0xff]
      %v704 = vld [vmem:[%s1 + $0xea0] sm:$0xff]
      %v705 = vld [vmem:[%s1 + $0xea8] sm:$0xff]
      %v706 = vld [vmem:[%s1 + $0xeb0] sm:$0xff]
      %v707 = vld [vmem:[%s1 + $0xeb8] sm:$0xff]
      %v708 = vld [vmem:[%s1 + $0xec0] sm:$0xff]
      %v709 = vld [vmem:[%s1 + $0xec8] sm:$0xff]
      %v710 = vld [vmem:[%s1 + $0xed0] sm:$0xff]
      %v711 = vld [vmem:[%s1 + $0xed8] sm:$0xff]
      %v712 = vld [vmem:[%s1 + $0xee0] sm:$0xff]
      %v713 = vld [vmem:[%s1 + $0xee8] sm:$0xff]
      %v714 = vld [vmem:[%s1 + $0xef0] sm:$0xff]
      %v715 = vld [vmem:[%s1 + $0xef8] sm:$0xff]
      %v716 = vld [vmem:[%s1 + $0xf00] sm:$0xff]
      %v717 = vld [vmem:[%s1 + $0xf08] sm:$0xff]
      %v718 = vld [vmem:[%s1 + $0xf10] sm:$0xff]
      %v719 = vld [vmem:[%s1 + $0xf18] sm:$0xff]
      %v720 = vld [vmem:[%s1 + $0xf20] sm:$0xff]
      %v721 = vld [vmem:[%s1 + $0xf28] sm:$0xff]
      %v722 = vld [vmem:[%s1 + $0xf30] sm:$0xff]
      %v723 = vld [vmem:[%s1 + $0xf38] sm:$0xff]
      %v724 = vld [vmem:[%s1 + $0xf40] sm:$0xff]
      %v725 = vld [vmem:[%s1 + $0xf48] sm:$0xff]
      %v726 = vld [vmem:[%s1 + $0xf50] sm:$0xff]
      %v727 = vld [vmem:[%s1 + $0xf58] sm:$0xff]
      %v728 = vld [vmem:[%s1 + $0xf60] sm:$0xff]
      %v729 = vld [vmem:[%s1 + $0xf68] sm:$0xff]
      %v730 = vld [vmem:[%s1 + $0xf70] sm:$0xff]
      %v731 = vld [vmem:[%s1 + $0xf78] sm:$0xff]
      %v732 = vld [vmem:[%s1 + $0xf80] sm:$0xff]
      %v733 = vld [vmem:[%s1 + $0xf88] sm:$0xff]
      %v734 = vld [vmem:[%s1 + $0xf90] sm:$0xff]
      %v735 = vld [vmem:[%s1 + $0xf98] sm:$0xff]
      %v736 = vld [vmem:[%s1 + $0xfa0] sm:$0xff]
      %v737 = vld [vmem:[%s1 + $0xfa8] sm:$0xff]
      %v738 = vld [vmem:[%s1 + $0xfb0] sm:$0xff]
      %v739 = vld [vmem:[%s1 + $0xfb8] sm:$0xff]
      %v740 = vld [vmem:[%s1 + $0xfc0] sm:$0xff]
      %v741 = vld [vmem:[%s1 + $0xfc8] sm:$0xff]
      %v742 = vld [vmem:[%s1 + $0xfd0] sm:$0xff]
      %v743 = vld [vmem:[%s1 + $0xfd8] sm:$0xff]
      %v744 = vld [vmem:[%s1 + $0xfe0] sm:$0xff]
      %v745 = vld [vmem:[%s1 + $0xfe8] sm:$0xff]
      %v746 = vld [vmem:[%s1 + $0xff0] sm:$0xff]
      %v747 = vld [vmem:[%s1 + $0xff8] sm:$0xff]
      %s748 = scalar_lea.vmem %s1, 4096
      %v749 = vld [vmem:[%s748] sm:$0xff]
      %v750 = vld [vmem:[%s748 + $0x8] sm:$0xff]
      %v751 = vld [vmem:[%s748 + $0x10] sm:$0xff]
      %v752 = vld [vmem:[%s748 + $0x18] sm:$0xff]
      %v753 = vld [vmem:[%s748 + $0x20] sm:$0xff]
      %v754 = vld [vmem:[%s748 + $0x28] sm:$0xff]
      %v755 = vld [vmem:[%s748 + $0x30] sm:$0xff]
      %v756 = vld [vmem:[%s748 + $0x38] sm:$0xff]
      %v757 = vld [vmem:[%s748 + $0x40] sm:$0xff]
      %v758 = vld [vmem:[%s748 + $0x48] sm:$0xff]
      %v759 = vld [vmem:[%s748 + $0x50] sm:$0xff]
      %v760 = vld [vmem:[%s748 + $0x58] sm:$0xff]
      %v761 = vld [vmem:[%s748 + $0x60] sm:$0xff]
      %v762 = vld [vmem:[%s748 + $0x68] sm:$0xff]
      %v763 = vld [vmem:[%s748 + $0x70] sm:$0xff]
      %v764 = vld [vmem:[%s748 + $0x78] sm:$0xff]
      %v765 = vld [vmem:[%s748 + $0x80] sm:$0xff]
      %v766 = vld [vmem:[%s748 + $0x88] sm:$0xff]
      %v767 = vld [vmem:[%s748 + $0x90] sm:$0xff]
      %v768 = vld [vmem:[%s748 + $0x98] sm:$0xff]
      %v769 = vld [vmem:[%s748 + $0xa0] sm:$0xff]
      %v770 = vld [vmem:[%s748 + $0xa8] sm:$0xff]
      %v771 = vld [vmem:[%s748 + $0xb0] sm:$0xff]
      %v772 = vld [vmem:[%s748 + $0xb8] sm:$0xff]
      %v773 = vld [vmem:[%s748 + $0xc0] sm:$0xff]
      %v774 = vld [vmem:[%s748 + $0xc8] sm:$0xff]
      %v775 = vld [vmem:[%s748 + $0xd0] sm:$0xff]
      %v776 = vld [vmem:[%s748 + $0xd8] sm:$0xff]
      %v777 = vld [vmem:[%s748 + $0xe0] sm:$0xff]
      %v778 = vld [vmem:[%s748 + $0xe8] sm:$0xff]
      %v779 = vld [vmem:[%s748 + $0xf0] sm:$0xff]
      %v780 = vld [vmem:[%s748 + $0xf8] sm:$0xff]
      %v781 = vld [vmem:[%s748 + $0x100] sm:$0xff]
      %v782 = vld [vmem:[%s748 + $0x108] sm:$0xff]
      %v783 = vld [vmem:[%s748 + $0x110] sm:$0xff]
      %v784 = vld [vmem:[%s748 + $0x118] sm:$0xff]
      %v785 = vld [vmem:[%s748 + $0x120] sm:$0xff]
      %v786 = vld [vmem:[%s748 + $0x128] sm:$0xff]
      %v787 = vld [vmem:[%s748 + $0x130] sm:$0xff]
      %v788 = vld [vmem:[%s748 + $0x138] sm:$0xff]
      %v789 = vld [vmem:[%s748 + $0x140] sm:$0xff]
      %v790 = vld [vmem:[%s748 + $0x148] sm:$0xff]
      %v791 = vld [vmem:[%s748 + $0x150] sm:$0xff]
      %v792 = vld [vmem:[%s748 + $0x158] sm:$0xff]
      %v793 = vld [vmem:[%s748 + $0x160] sm:$0xff]
      %v794 = vld [vmem:[%s748 + $0x168] sm:$0xff]
      %v795 = vld [vmem:[%s748 + $0x170] sm:$0xff]
      %v796 = vld [vmem:[%s748 + $0x178] sm:$0xff]
      %v797 = vld [vmem:[%s748 + $0x180] sm:$0xff]
      %v798 = vld [vmem:[%s748 + $0x188] sm:$0xff]
      %v799 = vld [vmem:[%s748 + $0x190] sm:$0xff]
      %v800 = vld [vmem:[%s748 + $0x198] sm:$0xff]
      %v801 = vld [vmem:[%s748 + $0x1a0] sm:$0xff]
      %v802 = vld [vmem:[%s748 + $0x1a8] sm:$0xff]
      %v803 = vld [vmem:[%s748 + $0x1b0] sm:$0xff]
      %v804 = vld [vmem:[%s748 + $0x1b8] sm:$0xff]
      %v805 = vld [vmem:[%s748 + $0x1c0] sm:$0xff]
      %v806 = vld [vmem:[%s748 + $0x1c8] sm:$0xff]
      %v807 = vld [vmem:[%s748 + $0x1d0] sm:$0xff]
      %v808 = vld [vmem:[%s748 + $0x1d8] sm:$0xff]
      %v809 = vld [vmem:[%s748 + $0x1e0] sm:$0xff]
      %v810 = vld [vmem:[%s748 + $0x1e8] sm:$0xff]
      %v811 = vld [vmem:[%s748 + $0x1f0] sm:$0xff]
      %v812 = vld [vmem:[%s748 + $0x1f8] sm:$0xff]
      %v813 = vld [vmem:[%s748 + $0x200] sm:$0xff]
      %v814 = vld [vmem:[%s748 + $0x208] sm:$0xff]
      %v815 = vld [vmem:[%s748 + $0x210] sm:$0xff]
      %v816 = vld [vmem:[%s748 + $0x218] sm:$0xff]
      %v817 = vld [vmem:[%s748 + $0x220] sm:$0xff]
      %v818 = vld [vmem:[%s748 + $0x228] sm:$0xff]
      %v819 = vld [vmem:[%s748 + $0x230] sm:$0xff]
      %v820 = vld [vmem:[%s748 + $0x238] sm:$0xff]
      %v821 = vld [vmem:[%s748 + $0x240] sm:$0xff]
      %v822 = vld [vmem:[%s748 + $0x248] sm:$0xff]
      %v823 = vld [vmem:[%s748 + $0x250] sm:$0xff]
      %v824 = vld [vmem:[%s748 + $0x258] sm:$0xff]
      %v825 = vld [vmem:[%s748 + $0x260] sm:$0xff]
      %v826 = vld [vmem:[%s748 + $0x268] sm:$0xff]
      %v827 = vld [vmem:[%s748 + $0x270] sm:$0xff]
      %v828 = vld [vmem:[%s748 + $0x278] sm:$0xff]
      %v829 = vld [vmem:[%s748 + $0x280] sm:$0xff]
      %v830 = vld [vmem:[%s748 + $0x288] sm:$0xff]
      %v831 = vld [vmem:[%s748 + $0x290] sm:$0xff]
      %v832 = vld [vmem:[%s748 + $0x298] sm:$0xff]
      %v833 = vld [vmem:[%s748 + $0x2a0] sm:$0xff]
      %v834 = vld [vmem:[%s748 + $0x2a8] sm:$0xff]
      %v835 = vld [vmem:[%s748 + $0x2b0] sm:$0xff]
      %v836 = vld [vmem:[%s748 + $0x2b8] sm:$0xff]
      %v837 = vld [vmem:[%s748 + $0x2c0] sm:$0xff]
      %v838 = vld [vmem:[%s748 + $0x2c8] sm:$0xff]
      %v839 = vld [vmem:[%s748 + $0x2d0] sm:$0xff]
      %v840 = vld [vmem:[%s748 + $0x2d8] sm:$0xff]
      %v841 = vld [vmem:[%s748 + $0x2e0] sm:$0xff]
      %v842 = vld [vmem:[%s748 + $0x2e8] sm:$0xff]
      %v843 = vld [vmem:[%s748 + $0x2f0] sm:$0xff]
      %v844 = vld [vmem:[%s748 + $0x2f8] sm:$0xff]
      %v845 = vld [vmem:[%s748 + $0x300] sm:$0xff]
      %v846 = vld [vmem:[%s748 + $0x308] sm:$0xff]
      %v847 = vld [vmem:[%s748 + $0x310] sm:$0xff]
      %v848 = vld [vmem:[%s748 + $0x318] sm:$0xff]
      %v849 = vld [vmem:[%s748 + $0x320] sm:$0xff]
      %v850 = vld [vmem:[%s748 + $0x328] sm:$0xff]
      %v851 = vld [vmem:[%s748 + $0x330] sm:$0xff]
      %v852 = vld [vmem:[%s748 + $0x338] sm:$0xff]
      %v853 = vld [vmem:[%s748 + $0x340] sm:$0xff]
      %v854 = vld [vmem:[%s748 + $0x348] sm:$0xff]
      %v855 = vld [vmem:[%s748 + $0x350] sm:$0xff]
      %v856 = vld [vmem:[%s748 + $0x358] sm:$0xff]
      %v857 = vld [vmem:[%s748 + $0x360] sm:$0xff]
      %v858 = vld [vmem:[%s748 + $0x368] sm:$0xff]
      %v859 = vld [vmem:[%s748 + $0x370] sm:$0xff]
      %v860 = vld [vmem:[%s748 + $0x378] sm:$0xff]
      %v861 = vld [vmem:[%s748 + $0x380] sm:$0xff]
      %v862 = vld [vmem:[%s748 + $0x388] sm:$0xff]
      %v863 = vld [vmem:[%s748 + $0x390] sm:$0xff]
      %v864 = vld [vmem:[%s748 + $0x398] sm:$0xff]
      %v865 = vld [vmem:[%s748 + $0x3a0] sm:$0xff]
      %v866 = vld [vmem:[%s748 + $0x3a8] sm:$0xff]
      %v867 = vld [vmem:[%s748 + $0x3b0] sm:$0xff]
      %v868 = vld [vmem:[%s748 + $0x3b8] sm:$0xff]
      %v869 = vld [vmem:[%s748 + $0x3c0] sm:$0xff]
      %v870 = vld [vmem:[%s748 + $0x3c8] sm:$0xff]
      %v871 = vld [vmem:[%s748 + $0x3d0] sm:$0xff]
      %v872 = vld [vmem:[%s748 + $0x3d8] sm:$0xff]
      %v873 = vld [vmem:[%s748 + $0x3e0] sm:$0xff]
      %v874 = vld [vmem:[%s748 + $0x3e8] sm:$0xff]
      %v875 = vld [vmem:[%s748 + $0x3f0] sm:$0xff]
      %v876 = vld [vmem:[%s748 + $0x3f8] sm:$0xff]
      %v877 = vld [vmem:[%s748 + $0x400] sm:$0xff]
      %v878 = vld [vmem:[%s748 + $0x408] sm:$0xff]
      %v879 = vld [vmem:[%s748 + $0x410] sm:$0xff]
      %v880 = vld [vmem:[%s748 + $0x418] sm:$0xff]
      %v881 = vld [vmem:[%s748 + $0x420] sm:$0xff]
      %v882 = vld [vmem:[%s748 + $0x428] sm:$0xff]
      %v883 = vld [vmem:[%s748 + $0x430] sm:$0xff]
      %v884 = vld [vmem:[%s748 + $0x438] sm:$0xff]
      %v885 = vld [vmem:[%s748 + $0x440] sm:$0xff]
      %v886 = vld [vmem:[%s748 + $0x448] sm:$0xff]
      %v887 = vld [vmem:[%s748 + $0x450] sm:$0xff]
      %v888 = vld [vmem:[%s748 + $0x458] sm:$0xff]
      %v889 = vld [vmem:[%s748 + $0x460] sm:$0xff]
      %v890 = vld [vmem:[%s748 + $0x468] sm:$0xff]
      %v891 = vld [vmem:[%s748 + $0x470] sm:$0xff]
      %v892 = vld [vmem:[%s748 + $0x478] sm:$0xff]
      %v893 = vld [vmem:[%s748 + $0x480] sm:$0xff]
      %v894 = vld [vmem:[%s748 + $0x488] sm:$0xff]
      %v895 = vld [vmem:[%s748 + $0x490] sm:$0xff]
      %v896 = vld [vmem:[%s748 + $0x498] sm:$0xff]
      %v897 = vld [vmem:[%s748 + $0x4a0] sm:$0xff]
      %v898 = vld [vmem:[%s748 + $0x4a8] sm:$0xff]
      %v899 = vld [vmem:[%s748 + $0x4b0] sm:$0xff]
      %v900 = vld [vmem:[%s748 + $0x4b8] sm:$0xff]
      %v901 = vld [vmem:[%s748 + $0x4c0] sm:$0xff]
      %v902 = vld [vmem:[%s748 + $0x4c8] sm:$0xff]
      %v903 = vld [vmem:[%s748 + $0x4d0] sm:$0xff]
      %v904 = vld [vmem:[%s748 + $0x4d8] sm:$0xff]
      %v905 = vld [vmem:[%s748 + $0x4e0] sm:$0xff]
      %v906 = vld [vmem:[%s748 + $0x4e8] sm:$0xff]
      %v907 = vld [vmem:[%s748 + $0x4f0] sm:$0xff]
      %v908 = vld [vmem:[%s748 + $0x4f8] sm:$0xff]
      %v909 = vld [vmem:[%s748 + $0x500] sm:$0xff]
      %v910 = vld [vmem:[%s748 + $0x508] sm:$0xff]
      %v911 = vld [vmem:[%s748 + $0x510] sm:$0xff]
      %v912 = vld [vmem:[%s748 + $0x518] sm:$0xff]
      %v913 = vld [vmem:[%s748 + $0x520] sm:$0xff]
      %v914 = vld [vmem:[%s748 + $0x528] sm:$0xff]
      %v915 = vld [vmem:[%s748 + $0x530] sm:$0xff]
      %v916 = vld [vmem:[%s748 + $0x538] sm:$0xff]
      %v917 = vld [vmem:[%s748 + $0x540] sm:$0xff]
      %v918 = vld [vmem:[%s748 + $0x548] sm:$0xff]
      %v919 = vld [vmem:[%s748 + $0x550] sm:$0xff]
      %v920 = vld [vmem:[%s748 + $0x558] sm:$0xff]
      %v921 = vld [vmem:[%s748 + $0x560] sm:$0xff]
      %v922 = vld [vmem:[%s748 + $0x568] sm:$0xff]
      %v923 = vld [vmem:[%s748 + $0x570] sm:$0xff]
      %v924 = vld [vmem:[%s748 + $0x578] sm:$0xff]
      %v925 = vld [vmem:[%s748 + $0x580] sm:$0xff]
      %v926 = vld [vmem:[%s748 + $0x588] sm:$0xff]
      %v927 = vld [vmem:[%s748 + $0x590] sm:$0xff]
      %v928 = vld [vmem:[%s748 + $0x598] sm:$0xff]
      %v929 = vld [vmem:[%s748 + $0x5a0] sm:$0xff]
      %v930 = vld [vmem:[%s748 + $0x5a8] sm:$0xff]
      %v931 = vld [vmem:[%s748 + $0x5b0] sm:$0xff]
      %v932 = vld [vmem:[%s748 + $0x5b8] sm:$0xff]
      %v933 = vld [vmem:[%s748 + $0x5c0] sm:$0xff]
      %v934 = vld [vmem:[%s748 + $0x5c8] sm:$0xff]
      %v935 = vld [vmem:[%s748 + $0x5d0] sm:$0xff]
      %v936 = vld [vmem:[%s748 + $0x5d8] sm:$0xff]
      %v937 = vld [vmem:[%s748 + $0x5e0] sm:$0xff]
      %v938 = vld [vmem:[%s748 + $0x5e8] sm:$0xff]
      %v939 = vld [vmem:[%s748 + $0x5f0] sm:$0xff]
      %v940 = vld [vmem:[%s748 + $0x5f8] sm:$0xff]
      %v941 = vld [vmem:[%s748 + $0x600] sm:$0xff]
      %v942 = vld [vmem:[%s748 + $0x608] sm:$0xff]
      %v943 = vld [vmem:[%s748 + $0x610] sm:$0xff]
      %v944 = vld [vmem:[%s748 + $0x618] sm:$0xff]
      %v945 = vld [vmem:[%s748 + $0x620] sm:$0xff]
      %v946 = vld [vmem:[%s748 + $0x628] sm:$0xff]
      %v947 = vld [vmem:[%s748 + $0x630] sm:$0xff]
      %v948 = vld [vmem:[%s748 + $0x638] sm:$0xff]
      %v949 = vld [vmem:[%s748 + $0x640] sm:$0xff]
      %v950 = vld [vmem:[%s748 + $0x648] sm:$0xff]
      %v951 = vld [vmem:[%s748 + $0x650] sm:$0xff]
      %v952 = vld [vmem:[%s748 + $0x658] sm:$0xff]
      %v953 = vld [vmem:[%s748 + $0x660] sm:$0xff]
      %v954 = vld [vmem:[%s748 + $0x668] sm:$0xff]
      %v955 = vld [vmem:[%s748 + $0x670] sm:$0xff]
      %v956 = vld [vmem:[%s748 + $0x678] sm:$0xff]
      %v957 = vld [vmem:[%s748 + $0x680] sm:$0xff]
      %v958 = vld [vmem:[%s748 + $0x688] sm:$0xff]
      %v959 = vld [vmem:[%s748 + $0x690] sm:$0xff]
      %v960 = vld [vmem:[%s748 + $0x698] sm:$0xff]
      %v961 = vld [vmem:[%s748 + $0x6a0] sm:$0xff]
      %v962 = vld [vmem:[%s748 + $0x6a8] sm:$0xff]
      %v963 = vld [vmem:[%s748 + $0x6b0] sm:$0xff]
      %v964 = vld [vmem:[%s748 + $0x6b8] sm:$0xff]
      %v965 = vld [vmem:[%s748 + $0x6c0] sm:$0xff]
      %v966 = vld [vmem:[%s748 + $0x6c8] sm:$0xff]
      %v967 = vld [vmem:[%s748 + $0x6d0] sm:$0xff]
      %v968 = vld [vmem:[%s748 + $0x6d8] sm:$0xff]
      %v969 = vld [vmem:[%s748 + $0x6e0] sm:$0xff]
      %v970 = vld [vmem:[%s748 + $0x6e8] sm:$0xff]
      %v971 = vld [vmem:[%s748 + $0x6f0] sm:$0xff]
      %v972 = vld [vmem:[%s748 + $0x6f8] sm:$0xff]
      %v973 = vld [vmem:[%s748 + $0x700] sm:$0xff]
      %v974 = vld [vmem:[%s748 + $0x708] sm:$0xff]
      %v975 = vld [vmem:[%s748 + $0x710] sm:$0xff]
      %v976 = vld [vmem:[%s748 + $0x718] sm:$0xff]
      %v977 = vld [vmem:[%s748 + $0x720] sm:$0xff]
      %v978 = vld [vmem:[%s748 + $0x728] sm:$0xff]
      %v979 = vld [vmem:[%s748 + $0x730] sm:$0xff]
      %v980 = vld [vmem:[%s748 + $0x738] sm:$0xff]
      %v981 = vld [vmem:[%s748 + $0x740] sm:$0xff]
      %v982 = vld [vmem:[%s748 + $0x748] sm:$0xff]
      %v983 = vld [vmem:[%s748 + $0x750] sm:$0xff]
      %v984 = vld [vmem:[%s748 + $0x758] sm:$0xff]
      %v985 = vld [vmem:[%s748 + $0x760] sm:$0xff]
      %v986 = vld [vmem:[%s748 + $0x768] sm:$0xff]
      %v987 = vld [vmem:[%s748 + $0x770] sm:$0xff]
      %v988 = vld [vmem:[%s748 + $0x778] sm:$0xff]
      %v989 = vld [vmem:[%s748 + $0x780] sm:$0xff]
      %v990 = vld [vmem:[%s748 + $0x788] sm:$0xff]
      %v991 = vld [vmem:[%s748 + $0x790] sm:$0xff]
      %v992 = vld [vmem:[%s748 + $0x798] sm:$0xff]
      %v993 = vld [vmem:[%s748 + $0x7a0] sm:$0xff]
      %v994 = vld [vmem:[%s748 + $0x7a8] sm:$0xff]
      %v995 = vld [vmem:[%s748 + $0x7b0] sm:$0xff]
      %v996 = vld [vmem:[%s748 + $0x7b8] sm:$0xff]
      %v997 = vld [vmem:[%s748 + $0x7c0] sm:$0xff]
      %v998 = vld [vmem:[%s748 + $0x7c8] sm:$0xff]
      %v999 = vld [vmem:[%s748 + $0x7d0] sm:$0xff]
      %v1000 = vld [vmem:[%s748 + $0x7d8] sm:$0xff]
      %v1001 = vld [vmem:[%s748 + $0x7e0] sm:$0xff]
      %v1002 = vld [vmem:[%s748 + $0x7e8] sm:$0xff]
      %v1003 = vld [vmem:[%s748 + $0x7f0] sm:$0xff]
      %v1004 = vld [vmem:[%s748 + $0x7f8] sm:$0xff]
      %v1005 = vld [vmem:[%s748 + $0x800] sm:$0xff]
      %v1006 = vld [vmem:[%s748 + $0x808] sm:$0xff]
      %v1007 = vld [vmem:[%s748 + $0x810] sm:$0xff]
      %v1008 = vld [vmem:[%s748 + $0x818] sm:$0xff]
      %v1009 = vld [vmem:[%s748 + $0x820] sm:$0xff]
      %v1010 = vld [vmem:[%s748 + $0x828] sm:$0xff]
      %v1011 = vld [vmem:[%s748 + $0x830] sm:$0xff]
      %v1012 = vld [vmem:[%s748 + $0x838] sm:$0xff]
      %v1013 = vld [vmem:[%s748 + $0x840] sm:$0xff]
      %v1014 = vld [vmem:[%s748 + $0x848] sm:$0xff]
      %v1015 = vld [vmem:[%s748 + $0x850] sm:$0xff]
      %v1016 = vld [vmem:[%s748 + $0x858] sm:$0xff]
      %v1017 = vld [vmem:[%s748 + $0x860] sm:$0xff]
      %v1018 = vld [vmem:[%s748 + $0x868] sm:$0xff]
      %v1019 = vld [vmem:[%s748 + $0x870] sm:$0xff]
      %v1020 = vld [vmem:[%s748 + $0x878] sm:$0xff]
      %v1021 = vld [vmem:[%s748 + $0x880] sm:$0xff]
      %v1022 = vld [vmem:[%s748 + $0x888] sm:$0xff]
      %v1023 = vld [vmem:[%s748 + $0x890] sm:$0xff]
      %v1024 = vld [vmem:[%s748 + $0x898] sm:$0xff]
      %v1025 = vld [vmem:[%s748 + $0x8a0] sm:$0xff]
      %v1026 = vld [vmem:[%s748 + $0x8a8] sm:$0xff]
      %v1027 = vld [vmem:[%s748 + $0x8b0] sm:$0xff]
      %v1028 = vld [vmem:[%s748 + $0x8b8] sm:$0xff]
      %v1029 = vld [vmem:[%s748 + $0x8c0] sm:$0xff]
      %v1030 = vld [vmem:[%s748 + $0x8c8] sm:$0xff]
      %v1031 = vld [vmem:[%s748 + $0x8d0] sm:$0xff]
      %v1032 = vld [vmem:[%s748 + $0x8d8] sm:$0xff]
      %v1033 = vld [vmem:[%s748 + $0x8e0] sm:$0xff]
      %v1034 = vld [vmem:[%s748 + $0x8e8] sm:$0xff]
      %v1035 = vld [vmem:[%s748 + $0x8f0] sm:$0xff]
      %v1036 = vld [vmem:[%s748 + $0x8f8] sm:$0xff]
      %v1037 = vld [vmem:[%s748 + $0x900] sm:$0xff]
      %v1038 = vld [vmem:[%s748 + $0x908] sm:$0xff]
      %v1039 = vld [vmem:[%s748 + $0x910] sm:$0xff]
      %v1040 = vld [vmem:[%s748 + $0x918] sm:$0xff]
      %v1041 = vld [vmem:[%s748 + $0x920] sm:$0xff]
      %v1042 = vld [vmem:[%s748 + $0x928] sm:$0xff]
      %v1043 = vld [vmem:[%s748 + $0x930] sm:$0xff]
      %v1044 = vld [vmem:[%s748 + $0x938] sm:$0xff]
      %v1045 = vld [vmem:[%s748 + $0x940] sm:$0xff]
      %v1046 = vld [vmem:[%s748 + $0x948] sm:$0xff]
      %v1047 = vld [vmem:[%s748 + $0x950] sm:$0xff]
      %v1048 = vld [vmem:[%s748 + $0x958] sm:$0xff]
      %v1049 = vld [vmem:[%s748 + $0x960] sm:$0xff]
      %v1050 = vld [vmem:[%s748 + $0x968] sm:$0xff]
      %v1051 = vld [vmem:[%s748 + $0x970] sm:$0xff]
      %v1052 = vld [vmem:[%s748 + $0x978] sm:$0xff]
      %v1053 = vld [vmem:[%s748 + $0x980] sm:$0xff]
      %v1054 = vld [vmem:[%s748 + $0x988] sm:$0xff]
      %v1055 = vld [vmem:[%s748 + $0x990] sm:$0xff]
      %v1056 = vld [vmem:[%s748 + $0x998] sm:$0xff]
      %v1057 = vld [vmem:[%s748 + $0x9a0] sm:$0xff]
      %v1058 = vld [vmem:[%s748 + $0x9a8] sm:$0xff]
      %v1059 = vld [vmem:[%s748 + $0x9b0] sm:$0xff]
      %v1060 = vld [vmem:[%s748 + $0x9b8] sm:$0xff]
      %v1061 = vld [vmem:[%s748 + $0x9c0] sm:$0xff]
      %v1062 = vld [vmem:[%s748 + $0x9c8] sm:$0xff]
      %v1063 = vld [vmem:[%s748 + $0x9d0] sm:$0xff]
      %v1064 = vld [vmem:[%s748 + $0x9d8] sm:$0xff]
      %v1065 = vld [vmem:[%s748 + $0x9e0] sm:$0xff]
      %v1066 = vld [vmem:[%s748 + $0x9e8] sm:$0xff]
      %v1067 = vld [vmem:[%s748 + $0x9f0] sm:$0xff]
      %v1068 = vld [vmem:[%s748 + $0x9f8] sm:$0xff]
      %v1069 = vld [vmem:[%s748 + $0xa00] sm:$0xff]
      %v1070 = vld [vmem:[%s748 + $0xa08] sm:$0xff]
      %v1071 = vld [vmem:[%s748 + $0xa10] sm:$0xff]
      %v1072 = vld [vmem:[%s748 + $0xa18] sm:$0xff]
      %v1073 = vld [vmem:[%s748 + $0xa20] sm:$0xff]
      %v1074 = vld [vmem:[%s748 + $0xa28] sm:$0xff]
      %v1075 = vld [vmem:[%s748 + $0xa30] sm:$0xff]
      %v1076 = vld [vmem:[%s748 + $0xa38] sm:$0xff]
      %v1077 = vld [vmem:[%s748 + $0xa40] sm:$0xff]
      %v1078 = vld [vmem:[%s748 + $0xa48] sm:$0xff]
      %v1079 = vld [vmem:[%s748 + $0xa50] sm:$0xff]
      %v1080 = vld [vmem:[%s748 + $0xa58] sm:$0xff]
      %v1081 = vld [vmem:[%s748 + $0xa60] sm:$0xff]
      %v1082 = vld [vmem:[%s748 + $0xa68] sm:$0xff]
      %v1083 = vld [vmem:[%s748 + $0xa70] sm:$0xff]
      %v1084 = vld [vmem:[%s748 + $0xa78] sm:$0xff]
      %v1085 = vld [vmem:[%s748 + $0xa80] sm:$0xff]
      %v1086 = vld [vmem:[%s748 + $0xa88] sm:$0xff]
      %v1087 = vld [vmem:[%s748 + $0xa90] sm:$0xff]
      %v1088 = vld [vmem:[%s748 + $0xa98] sm:$0xff]
      %v1089 = vld [vmem:[%s748 + $0xaa0] sm:$0xff]
      %v1090 = vld [vmem:[%s748 + $0xaa8] sm:$0xff]
      %v1091 = vld [vmem:[%s748 + $0xab0] sm:$0xff]
      %v1092 = vld [vmem:[%s748 + $0xab8] sm:$0xff]
      %v1093 = vld [vmem:[%s748 + $0xac0] sm:$0xff]
      %v1094 = vld [vmem:[%s748 + $0xac8] sm:$0xff]
      %v1095 = vld [vmem:[%s748 + $0xad0] sm:$0xff]
      %v1096 = vld [vmem:[%s748 + $0xad8] sm:$0xff]
      %v1097 = vld [vmem:[%s748 + $0xae0] sm:$0xff]
      %v1098 = vld [vmem:[%s748 + $0xae8] sm:$0xff]
      %v1099 = vld [vmem:[%s748 + $0xaf0] sm:$0xff]
      %v1100 = vld [vmem:[%s748 + $0xaf8] sm:$0xff]
      %v1101 = vld [vmem:[%s748 + $0xb00] sm:$0xff]
      %v1102 = vld [vmem:[%s748 + $0xb08] sm:$0xff]
      %v1103 = vld [vmem:[%s748 + $0xb10] sm:$0xff]
      %v1104 = vld [vmem:[%s748 + $0xb18] sm:$0xff]
      %v1105 = vld [vmem:[%s748 + $0xb20] sm:$0xff]
      %v1106 = vld [vmem:[%s748 + $0xb28] sm:$0xff]
      %v1107 = vld [vmem:[%s748 + $0xb30] sm:$0xff]
      %v1108 = vld [vmem:[%s748 + $0xb38] sm:$0xff]
      %v1109 = vld [vmem:[%s748 + $0xb40] sm:$0xff]
      %v1110 = vld [vmem:[%s748 + $0xb48] sm:$0xff]
      %v1111 = vld [vmem:[%s748 + $0xb50] sm:$0xff]
      %v1112 = vld [vmem:[%s748 + $0xb58] sm:$0xff]
      %v1113 = vld [vmem:[%s748 + $0xb60] sm:$0xff]
      %v1114 = vld [vmem:[%s748 + $0xb68] sm:$0xff]
      %v1115 = vld [vmem:[%s748 + $0xb70] sm:$0xff]
      %v1116 = vld [vmem:[%s748 + $0xb78] sm:$0xff]
      %v1117 = vld [vmem:[%s748 + $0xb80] sm:$0xff]
      %v1118 = vld [vmem:[%s748 + $0xb88] sm:$0xff]
      %v1119 = vld [vmem:[%s748 + $0xb90] sm:$0xff]
      %v1120 = vld [vmem:[%s748 + $0xb98] sm:$0xff]
      %v1121 = vld [vmem:[%s748 + $0xba0] sm:$0xff]
      %v1122 = vld [vmem:[%s748 + $0xba8] sm:$0xff]
      %v1123 = vld [vmem:[%s748 + $0xbb0] sm:$0xff]
      %v1124 = vld [vmem:[%s748 + $0xbb8] sm:$0xff]
      %v1125 = vld [vmem:[%s748 + $0xbc0] sm:$0xff]
      %v1126 = vld [vmem:[%s748 + $0xbc8] sm:$0xff]
      %v1127 = vld [vmem:[%s748 + $0xbd0] sm:$0xff]
      %v1128 = vld [vmem:[%s748 + $0xbd8] sm:$0xff]
      %v1129 = vld [vmem:[%s748 + $0xbe0] sm:$0xff]
      %v1130 = vld [vmem:[%s748 + $0xbe8] sm:$0xff]
      %v1131 = vld [vmem:[%s748 + $0xbf0] sm:$0xff]
      %v1132 = vld [vmem:[%s748 + $0xbf8] sm:$0xff]
      %v1133 = vld [vmem:[%s748 + $0xc00] sm:$0xff]
      %v1134 = vld [vmem:[%s748 + $0xc08] sm:$0xff]
      %v1135 = vld [vmem:[%s748 + $0xc10] sm:$0xff]
      %v1136 = vld [vmem:[%s748 + $0xc18] sm:$0xff]
      %v1137 = vld [vmem:[%s748 + $0xc20] sm:$0xff]
      %v1138 = vld [vmem:[%s748 + $0xc28] sm:$0xff]
      %v1139 = vld [vmem:[%s748 + $0xc30] sm:$0xff]
      %v1140 = vld [vmem:[%s748 + $0xc38] sm:$0xff]
      %v1141 = vld [vmem:[%s748 + $0xc40] sm:$0xff]
      %v1142 = vld [vmem:[%s748 + $0xc48] sm:$0xff]
      %v1143 = vld [vmem:[%s748 + $0xc50] sm:$0xff]
      %v1144 = vld [vmem:[%s748 + $0xc58] sm:$0xff]
      %v1145 = vld [vmem:[%s748 + $0xc60] sm:$0xff]
      %v1146 = vld [vmem:[%s748 + $0xc68] sm:$0xff]
      %v1147 = vld [vmem:[%s748 + $0xc70] sm:$0xff]
      %v1148 = vld [vmem:[%s748 + $0xc78] sm:$0xff]
      %v1149 = vld [vmem:[%s748 + $0xc80] sm:$0xff]
      %v1150 = vld [vmem:[%s748 + $0xc88] sm:$0xff]
      %v1151 = vld [vmem:[%s748 + $0xc90] sm:$0xff]
      %v1152 = vld [vmem:[%s748 + $0xc98] sm:$0xff]
      %v1153 = vld [vmem:[%s748 + $0xca0] sm:$0xff]
      %v1154 = vld [vmem:[%s748 + $0xca8] sm:$0xff]
      %v1155 = vld [vmem:[%s748 + $0xcb0] sm:$0xff]
      %v1156 = vld [vmem:[%s748 + $0xcb8] sm:$0xff]
      %v1157 = vld [vmem:[%s748 + $0xcc0] sm:$0xff]
      %v1158 = vld [vmem:[%s748 + $0xcc8] sm:$0xff]
      %v1159 = vld [vmem:[%s748 + $0xcd0] sm:$0xff]
      %v1160 = vld [vmem:[%s748 + $0xcd8] sm:$0xff]
      %v1161 = vld [vmem:[%s748 + $0xce0] sm:$0xff]
      %v1162 = vld [vmem:[%s748 + $0xce8] sm:$0xff]
      %v1163 = vld [vmem:[%s748 + $0xcf0] sm:$0xff]
      %v1164 = vld [vmem:[%s748 + $0xcf8] sm:$0xff]
      %v1165 = vld [vmem:[%s748 + $0xd00] sm:$0xff]
      %v1166 = vld [vmem:[%s748 + $0xd08] sm:$0xff]
      %v1167 = vld [vmem:[%s748 + $0xd10] sm:$0xff]
      %v1168 = vld [vmem:[%s748 + $0xd18] sm:$0xff]
      %v1169 = vld [vmem:[%s748 + $0xd20] sm:$0xff]
      %v1170 = vld [vmem:[%s748 + $0xd28] sm:$0xff]
      %v1171 = vld [vmem:[%s748 + $0xd30] sm:$0xff]
      %v1172 = vld [vmem:[%s748 + $0xd38] sm:$0xff]
      %v1173 = vld [vmem:[%s748 + $0xd40] sm:$0xff]
      %v1174 = vld [vmem:[%s748 + $0xd48] sm:$0xff]
      %v1175 = vld [vmem:[%s748 + $0xd50] sm:$0xff]
      %v1176 = vld [vmem:[%s748 + $0xd58] sm:$0xff]
      %v1177 = vld [vmem:[%s748 + $0xd60] sm:$0xff]
      %v1178 = vld [vmem:[%s748 + $0xd68] sm:$0xff]
      %v1179 = vld [vmem:[%s748 + $0xd70] sm:$0xff]
      %v1180 = vld [vmem:[%s748 + $0xd78] sm:$0xff]
      %v1181 = vld [vmem:[%s748 + $0xd80] sm:$0xff]
      %v1182 = vld [vmem:[%s748 + $0xd88] sm:$0xff]
      %v1183 = vld [vmem:[%s748 + $0xd90] sm:$0xff]
      %v1184 = vld [vmem:[%s748 + $0xd98] sm:$0xff]
      %v1185 = vld [vmem:[%s748 + $0xda0] sm:$0xff]
      %v1186 = vld [vmem:[%s748 + $0xda8] sm:$0xff]
      %v1187 = vld [vmem:[%s748 + $0xdb0] sm:$0xff]
      %v1188 = vld [vmem:[%s748 + $0xdb8] sm:$0xff]
      %v1189 = vld [vmem:[%s748 + $0xdc0] sm:$0xff]
      %v1190 = vld [vmem:[%s748 + $0xdc8] sm:$0xff]
      %v1191 = vld [vmem:[%s748 + $0xdd0] sm:$0xff]
      %v1192 = vld [vmem:[%s748 + $0xdd8] sm:$0xff]
      %v1193 = vld [vmem:[%s748 + $0xde0] sm:$0xff]
      %v1194 = vld [vmem:[%s748 + $0xde8] sm:$0xff]
      %v1195 = vld [vmem:[%s748 + $0xdf0] sm:$0xff]
      %v1196 = vld [vmem:[%s748 + $0xdf8] sm:$0xff]
      %v1197 = vld [vmem:[%s748 + $0xe00] sm:$0xff]
      %v1198 = vld [vmem:[%s748 + $0xe08] sm:$0xff]
      %v1199 = vld [vmem:[%s748 + $0xe10] sm:$0xff]
      %v1200 = vld [vmem:[%s748 + $0xe18] sm:$0xff]
      %v1201 = vld [vmem:[%s748 + $0xe20] sm:$0xff]
      %v1202 = vld [vmem:[%s748 + $0xe28] sm:$0xff]
      %v1203 = vld [vmem:[%s748 + $0xe30] sm:$0xff]
      %v1204 = vld [vmem:[%s748 + $0xe38] sm:$0xff]
      %v1205 = vld [vmem:[%s748 + $0xe40] sm:$0xff]
      %v1206 = vld [vmem:[%s748 + $0xe48] sm:$0xff]
      %v1207 = vld [vmem:[%s748 + $0xe50] sm:$0xff]
      %v1208 = vld [vmem:[%s748 + $0xe58] sm:$0xff]
      %v1209 = vld [vmem:[%s748 + $0xe60] sm:$0xff]
      %v1210 = vld [vmem:[%s748 + $0xe68] sm:$0xff]
      %v1211 = vld [vmem:[%s748 + $0xe70] sm:$0xff]
      %v1212 = vld [vmem:[%s748 + $0xe78] sm:$0xff]
      %v1213 = vld [vmem:[%s748 + $0xe80] sm:$0xff]
      %v1214 = vld [vmem:[%s748 + $0xe88] sm:$0xff]
      %v1215 = vld [vmem:[%s748 + $0xe90] sm:$0xff]
      %v1216 = vld [vmem:[%s748 + $0xe98] sm:$0xff]
      %v1217 = vld [vmem:[%s748 + $0xea0] sm:$0xff]
      %v1218 = vld [vmem:[%s748 + $0xea8] sm:$0xff]
      %v1219 = vld [vmem:[%s748 + $0xeb0] sm:$0xff]
      %v1220 = vld [vmem:[%s748 + $0xeb8] sm:$0xff]
      %v1221 = vld [vmem:[%s748 + $0xec0] sm:$0xff]
      %v1222 = vld [vmem:[%s748 + $0xec8] sm:$0xff]
      %v1223 = vld [vmem:[%s748 + $0xed0] sm:$0xff]
      %v1224 = vld [vmem:[%s748 + $0xed8] sm:$0xff]
      %v1225 = vld [vmem:[%s748 + $0xee0] sm:$0xff]
      %v1226 = vld [vmem:[%s748 + $0xee8] sm:$0xff]
      %v1227 = vld [vmem:[%s748 + $0xef0] sm:$0xff]
      %v1228 = vld [vmem:[%s748 + $0xef8] sm:$0xff]
      %v1229 = vld [vmem:[%s748 + $0xf00] sm:$0xff]
      %v1230 = vld [vmem:[%s748 + $0xf08] sm:$0xff]
      %v1231 = vld [vmem:[%s748 + $0xf10] sm:$0xff]
      %v1232 = vld [vmem:[%s748 + $0xf18] sm:$0xff]
      %v1233 = vld [vmem:[%s748 + $0xf20] sm:$0xff]
      %v1234 = vld [vmem:[%s748 + $0xf28] sm:$0xff]
      %v1235 = vld [vmem:[%s748 + $0xf30] sm:$0xff]
      %v1236 = vld [vmem:[%s748 + $0xf38] sm:$0xff]
      %v1237 = vld [vmem:[%s748 + $0xf40] sm:$0xff]
      %v1238 = vld [vmem:[%s748 + $0xf48] sm:$0xff]
      %v1239 = vld [vmem:[%s748 + $0xf50] sm:$0xff]
      %v1240 = vld [vmem:[%s748 + $0xf58] sm:$0xff]
      %v1241 = vld [vmem:[%s748 + $0xf60] sm:$0xff]
      %v1242 = vld [vmem:[%s748 + $0xf68] sm:$0xff]
      %v1243 = vld [vmem:[%s748 + $0xf70] sm:$0xff]
      %v1244 = vld [vmem:[%s748 + $0xf78] sm:$0xff]
      %v1245 = vld [vmem:[%s748 + $0xf80] sm:$0xff]
      %v1246 = vld [vmem:[%s748 + $0xf88] sm:$0xff]
      %v1247 = vld [vmem:[%s748 + $0xf90] sm:$0xff]
      %v1248 = vld [vmem:[%s748 + $0xf98] sm:$0xff]
      %v1249 = vld [vmem:[%s748 + $0xfa0] sm:$0xff]
      %v1250 = vld [vmem:[%s748 + $0xfa8] sm:$0xff]
      %v1251 = vld [vmem:[%s748 + $0xfb0] sm:$0xff]
      %v1252 = vld [vmem:[%s748 + $0xfb8] sm:$0xff]
      %v1253 = vld [vmem:[%s748 + $0xfc0] sm:$0xff]
      %v1254 = vld [vmem:[%s748 + $0xfc8] sm:$0xff]
      %v1255 = vld [vmem:[%s748 + $0xfd0] sm:$0xff]
      %v1256 = vld [vmem:[%s748 + $0xfd8] sm:$0xff]
      %v1257 = vld [vmem:[%s748 + $0xfe0] sm:$0xff]
      %v1258 = vld [vmem:[%s748 + $0xfe8] sm:$0xff]
      %v1259 = vld [vmem:[%s748 + $0xff0] sm:$0xff]
      %v1260 = vld [vmem:[%s748 + $0xff8] sm:$0xff]
      %v1277 = vunpack.c.l.b16 %v220
      %v1278 = vunpack.c.h.b16 %v220
      %v1279 = vunpack.c.l.b16 %v221
      %v1280 = vunpack.c.h.b16 %v221
      %v1281 = vunpack.c.l.b16 %v222
      %v1282 = vunpack.c.h.b16 %v222
      %v1283 = vunpack.c.l.b16 %v223
      %v1284 = vunpack.c.h.b16 %v223
      %v1285 = vunpack.c.l.b16 %v224
      %v1286 = vunpack.c.h.b16 %v224
      %v1287 = vunpack.c.l.b16 %v225
      %v1288 = vunpack.c.h.b16 %v225
      %v1289 = vunpack.c.l.b16 %v226
      %v1290 = vunpack.c.h.b16 %v226
      %v1291 = vunpack.c.l.b16 %v227
      %v1292 = vunpack.c.h.b16 %v227
      %v1293 = vunpack.c.l.b16 %v228
      %v1294 = vunpack.c.h.b16 %v228
      %v1295 = vunpack.c.l.b16 %v229
      %v1296 = vunpack.c.h.b16 %v229
      %v1297 = vunpack.c.l.b16 %v230
      %v1298 = vunpack.c.h.b16 %v230
      %v1299 = vunpack.c.l.b16 %v231
      %v1300 = vunpack.c.h.b16 %v231
      %v1301 = vunpack.c.l.b16 %v232
      %v1302 = vunpack.c.h.b16 %v232
      %v1303 = vunpack.c.l.b16 %v233
      %v1304 = vunpack.c.h.b16 %v233
      %v1305 = vunpack.c.l.b16 %v234
      %v1306 = vunpack.c.h.b16 %v234
      %v1307 = vunpack.c.l.b16 %v235
      %v1308 = vunpack.c.h.b16 %v235
      %v1309 = vpack.c.b16 %v1293, %v1277
      %v1310 = vpack.c.b16 %v1294, %v1278
      %v1311 = vpack.c.b16 %v1295, %v1279
      %v1312 = vpack.c.b16 %v1296, %v1280
      %v1313 = vpack.c.b16 %v1297, %v1281
      %v1314 = vpack.c.b16 %v1298, %v1282
      %v1315 = vpack.c.b16 %v1299, %v1283
      %v1316 = vpack.c.b16 %v1300, %v1284
      %v1317 = vpack.c.b16 %v1301, %v1285
      %v1318 = vpack.c.b16 %v1302, %v1286
      %v1319 = vpack.c.b16 %v1303, %v1287
      %v1320 = vpack.c.b16 %v1304, %v1288
      %v1321 = vpack.c.b16 %v1305, %v1289
      %v1322 = vpack.c.b16 %v1306, %v1290
      %v1323 = vpack.c.b16 %v1307, %v1291
      %v1324 = vpack.c.b16 %v1308, %v1292
      %v1326 = vshrl.u32 %v1309, 16
      %v1328 = vshll.u32 %v1309, 16
      %v1330 = vrot.slane %v1328, 1
      %v1331 = vor.u32 %v1326, %v1330
      %v1333 = vshrl.u32 %v1310, 16
      %v1335 = vshll.u32 %v1310, 16
      %v1337 = vrot.slane %v1335, 1
      %v1338 = vor.u32 %v1333, %v1337
      %v1340 = vshrl.u32 %v1311, 16
      %v1342 = vshll.u32 %v1311, 16
      %v1344 = vrot.slane %v1342, 1
      %v1345 = vor.u32 %v1340, %v1344
      %v1347 = vshrl.u32 %v1312, 16
      %v1349 = vshll.u32 %v1312, 16
      %v1351 = vrot.slane %v1349, 1
      %v1352 = vor.u32 %v1347, %v1351
      %v1354 = vshrl.u32 %v1313, 16
      %v1356 = vshll.u32 %v1313, 16
      %v1358 = vrot.slane %v1356, 1
      %v1359 = vor.u32 %v1354, %v1358
      %v1361 = vshrl.u32 %v1314, 16
      %v1363 = vshll.u32 %v1314, 16
      %v1365 = vrot.slane %v1363, 1
      %v1366 = vor.u32 %v1361, %v1365
      %v1368 = vshrl.u32 %v1315, 16
      %v1370 = vshll.u32 %v1315, 16
      %v1372 = vrot.slane %v1370, 1
      %v1373 = vor.u32 %v1368, %v1372
      %v1375 = vshrl.u32 %v1316, 16
      %v1377 = vshll.u32 %v1316, 16
      %v1379 = vrot.slane %v1377, 1
      %v1380 = vor.u32 %v1375, %v1379
      %v1382 = vshrl.u32 %v1317, 16
      %v1384 = vshll.u32 %v1317, 16
      %v1386 = vrot.slane %v1384, 1
      %v1387 = vor.u32 %v1382, %v1386
      %v1389 = vshrl.u32 %v1318, 16
      %v1391 = vshll.u32 %v1318, 16
      %v1393 = vrot.slane %v1391, 1
      %v1394 = vor.u32 %v1389, %v1393
      %v1396 = vshrl.u32 %v1319, 16
      %v1398 = vshll.u32 %v1319, 16
      %v1400 = vrot.slane %v1398, 1
      %v1401 = vor.u32 %v1396, %v1400
      %v1403 = vshrl.u32 %v1320, 16
      %v1405 = vshll.u32 %v1320, 16
      %v1407 = vrot.slane %v1405, 1
      %v1408 = vor.u32 %v1403, %v1407
      %v1410 = vshrl.u32 %v1321, 16
      %v1412 = vshll.u32 %v1321, 16
      %v1414 = vrot.slane %v1412, 1
      %v1415 = vor.u32 %v1410, %v1414
      %v1417 = vshrl.u32 %v1322, 16
      %v1419 = vshll.u32 %v1322, 16
      %v1421 = vrot.slane %v1419, 1
      %v1422 = vor.u32 %v1417, %v1421
      %v1424 = vshrl.u32 %v1323, 16
      %v1426 = vshll.u32 %v1323, 16
      %v1428 = vrot.slane %v1426, 1
      %v1429 = vor.u32 %v1424, %v1428
      %v1431 = vshrl.u32 %v1324, 16
      %v1433 = vshll.u32 %v1324, 16
      %v1435 = vrot.slane %v1433, 1
      %v1436 = vor.u32 %v1431, %v1435
      %v1965 = vunpack.c.l.b16 %v749
      %v1966 = vunpack.c.h.b16 %v749
      %v1967 = vunpack.c.l.b16 %v750
      %v1968 = vunpack.c.h.b16 %v750
      %v1969 = vunpack.c.l.b16 %v751
      %v1970 = vunpack.c.h.b16 %v751
      %v1971 = vunpack.c.l.b16 %v752
      %v1972 = vunpack.c.h.b16 %v752
      %v1973 = vunpack.c.l.b16 %v753
      %v1974 = vunpack.c.h.b16 %v753
      %v1975 = vunpack.c.l.b16 %v754
      %v1976 = vunpack.c.h.b16 %v754
      %v1977 = vunpack.c.l.b16 %v755
      %v1978 = vunpack.c.h.b16 %v755
      %v1979 = vunpack.c.l.b16 %v756
      %v1980 = vunpack.c.h.b16 %v756
      %v1981 = vunpack.c.l.b16 %v757
      %v1982 = vunpack.c.h.b16 %v757
      %v1983 = vunpack.c.l.b16 %v758
      %v1984 = vunpack.c.h.b16 %v758
      %v1985 = vunpack.c.l.b16 %v759
      %v1986 = vunpack.c.h.b16 %v759
      %v1987 = vunpack.c.l.b16 %v760
      %v1988 = vunpack.c.h.b16 %v760
      %v1989 = vunpack.c.l.b16 %v761
      %v1990 = vunpack.c.h.b16 %v761
      %v1991 = vunpack.c.l.b16 %v762
      %v1992 = vunpack.c.h.b16 %v762
      %v1993 = vunpack.c.l.b16 %v763
      %v1994 = vunpack.c.h.b16 %v763
      %v1995 = vunpack.c.l.b16 %v764
      %v1996 = vunpack.c.h.b16 %v764
      %v1997 = vunpack.c.l.b16 %v765
      %v1998 = vunpack.c.h.b16 %v765
      %v1999 = vunpack.c.l.b16 %v766
      %v2000 = vunpack.c.h.b16 %v766
      %v2001 = vunpack.c.l.b16 %v767
      %v2002 = vunpack.c.h.b16 %v767
      %v2003 = vunpack.c.l.b16 %v768
      %v2004 = vunpack.c.h.b16 %v768
      %v2005 = vunpack.c.l.b16 %v769
      %v2006 = vunpack.c.h.b16 %v769
      %v2007 = vunpack.c.l.b16 %v770
      %v2008 = vunpack.c.h.b16 %v770
      %v2009 = vunpack.c.l.b16 %v771
      %v2010 = vunpack.c.h.b16 %v771
      %v2011 = vunpack.c.l.b16 %v772
      %v2012 = vunpack.c.h.b16 %v772
      %v2013 = vunpack.c.l.b16 %v773
      %v2014 = vunpack.c.h.b16 %v773
      %v2015 = vunpack.c.l.b16 %v774
      %v2016 = vunpack.c.h.b16 %v774
      %v2017 = vunpack.c.l.b16 %v775
      %v2018 = vunpack.c.h.b16 %v775
      %v2019 = vunpack.c.l.b16 %v776
      %v2020 = vunpack.c.h.b16 %v776
      %v2021 = vunpack.c.l.b16 %v777
      %v2022 = vunpack.c.h.b16 %v777
      %v2023 = vunpack.c.l.b16 %v778
      %v2024 = vunpack.c.h.b16 %v778
      %v2025 = vunpack.c.l.b16 %v779
      %v2026 = vunpack.c.h.b16 %v779
      %v2027 = vunpack.c.l.b16 %v780
      %v2028 = vunpack.c.h.b16 %v780
      %v2029 = vunpack.c.l.b16 %v781
      %v2030 = vunpack.c.h.b16 %v781
      %v2031 = vunpack.c.l.b16 %v782
      %v2032 = vunpack.c.h.b16 %v782
      %v2033 = vunpack.c.l.b16 %v783
      %v2034 = vunpack.c.h.b16 %v783
      %v2035 = vunpack.c.l.b16 %v784
      %v2036 = vunpack.c.h.b16 %v784
      %v2037 = vunpack.c.l.b16 %v785
      %v2038 = vunpack.c.h.b16 %v785
      %v2039 = vunpack.c.l.b16 %v786
      %v2040 = vunpack.c.h.b16 %v786
      %v2041 = vunpack.c.l.b16 %v787
      %v2042 = vunpack.c.h.b16 %v787
      %v2043 = vunpack.c.l.b16 %v788
      %v2044 = vunpack.c.h.b16 %v788
      %v2045 = vunpack.c.l.b16 %v789
      %v2046 = vunpack.c.h.b16 %v789
      %v2047 = vunpack.c.l.b16 %v790
      %v2048 = vunpack.c.h.b16 %v790
      %v2049 = vunpack.c.l.b16 %v791
      %v2050 = vunpack.c.h.b16 %v791
      %v2051 = vunpack.c.l.b16 %v792
      %v2052 = vunpack.c.h.b16 %v792
      %v2053 = vunpack.c.l.b16 %v793
      %v2054 = vunpack.c.h.b16 %v793
      %v2055 = vunpack.c.l.b16 %v794
      %v2056 = vunpack.c.h.b16 %v794
      %v2057 = vunpack.c.l.b16 %v795
      %v2058 = vunpack.c.h.b16 %v795
      %v2059 = vunpack.c.l.b16 %v796
      %v2060 = vunpack.c.h.b16 %v796
      %v2061 = vunpack.c.l.b16 %v797
      %v2062 = vunpack.c.h.b16 %v797
      %v2063 = vunpack.c.l.b16 %v798
      %v2064 = vunpack.c.h.b16 %v798
      %v2065 = vunpack.c.l.b16 %v799
      %v2066 = vunpack.c.h.b16 %v799
      %v2067 = vunpack.c.l.b16 %v800
      %v2068 = vunpack.c.h.b16 %v800
      %v2069 = vunpack.c.l.b16 %v801
      %v2070 = vunpack.c.h.b16 %v801
      %v2071 = vunpack.c.l.b16 %v802
      %v2072 = vunpack.c.h.b16 %v802
      %v2073 = vunpack.c.l.b16 %v803
      %v2074 = vunpack.c.h.b16 %v803
      %v2075 = vunpack.c.l.b16 %v804
      %v2076 = vunpack.c.h.b16 %v804
      %v2077 = vunpack.c.l.b16 %v805
      %v2078 = vunpack.c.h.b16 %v805
      %v2079 = vunpack.c.l.b16 %v806
      %v2080 = vunpack.c.h.b16 %v806
      %v2081 = vunpack.c.l.b16 %v807
      %v2082 = vunpack.c.h.b16 %v807
      %v2083 = vunpack.c.l.b16 %v808
      %v2084 = vunpack.c.h.b16 %v808
      %v2085 = vunpack.c.l.b16 %v809
      %v2086 = vunpack.c.h.b16 %v809
      %v2087 = vunpack.c.l.b16 %v810
      %v2088 = vunpack.c.h.b16 %v810
      %v2089 = vunpack.c.l.b16 %v811
      %v2090 = vunpack.c.h.b16 %v811
      %v2091 = vunpack.c.l.b16 %v812
      %v2092 = vunpack.c.h.b16 %v812
      %v2093 = vunpack.c.l.b16 %v813
      %v2094 = vunpack.c.h.b16 %v813
      %v2095 = vunpack.c.l.b16 %v814
      %v2096 = vunpack.c.h.b16 %v814
      %v2097 = vunpack.c.l.b16 %v815
      %v2098 = vunpack.c.h.b16 %v815
      %v2099 = vunpack.c.l.b16 %v816
      %v2100 = vunpack.c.h.b16 %v816
      %v2101 = vunpack.c.l.b16 %v817
      %v2102 = vunpack.c.h.b16 %v817
      %v2103 = vunpack.c.l.b16 %v818
      %v2104 = vunpack.c.h.b16 %v818
      %v2105 = vunpack.c.l.b16 %v819
      %v2106 = vunpack.c.h.b16 %v819
      %v2107 = vunpack.c.l.b16 %v820
      %v2108 = vunpack.c.h.b16 %v820
      %v2109 = vunpack.c.l.b16 %v821
      %v2110 = vunpack.c.h.b16 %v821
      %v2111 = vunpack.c.l.b16 %v822
      %v2112 = vunpack.c.h.b16 %v822
      %v2113 = vunpack.c.l.b16 %v823
      %v2114 = vunpack.c.h.b16 %v823
      %v2115 = vunpack.c.l.b16 %v824
      %v2116 = vunpack.c.h.b16 %v824
      %v2117 = vunpack.c.l.b16 %v825
      %v2118 = vunpack.c.h.b16 %v825
      %v2119 = vunpack.c.l.b16 %v826
      %v2120 = vunpack.c.h.b16 %v826
      %v2121 = vunpack.c.l.b16 %v827
      %v2122 = vunpack.c.h.b16 %v827
      %v2123 = vunpack.c.l.b16 %v828
      %v2124 = vunpack.c.h.b16 %v828
      %v2125 = vunpack.c.l.b16 %v829
      %v2126 = vunpack.c.h.b16 %v829
      %v2127 = vunpack.c.l.b16 %v830
      %v2128 = vunpack.c.h.b16 %v830
      %v2129 = vunpack.c.l.b16 %v831
      %v2130 = vunpack.c.h.b16 %v831
      %v2131 = vunpack.c.l.b16 %v832
      %v2132 = vunpack.c.h.b16 %v832
      %v2133 = vunpack.c.l.b16 %v833
      %v2134 = vunpack.c.h.b16 %v833
      %v2135 = vunpack.c.l.b16 %v834
      %v2136 = vunpack.c.h.b16 %v834
      %v2137 = vunpack.c.l.b16 %v835
      %v2138 = vunpack.c.h.b16 %v835
      %v2139 = vunpack.c.l.b16 %v836
      %v2140 = vunpack.c.h.b16 %v836
      %v2141 = vunpack.c.l.b16 %v837
      %v2142 = vunpack.c.h.b16 %v837
      %v2143 = vunpack.c.l.b16 %v838
      %v2144 = vunpack.c.h.b16 %v838
      %v2145 = vunpack.c.l.b16 %v839
      %v2146 = vunpack.c.h.b16 %v839
      %v2147 = vunpack.c.l.b16 %v840
      %v2148 = vunpack.c.h.b16 %v840
      %v2149 = vunpack.c.l.b16 %v841
      %v2150 = vunpack.c.h.b16 %v841
      %v2151 = vunpack.c.l.b16 %v842
      %v2152 = vunpack.c.h.b16 %v842
      %v2153 = vunpack.c.l.b16 %v843
      %v2154 = vunpack.c.h.b16 %v843
      %v2155 = vunpack.c.l.b16 %v844
      %v2156 = vunpack.c.h.b16 %v844
      %v2157 = vunpack.c.l.b16 %v845
      %v2158 = vunpack.c.h.b16 %v845
      %v2159 = vunpack.c.l.b16 %v846
      %v2160 = vunpack.c.h.b16 %v846
      %v2161 = vunpack.c.l.b16 %v847
      %v2162 = vunpack.c.h.b16 %v847
      %v2163 = vunpack.c.l.b16 %v848
      %v2164 = vunpack.c.h.b16 %v848
      %v2165 = vunpack.c.l.b16 %v849
      %v2166 = vunpack.c.h.b16 %v849
      %v2167 = vunpack.c.l.b16 %v850
      %v2168 = vunpack.c.h.b16 %v850
      %v2169 = vunpack.c.l.b16 %v851
      %v2170 = vunpack.c.h.b16 %v851
      %v2171 = vunpack.c.l.b16 %v852
      %v2172 = vunpack.c.h.b16 %v852
      %v2173 = vunpack.c.l.b16 %v853
      %v2174 = vunpack.c.h.b16 %v853
      %v2175 = vunpack.c.l.b16 %v854
      %v2176 = vunpack.c.h.b16 %v854
      %v2177 = vunpack.c.l.b16 %v855
      %v2178 = vunpack.c.h.b16 %v855
      %v2179 = vunpack.c.l.b16 %v856
      %v2180 = vunpack.c.h.b16 %v856
      %v2181 = vunpack.c.l.b16 %v857
      %v2182 = vunpack.c.h.b16 %v857
      %v2183 = vunpack.c.l.b16 %v858
      %v2184 = vunpack.c.h.b16 %v858
      %v2185 = vunpack.c.l.b16 %v859
      %v2186 = vunpack.c.h.b16 %v859
      %v2187 = vunpack.c.l.b16 %v860
      %v2188 = vunpack.c.h.b16 %v860
      %v2189 = vunpack.c.l.b16 %v861
      %v2190 = vunpack.c.h.b16 %v861
      %v2191 = vunpack.c.l.b16 %v862
      %v2192 = vunpack.c.h.b16 %v862
      %v2193 = vunpack.c.l.b16 %v863
      %v2194 = vunpack.c.h.b16 %v863
      %v2195 = vunpack.c.l.b16 %v864
      %v2196 = vunpack.c.h.b16 %v864
      %v2197 = vunpack.c.l.b16 %v865
      %v2198 = vunpack.c.h.b16 %v865
      %v2199 = vunpack.c.l.b16 %v866
      %v2200 = vunpack.c.h.b16 %v866
      %v2201 = vunpack.c.l.b16 %v867
      %v2202 = vunpack.c.h.b16 %v867
      %v2203 = vunpack.c.l.b16 %v868
      %v2204 = vunpack.c.h.b16 %v868
      %v2205 = vunpack.c.l.b16 %v869
      %v2206 = vunpack.c.h.b16 %v869
      %v2207 = vunpack.c.l.b16 %v870
      %v2208 = vunpack.c.h.b16 %v870
      %v2209 = vunpack.c.l.b16 %v871
      %v2210 = vunpack.c.h.b16 %v871
      %v2211 = vunpack.c.l.b16 %v872
      %v2212 = vunpack.c.h.b16 %v872
      %v2213 = vunpack.c.l.b16 %v873
      %v2214 = vunpack.c.h.b16 %v873
      %v2215 = vunpack.c.l.b16 %v874
      %v2216 = vunpack.c.h.b16 %v874
      %v2217 = vunpack.c.l.b16 %v875
      %v2218 = vunpack.c.h.b16 %v875
      %v2219 = vunpack.c.l.b16 %v876
      %v2220 = vunpack.c.h.b16 %v876
      %v2221 = vunpack.c.l.b16 %v877
      %v2222 = vunpack.c.h.b16 %v877
      %v2223 = vunpack.c.l.b16 %v878
      %v2224 = vunpack.c.h.b16 %v878
      %v2225 = vunpack.c.l.b16 %v879
      %v2226 = vunpack.c.h.b16 %v879
      %v2227 = vunpack.c.l.b16 %v880
      %v2228 = vunpack.c.h.b16 %v880
      %v2229 = vunpack.c.l.b16 %v881
      %v2230 = vunpack.c.h.b16 %v881
      %v2231 = vunpack.c.l.b16 %v882
      %v2232 = vunpack.c.h.b16 %v882
      %v2233 = vunpack.c.l.b16 %v883
      %v2234 = vunpack.c.h.b16 %v883
      %v2235 = vunpack.c.l.b16 %v884
      %v2236 = vunpack.c.h.b16 %v884
      %v2237 = vunpack.c.l.b16 %v885
      %v2238 = vunpack.c.h.b16 %v885
      %v2239 = vunpack.c.l.b16 %v886
      %v2240 = vunpack.c.h.b16 %v886
      %v2241 = vunpack.c.l.b16 %v887
      %v2242 = vunpack.c.h.b16 %v887
      %v2243 = vunpack.c.l.b16 %v888
      %v2244 = vunpack.c.h.b16 %v888
      %v2245 = vunpack.c.l.b16 %v889
      %v2246 = vunpack.c.h.b16 %v889
      %v2247 = vunpack.c.l.b16 %v890
      %v2248 = vunpack.c.h.b16 %v890
      %v2249 = vunpack.c.l.b16 %v891
      %v2250 = vunpack.c.h.b16 %v891
      %v2251 = vunpack.c.l.b16 %v892
      %v2252 = vunpack.c.h.b16 %v892
      %v2253 = vunpack.c.l.b16 %v893
      %v2254 = vunpack.c.h.b16 %v893
      %v2255 = vunpack.c.l.b16 %v894
      %v2256 = vunpack.c.h.b16 %v894
      %v2257 = vunpack.c.l.b16 %v895
      %v2258 = vunpack.c.h.b16 %v895
      %v2259 = vunpack.c.l.b16 %v896
      %v2260 = vunpack.c.h.b16 %v896
      %v2261 = vunpack.c.l.b16 %v897
      %v2262 = vunpack.c.h.b16 %v897
      %v2263 = vunpack.c.l.b16 %v898
      %v2264 = vunpack.c.h.b16 %v898
      %v2265 = vunpack.c.l.b16 %v899
      %v2266 = vunpack.c.h.b16 %v899
      %v2267 = vunpack.c.l.b16 %v900
      %v2268 = vunpack.c.h.b16 %v900
      %v2269 = vunpack.c.l.b16 %v901
      %v2270 = vunpack.c.h.b16 %v901
      %v2271 = vunpack.c.l.b16 %v902
      %v2272 = vunpack.c.h.b16 %v902
      %v2273 = vunpack.c.l.b16 %v903
      %v2274 = vunpack.c.h.b16 %v903
      %v2275 = vunpack.c.l.b16 %v904
      %v2276 = vunpack.c.h.b16 %v904
      %v2277 = vunpack.c.l.b16 %v905
      %v2278 = vunpack.c.h.b16 %v905
      %v2279 = vunpack.c.l.b16 %v906
      %v2280 = vunpack.c.h.b16 %v906
      %v2281 = vunpack.c.l.b16 %v907
      %v2282 = vunpack.c.h.b16 %v907
      %v2283 = vunpack.c.l.b16 %v908
      %v2284 = vunpack.c.h.b16 %v908
      %v2285 = vunpack.c.l.b16 %v909
      %v2286 = vunpack.c.h.b16 %v909
      %v2287 = vunpack.c.l.b16 %v910
      %v2288 = vunpack.c.h.b16 %v910
      %v2289 = vunpack.c.l.b16 %v911
      %v2290 = vunpack.c.h.b16 %v911
      %v2291 = vunpack.c.l.b16 %v912
      %v2292 = vunpack.c.h.b16 %v912
      %v2293 = vunpack.c.l.b16 %v913
      %v2294 = vunpack.c.h.b16 %v913
      %v2295 = vunpack.c.l.b16 %v914
      %v2296 = vunpack.c.h.b16 %v914
      %v2297 = vunpack.c.l.b16 %v915
      %v2298 = vunpack.c.h.b16 %v915
      %v2299 = vunpack.c.l.b16 %v916
      %v2300 = vunpack.c.h.b16 %v916
      %v2301 = vunpack.c.l.b16 %v917
      %v2302 = vunpack.c.h.b16 %v917
      %v2303 = vunpack.c.l.b16 %v918
      %v2304 = vunpack.c.h.b16 %v918
      %v2305 = vunpack.c.l.b16 %v919
      %v2306 = vunpack.c.h.b16 %v919
      %v2307 = vunpack.c.l.b16 %v920
      %v2308 = vunpack.c.h.b16 %v920
      %v2309 = vunpack.c.l.b16 %v921
      %v2310 = vunpack.c.h.b16 %v921
      %v2311 = vunpack.c.l.b16 %v922
      %v2312 = vunpack.c.h.b16 %v922
      %v2313 = vunpack.c.l.b16 %v923
      %v2314 = vunpack.c.h.b16 %v923
      %v2315 = vunpack.c.l.b16 %v924
      %v2316 = vunpack.c.h.b16 %v924
      %v2317 = vunpack.c.l.b16 %v925
      %v2318 = vunpack.c.h.b16 %v925
      %v2319 = vunpack.c.l.b16 %v926
      %v2320 = vunpack.c.h.b16 %v926
      %v2321 = vunpack.c.l.b16 %v927
      %v2322 = vunpack.c.h.b16 %v927
      %v2323 = vunpack.c.l.b16 %v928
      %v2324 = vunpack.c.h.b16 %v928
      %v2325 = vunpack.c.l.b16 %v929
      %v2326 = vunpack.c.h.b16 %v929
      %v2327 = vunpack.c.l.b16 %v930
      %v2328 = vunpack.c.h.b16 %v930
      %v2329 = vunpack.c.l.b16 %v931
      %v2330 = vunpack.c.h.b16 %v931
      %v2331 = vunpack.c.l.b16 %v932
      %v2332 = vunpack.c.h.b16 %v932
      %v2333 = vunpack.c.l.b16 %v933
      %v2334 = vunpack.c.h.b16 %v933
      %v2335 = vunpack.c.l.b16 %v934
      %v2336 = vunpack.c.h.b16 %v934
      %v2337 = vunpack.c.l.b16 %v935
      %v2338 = vunpack.c.h.b16 %v935
      %v2339 = vunpack.c.l.b16 %v936
      %v2340 = vunpack.c.h.b16 %v936
      %v2341 = vunpack.c.l.b16 %v937
      %v2342 = vunpack.c.h.b16 %v937
      %v2343 = vunpack.c.l.b16 %v938
      %v2344 = vunpack.c.h.b16 %v938
      %v2345 = vunpack.c.l.b16 %v939
      %v2346 = vunpack.c.h.b16 %v939
      %v2347 = vunpack.c.l.b16 %v940
      %v2348 = vunpack.c.h.b16 %v940
      %v2349 = vunpack.c.l.b16 %v941
      %v2350 = vunpack.c.h.b16 %v941
      %v2351 = vunpack.c.l.b16 %v942
      %v2352 = vunpack.c.h.b16 %v942
      %v2353 = vunpack.c.l.b16 %v943
      %v2354 = vunpack.c.h.b16 %v943
      %v2355 = vunpack.c.l.b16 %v944
      %v2356 = vunpack.c.h.b16 %v944
      %v2357 = vunpack.c.l.b16 %v945
      %v2358 = vunpack.c.h.b16 %v945
      %v2359 = vunpack.c.l.b16 %v946
      %v2360 = vunpack.c.h.b16 %v946
      %v2361 = vunpack.c.l.b16 %v947
      %v2362 = vunpack.c.h.b16 %v947
      %v2363 = vunpack.c.l.b16 %v948
      %v2364 = vunpack.c.h.b16 %v948
      %v2365 = vunpack.c.l.b16 %v949
      %v2366 = vunpack.c.h.b16 %v949
      %v2367 = vunpack.c.l.b16 %v950
      %v2368 = vunpack.c.h.b16 %v950
      %v2369 = vunpack.c.l.b16 %v951
      %v2370 = vunpack.c.h.b16 %v951
      %v2371 = vunpack.c.l.b16 %v952
      %v2372 = vunpack.c.h.b16 %v952
      %v2373 = vunpack.c.l.b16 %v953
      %v2374 = vunpack.c.h.b16 %v953
      %v2375 = vunpack.c.l.b16 %v954
      %v2376 = vunpack.c.h.b16 %v954
      %v2377 = vunpack.c.l.b16 %v955
      %v2378 = vunpack.c.h.b16 %v955
      %v2379 = vunpack.c.l.b16 %v956
      %v2380 = vunpack.c.h.b16 %v956
      %v2381 = vunpack.c.l.b16 %v957
      %v2382 = vunpack.c.h.b16 %v957
      %v2383 = vunpack.c.l.b16 %v958
      %v2384 = vunpack.c.h.b16 %v958
      %v2385 = vunpack.c.l.b16 %v959
      %v2386 = vunpack.c.h.b16 %v959
      %v2387 = vunpack.c.l.b16 %v960
      %v2388 = vunpack.c.h.b16 %v960
      %v2389 = vunpack.c.l.b16 %v961
      %v2390 = vunpack.c.h.b16 %v961
      %v2391 = vunpack.c.l.b16 %v962
      %v2392 = vunpack.c.h.b16 %v962
      %v2393 = vunpack.c.l.b16 %v963
      %v2394 = vunpack.c.h.b16 %v963
      %v2395 = vunpack.c.l.b16 %v964
      %v2396 = vunpack.c.h.b16 %v964
      %v2397 = vunpack.c.l.b16 %v965
      %v2398 = vunpack.c.h.b16 %v965
      %v2399 = vunpack.c.l.b16 %v966
      %v2400 = vunpack.c.h.b16 %v966
      %v2401 = vunpack.c.l.b16 %v967
      %v2402 = vunpack.c.h.b16 %v967
      %v2403 = vunpack.c.l.b16 %v968
      %v2404 = vunpack.c.h.b16 %v968
      %v2405 = vunpack.c.l.b16 %v969
      %v2406 = vunpack.c.h.b16 %v969
      %v2407 = vunpack.c.l.b16 %v970
      %v2408 = vunpack.c.h.b16 %v970
      %v2409 = vunpack.c.l.b16 %v971
      %v2410 = vunpack.c.h.b16 %v971
      %v2411 = vunpack.c.l.b16 %v972
      %v2412 = vunpack.c.h.b16 %v972
      %v2413 = vunpack.c.l.b16 %v973
      %v2414 = vunpack.c.h.b16 %v973
      %v2415 = vunpack.c.l.b16 %v974
      %v2416 = vunpack.c.h.b16 %v974
      %v2417 = vunpack.c.l.b16 %v975
      %v2418 = vunpack.c.h.b16 %v975
      %v2419 = vunpack.c.l.b16 %v976
      %v2420 = vunpack.c.h.b16 %v976
      %v2421 = vunpack.c.l.b16 %v977
      %v2422 = vunpack.c.h.b16 %v977
      %v2423 = vunpack.c.l.b16 %v978
      %v2424 = vunpack.c.h.b16 %v978
      %v2425 = vunpack.c.l.b16 %v979
      %v2426 = vunpack.c.h.b16 %v979
      %v2427 = vunpack.c.l.b16 %v980
      %v2428 = vunpack.c.h.b16 %v980
      %v2429 = vunpack.c.l.b16 %v981
      %v2430 = vunpack.c.h.b16 %v981
      %v2431 = vunpack.c.l.b16 %v982
      %v2432 = vunpack.c.h.b16 %v982
      %v2433 = vunpack.c.l.b16 %v983
      %v2434 = vunpack.c.h.b16 %v983
      %v2435 = vunpack.c.l.b16 %v984
      %v2436 = vunpack.c.h.b16 %v984
      %v2437 = vunpack.c.l.b16 %v985
      %v2438 = vunpack.c.h.b16 %v985
      %v2439 = vunpack.c.l.b16 %v986
      %v2440 = vunpack.c.h.b16 %v986
      %v2441 = vunpack.c.l.b16 %v987
      %v2442 = vunpack.c.h.b16 %v987
      %v2443 = vunpack.c.l.b16 %v988
      %v2444 = vunpack.c.h.b16 %v988
      %v2445 = vunpack.c.l.b16 %v989
      %v2446 = vunpack.c.h.b16 %v989
      %v2447 = vunpack.c.l.b16 %v990
      %v2448 = vunpack.c.h.b16 %v990
      %v2449 = vunpack.c.l.b16 %v991
      %v2450 = vunpack.c.h.b16 %v991
      %v2451 = vunpack.c.l.b16 %v992
      %v2452 = vunpack.c.h.b16 %v992
      %v2453 = vunpack.c.l.b16 %v993
      %v2454 = vunpack.c.h.b16 %v993
      %v2455 = vunpack.c.l.b16 %v994
      %v2456 = vunpack.c.h.b16 %v994
      %v2457 = vunpack.c.l.b16 %v995
      %v2458 = vunpack.c.h.b16 %v995
      %v2459 = vunpack.c.l.b16 %v996
      %v2460 = vunpack.c.h.b16 %v996
      %v2461 = vunpack.c.l.b16 %v997
      %v2462 = vunpack.c.h.b16 %v997
      %v2463 = vunpack.c.l.b16 %v998
      %v2464 = vunpack.c.h.b16 %v998
      %v2465 = vunpack.c.l.b16 %v999
      %v2466 = vunpack.c.h.b16 %v999
      %v2467 = vunpack.c.l.b16 %v1000
      %v2468 = vunpack.c.h.b16 %v1000
      %v2469 = vunpack.c.l.b16 %v1001
      %v2470 = vunpack.c.h.b16 %v1001
      %v2471 = vunpack.c.l.b16 %v1002
      %v2472 = vunpack.c.h.b16 %v1002
      %v2473 = vunpack.c.l.b16 %v1003
      %v2474 = vunpack.c.h.b16 %v1003
      %v2475 = vunpack.c.l.b16 %v1004
      %v2476 = vunpack.c.h.b16 %v1004
      %v2477 = vunpack.c.l.b16 %v1005
      %v2478 = vunpack.c.h.b16 %v1005
      %v2479 = vunpack.c.l.b16 %v1006
      %v2480 = vunpack.c.h.b16 %v1006
      %v2481 = vunpack.c.l.b16 %v1007
      %v2482 = vunpack.c.h.b16 %v1007
      %v2483 = vunpack.c.l.b16 %v1008
      %v2484 = vunpack.c.h.b16 %v1008
      %v2485 = vunpack.c.l.b16 %v1009
      %v2486 = vunpack.c.h.b16 %v1009
      %v2487 = vunpack.c.l.b16 %v1010
      %v2488 = vunpack.c.h.b16 %v1010
      %v2489 = vunpack.c.l.b16 %v1011
      %v2490 = vunpack.c.h.b16 %v1011
      %v2491 = vunpack.c.l.b16 %v1012
      %v2492 = vunpack.c.h.b16 %v1012
      %v2493 = vunpack.c.l.b16 %v1013
      %v2494 = vunpack.c.h.b16 %v1013
      %v2495 = vunpack.c.l.b16 %v1014
      %v2496 = vunpack.c.h.b16 %v1014
      %v2497 = vunpack.c.l.b16 %v1015
      %v2498 = vunpack.c.h.b16 %v1015
      %v2499 = vunpack.c.l.b16 %v1016
      %v2500 = vunpack.c.h.b16 %v1016
      %v2501 = vunpack.c.l.b16 %v1017
      %v2502 = vunpack.c.h.b16 %v1017
      %v2503 = vunpack.c.l.b16 %v1018
      %v2504 = vunpack.c.h.b16 %v1018
      %v2505 = vunpack.c.l.b16 %v1019
      %v2506 = vunpack.c.h.b16 %v1019
      %v2507 = vunpack.c.l.b16 %v1020
      %v2508 = vunpack.c.h.b16 %v1020
      %v2509 = vunpack.c.l.b16 %v1021
      %v2510 = vunpack.c.h.b16 %v1021
      %v2511 = vunpack.c.l.b16 %v1022
      %v2512 = vunpack.c.h.b16 %v1022
      %v2513 = vunpack.c.l.b16 %v1023
      %v2514 = vunpack.c.h.b16 %v1023
      %v2515 = vunpack.c.l.b16 %v1024
      %v2516 = vunpack.c.h.b16 %v1024
      %v2517 = vunpack.c.l.b16 %v1025
      %v2518 = vunpack.c.h.b16 %v1025
      %v2519 = vunpack.c.l.b16 %v1026
      %v2520 = vunpack.c.h.b16 %v1026
      %v2521 = vunpack.c.l.b16 %v1027
      %v2522 = vunpack.c.h.b16 %v1027
      %v2523 = vunpack.c.l.b16 %v1028
      %v2524 = vunpack.c.h.b16 %v1028
      %v2525 = vunpack.c.l.b16 %v1029
      %v2526 = vunpack.c.h.b16 %v1029
      %v2527 = vunpack.c.l.b16 %v1030
      %v2528 = vunpack.c.h.b16 %v1030
      %v2529 = vunpack.c.l.b16 %v1031
      %v2530 = vunpack.c.h.b16 %v1031
      %v2531 = vunpack.c.l.b16 %v1032
      %v2532 = vunpack.c.h.b16 %v1032
      %v2533 = vunpack.c.l.b16 %v1033
      %v2534 = vunpack.c.h.b16 %v1033
      %v2535 = vunpack.c.l.b16 %v1034
      %v2536 = vunpack.c.h.b16 %v1034
      %v2537 = vunpack.c.l.b16 %v1035
      %v2538 = vunpack.c.h.b16 %v1035
      %v2539 = vunpack.c.l.b16 %v1036
      %v2540 = vunpack.c.h.b16 %v1036
      %v2541 = vunpack.c.l.b16 %v1037
      %v2542 = vunpack.c.h.b16 %v1037
      %v2543 = vunpack.c.l.b16 %v1038
      %v2544 = vunpack.c.h.b16 %v1038
      %v2545 = vunpack.c.l.b16 %v1039
      %v2546 = vunpack.c.h.b16 %v1039
      %v2547 = vunpack.c.l.b16 %v1040
      %v2548 = vunpack.c.h.b16 %v1040
      %v2549 = vunpack.c.l.b16 %v1041
      %v2550 = vunpack.c.h.b16 %v1041
      %v2551 = vunpack.c.l.b16 %v1042
      %v2552 = vunpack.c.h.b16 %v1042
      %v2553 = vunpack.c.l.b16 %v1043
      %v2554 = vunpack.c.h.b16 %v1043
      %v2555 = vunpack.c.l.b16 %v1044
      %v2556 = vunpack.c.h.b16 %v1044
      %v2557 = vunpack.c.l.b16 %v1045
      %v2558 = vunpack.c.h.b16 %v1045
      %v2559 = vunpack.c.l.b16 %v1046
      %v2560 = vunpack.c.h.b16 %v1046
      %v2561 = vunpack.c.l.b16 %v1047
      %v2562 = vunpack.c.h.b16 %v1047
      %v2563 = vunpack.c.l.b16 %v1048
      %v2564 = vunpack.c.h.b16 %v1048
      %v2565 = vunpack.c.l.b16 %v1049
      %v2566 = vunpack.c.h.b16 %v1049
      %v2567 = vunpack.c.l.b16 %v1050
      %v2568 = vunpack.c.h.b16 %v1050
      %v2569 = vunpack.c.l.b16 %v1051
      %v2570 = vunpack.c.h.b16 %v1051
      %v2571 = vunpack.c.l.b16 %v1052
      %v2572 = vunpack.c.h.b16 %v1052
      %v2573 = vunpack.c.l.b16 %v1053
      %v2574 = vunpack.c.h.b16 %v1053
      %v2575 = vunpack.c.l.b16 %v1054
      %v2576 = vunpack.c.h.b16 %v1054
      %v2577 = vunpack.c.l.b16 %v1055
      %v2578 = vunpack.c.h.b16 %v1055
      %v2579 = vunpack.c.l.b16 %v1056
      %v2580 = vunpack.c.h.b16 %v1056
      %v2581 = vunpack.c.l.b16 %v1057
      %v2582 = vunpack.c.h.b16 %v1057
      %v2583 = vunpack.c.l.b16 %v1058
      %v2584 = vunpack.c.h.b16 %v1058
      %v2585 = vunpack.c.l.b16 %v1059
      %v2586 = vunpack.c.h.b16 %v1059
      %v2587 = vunpack.c.l.b16 %v1060
      %v2588 = vunpack.c.h.b16 %v1060
      %v2589 = vunpack.c.l.b16 %v1061
      %v2590 = vunpack.c.h.b16 %v1061
      %v2591 = vunpack.c.l.b16 %v1062
      %v2592 = vunpack.c.h.b16 %v1062
      %v2593 = vunpack.c.l.b16 %v1063
      %v2594 = vunpack.c.h.b16 %v1063
      %v2595 = vunpack.c.l.b16 %v1064
      %v2596 = vunpack.c.h.b16 %v1064
      %v2597 = vunpack.c.l.b16 %v1065
      %v2598 = vunpack.c.h.b16 %v1065
      %v2599 = vunpack.c.l.b16 %v1066
      %v2600 = vunpack.c.h.b16 %v1066
      %v2601 = vunpack.c.l.b16 %v1067
      %v2602 = vunpack.c.h.b16 %v1067
      %v2603 = vunpack.c.l.b16 %v1068
      %v2604 = vunpack.c.h.b16 %v1068
      %v2605 = vunpack.c.l.b16 %v1069
      %v2606 = vunpack.c.h.b16 %v1069
      %v2607 = vunpack.c.l.b16 %v1070
      %v2608 = vunpack.c.h.b16 %v1070
      %v2609 = vunpack.c.l.b16 %v1071
      %v2610 = vunpack.c.h.b16 %v1071
      %v2611 = vunpack.c.l.b16 %v1072
      %v2612 = vunpack.c.h.b16 %v1072
      %v2613 = vunpack.c.l.b16 %v1073
      %v2614 = vunpack.c.h.b16 %v1073
      %v2615 = vunpack.c.l.b16 %v1074
      %v2616 = vunpack.c.h.b16 %v1074
      %v2617 = vunpack.c.l.b16 %v1075
      %v2618 = vunpack.c.h.b16 %v1075
      %v2619 = vunpack.c.l.b16 %v1076
      %v2620 = vunpack.c.h.b16 %v1076
      %v2621 = vunpack.c.l.b16 %v1077
      %v2622 = vunpack.c.h.b16 %v1077
      %v2623 = vunpack.c.l.b16 %v1078
      %v2624 = vunpack.c.h.b16 %v1078
      %v2625 = vunpack.c.l.b16 %v1079
      %v2626 = vunpack.c.h.b16 %v1079
      %v2627 = vunpack.c.l.b16 %v1080
      %v2628 = vunpack.c.h.b16 %v1080
      %v2629 = vunpack.c.l.b16 %v1081
      %v2630 = vunpack.c.h.b16 %v1081
      %v2631 = vunpack.c.l.b16 %v1082
      %v2632 = vunpack.c.h.b16 %v1082
      %v2633 = vunpack.c.l.b16 %v1083
      %v2634 = vunpack.c.h.b16 %v1083
      %v2635 = vunpack.c.l.b16 %v1084
      %v2636 = vunpack.c.h.b16 %v1084
      %v2637 = vunpack.c.l.b16 %v1085
      %v2638 = vunpack.c.h.b16 %v1085
      %v2639 = vunpack.c.l.b16 %v1086
      %v2640 = vunpack.c.h.b16 %v1086
      %v2641 = vunpack.c.l.b16 %v1087
      %v2642 = vunpack.c.h.b16 %v1087
      %v2643 = vunpack.c.l.b16 %v1088
      %v2644 = vunpack.c.h.b16 %v1088
      %v2645 = vunpack.c.l.b16 %v1089
      %v2646 = vunpack.c.h.b16 %v1089
      %v2647 = vunpack.c.l.b16 %v1090
      %v2648 = vunpack.c.h.b16 %v1090
      %v2649 = vunpack.c.l.b16 %v1091
      %v2650 = vunpack.c.h.b16 %v1091
      %v2651 = vunpack.c.l.b16 %v1092
      %v2652 = vunpack.c.h.b16 %v1092
      %v2653 = vunpack.c.l.b16 %v1093
      %v2654 = vunpack.c.h.b16 %v1093
      %v2655 = vunpack.c.l.b16 %v1094
      %v2656 = vunpack.c.h.b16 %v1094
      %v2657 = vunpack.c.l.b16 %v1095
      %v2658 = vunpack.c.h.b16 %v1095
      %v2659 = vunpack.c.l.b16 %v1096
      %v2660 = vunpack.c.h.b16 %v1096
      %v2661 = vunpack.c.l.b16 %v1097
      %v2662 = vunpack.c.h.b16 %v1097
      %v2663 = vunpack.c.l.b16 %v1098
      %v2664 = vunpack.c.h.b16 %v1098
      %v2665 = vunpack.c.l.b16 %v1099
      %v2666 = vunpack.c.h.b16 %v1099
      %v2667 = vunpack.c.l.b16 %v1100
      %v2668 = vunpack.c.h.b16 %v1100
      %v2669 = vunpack.c.l.b16 %v1101
      %v2670 = vunpack.c.h.b16 %v1101
      %v2671 = vunpack.c.l.b16 %v1102
      %v2672 = vunpack.c.h.b16 %v1102
      %v2673 = vunpack.c.l.b16 %v1103
      %v2674 = vunpack.c.h.b16 %v1103
      %v2675 = vunpack.c.l.b16 %v1104
      %v2676 = vunpack.c.h.b16 %v1104
      %v2677 = vunpack.c.l.b16 %v1105
      %v2678 = vunpack.c.h.b16 %v1105
      %v2679 = vunpack.c.l.b16 %v1106
      %v2680 = vunpack.c.h.b16 %v1106
      %v2681 = vunpack.c.l.b16 %v1107
      %v2682 = vunpack.c.h.b16 %v1107
      %v2683 = vunpack.c.l.b16 %v1108
      %v2684 = vunpack.c.h.b16 %v1108
      %v2685 = vunpack.c.l.b16 %v1109
      %v2686 = vunpack.c.h.b16 %v1109
      %v2687 = vunpack.c.l.b16 %v1110
      %v2688 = vunpack.c.h.b16 %v1110
      %v2689 = vunpack.c.l.b16 %v1111
      %v2690 = vunpack.c.h.b16 %v1111
      %v2691 = vunpack.c.l.b16 %v1112
      %v2692 = vunpack.c.h.b16 %v1112
      %v2693 = vunpack.c.l.b16 %v1113
      %v2694 = vunpack.c.h.b16 %v1113
      %v2695 = vunpack.c.l.b16 %v1114
      %v2696 = vunpack.c.h.b16 %v1114
      %v2697 = vunpack.c.l.b16 %v1115
      %v2698 = vunpack.c.h.b16 %v1115
      %v2699 = vunpack.c.l.b16 %v1116
      %v2700 = vunpack.c.h.b16 %v1116
      %v2701 = vunpack.c.l.b16 %v1117
      %v2702 = vunpack.c.h.b16 %v1117
      %v2703 = vunpack.c.l.b16 %v1118
      %v2704 = vunpack.c.h.b16 %v1118
      %v2705 = vunpack.c.l.b16 %v1119
      %v2706 = vunpack.c.h.b16 %v1119
      %v2707 = vunpack.c.l.b16 %v1120
      %v2708 = vunpack.c.h.b16 %v1120
      %v2709 = vunpack.c.l.b16 %v1121
      %v2710 = vunpack.c.h.b16 %v1121
      %v2711 = vunpack.c.l.b16 %v1122
      %v2712 = vunpack.c.h.b16 %v1122
      %v2713 = vunpack.c.l.b16 %v1123
      %v2714 = vunpack.c.h.b16 %v1123
      %v2715 = vunpack.c.l.b16 %v1124
      %v2716 = vunpack.c.h.b16 %v1124
      %v2717 = vunpack.c.l.b16 %v1125
      %v2718 = vunpack.c.h.b16 %v1125
      %v2719 = vunpack.c.l.b16 %v1126
      %v2720 = vunpack.c.h.b16 %v1126
      %v2721 = vunpack.c.l.b16 %v1127
      %v2722 = vunpack.c.h.b16 %v1127
      %v2723 = vunpack.c.l.b16 %v1128
      %v2724 = vunpack.c.h.b16 %v1128
      %v2725 = vunpack.c.l.b16 %v1129
      %v2726 = vunpack.c.h.b16 %v1129
      %v2727 = vunpack.c.l.b16 %v1130
      %v2728 = vunpack.c.h.b16 %v1130
      %v2729 = vunpack.c.l.b16 %v1131
      %v2730 = vunpack.c.h.b16 %v1131
      %v2731 = vunpack.c.l.b16 %v1132
      %v2732 = vunpack.c.h.b16 %v1132
      %v2733 = vunpack.c.l.b16 %v1133
      %v2734 = vunpack.c.h.b16 %v1133
      %v2735 = vunpack.c.l.b16 %v1134
      %v2736 = vunpack.c.h.b16 %v1134
      %v2737 = vunpack.c.l.b16 %v1135
      %v2738 = vunpack.c.h.b16 %v1135
      %v2739 = vunpack.c.l.b16 %v1136
      %v2740 = vunpack.c.h.b16 %v1136
      %v2741 = vunpack.c.l.b16 %v1137
      %v2742 = vunpack.c.h.b16 %v1137
      %v2743 = vunpack.c.l.b16 %v1138
      %v2744 = vunpack.c.h.b16 %v1138
      %v2745 = vunpack.c.l.b16 %v1139
      %v2746 = vunpack.c.h.b16 %v1139
      %v2747 = vunpack.c.l.b16 %v1140
      %v2748 = vunpack.c.h.b16 %v1140
      %v2749 = vunpack.c.l.b16 %v1141
      %v2750 = vunpack.c.h.b16 %v1141
      %v2751 = vunpack.c.l.b16 %v1142
      %v2752 = vunpack.c.h.b16 %v1142
      %v2753 = vunpack.c.l.b16 %v1143
      %v2754 = vunpack.c.h.b16 %v1143
      %v2755 = vunpack.c.l.b16 %v1144
      %v2756 = vunpack.c.h.b16 %v1144
      %v2757 = vunpack.c.l.b16 %v1145
      %v2758 = vunpack.c.h.b16 %v1145
      %v2759 = vunpack.c.l.b16 %v1146
      %v2760 = vunpack.c.h.b16 %v1146
      %v2761 = vunpack.c.l.b16 %v1147
      %v2762 = vunpack.c.h.b16 %v1147
      %v2763 = vunpack.c.l.b16 %v1148
      %v2764 = vunpack.c.h.b16 %v1148
      %v2765 = vunpack.c.l.b16 %v1149
      %v2766 = vunpack.c.h.b16 %v1149
      %v2767 = vunpack.c.l.b16 %v1150
      %v2768 = vunpack.c.h.b16 %v1150
      %v2769 = vunpack.c.l.b16 %v1151
      %v2770 = vunpack.c.h.b16 %v1151
      %v2771 = vunpack.c.l.b16 %v1152
      %v2772 = vunpack.c.h.b16 %v1152
      %v2773 = vunpack.c.l.b16 %v1153
      %v2774 = vunpack.c.h.b16 %v1153
      %v2775 = vunpack.c.l.b16 %v1154
      %v2776 = vunpack.c.h.b16 %v1154
      %v2777 = vunpack.c.l.b16 %v1155
      %v2778 = vunpack.c.h.b16 %v1155
      %v2779 = vunpack.c.l.b16 %v1156
      %v2780 = vunpack.c.h.b16 %v1156
      %v2781 = vunpack.c.l.b16 %v1157
      %v2782 = vunpack.c.h.b16 %v1157
      %v2783 = vunpack.c.l.b16 %v1158
      %v2784 = vunpack.c.h.b16 %v1158
      %v2785 = vunpack.c.l.b16 %v1159
      %v2786 = vunpack.c.h.b16 %v1159
      %v2787 = vunpack.c.l.b16 %v1160
      %v2788 = vunpack.c.h.b16 %v1160
      %v2789 = vunpack.c.l.b16 %v1161
      %v2790 = vunpack.c.h.b16 %v1161
      %v2791 = vunpack.c.l.b16 %v1162
      %v2792 = vunpack.c.h.b16 %v1162
      %v2793 = vunpack.c.l.b16 %v1163
      %v2794 = vunpack.c.h.b16 %v1163
      %v2795 = vunpack.c.l.b16 %v1164
      %v2796 = vunpack.c.h.b16 %v1164
      %v2797 = vunpack.c.l.b16 %v1165
      %v2798 = vunpack.c.h.b16 %v1165
      %v2799 = vunpack.c.l.b16 %v1166
      %v2800 = vunpack.c.h.b16 %v1166
      %v2801 = vunpack.c.l.b16 %v1167
      %v2802 = vunpack.c.h.b16 %v1167
      %v2803 = vunpack.c.l.b16 %v1168
      %v2804 = vunpack.c.h.b16 %v1168
      %v2805 = vunpack.c.l.b16 %v1169
      %v2806 = vunpack.c.h.b16 %v1169
      %v2807 = vunpack.c.l.b16 %v1170
      %v2808 = vunpack.c.h.b16 %v1170
      %v2809 = vunpack.c.l.b16 %v1171
      %v2810 = vunpack.c.h.b16 %v1171
      %v2811 = vunpack.c.l.b16 %v1172
      %v2812 = vunpack.c.h.b16 %v1172
      %v2813 = vunpack.c.l.b16 %v1173
      %v2814 = vunpack.c.h.b16 %v1173
      %v2815 = vunpack.c.l.b16 %v1174
      %v2816 = vunpack.c.h.b16 %v1174
      %v2817 = vunpack.c.l.b16 %v1175
      %v2818 = vunpack.c.h.b16 %v1175
      %v2819 = vunpack.c.l.b16 %v1176
      %v2820 = vunpack.c.h.b16 %v1176
      %v2821 = vunpack.c.l.b16 %v1177
      %v2822 = vunpack.c.h.b16 %v1177
      %v2823 = vunpack.c.l.b16 %v1178
      %v2824 = vunpack.c.h.b16 %v1178
      %v2825 = vunpack.c.l.b16 %v1179
      %v2826 = vunpack.c.h.b16 %v1179
      %v2827 = vunpack.c.l.b16 %v1180
      %v2828 = vunpack.c.h.b16 %v1180
      %v2829 = vunpack.c.l.b16 %v1181
      %v2830 = vunpack.c.h.b16 %v1181
      %v2831 = vunpack.c.l.b16 %v1182
      %v2832 = vunpack.c.h.b16 %v1182
      %v2833 = vunpack.c.l.b16 %v1183
      %v2834 = vunpack.c.h.b16 %v1183
      %v2835 = vunpack.c.l.b16 %v1184
      %v2836 = vunpack.c.h.b16 %v1184
      %v2837 = vunpack.c.l.b16 %v1185
      %v2838 = vunpack.c.h.b16 %v1185
      %v2839 = vunpack.c.l.b16 %v1186
      %v2840 = vunpack.c.h.b16 %v1186
      %v2841 = vunpack.c.l.b16 %v1187
      %v2842 = vunpack.c.h.b16 %v1187
      %v2843 = vunpack.c.l.b16 %v1188
      %v2844 = vunpack.c.h.b16 %v1188
      %v2845 = vunpack.c.l.b16 %v1189
      %v2846 = vunpack.c.h.b16 %v1189
      %v2847 = vunpack.c.l.b16 %v1190
      %v2848 = vunpack.c.h.b16 %v1190
      %v2849 = vunpack.c.l.b16 %v1191
      %v2850 = vunpack.c.h.b16 %v1191
      %v2851 = vunpack.c.l.b16 %v1192
      %v2852 = vunpack.c.h.b16 %v1192
      %v2853 = vunpack.c.l.b16 %v1193
      %v2854 = vunpack.c.h.b16 %v1193
      %v2855 = vunpack.c.l.b16 %v1194
      %v2856 = vunpack.c.h.b16 %v1194
      %v2857 = vunpack.c.l.b16 %v1195
      %v2858 = vunpack.c.h.b16 %v1195
      %v2859 = vunpack.c.l.b16 %v1196
      %v2860 = vunpack.c.h.b16 %v1196
      %v2861 = vunpack.c.l.b16 %v1197
      %v2862 = vunpack.c.h.b16 %v1197
      %v2863 = vunpack.c.l.b16 %v1198
      %v2864 = vunpack.c.h.b16 %v1198
      %v2865 = vunpack.c.l.b16 %v1199
      %v2866 = vunpack.c.h.b16 %v1199
      %v2867 = vunpack.c.l.b16 %v1200
      %v2868 = vunpack.c.h.b16 %v1200
      %v2869 = vunpack.c.l.b16 %v1201
      %v2870 = vunpack.c.h.b16 %v1201
      %v2871 = vunpack.c.l.b16 %v1202
      %v2872 = vunpack.c.h.b16 %v1202
      %v2873 = vunpack.c.l.b16 %v1203
      %v2874 = vunpack.c.h.b16 %v1203
      %v2875 = vunpack.c.l.b16 %v1204
      %v2876 = vunpack.c.h.b16 %v1204
      %v2877 = vunpack.c.l.b16 %v1205
      %v2878 = vunpack.c.h.b16 %v1205
      %v2879 = vunpack.c.l.b16 %v1206
      %v2880 = vunpack.c.h.b16 %v1206
      %v2881 = vunpack.c.l.b16 %v1207
      %v2882 = vunpack.c.h.b16 %v1207
      %v2883 = vunpack.c.l.b16 %v1208
      %v2884 = vunpack.c.h.b16 %v1208
      %v2885 = vunpack.c.l.b16 %v1209
      %v2886 = vunpack.c.h.b16 %v1209
      %v2887 = vunpack.c.l.b16 %v1210
      %v2888 = vunpack.c.h.b16 %v1210
      %v2889 = vunpack.c.l.b16 %v1211
      %v2890 = vunpack.c.h.b16 %v1211
      %v2891 = vunpack.c.l.b16 %v1212
      %v2892 = vunpack.c.h.b16 %v1212
      %v2893 = vunpack.c.l.b16 %v1213
      %v2894 = vunpack.c.h.b16 %v1213
      %v2895 = vunpack.c.l.b16 %v1214
      %v2896 = vunpack.c.h.b16 %v1214
      %v2897 = vunpack.c.l.b16 %v1215
      %v2898 = vunpack.c.h.b16 %v1215
      %v2899 = vunpack.c.l.b16 %v1216
      %v2900 = vunpack.c.h.b16 %v1216
      %v2901 = vunpack.c.l.b16 %v1217
      %v2902 = vunpack.c.h.b16 %v1217
      %v2903 = vunpack.c.l.b16 %v1218
      %v2904 = vunpack.c.h.b16 %v1218
      %v2905 = vunpack.c.l.b16 %v1219
      %v2906 = vunpack.c.h.b16 %v1219
      %v2907 = vunpack.c.l.b16 %v1220
      %v2908 = vunpack.c.h.b16 %v1220
      %v2909 = vunpack.c.l.b16 %v1221
      %v2910 = vunpack.c.h.b16 %v1221
      %v2911 = vunpack.c.l.b16 %v1222
      %v2912 = vunpack.c.h.b16 %v1222
      %v2913 = vunpack.c.l.b16 %v1223
      %v2914 = vunpack.c.h.b16 %v1223
      %v2915 = vunpack.c.l.b16 %v1224
      %v2916 = vunpack.c.h.b16 %v1224
      %v2917 = vunpack.c.l.b16 %v1225
      %v2918 = vunpack.c.h.b16 %v1225
      %v2919 = vunpack.c.l.b16 %v1226
      %v2920 = vunpack.c.h.b16 %v1226
      %v2921 = vunpack.c.l.b16 %v1227
      %v2922 = vunpack.c.h.b16 %v1227
      %v2923 = vunpack.c.l.b16 %v1228
      %v2924 = vunpack.c.h.b16 %v1228
      %v2925 = vunpack.c.l.b16 %v1229
      %v2926 = vunpack.c.h.b16 %v1229
      %v2927 = vunpack.c.l.b16 %v1230
      %v2928 = vunpack.c.h.b16 %v1230
      %v2929 = vunpack.c.l.b16 %v1231
      %v2930 = vunpack.c.h.b16 %v1231
      %v2931 = vunpack.c.l.b16 %v1232
      %v2932 = vunpack.c.h.b16 %v1232
      %v2933 = vunpack.c.l.b16 %v1233
      %v2934 = vunpack.c.h.b16 %v1233
      %v2935 = vunpack.c.l.b16 %v1234
      %v2936 = vunpack.c.h.b16 %v1234
      %v2937 = vunpack.c.l.b16 %v1235
      %v2938 = vunpack.c.h.b16 %v1235
      %v2939 = vunpack.c.l.b16 %v1236
      %v2940 = vunpack.c.h.b16 %v1236
      %v2941 = vunpack.c.l.b16 %v1237
      %v2942 = vunpack.c.h.b16 %v1237
      %v2943 = vunpack.c.l.b16 %v1238
      %v2944 = vunpack.c.h.b16 %v1238
      %v2945 = vunpack.c.l.b16 %v1239
      %v2946 = vunpack.c.h.b16 %v1239
      %v2947 = vunpack.c.l.b16 %v1240
      %v2948 = vunpack.c.h.b16 %v1240
      %v2949 = vunpack.c.l.b16 %v1241
      %v2950 = vunpack.c.h.b16 %v1241
      %v2951 = vunpack.c.l.b16 %v1242
      %v2952 = vunpack.c.h.b16 %v1242
      %v2953 = vunpack.c.l.b16 %v1243
      %v2954 = vunpack.c.h.b16 %v1243
      %v2955 = vunpack.c.l.b16 %v1244
      %v2956 = vunpack.c.h.b16 %v1244
      %v2957 = vunpack.c.l.b16 %v1245
      %v2958 = vunpack.c.h.b16 %v1245
      %v2959 = vunpack.c.l.b16 %v1246
      %v2960 = vunpack.c.h.b16 %v1246
      %v2961 = vunpack.c.l.b16 %v1247
      %v2962 = vunpack.c.h.b16 %v1247
      %v2963 = vunpack.c.l.b16 %v1248
      %v2964 = vunpack.c.h.b16 %v1248
      %v2965 = vunpack.c.l.b16 %v1249
      %v2966 = vunpack.c.h.b16 %v1249
      %v2967 = vunpack.c.l.b16 %v1250
      %v2968 = vunpack.c.h.b16 %v1250
      %v2969 = vunpack.c.l.b16 %v1251
      %v2970 = vunpack.c.h.b16 %v1251
      %v2971 = vunpack.c.l.b16 %v1252
      %v2972 = vunpack.c.h.b16 %v1252
      %v2973 = vunpack.c.l.b16 %v1253
      %v2974 = vunpack.c.h.b16 %v1253
      %v2975 = vunpack.c.l.b16 %v1254
      %v2976 = vunpack.c.h.b16 %v1254
      %v2977 = vunpack.c.l.b16 %v1255
      %v2978 = vunpack.c.h.b16 %v1255
      %v2979 = vunpack.c.l.b16 %v1256
      %v2980 = vunpack.c.h.b16 %v1256
      %v2981 = vunpack.c.l.b16 %v1257
      %v2982 = vunpack.c.h.b16 %v1257
      %v2983 = vunpack.c.l.b16 %v1258
      %v2984 = vunpack.c.h.b16 %v1258
      %v2985 = vunpack.c.l.b16 %v1259
      %v2986 = vunpack.c.h.b16 %v1259
      %v2987 = vunpack.c.l.b16 %v1260
      %v2988 = vunpack.c.h.b16 %v1260
      %v2989 = vpack.c.b16 %v1969, %v1965
      %v2990 = vpack.c.b16 %v1970, %v1966
      %v2991 = vpack.c.b16 %v1971, %v1967
      %v2992 = vpack.c.b16 %v1972, %v1968
      %v2993 = vpack.c.b16 %v1977, %v1973
      %v2994 = vpack.c.b16 %v1978, %v1974
      %v2995 = vpack.c.b16 %v1979, %v1975
      %v2996 = vpack.c.b16 %v1980, %v1976
      %v2997 = vpack.c.b16 %v1985, %v1981
      %v2998 = vpack.c.b16 %v1986, %v1982
      %v2999 = vpack.c.b16 %v1987, %v1983
      %v3000 = vpack.c.b16 %v1988, %v1984
      %v3001 = vpack.c.b16 %v1993, %v1989
      %v3002 = vpack.c.b16 %v1994, %v1990
      %v3003 = vpack.c.b16 %v1995, %v1991
      %v3004 = vpack.c.b16 %v1996, %v1992
      %v3005 = vpack.c.b16 %v2001, %v1997
      %v3006 = vpack.c.b16 %v2002, %v1998
      %v3007 = vpack.c.b16 %v2003, %v1999
      %v3008 = vpack.c.b16 %v2004, %v2000
      %v3009 = vpack.c.b16 %v2009, %v2005
      %v3010 = vpack.c.b16 %v2010, %v2006
      %v3011 = vpack.c.b16 %v2011, %v2007
      %v3012 = vpack.c.b16 %v2012, %v2008
      %v3013 = vpack.c.b16 %v2017, %v2013
      %v3014 = vpack.c.b16 %v2018, %v2014
      %v3015 = vpack.c.b16 %v2019, %v2015
      %v3016 = vpack.c.b16 %v2020, %v2016
      %v3017 = vpack.c.b16 %v2025, %v2021
      %v3018 = vpack.c.b16 %v2026, %v2022
      %v3019 = vpack.c.b16 %v2027, %v2023
      %v3020 = vpack.c.b16 %v2028, %v2024
      %v3021 = vpack.c.b16 %v2033, %v2029
      %v3022 = vpack.c.b16 %v2034, %v2030
      %v3023 = vpack.c.b16 %v2035, %v2031
      %v3024 = vpack.c.b16 %v2036, %v2032
      %v3025 = vpack.c.b16 %v2041, %v2037
      %v3026 = vpack.c.b16 %v2042, %v2038
      %v3027 = vpack.c.b16 %v2043, %v2039
      %v3028 = vpack.c.b16 %v2044, %v2040
      %v3029 = vpack.c.b16 %v2049, %v2045
      %v3030 = vpack.c.b16 %v2050, %v2046
      %v3031 = vpack.c.b16 %v2051, %v2047
      %v3032 = vpack.c.b16 %v2052, %v2048
      %v3033 = vpack.c.b16 %v2057, %v2053
      %v3034 = vpack.c.b16 %v2058, %v2054
      %v3035 = vpack.c.b16 %v2059, %v2055
      %v3036 = vpack.c.b16 %v2060, %v2056
      %v3037 = vpack.c.b16 %v2065, %v2061
      %v3038 = vpack.c.b16 %v2066, %v2062
      %v3039 = vpack.c.b16 %v2067, %v2063
      %v3040 = vpack.c.b16 %v2068, %v2064
      %v3041 = vpack.c.b16 %v2073, %v2069
      %v3042 = vpack.c.b16 %v2074, %v2070
      %v3043 = vpack.c.b16 %v2075, %v2071
      %v3044 = vpack.c.b16 %v2076, %v2072
      %v3045 = vpack.c.b16 %v2081, %v2077
      %v3046 = vpack.c.b16 %v2082, %v2078
      %v3047 = vpack.c.b16 %v2083, %v2079
      %v3048 = vpack.c.b16 %v2084, %v2080
      %v3049 = vpack.c.b16 %v2089, %v2085
      %v3050 = vpack.c.b16 %v2090, %v2086
      %v3051 = vpack.c.b16 %v2091, %v2087
      %v3052 = vpack.c.b16 %v2092, %v2088
      %v3053 = vpack.c.b16 %v2097, %v2093
      %v3054 = vpack.c.b16 %v2098, %v2094
      %v3055 = vpack.c.b16 %v2099, %v2095
      %v3056 = vpack.c.b16 %v2100, %v2096
      %v3057 = vpack.c.b16 %v2105, %v2101
      %v3058 = vpack.c.b16 %v2106, %v2102
      %v3059 = vpack.c.b16 %v2107, %v2103
      %v3060 = vpack.c.b16 %v2108, %v2104
      %v3061 = vpack.c.b16 %v2113, %v2109
      %v3062 = vpack.c.b16 %v2114, %v2110
      %v3063 = vpack.c.b16 %v2115, %v2111
      %v3064 = vpack.c.b16 %v2116, %v2112
      %v3065 = vpack.c.b16 %v2121, %v2117
      %v3066 = vpack.c.b16 %v2122, %v2118
      %v3067 = vpack.c.b16 %v2123, %v2119
      %v3068 = vpack.c.b16 %v2124, %v2120
      %v3069 = vpack.c.b16 %v2129, %v2125
      %v3070 = vpack.c.b16 %v2130, %v2126
      %v3071 = vpack.c.b16 %v2131, %v2127
      %v3072 = vpack.c.b16 %v2132, %v2128
      %v3073 = vpack.c.b16 %v2137, %v2133
      %v3074 = vpack.c.b16 %v2138, %v2134
      %v3075 = vpack.c.b16 %v2139, %v2135
      %v3076 = vpack.c.b16 %v2140, %v2136
      %v3077 = vpack.c.b16 %v2145, %v2141
      %v3078 = vpack.c.b16 %v2146, %v2142
      %v3079 = vpack.c.b16 %v2147, %v2143
      %v3080 = vpack.c.b16 %v2148, %v2144
      %v3081 = vpack.c.b16 %v2153, %v2149
      %v3082 = vpack.c.b16 %v2154, %v2150
      %v3083 = vpack.c.b16 %v2155, %v2151
      %v3084 = vpack.c.b16 %v2156, %v2152
      %v3085 = vpack.c.b16 %v2161, %v2157
      %v3086 = vpack.c.b16 %v2162, %v2158
      %v3087 = vpack.c.b16 %v2163, %v2159
      %v3088 = vpack.c.b16 %v2164, %v2160
      %v3089 = vpack.c.b16 %v2169, %v2165
      %v3090 = vpack.c.b16 %v2170, %v2166
      %v3091 = vpack.c.b16 %v2171, %v2167
      %v3092 = vpack.c.b16 %v2172, %v2168
      %v3093 = vpack.c.b16 %v2177, %v2173
      %v3094 = vpack.c.b16 %v2178, %v2174
      %v3095 = vpack.c.b16 %v2179, %v2175
      %v3096 = vpack.c.b16 %v2180, %v2176
      %v3097 = vpack.c.b16 %v2185, %v2181
      %v3098 = vpack.c.b16 %v2186, %v2182
      %v3099 = vpack.c.b16 %v2187, %v2183
      %v3100 = vpack.c.b16 %v2188, %v2184
      %v3101 = vpack.c.b16 %v2193, %v2189
      %v3102 = vpack.c.b16 %v2194, %v2190
      %v3103 = vpack.c.b16 %v2195, %v2191
      %v3104 = vpack.c.b16 %v2196, %v2192
      %v3105 = vpack.c.b16 %v2201, %v2197
      %v3106 = vpack.c.b16 %v2202, %v2198
      %v3107 = vpack.c.b16 %v2203, %v2199
      %v3108 = vpack.c.b16 %v2204, %v2200
      %v3109 = vpack.c.b16 %v2209, %v2205
      %v3110 = vpack.c.b16 %v2210, %v2206
      %v3111 = vpack.c.b16 %v2211, %v2207
      %v3112 = vpack.c.b16 %v2212, %v2208
      %v3113 = vpack.c.b16 %v2217, %v2213
      %v3114 = vpack.c.b16 %v2218, %v2214
      %v3115 = vpack.c.b16 %v2219, %v2215
      %v3116 = vpack.c.b16 %v2220, %v2216
      %v3117 = vpack.c.b16 %v2225, %v2221
      %v3118 = vpack.c.b16 %v2226, %v2222
      %v3119 = vpack.c.b16 %v2227, %v2223
      %v3120 = vpack.c.b16 %v2228, %v2224
      %v3121 = vpack.c.b16 %v2233, %v2229
      %v3122 = vpack.c.b16 %v2234, %v2230
      %v3123 = vpack.c.b16 %v2235, %v2231
      %v3124 = vpack.c.b16 %v2236, %v2232
      %v3125 = vpack.c.b16 %v2241, %v2237
      %v3126 = vpack.c.b16 %v2242, %v2238
      %v3127 = vpack.c.b16 %v2243, %v2239
      %v3128 = vpack.c.b16 %v2244, %v2240
      %v3129 = vpack.c.b16 %v2249, %v2245
      %v3130 = vpack.c.b16 %v2250, %v2246
      %v3131 = vpack.c.b16 %v2251, %v2247
      %v3132 = vpack.c.b16 %v2252, %v2248
      %v3133 = vpack.c.b16 %v2257, %v2253
      %v3134 = vpack.c.b16 %v2258, %v2254
      %v3135 = vpack.c.b16 %v2259, %v2255
      %v3136 = vpack.c.b16 %v2260, %v2256
      %v3137 = vpack.c.b16 %v2265, %v2261
      %v3138 = vpack.c.b16 %v2266, %v2262
      %v3139 = vpack.c.b16 %v2267, %v2263
      %v3140 = vpack.c.b16 %v2268, %v2264
      %v3141 = vpack.c.b16 %v2273, %v2269
      %v3142 = vpack.c.b16 %v2274, %v2270
      %v3143 = vpack.c.b16 %v2275, %v2271
      %v3144 = vpack.c.b16 %v2276, %v2272
      %v3145 = vpack.c.b16 %v2281, %v2277
      %v3146 = vpack.c.b16 %v2282, %v2278
      %v3147 = vpack.c.b16 %v2283, %v2279
      %v3148 = vpack.c.b16 %v2284, %v2280
      %v3149 = vpack.c.b16 %v2289, %v2285
      %v3150 = vpack.c.b16 %v2290, %v2286
      %v3151 = vpack.c.b16 %v2291, %v2287
      %v3152 = vpack.c.b16 %v2292, %v2288
      %v3153 = vpack.c.b16 %v2297, %v2293
      %v3154 = vpack.c.b16 %v2298, %v2294
      %v3155 = vpack.c.b16 %v2299, %v2295
      %v3156 = vpack.c.b16 %v2300, %v2296
      %v3157 = vpack.c.b16 %v2305, %v2301
      %v3158 = vpack.c.b16 %v2306, %v2302
      %v3159 = vpack.c.b16 %v2307, %v2303
      %v3160 = vpack.c.b16 %v2308, %v2304
      %v3161 = vpack.c.b16 %v2313, %v2309
      %v3162 = vpack.c.b16 %v2314, %v2310
      %v3163 = vpack.c.b16 %v2315, %v2311
      %v3164 = vpack.c.b16 %v2316, %v2312
      %v3165 = vpack.c.b16 %v2321, %v2317
      %v3166 = vpack.c.b16 %v2322, %v2318
      %v3167 = vpack.c.b16 %v2323, %v2319
      %v3168 = vpack.c.b16 %v2324, %v2320
      %v3169 = vpack.c.b16 %v2329, %v2325
      %v3170 = vpack.c.b16 %v2330, %v2326
      %v3171 = vpack.c.b16 %v2331, %v2327
      %v3172 = vpack.c.b16 %v2332, %v2328
      %v3173 = vpack.c.b16 %v2337, %v2333
      %v3174 = vpack.c.b16 %v2338, %v2334
      %v3175 = vpack.c.b16 %v2339, %v2335
      %v3176 = vpack.c.b16 %v2340, %v2336
      %v3177 = vpack.c.b16 %v2345, %v2341
      %v3178 = vpack.c.b16 %v2346, %v2342
      %v3179 = vpack.c.b16 %v2347, %v2343
      %v3180 = vpack.c.b16 %v2348, %v2344
      %v3181 = vpack.c.b16 %v2353, %v2349
      %v3182 = vpack.c.b16 %v2354, %v2350
      %v3183 = vpack.c.b16 %v2355, %v2351
      %v3184 = vpack.c.b16 %v2356, %v2352
      %v3185 = vpack.c.b16 %v2361, %v2357
      %v3186 = vpack.c.b16 %v2362, %v2358
      %v3187 = vpack.c.b16 %v2363, %v2359
      %v3188 = vpack.c.b16 %v2364, %v2360
      %v3189 = vpack.c.b16 %v2369, %v2365
      %v3190 = vpack.c.b16 %v2370, %v2366
      %v3191 = vpack.c.b16 %v2371, %v2367
      %v3192 = vpack.c.b16 %v2372, %v2368
      %v3193 = vpack.c.b16 %v2377, %v2373
      %v3194 = vpack.c.b16 %v2378, %v2374
      %v3195 = vpack.c.b16 %v2379, %v2375
      %v3196 = vpack.c.b16 %v2380, %v2376
      %v3197 = vpack.c.b16 %v2385, %v2381
      %v3198 = vpack.c.b16 %v2386, %v2382
      %v3199 = vpack.c.b16 %v2387, %v2383
      %v3200 = vpack.c.b16 %v2388, %v2384
      %v3201 = vpack.c.b16 %v2393, %v2389
      %v3202 = vpack.c.b16 %v2394, %v2390
      %v3203 = vpack.c.b16 %v2395, %v2391
      %v3204 = vpack.c.b16 %v2396, %v2392
      %v3205 = vpack.c.b16 %v2401, %v2397
      %v3206 = vpack.c.b16 %v2402, %v2398
      %v3207 = vpack.c.b16 %v2403, %v2399
      %v3208 = vpack.c.b16 %v2404, %v2400
      %v3209 = vpack.c.b16 %v2409, %v2405
      %v3210 = vpack.c.b16 %v2410, %v2406
      %v3211 = vpack.c.b16 %v2411, %v2407
      %v3212 = vpack.c.b16 %v2412, %v2408
      %v3213 = vpack.c.b16 %v2417, %v2413
      %v3214 = vpack.c.b16 %v2418, %v2414
      %v3215 = vpack.c.b16 %v2419, %v2415
      %v3216 = vpack.c.b16 %v2420, %v2416
      %v3217 = vpack.c.b16 %v2425, %v2421
      %v3218 = vpack.c.b16 %v2426, %v2422
      %v3219 = vpack.c.b16 %v2427, %v2423
      %v3220 = vpack.c.b16 %v2428, %v2424
      %v3221 = vpack.c.b16 %v2433, %v2429
      %v3222 = vpack.c.b16 %v2434, %v2430
      %v3223 = vpack.c.b16 %v2435, %v2431
      %v3224 = vpack.c.b16 %v2436, %v2432
      %v3225 = vpack.c.b16 %v2441, %v2437
      %v3226 = vpack.c.b16 %v2442, %v2438
      %v3227 = vpack.c.b16 %v2443, %v2439
      %v3228 = vpack.c.b16 %v2444, %v2440
      %v3229 = vpack.c.b16 %v2449, %v2445
      %v3230 = vpack.c.b16 %v2450, %v2446
      %v3231 = vpack.c.b16 %v2451, %v2447
      %v3232 = vpack.c.b16 %v2452, %v2448
      %v3233 = vpack.c.b16 %v2457, %v2453
      %v3234 = vpack.c.b16 %v2458, %v2454
      %v3235 = vpack.c.b16 %v2459, %v2455
      %v3236 = vpack.c.b16 %v2460, %v2456
      %v3237 = vpack.c.b16 %v2465, %v2461
      %v3238 = vpack.c.b16 %v2466, %v2462
      %v3239 = vpack.c.b16 %v2467, %v2463
      %v3240 = vpack.c.b16 %v2468, %v2464
      %v3241 = vpack.c.b16 %v2473, %v2469
      %v3242 = vpack.c.b16 %v2474, %v2470
      %v3243 = vpack.c.b16 %v2475, %v2471
      %v3244 = vpack.c.b16 %v2476, %v2472
      %v3245 = vpack.c.b16 %v2481, %v2477
      %v3246 = vpack.c.b16 %v2482, %v2478
      %v3247 = vpack.c.b16 %v2483, %v2479
      %v3248 = vpack.c.b16 %v2484, %v2480
      %v3249 = vpack.c.b16 %v2489, %v2485
      %v3250 = vpack.c.b16 %v2490, %v2486
      %v3251 = vpack.c.b16 %v2491, %v2487
      %v3252 = vpack.c.b16 %v2492, %v2488
      %v3253 = vpack.c.b16 %v2497, %v2493
      %v3254 = vpack.c.b16 %v2498, %v2494
      %v3255 = vpack.c.b16 %v2499, %v2495
      %v3256 = vpack.c.b16 %v2500, %v2496
      %v3257 = vpack.c.b16 %v2505, %v2501
      %v3258 = vpack.c.b16 %v2506, %v2502
      %v3259 = vpack.c.b16 %v2507, %v2503
      %v3260 = vpack.c.b16 %v2508, %v2504
      %v3261 = vpack.c.b16 %v2513, %v2509
      %v3262 = vpack.c.b16 %v2514, %v2510
      %v3263 = vpack.c.b16 %v2515, %v2511
      %v3264 = vpack.c.b16 %v2516, %v2512
      %v3265 = vpack.c.b16 %v2521, %v2517
      %v3266 = vpack.c.b16 %v2522, %v2518
      %v3267 = vpack.c.b16 %v2523, %v2519
      %v3268 = vpack.c.b16 %v2524, %v2520
      %v3269 = vpack.c.b16 %v2529, %v2525
      %v3270 = vpack.c.b16 %v2530, %v2526
      %v3271 = vpack.c.b16 %v2531, %v2527
      %v3272 = vpack.c.b16 %v2532, %v2528
      %v3273 = vpack.c.b16 %v2537, %v2533
      %v3274 = vpack.c.b16 %v2538, %v2534
      %v3275 = vpack.c.b16 %v2539, %v2535
      %v3276 = vpack.c.b16 %v2540, %v2536
      %v3277 = vpack.c.b16 %v2545, %v2541
      %v3278 = vpack.c.b16 %v2546, %v2542
      %v3279 = vpack.c.b16 %v2547, %v2543
      %v3280 = vpack.c.b16 %v2548, %v2544
      %v3281 = vpack.c.b16 %v2553, %v2549
      %v3282 = vpack.c.b16 %v2554, %v2550
      %v3283 = vpack.c.b16 %v2555, %v2551
      %v3284 = vpack.c.b16 %v2556, %v2552
      %v3285 = vpack.c.b16 %v2561, %v2557
      %v3286 = vpack.c.b16 %v2562, %v2558
      %v3287 = vpack.c.b16 %v2563, %v2559
      %v3288 = vpack.c.b16 %v2564, %v2560
      %v3289 = vpack.c.b16 %v2569, %v2565
      %v3290 = vpack.c.b16 %v2570, %v2566
      %v3291 = vpack.c.b16 %v2571, %v2567
      %v3292 = vpack.c.b16 %v2572, %v2568
      %v3293 = vpack.c.b16 %v2577, %v2573
      %v3294 = vpack.c.b16 %v2578, %v2574
      %v3295 = vpack.c.b16 %v2579, %v2575
      %v3296 = vpack.c.b16 %v2580, %v2576
      %v3297 = vpack.c.b16 %v2585, %v2581
      %v3298 = vpack.c.b16 %v2586, %v2582
      %v3299 = vpack.c.b16 %v2587, %v2583
      %v3300 = vpack.c.b16 %v2588, %v2584
      %v3301 = vpack.c.b16 %v2593, %v2589
      %v3302 = vpack.c.b16 %v2594, %v2590
      %v3303 = vpack.c.b16 %v2595, %v2591
      %v3304 = vpack.c.b16 %v2596, %v2592
      %v3305 = vpack.c.b16 %v2601, %v2597
      %v3306 = vpack.c.b16 %v2602, %v2598
      %v3307 = vpack.c.b16 %v2603, %v2599
      %v3308 = vpack.c.b16 %v2604, %v2600
      %v3309 = vpack.c.b16 %v2609, %v2605
      %v3310 = vpack.c.b16 %v2610, %v2606
      %v3311 = vpack.c.b16 %v2611, %v2607
      %v3312 = vpack.c.b16 %v2612, %v2608
      %v3313 = vpack.c.b16 %v2617, %v2613
      %v3314 = vpack.c.b16 %v2618, %v2614
      %v3315 = vpack.c.b16 %v2619, %v2615
      %v3316 = vpack.c.b16 %v2620, %v2616
      %v3317 = vpack.c.b16 %v2625, %v2621
      %v3318 = vpack.c.b16 %v2626, %v2622
      %v3319 = vpack.c.b16 %v2627, %v2623
      %v3320 = vpack.c.b16 %v2628, %v2624
      %v3321 = vpack.c.b16 %v2633, %v2629
      %v3322 = vpack.c.b16 %v2634, %v2630
      %v3323 = vpack.c.b16 %v2635, %v2631
      %v3324 = vpack.c.b16 %v2636, %v2632
      %v3325 = vpack.c.b16 %v2641, %v2637
      %v3326 = vpack.c.b16 %v2642, %v2638
      %v3327 = vpack.c.b16 %v2643, %v2639
      %v3328 = vpack.c.b16 %v2644, %v2640
      %v3329 = vpack.c.b16 %v2649, %v2645
      %v3330 = vpack.c.b16 %v2650, %v2646
      %v3331 = vpack.c.b16 %v2651, %v2647
      %v3332 = vpack.c.b16 %v2652, %v2648
      %v3333 = vpack.c.b16 %v2657, %v2653
      %v3334 = vpack.c.b16 %v2658, %v2654
      %v3335 = vpack.c.b16 %v2659, %v2655
      %v3336 = vpack.c.b16 %v2660, %v2656
      %v3337 = vpack.c.b16 %v2665, %v2661
      %v3338 = vpack.c.b16 %v2666, %v2662
      %v3339 = vpack.c.b16 %v2667, %v2663
      %v3340 = vpack.c.b16 %v2668, %v2664
      %v3341 = vpack.c.b16 %v2673, %v2669
      %v3342 = vpack.c.b16 %v2674, %v2670
      %v3343 = vpack.c.b16 %v2675, %v2671
      %v3344 = vpack.c.b16 %v2676, %v2672
      %v3345 = vpack.c.b16 %v2681, %v2677
      %v3346 = vpack.c.b16 %v2682, %v2678
      %v3347 = vpack.c.b16 %v2683, %v2679
      %v3348 = vpack.c.b16 %v2684, %v2680
      %v3349 = vpack.c.b16 %v2689, %v2685
      %v3350 = vpack.c.b16 %v2690, %v2686
      %v3351 = vpack.c.b16 %v2691, %v2687
      %v3352 = vpack.c.b16 %v2692, %v2688
      %v3353 = vpack.c.b16 %v2697, %v2693
      %v3354 = vpack.c.b16 %v2698, %v2694
      %v3355 = vpack.c.b16 %v2699, %v2695
      %v3356 = vpack.c.b16 %v2700, %v2696
      %v3357 = vpack.c.b16 %v2705, %v2701
      %v3358 = vpack.c.b16 %v2706, %v2702
      %v3359 = vpack.c.b16 %v2707, %v2703
      %v3360 = vpack.c.b16 %v2708, %v2704
      %v3361 = vpack.c.b16 %v2713, %v2709
      %v3362 = vpack.c.b16 %v2714, %v2710
      %v3363 = vpack.c.b16 %v2715, %v2711
      %v3364 = vpack.c.b16 %v2716, %v2712
      %v3365 = vpack.c.b16 %v2721, %v2717
      %v3366 = vpack.c.b16 %v2722, %v2718
      %v3367 = vpack.c.b16 %v2723, %v2719
      %v3368 = vpack.c.b16 %v2724, %v2720
      %v3369 = vpack.c.b16 %v2729, %v2725
      %v3370 = vpack.c.b16 %v2730, %v2726
      %v3371 = vpack.c.b16 %v2731, %v2727
      %v3372 = vpack.c.b16 %v2732, %v2728
      %v3373 = vpack.c.b16 %v2737, %v2733
      %v3374 = vpack.c.b16 %v2738, %v2734
      %v3375 = vpack.c.b16 %v2739, %v2735
      %v3376 = vpack.c.b16 %v2740, %v2736
      %v3377 = vpack.c.b16 %v2745, %v2741
      %v3378 = vpack.c.b16 %v2746, %v2742
      %v3379 = vpack.c.b16 %v2747, %v2743
      %v3380 = vpack.c.b16 %v2748, %v2744
      %v3381 = vpack.c.b16 %v2753, %v2749
      %v3382 = vpack.c.b16 %v2754, %v2750
      %v3383 = vpack.c.b16 %v2755, %v2751
      %v3384 = vpack.c.b16 %v2756, %v2752
      %v3385 = vpack.c.b16 %v2761, %v2757
      %v3386 = vpack.c.b16 %v2762, %v2758
      %v3387 = vpack.c.b16 %v2763, %v2759
      %v3388 = vpack.c.b16 %v2764, %v2760
      %v3389 = vpack.c.b16 %v2769, %v2765
      %v3390 = vpack.c.b16 %v2770, %v2766
      %v3391 = vpack.c.b16 %v2771, %v2767
      %v3392 = vpack.c.b16 %v2772, %v2768
      %v3393 = vpack.c.b16 %v2777, %v2773
      %v3394 = vpack.c.b16 %v2778, %v2774
      %v3395 = vpack.c.b16 %v2779, %v2775
      %v3396 = vpack.c.b16 %v2780, %v2776
      %v3397 = vpack.c.b16 %v2785, %v2781
      %v3398 = vpack.c.b16 %v2786, %v2782
      %v3399 = vpack.c.b16 %v2787, %v2783
      %v3400 = vpack.c.b16 %v2788, %v2784
      %v3401 = vpack.c.b16 %v2793, %v2789
      %v3402 = vpack.c.b16 %v2794, %v2790
      %v3403 = vpack.c.b16 %v2795, %v2791
      %v3404 = vpack.c.b16 %v2796, %v2792
      %v3405 = vpack.c.b16 %v2801, %v2797
      %v3406 = vpack.c.b16 %v2802, %v2798
      %v3407 = vpack.c.b16 %v2803, %v2799
      %v3408 = vpack.c.b16 %v2804, %v2800
      %v3409 = vpack.c.b16 %v2809, %v2805
      %v3410 = vpack.c.b16 %v2810, %v2806
      %v3411 = vpack.c.b16 %v2811, %v2807
      %v3412 = vpack.c.b16 %v2812, %v2808
      %v3413 = vpack.c.b16 %v2817, %v2813
      %v3414 = vpack.c.b16 %v2818, %v2814
      %v3415 = vpack.c.b16 %v2819, %v2815
      %v3416 = vpack.c.b16 %v2820, %v2816
      %v3417 = vpack.c.b16 %v2825, %v2821
      %v3418 = vpack.c.b16 %v2826, %v2822
      %v3419 = vpack.c.b16 %v2827, %v2823
      %v3420 = vpack.c.b16 %v2828, %v2824
      %v3421 = vpack.c.b16 %v2833, %v2829
      %v3422 = vpack.c.b16 %v2834, %v2830
      %v3423 = vpack.c.b16 %v2835, %v2831
      %v3424 = vpack.c.b16 %v2836, %v2832
      %v3425 = vpack.c.b16 %v2841, %v2837
      %v3426 = vpack.c.b16 %v2842, %v2838
      %v3427 = vpack.c.b16 %v2843, %v2839
      %v3428 = vpack.c.b16 %v2844, %v2840
      %v3429 = vpack.c.b16 %v2849, %v2845
      %v3430 = vpack.c.b16 %v2850, %v2846
      %v3431 = vpack.c.b16 %v2851, %v2847
      %v3432 = vpack.c.b16 %v2852, %v2848
      %v3433 = vpack.c.b16 %v2857, %v2853
      %v3434 = vpack.c.b16 %v2858, %v2854
      %v3435 = vpack.c.b16 %v2859, %v2855
      %v3436 = vpack.c.b16 %v2860, %v2856
      %v3437 = vpack.c.b16 %v2865, %v2861
      %v3438 = vpack.c.b16 %v2866, %v2862
      %v3439 = vpack.c.b16 %v2867, %v2863
      %v3440 = vpack.c.b16 %v2868, %v2864
      %v3441 = vpack.c.b16 %v2873, %v2869
      %v3442 = vpack.c.b16 %v2874, %v2870
      %v3443 = vpack.c.b16 %v2875, %v2871
      %v3444 = vpack.c.b16 %v2876, %v2872
      %v3445 = vpack.c.b16 %v2881, %v2877
      %v3446 = vpack.c.b16 %v2882, %v2878
      %v3447 = vpack.c.b16 %v2883, %v2879
      %v3448 = vpack.c.b16 %v2884, %v2880
      %v3449 = vpack.c.b16 %v2889, %v2885
      %v3450 = vpack.c.b16 %v2890, %v2886
      %v3451 = vpack.c.b16 %v2891, %v2887
      %v3452 = vpack.c.b16 %v2892, %v2888
      %v3453 = vpack.c.b16 %v2897, %v2893
      %v3454 = vpack.c.b16 %v2898, %v2894
      %v3455 = vpack.c.b16 %v2899, %v2895
      %v3456 = vpack.c.b16 %v2900, %v2896
      %v3457 = vpack.c.b16 %v2905, %v2901
      %v3458 = vpack.c.b16 %v2906, %v2902
      %v3459 = vpack.c.b16 %v2907, %v2903
      %v3460 = vpack.c.b16 %v2908, %v2904
      %v3461 = vpack.c.b16 %v2913, %v2909
      %v3462 = vpack.c.b16 %v2914, %v2910
      %v3463 = vpack.c.b16 %v2915, %v2911
      %v3464 = vpack.c.b16 %v2916, %v2912
      %v3465 = vpack.c.b16 %v2921, %v2917
      %v3466 = vpack.c.b16 %v2922, %v2918
      %v3467 = vpack.c.b16 %v2923, %v2919
      %v3468 = vpack.c.b16 %v2924, %v2920
      %v3469 = vpack.c.b16 %v2929, %v2925
      %v3470 = vpack.c.b16 %v2930, %v2926
      %v3471 = vpack.c.b16 %v2931, %v2927
      %v3472 = vpack.c.b16 %v2932, %v2928
      %v3473 = vpack.c.b16 %v2937, %v2933
      %v3474 = vpack.c.b16 %v2938, %v2934
      %v3475 = vpack.c.b16 %v2939, %v2935
      %v3476 = vpack.c.b16 %v2940, %v2936
      %v3477 = vpack.c.b16 %v2945, %v2941
      %v3478 = vpack.c.b16 %v2946, %v2942
      %v3479 = vpack.c.b16 %v2947, %v2943
      %v3480 = vpack.c.b16 %v2948, %v2944
      %v3481 = vpack.c.b16 %v2953, %v2949
      %v3482 = vpack.c.b16 %v2954, %v2950
      %v3483 = vpack.c.b16 %v2955, %v2951
      %v3484 = vpack.c.b16 %v2956, %v2952
      %v3485 = vpack.c.b16 %v2961, %v2957
      %v3486 = vpack.c.b16 %v2962, %v2958
      %v3487 = vpack.c.b16 %v2963, %v2959
      %v3488 = vpack.c.b16 %v2964, %v2960
      %v3489 = vpack.c.b16 %v2969, %v2965
      %v3490 = vpack.c.b16 %v2970, %v2966
      %v3491 = vpack.c.b16 %v2971, %v2967
      %v3492 = vpack.c.b16 %v2972, %v2968
      %v3493 = vpack.c.b16 %v2977, %v2973
      %v3494 = vpack.c.b16 %v2978, %v2974
      %v3495 = vpack.c.b16 %v2979, %v2975
      %v3496 = vpack.c.b16 %v2980, %v2976
      %v3497 = vpack.c.b16 %v2985, %v2981
      %v3498 = vpack.c.b16 %v2986, %v2982
      %v3499 = vpack.c.b16 %v2987, %v2983
      %v3500 = vpack.c.b16 %v2988, %v2984
      %4013 = vmatpush.bf16.msra.mxu0 %v3017
      %4014 = vmatpush.bf16.msra.mxu0 %v3013
      %4015 = vmatpush.bf16.msra.mxu0 %v3009
      %4016 = vmatpush.bf16.msra.mxu0 %v3005
      %4017 = vmatpush.bf16.msra.mxu0 %v3001
      %4018 = vmatpush.bf16.msra.mxu0 %v2997
      %4019 = vmatpush.bf16.msra.mxu0 %v2993
      %4020 = vmatpush.bf16.msra.mxu0 %v2989
      %4021 = vmatmul.bf16.gmra.mxu0 %v1331
      %v4022 = vpop.f32.mrf.mxu0
      %v4023 = vadd.f32 0.0, %v4022
      %v4024 = vpop.f32.mrf.mxu0
      %4025 = vdwg.mxu0
      %4026 = vmatpush.bf16.msra.mxu0 %v3049
      %4027 = vmatpush.bf16.msra.mxu0 %v3045
      %4028 = vmatpush.bf16.msra.mxu0 %v3041
      %4029 = vmatpush.bf16.msra.mxu0 %v3037
      %4030 = vmatpush.bf16.msra.mxu0 %v3033
      %4031 = vmatpush.bf16.msra.mxu0 %v3029
      %4032 = vmatpush.bf16.msra.mxu0 %v3025
      %4033 = vmatpush.bf16.msra.mxu0 %v3021
      %4034 = vmatmul.bf16.gmra.mxu0 %v1338
      %v4035 = vpop.f32.mrf.mxu0
      %v4036 = vadd.f32 %v4023, %v4035
      %v4037 = vpop.f32.mrf.mxu0
      %4038 = vdwg.mxu0
      %4039 = vmatpush.bf16.msra.mxu0 %v3081
      %4040 = vmatpush.bf16.msra.mxu0 %v3077
      %4041 = vmatpush.bf16.msra.mxu0 %v3073
      %4042 = vmatpush.bf16.msra.mxu0 %v3069
      %4043 = vmatpush.bf16.msra.mxu0 %v3065
      %4044 = vmatpush.bf16.msra.mxu0 %v3061
      %4045 = vmatpush.bf16.msra.mxu0 %v3057
      %4046 = vmatpush.bf16.msra.mxu0 %v3053
      %4047 = vmatmul.bf16.gmra.mxu0 %v1345
      %v4048 = vpop.f32.mrf.mxu0
      %v4049 = vadd.f32 %v4036, %v4048
      %v4050 = vpop.f32.mrf.mxu0
      %4051 = vdwg.mxu0
      %4052 = vmatpush.bf16.msra.mxu0 %v3113
      %4053 = vmatpush.bf16.msra.mxu0 %v3109
      %4054 = vmatpush.bf16.msra.mxu0 %v3105
      %4055 = vmatpush.bf16.msra.mxu0 %v3101
      %4056 = vmatpush.bf16.msra.mxu0 %v3097
      %4057 = vmatpush.bf16.msra.mxu0 %v3093
      %4058 = vmatpush.bf16.msra.mxu0 %v3089
      %4059 = vmatpush.bf16.msra.mxu0 %v3085
      %4060 = vmatmul.bf16.gmra.mxu0 %v1352
      %v4061 = vpop.f32.mrf.mxu0
      %v4062 = vadd.f32 %v4049, %v4061
      %v4063 = vpop.f32.mrf.mxu0
      %4064 = vdwg.mxu0
      %4065 = vmatpush.bf16.msra.mxu0 %v3145
      %4066 = vmatpush.bf16.msra.mxu0 %v3141
      %4067 = vmatpush.bf16.msra.mxu0 %v3137
      %4068 = vmatpush.bf16.msra.mxu0 %v3133
      %4069 = vmatpush.bf16.msra.mxu0 %v3129
      %4070 = vmatpush.bf16.msra.mxu0 %v3125
      %4071 = vmatpush.bf16.msra.mxu0 %v3121
      %4072 = vmatpush.bf16.msra.mxu0 %v3117
      %4073 = vmatmul.bf16.gmra.mxu0 %v1359
      %v4074 = vpop.f32.mrf.mxu0
      %v4075 = vadd.f32 %v4062, %v4074
      %v4076 = vpop.f32.mrf.mxu0
      %4077 = vdwg.mxu0
      %4078 = vmatpush.bf16.msra.mxu0 %v3177
      %4079 = vmatpush.bf16.msra.mxu0 %v3173
      %4080 = vmatpush.bf16.msra.mxu0 %v3169
      %4081 = vmatpush.bf16.msra.mxu0 %v3165
      %4082 = vmatpush.bf16.msra.mxu0 %v3161
      %4083 = vmatpush.bf16.msra.mxu0 %v3157
      %4084 = vmatpush.bf16.msra.mxu0 %v3153
      %4085 = vmatpush.bf16.msra.mxu0 %v3149
      %4086 = vmatmul.bf16.gmra.mxu0 %v1366
      %v4087 = vpop.f32.mrf.mxu0
      %v4088 = vadd.f32 %v4075, %v4087
      %v4089 = vpop.f32.mrf.mxu0
      %4090 = vdwg.mxu0
      %4091 = vmatpush.bf16.msra.mxu0 %v3209
      %4092 = vmatpush.bf16.msra.mxu0 %v3205
      %4093 = vmatpush.bf16.msra.mxu0 %v3201
      %4094 = vmatpush.bf16.msra.mxu0 %v3197
      %4095 = vmatpush.bf16.msra.mxu0 %v3193
      %4096 = vmatpush.bf16.msra.mxu0 %v3189
      %4097 = vmatpush.bf16.msra.mxu0 %v3185
      %4098 = vmatpush.bf16.msra.mxu0 %v3181
      %4099 = vmatmul.bf16.gmra.mxu0 %v1373
      %v4100 = vpop.f32.mrf.mxu0
      %v4101 = vadd.f32 %v4088, %v4100
      %v4102 = vpop.f32.mrf.mxu0
      %4103 = vdwg.mxu0
      %4104 = vmatpush.bf16.msra.mxu0 %v3241
      %4105 = vmatpush.bf16.msra.mxu0 %v3237
      %4106 = vmatpush.bf16.msra.mxu0 %v3233
      %4107 = vmatpush.bf16.msra.mxu0 %v3229
      %4108 = vmatpush.bf16.msra.mxu0 %v3225
      %4109 = vmatpush.bf16.msra.mxu0 %v3221
      %4110 = vmatpush.bf16.msra.mxu0 %v3217
      %4111 = vmatpush.bf16.msra.mxu0 %v3213
      %4112 = vmatmul.bf16.gmra.mxu0 %v1380
      %v4113 = vpop.f32.mrf.mxu0
      %v4114 = vadd.f32 %v4101, %v4113
      %v4115 = vpop.f32.mrf.mxu0
      %4116 = vdwg.mxu0
      %4117 = vmatpush.bf16.msra.mxu0 %v3273
      %4118 = vmatpush.bf16.msra.mxu0 %v3269
      %4119 = vmatpush.bf16.msra.mxu0 %v3265
      %4120 = vmatpush.bf16.msra.mxu0 %v3261
      %4121 = vmatpush.bf16.msra.mxu0 %v3257
      %4122 = vmatpush.bf16.msra.mxu0 %v3253
      %4123 = vmatpush.bf16.msra.mxu0 %v3249
      %4124 = vmatpush.bf16.msra.mxu0 %v3245
      %4125 = vmatmul.bf16.gmra.mxu0 %v1387
      %v4126 = vpop.f32.mrf.mxu0
      %v4127 = vadd.f32 %v4114, %v4126
      %v4128 = vpop.f32.mrf.mxu0
      %4129 = vdwg.mxu0
      %4130 = vmatpush.bf16.msra.mxu0 %v3305
      %4131 = vmatpush.bf16.msra.mxu0 %v3301
      %4132 = vmatpush.bf16.msra.mxu0 %v3297
      %4133 = vmatpush.bf16.msra.mxu0 %v3293
      %4134 = vmatpush.bf16.msra.mxu0 %v3289
      %4135 = vmatpush.bf16.msra.mxu0 %v3285
      %4136 = vmatpush.bf16.msra.mxu0 %v3281
      %4137 = vmatpush.bf16.msra.mxu0 %v3277
      %4138 = vmatmul.bf16.gmra.mxu0 %v1394
      %v4139 = vpop.f32.mrf.mxu0
      %v4140 = vadd.f32 %v4127, %v4139
      %v4141 = vpop.f32.mrf.mxu0
      %4142 = vdwg.mxu0
      %4143 = vmatpush.bf16.msra.mxu0 %v3337
      %4144 = vmatpush.bf16.msra.mxu0 %v3333
      %4145 = vmatpush.bf16.msra.mxu0 %v3329
      %4146 = vmatpush.bf16.msra.mxu0 %v3325
      %4147 = vmatpush.bf16.msra.mxu0 %v3321
      %4148 = vmatpush.bf16.msra.mxu0 %v3317
      %4149 = vmatpush.bf16.msra.mxu0 %v3313
      %4150 = vmatpush.bf16.msra.mxu0 %v3309
      %4151 = vmatmul.bf16.gmra.mxu0 %v1401
      %v4152 = vpop.f32.mrf.mxu0
      %v4153 = vadd.f32 %v4140, %v4152
      %v4154 = vpop.f32.mrf.mxu0
      %4155 = vdwg.mxu0
      %4156 = vmatpush.bf16.msra.mxu0 %v3369
      %4157 = vmatpush.bf16.msra.mxu0 %v3365
      %4158 = vmatpush.bf16.msra.mxu0 %v3361
      %4159 = vmatpush.bf16.msra.mxu0 %v3357
      %4160 = vmatpush.bf16.msra.mxu0 %v3353
      %4161 = vmatpush.bf16.msra.mxu0 %v3349
      %4162 = vmatpush.bf16.msra.mxu0 %v3345
      %4163 = vmatpush.bf16.msra.mxu0 %v3341
      %4164 = vmatmul.bf16.gmra.mxu0 %v1408
      %v4165 = vpop.f32.mrf.mxu0
      %v4166 = vadd.f32 %v4153, %v4165
      %v4167 = vpop.f32.mrf.mxu0
      %4168 = vdwg.mxu0
      %4169 = vmatpush.bf16.msra.mxu0 %v3401
      %4170 = vmatpush.bf16.msra.mxu0 %v3397
      %4171 = vmatpush.bf16.msra.mxu0 %v3393
      %4172 = vmatpush.bf16.msra.mxu0 %v3389
      %4173 = vmatpush.bf16.msra.mxu0 %v3385
      %4174 = vmatpush.bf16.msra.mxu0 %v3381
      %4175 = vmatpush.bf16.msra.mxu0 %v3377
      %4176 = vmatpush.bf16.msra.mxu0 %v3373
      %4177 = vmatmul.bf16.gmra.mxu0 %v1415
      %v4178 = vpop.f32.mrf.mxu0
      %v4179 = vadd.f32 %v4166, %v4178
      %v4180 = vpop.f32.mrf.mxu0
      %4181 = vdwg.mxu0
      %4182 = vmatpush.bf16.msra.mxu0 %v3433
      %4183 = vmatpush.bf16.msra.mxu0 %v3429
      %4184 = vmatpush.bf16.msra.mxu0 %v3425
      %4185 = vmatpush.bf16.msra.mxu0 %v3421
      %4186 = vmatpush.bf16.msra.mxu0 %v3417
      %4187 = vmatpush.bf16.msra.mxu0 %v3413
      %4188 = vmatpush.bf16.msra.mxu0 %v3409
      %4189 = vmatpush.bf16.msra.mxu0 %v3405
      %4190 = vmatmul.bf16.gmra.mxu0 %v1422
      %v4191 = vpop.f32.mrf.mxu0
      %v4192 = vadd.f32 %v4179, %v4191
      %v4193 = vpop.f32.mrf.mxu0
      %4194 = vdwg.mxu0
      %4195 = vmatpush.bf16.msra.mxu0 %v3465
      %4196 = vmatpush.bf16.msra.mxu0 %v3461
      %4197 = vmatpush.bf16.msra.mxu0 %v3457
      %4198 = vmatpush.bf16.msra.mxu0 %v3453
      %4199 = vmatpush.bf16.msra.mxu0 %v3449
      %4200 = vmatpush.bf16.msra.mxu0 %v3445
      %4201 = vmatpush.bf16.msra.mxu0 %v3441
      %4202 = vmatpush.bf16.msra.mxu0 %v3437
      %4203 = vmatmul.bf16.gmra.mxu0 %v1429
      %v4204 = vpop.f32.mrf.mxu0
      %v4205 = vadd.f32 %v4192, %v4204
      %v4206 = vpop.f32.mrf.mxu0
      %4207 = vdwg.mxu0
      %4208 = vmatpush.bf16.msra.mxu0 %v3497
      %4209 = vmatpush.bf16.msra.mxu0 %v3493
      %4210 = vmatpush.bf16.msra.mxu0 %v3489
      %4211 = vmatpush.bf16.msra.mxu0 %v3485
      %4212 = vmatpush.bf16.msra.mxu0 %v3481
      %4213 = vmatpush.bf16.msra.mxu0 %v3477
      %4214 = vmatpush.bf16.msra.mxu0 %v3473
      %4215 = vmatpush.bf16.msra.mxu0 %v3469
      %4216 = vmatmul.bf16.gmra.mxu0 %v1436
      %v4217 = vpop.f32.mrf.mxu0
      %v4218 = vadd.f32 %v4205, %v4217
      %v4219 = vpop.f32.mrf.mxu0
      %4220 = vdwg.mxu0
      %4221 = vmatpush.bf16.msra.mxu0 %v3018
      %4222 = vmatpush.bf16.msra.mxu0 %v3014
      %4223 = vmatpush.bf16.msra.mxu0 %v3010
      %4224 = vmatpush.bf16.msra.mxu0 %v3006
      %4225 = vmatpush.bf16.msra.mxu0 %v3002
      %4226 = vmatpush.bf16.msra.mxu0 %v2998
      %4227 = vmatpush.bf16.msra.mxu0 %v2994
      %4228 = vmatpush.bf16.msra.mxu0 %v2990
      %4229 = vmatmul.bf16.gmra.mxu0 %v1331
      %v4230 = vpop.f32.mrf.mxu0
      %v4231 = vadd.f32 0.0, %v4230
      %v4232 = vpop.f32.mrf.mxu0
      %4233 = vdwg.mxu0
      %4234 = vmatpush.bf16.msra.mxu0 %v3050
      %4235 = vmatpush.bf16.msra.mxu0 %v3046
      %4236 = vmatpush.bf16.msra.mxu0 %v3042
      %4237 = vmatpush.bf16.msra.mxu0 %v3038
      %4238 = vmatpush.bf16.msra.mxu0 %v3034
      %4239 = vmatpush.bf16.msra.mxu0 %v3030
      %4240 = vmatpush.bf16.msra.mxu0 %v3026
      %4241 = vmatpush.bf16.msra.mxu0 %v3022
      %4242 = vmatmul.bf16.gmra.mxu0 %v1338
      %v4243 = vpop.f32.mrf.mxu0
      %v4244 = vadd.f32 %v4231, %v4243
      %v4245 = vpop.f32.mrf.mxu0
      %4246 = vdwg.mxu0
      %4247 = vmatpush.bf16.msra.mxu0 %v3082
      %4248 = vmatpush.bf16.msra.mxu0 %v3078
      %4249 = vmatpush.bf16.msra.mxu0 %v3074
      %4250 = vmatpush.bf16.msra.mxu0 %v3070
      %4251 = vmatpush.bf16.msra.mxu0 %v3066
      %4252 = vmatpush.bf16.msra.mxu0 %v3062
      %4253 = vmatpush.bf16.msra.mxu0 %v3058
      %4254 = vmatpush.bf16.msra.mxu0 %v3054
      %4255 = vmatmul.bf16.gmra.mxu0 %v1345
      %v4256 = vpop.f32.mrf.mxu0
      %v4257 = vadd.f32 %v4244, %v4256
      %v4258 = vpop.f32.mrf.mxu0
      %4259 = vdwg.mxu0
      %4260 = vmatpush.bf16.msra.mxu0 %v3114
      %4261 = vmatpush.bf16.msra.mxu0 %v3110
      %4262 = vmatpush.bf16.msra.mxu0 %v3106
      %4263 = vmatpush.bf16.msra.mxu0 %v3102
      %4264 = vmatpush.bf16.msra.mxu0 %v3098
      %4265 = vmatpush.bf16.msra.mxu0 %v3094
      %4266 = vmatpush.bf16.msra.mxu0 %v3090
      %4267 = vmatpush.bf16.msra.mxu0 %v3086
      %4268 = vmatmul.bf16.gmra.mxu0 %v1352
      %v4269 = vpop.f32.mrf.mxu0
      %v4270 = vadd.f32 %v4257, %v4269
      %v4271 = vpop.f32.mrf.mxu0
      %4272 = vdwg.mxu0
      %4273 = vmatpush.bf16.msra.mxu0 %v3146
      %4274 = vmatpush.bf16.msra.mxu0 %v3142
      %4275 = vmatpush.bf16.msra.mxu0 %v3138
      %4276 = vmatpush.bf16.msra.mxu0 %v3134
      %4277 = vmatpush.bf16.msra.mxu0 %v3130
      %4278 = vmatpush.bf16.msra.mxu0 %v3126
      %4279 = vmatpush.bf16.msra.mxu0 %v3122
      %4280 = vmatpush.bf16.msra.mxu0 %v3118
      %4281 = vmatmul.bf16.gmra.mxu0 %v1359
      %v4282 = vpop.f32.mrf.mxu0
      %v4283 = vadd.f32 %v4270, %v4282
      %v4284 = vpop.f32.mrf.mxu0
      %4285 = vdwg.mxu0
      %4286 = vmatpush.bf16.msra.mxu0 %v3178
      %4287 = vmatpush.bf16.msra.mxu0 %v3174
      %4288 = vmatpush.bf16.msra.mxu0 %v3170
      %4289 = vmatpush.bf16.msra.mxu0 %v3166
      %4290 = vmatpush.bf16.msra.mxu0 %v3162
      %4291 = vmatpush.bf16.msra.mxu0 %v3158
      %4292 = vmatpush.bf16.msra.mxu0 %v3154
      %4293 = vmatpush.bf16.msra.mxu0 %v3150
      %4294 = vmatmul.bf16.gmra.mxu0 %v1366
      %v4295 = vpop.f32.mrf.mxu0
      %v4296 = vadd.f32 %v4283, %v4295
      %v4297 = vpop.f32.mrf.mxu0
      %4298 = vdwg.mxu0
      %4299 = vmatpush.bf16.msra.mxu0 %v3210
      %4300 = vmatpush.bf16.msra.mxu0 %v3206
      %4301 = vmatpush.bf16.msra.mxu0 %v3202
      %4302 = vmatpush.bf16.msra.mxu0 %v3198
      %4303 = vmatpush.bf16.msra.mxu0 %v3194
      %4304 = vmatpush.bf16.msra.mxu0 %v3190
      %4305 = vmatpush.bf16.msra.mxu0 %v3186
      %4306 = vmatpush.bf16.msra.mxu0 %v3182
      %4307 = vmatmul.bf16.gmra.mxu0 %v1373
      %v4308 = vpop.f32.mrf.mxu0
      %v4309 = vadd.f32 %v4296, %v4308
      %v4310 = vpop.f32.mrf.mxu0
      %4311 = vdwg.mxu0
      %4312 = vmatpush.bf16.msra.mxu0 %v3242
      %4313 = vmatpush.bf16.msra.mxu0 %v3238
      %4314 = vmatpush.bf16.msra.mxu0 %v3234
      %4315 = vmatpush.bf16.msra.mxu0 %v3230
      %4316 = vmatpush.bf16.msra.mxu0 %v3226
      %4317 = vmatpush.bf16.msra.mxu0 %v3222
      %4318 = vmatpush.bf16.msra.mxu0 %v3218
      %4319 = vmatpush.bf16.msra.mxu0 %v3214
      %4320 = vmatmul.bf16.gmra.mxu0 %v1380
      %v4321 = vpop.f32.mrf.mxu0
      %v4322 = vadd.f32 %v4309, %v4321
      %v4323 = vpop.f32.mrf.mxu0
      %4324 = vdwg.mxu0
      %4325 = vmatpush.bf16.msra.mxu0 %v3274
      %4326 = vmatpush.bf16.msra.mxu0 %v3270
      %4327 = vmatpush.bf16.msra.mxu0 %v3266
      %4328 = vmatpush.bf16.msra.mxu0 %v3262
      %4329 = vmatpush.bf16.msra.mxu0 %v3258
      %4330 = vmatpush.bf16.msra.mxu0 %v3254
      %4331 = vmatpush.bf16.msra.mxu0 %v3250
      %4332 = vmatpush.bf16.msra.mxu0 %v3246
      %4333 = vmatmul.bf16.gmra.mxu0 %v1387
      %v4334 = vpop.f32.mrf.mxu0
      %v4335 = vadd.f32 %v4322, %v4334
      %v4336 = vpop.f32.mrf.mxu0
      %4337 = vdwg.mxu0
      %4338 = vmatpush.bf16.msra.mxu0 %v3306
      %4339 = vmatpush.bf16.msra.mxu0 %v3302
      %4340 = vmatpush.bf16.msra.mxu0 %v3298
      %4341 = vmatpush.bf16.msra.mxu0 %v3294
      %4342 = vmatpush.bf16.msra.mxu0 %v3290
      %4343 = vmatpush.bf16.msra.mxu0 %v3286
      %4344 = vmatpush.bf16.msra.mxu0 %v3282
      %4345 = vmatpush.bf16.msra.mxu0 %v3278
      %4346 = vmatmul.bf16.gmra.mxu0 %v1394
      %v4347 = vpop.f32.mrf.mxu0
      %v4348 = vadd.f32 %v4335, %v4347
      %v4349 = vpop.f32.mrf.mxu0
      %4350 = vdwg.mxu0
      %4351 = vmatpush.bf16.msra.mxu0 %v3338
      %4352 = vmatpush.bf16.msra.mxu0 %v3334
      %4353 = vmatpush.bf16.msra.mxu0 %v3330
      %4354 = vmatpush.bf16.msra.mxu0 %v3326
      %4355 = vmatpush.bf16.msra.mxu0 %v3322
      %4356 = vmatpush.bf16.msra.mxu0 %v3318
      %4357 = vmatpush.bf16.msra.mxu0 %v3314
      %4358 = vmatpush.bf16.msra.mxu0 %v3310
      %4359 = vmatmul.bf16.gmra.mxu0 %v1401
      %v4360 = vpop.f32.mrf.mxu0
      %v4361 = vadd.f32 %v4348, %v4360
      %v4362 = vpop.f32.mrf.mxu0
      %4363 = vdwg.mxu0
      %4364 = vmatpush.bf16.msra.mxu0 %v3370
      %4365 = vmatpush.bf16.msra.mxu0 %v3366
      %4366 = vmatpush.bf16.msra.mxu0 %v3362
      %4367 = vmatpush.bf16.msra.mxu0 %v3358
      %4368 = vmatpush.bf16.msra.mxu0 %v3354
      %4369 = vmatpush.bf16.msra.mxu0 %v3350
      %4370 = vmatpush.bf16.msra.mxu0 %v3346
      %4371 = vmatpush.bf16.msra.mxu0 %v3342
      %4372 = vmatmul.bf16.gmra.mxu0 %v1408
      %v4373 = vpop.f32.mrf.mxu0
      %v4374 = vadd.f32 %v4361, %v4373
      %v4375 = vpop.f32.mrf.mxu0
      %4376 = vdwg.mxu0
      %4377 = vmatpush.bf16.msra.mxu0 %v3402
      %4378 = vmatpush.bf16.msra.mxu0 %v3398
      %4379 = vmatpush.bf16.msra.mxu0 %v3394
      %4380 = vmatpush.bf16.msra.mxu0 %v3390
      %4381 = vmatpush.bf16.msra.mxu0 %v3386
      %4382 = vmatpush.bf16.msra.mxu0 %v3382
      %4383 = vmatpush.bf16.msra.mxu0 %v3378
      %4384 = vmatpush.bf16.msra.mxu0 %v3374
      %4385 = vmatmul.bf16.gmra.mxu0 %v1415
      %v4386 = vpop.f32.mrf.mxu0
      %v4387 = vadd.f32 %v4374, %v4386
      %v4388 = vpop.f32.mrf.mxu0
      %4389 = vdwg.mxu0
      %4390 = vmatpush.bf16.msra.mxu0 %v3434
      %4391 = vmatpush.bf16.msra.mxu0 %v3430
      %4392 = vmatpush.bf16.msra.mxu0 %v3426
      %4393 = vmatpush.bf16.msra.mxu0 %v3422
      %4394 = vmatpush.bf16.msra.mxu0 %v3418
      %4395 = vmatpush.bf16.msra.mxu0 %v3414
      %4396 = vmatpush.bf16.msra.mxu0 %v3410
      %4397 = vmatpush.bf16.msra.mxu0 %v3406
      %4398 = vmatmul.bf16.gmra.mxu0 %v1422
      %v4399 = vpop.f32.mrf.mxu0
      %v4400 = vadd.f32 %v4387, %v4399
      %v4401 = vpop.f32.mrf.mxu0
      %4402 = vdwg.mxu0
      %4403 = vmatpush.bf16.msra.mxu0 %v3466
      %4404 = vmatpush.bf16.msra.mxu0 %v3462
      %4405 = vmatpush.bf16.msra.mxu0 %v3458
      %4406 = vmatpush.bf16.msra.mxu0 %v3454
      %4407 = vmatpush.bf16.msra.mxu0 %v3450
      %4408 = vmatpush.bf16.msra.mxu0 %v3446
      %4409 = vmatpush.bf16.msra.mxu0 %v3442
      %4410 = vmatpush.bf16.msra.mxu0 %v3438
      %4411 = vmatmul.bf16.gmra.mxu0 %v1429
      %v4412 = vpop.f32.mrf.mxu0
      %v4413 = vadd.f32 %v4400, %v4412
      %v4414 = vpop.f32.mrf.mxu0
      %4415 = vdwg.mxu0
      %4416 = vmatpush.bf16.msra.mxu0 %v3498
      %4417 = vmatpush.bf16.msra.mxu0 %v3494
      %4418 = vmatpush.bf16.msra.mxu0 %v3490
      %4419 = vmatpush.bf16.msra.mxu0 %v3486
      %4420 = vmatpush.bf16.msra.mxu0 %v3482
      %4421 = vmatpush.bf16.msra.mxu0 %v3478
      %4422 = vmatpush.bf16.msra.mxu0 %v3474
      %4423 = vmatpush.bf16.msra.mxu0 %v3470
      %4424 = vmatmul.bf16.gmra.mxu0 %v1436
      %v4425 = vpop.f32.mrf.mxu0
      %v4426 = vadd.f32 %v4413, %v4425
      %v4427 = vpop.f32.mrf.mxu0
      %4428 = vdwg.mxu0
      %4429 = vmatpush.bf16.msra.mxu0 %v3019
      %4430 = vmatpush.bf16.msra.mxu0 %v3015
      %4431 = vmatpush.bf16.msra.mxu0 %v3011
      %4432 = vmatpush.bf16.msra.mxu0 %v3007
      %4433 = vmatpush.bf16.msra.mxu0 %v3003
      %4434 = vmatpush.bf16.msra.mxu0 %v2999
      %4435 = vmatpush.bf16.msra.mxu0 %v2995
      %4436 = vmatpush.bf16.msra.mxu0 %v2991
      %4437 = vmatmul.bf16.gmra.mxu0 %v1331
      %v4438 = vpop.f32.mrf.mxu0
      %v4439 = vadd.f32 0.0, %v4438
      %v4440 = vpop.f32.mrf.mxu0
      %4441 = vdwg.mxu0
      %4442 = vmatpush.bf16.msra.mxu0 %v3051
      %4443 = vmatpush.bf16.msra.mxu0 %v3047
      %4444 = vmatpush.bf16.msra.mxu0 %v3043
      %4445 = vmatpush.bf16.msra.mxu0 %v3039
      %4446 = vmatpush.bf16.msra.mxu0 %v3035
      %4447 = vmatpush.bf16.msra.mxu0 %v3031
      %4448 = vmatpush.bf16.msra.mxu0 %v3027
      %4449 = vmatpush.bf16.msra.mxu0 %v3023
      %4450 = vmatmul.bf16.gmra.mxu0 %v1338
      %v4451 = vpop.f32.mrf.mxu0
      %v4452 = vadd.f32 %v4439, %v4451
      %v4453 = vpop.f32.mrf.mxu0
      %4454 = vdwg.mxu0
      %4455 = vmatpush.bf16.msra.mxu0 %v3083
      %4456 = vmatpush.bf16.msra.mxu0 %v3079
      %4457 = vmatpush.bf16.msra.mxu0 %v3075
      %4458 = vmatpush.bf16.msra.mxu0 %v3071
      %4459 = vmatpush.bf16.msra.mxu0 %v3067
      %4460 = vmatpush.bf16.msra.mxu0 %v3063
      %4461 = vmatpush.bf16.msra.mxu0 %v3059
      %4462 = vmatpush.bf16.msra.mxu0 %v3055
      %4463 = vmatmul.bf16.gmra.mxu0 %v1345
      %v4464 = vpop.f32.mrf.mxu0
      %v4465 = vadd.f32 %v4452, %v4464
      %v4466 = vpop.f32.mrf.mxu0
      %4467 = vdwg.mxu0
      %4468 = vmatpush.bf16.msra.mxu0 %v3115
      %4469 = vmatpush.bf16.msra.mxu0 %v3111
      %4470 = vmatpush.bf16.msra.mxu0 %v3107
      %4471 = vmatpush.bf16.msra.mxu0 %v3103
      %4472 = vmatpush.bf16.msra.mxu0 %v3099
      %4473 = vmatpush.bf16.msra.mxu0 %v3095
      %4474 = vmatpush.bf16.msra.mxu0 %v3091
      %4475 = vmatpush.bf16.msra.mxu0 %v3087
      %4476 = vmatmul.bf16.gmra.mxu0 %v1352
      %v4477 = vpop.f32.mrf.mxu0
      %v4478 = vadd.f32 %v4465, %v4477
      %v4479 = vpop.f32.mrf.mxu0
      %4480 = vdwg.mxu0
      %4481 = vmatpush.bf16.msra.mxu0 %v3147
      %4482 = vmatpush.bf16.msra.mxu0 %v3143
      %4483 = vmatpush.bf16.msra.mxu0 %v3139
      %4484 = vmatpush.bf16.msra.mxu0 %v3135
      %4485 = vmatpush.bf16.msra.mxu0 %v3131
      %4486 = vmatpush.bf16.msra.mxu0 %v3127
      %4487 = vmatpush.bf16.msra.mxu0 %v3123
      %4488 = vmatpush.bf16.msra.mxu0 %v3119
      %4489 = vmatmul.bf16.gmra.mxu0 %v1359
      %v4490 = vpop.f32.mrf.mxu0
      %v4491 = vadd.f32 %v4478, %v4490
      %v4492 = vpop.f32.mrf.mxu0
      %4493 = vdwg.mxu0
      %4494 = vmatpush.bf16.msra.mxu0 %v3179
      %4495 = vmatpush.bf16.msra.mxu0 %v3175
      %4496 = vmatpush.bf16.msra.mxu0 %v3171
      %4497 = vmatpush.bf16.msra.mxu0 %v3167
      %4498 = vmatpush.bf16.msra.mxu0 %v3163
      %4499 = vmatpush.bf16.msra.mxu0 %v3159
      %4500 = vmatpush.bf16.msra.mxu0 %v3155
      %4501 = vmatpush.bf16.msra.mxu0 %v3151
      %4502 = vmatmul.bf16.gmra.mxu0 %v1366
      %v4503 = vpop.f32.mrf.mxu0
      %v4504 = vadd.f32 %v4491, %v4503
      %v4505 = vpop.f32.mrf.mxu0
      %4506 = vdwg.mxu0
      %4507 = vmatpush.bf16.msra.mxu0 %v3211
      %4508 = vmatpush.bf16.msra.mxu0 %v3207
      %4509 = vmatpush.bf16.msra.mxu0 %v3203
      %4510 = vmatpush.bf16.msra.mxu0 %v3199
      %4511 = vmatpush.bf16.msra.mxu0 %v3195
      %4512 = vmatpush.bf16.msra.mxu0 %v3191
      %4513 = vmatpush.bf16.msra.mxu0 %v3187
      %4514 = vmatpush.bf16.msra.mxu0 %v3183
      %4515 = vmatmul.bf16.gmra.mxu0 %v1373
      %v4516 = vpop.f32.mrf.mxu0
      %v4517 = vadd.f32 %v4504, %v4516
      %v4518 = vpop.f32.mrf.mxu0
      %4519 = vdwg.mxu0
      %4520 = vmatpush.bf16.msra.mxu0 %v3243
      %4521 = vmatpush.bf16.msra.mxu0 %v3239
      %4522 = vmatpush.bf16.msra.mxu0 %v3235
      %4523 = vmatpush.bf16.msra.mxu0 %v3231
      %4524 = vmatpush.bf16.msra.mxu0 %v3227
      %4525 = vmatpush.bf16.msra.mxu0 %v3223
      %4526 = vmatpush.bf16.msra.mxu0 %v3219
      %4527 = vmatpush.bf16.msra.mxu0 %v3215
      %4528 = vmatmul.bf16.gmra.mxu0 %v1380
      %v4529 = vpop.f32.mrf.mxu0
      %v4530 = vadd.f32 %v4517, %v4529
      %v4531 = vpop.f32.mrf.mxu0
      %4532 = vdwg.mxu0
      %4533 = vmatpush.bf16.msra.mxu0 %v3275
      %4534 = vmatpush.bf16.msra.mxu0 %v3271
      %4535 = vmatpush.bf16.msra.mxu0 %v3267
      %4536 = vmatpush.bf16.msra.mxu0 %v3263
      %4537 = vmatpush.bf16.msra.mxu0 %v3259
      %4538 = vmatpush.bf16.msra.mxu0 %v3255
      %4539 = vmatpush.bf16.msra.mxu0 %v3251
      %4540 = vmatpush.bf16.msra.mxu0 %v3247
      %4541 = vmatmul.bf16.gmra.mxu0 %v1387
      %v4542 = vpop.f32.mrf.mxu0
      %v4543 = vadd.f32 %v4530, %v4542
      %v4544 = vpop.f32.mrf.mxu0
      %4545 = vdwg.mxu0
      %4546 = vmatpush.bf16.msra.mxu0 %v3307
      %4547 = vmatpush.bf16.msra.mxu0 %v3303
      %4548 = vmatpush.bf16.msra.mxu0 %v3299
      %4549 = vmatpush.bf16.msra.mxu0 %v3295
      %4550 = vmatpush.bf16.msra.mxu0 %v3291
      %4551 = vmatpush.bf16.msra.mxu0 %v3287
      %4552 = vmatpush.bf16.msra.mxu0 %v3283
      %4553 = vmatpush.bf16.msra.mxu0 %v3279
      %4554 = vmatmul.bf16.gmra.mxu0 %v1394
      %v4555 = vpop.f32.mrf.mxu0
      %v4556 = vadd.f32 %v4543, %v4555
      %v4557 = vpop.f32.mrf.mxu0
      %4558 = vdwg.mxu0
      %4559 = vmatpush.bf16.msra.mxu0 %v3339
      %4560 = vmatpush.bf16.msra.mxu0 %v3335
      %4561 = vmatpush.bf16.msra.mxu0 %v3331
      %4562 = vmatpush.bf16.msra.mxu0 %v3327
      %4563 = vmatpush.bf16.msra.mxu0 %v3323
      %4564 = vmatpush.bf16.msra.mxu0 %v3319
      %4565 = vmatpush.bf16.msra.mxu0 %v3315
      %4566 = vmatpush.bf16.msra.mxu0 %v3311
      %4567 = vmatmul.bf16.gmra.mxu0 %v1401
      %v4568 = vpop.f32.mrf.mxu0
      %v4569 = vadd.f32 %v4556, %v4568
      %v4570 = vpop.f32.mrf.mxu0
      %4571 = vdwg.mxu0
      %4572 = vmatpush.bf16.msra.mxu0 %v3371
      %4573 = vmatpush.bf16.msra.mxu0 %v3367
      %4574 = vmatpush.bf16.msra.mxu0 %v3363
      %4575 = vmatpush.bf16.msra.mxu0 %v3359
      %4576 = vmatpush.bf16.msra.mxu0 %v3355
      %4577 = vmatpush.bf16.msra.mxu0 %v3351
      %4578 = vmatpush.bf16.msra.mxu0 %v3347
      %4579 = vmatpush.bf16.msra.mxu0 %v3343
      %4580 = vmatmul.bf16.gmra.mxu0 %v1408
      %v4581 = vpop.f32.mrf.mxu0
      %v4582 = vadd.f32 %v4569, %v4581
      %v4583 = vpop.f32.mrf.mxu0
      %4584 = vdwg.mxu0
      %4585 = vmatpush.bf16.msra.mxu0 %v3403
      %4586 = vmatpush.bf16.msra.mxu0 %v3399
      %4587 = vmatpush.bf16.msra.mxu0 %v3395
      %4588 = vmatpush.bf16.msra.mxu0 %v3391
      %4589 = vmatpush.bf16.msra.mxu0 %v3387
      %4590 = vmatpush.bf16.msra.mxu0 %v3383
      %4591 = vmatpush.bf16.msra.mxu0 %v3379
      %4592 = vmatpush.bf16.msra.mxu0 %v3375
      %4593 = vmatmul.bf16.gmra.mxu0 %v1415
      %v4594 = vpop.f32.mrf.mxu0
      %v4595 = vadd.f32 %v4582, %v4594
      %v4596 = vpop.f32.mrf.mxu0
      %4597 = vdwg.mxu0
      %4598 = vmatpush.bf16.msra.mxu0 %v3435
      %4599 = vmatpush.bf16.msra.mxu0 %v3431
      %4600 = vmatpush.bf16.msra.mxu0 %v3427
      %4601 = vmatpush.bf16.msra.mxu0 %v3423
      %4602 = vmatpush.bf16.msra.mxu0 %v3419
      %4603 = vmatpush.bf16.msra.mxu0 %v3415
      %4604 = vmatpush.bf16.msra.mxu0 %v3411
      %4605 = vmatpush.bf16.msra.mxu0 %v3407
      %4606 = vmatmul.bf16.gmra.mxu0 %v1422
      %v4607 = vpop.f32.mrf.mxu0
      %v4608 = vadd.f32 %v4595, %v4607
      %v4609 = vpop.f32.mrf.mxu0
      %4610 = vdwg.mxu0
      %4611 = vmatpush.bf16.msra.mxu0 %v3467
      %4612 = vmatpush.bf16.msra.mxu0 %v3463
      %4613 = vmatpush.bf16.msra.mxu0 %v3459
      %4614 = vmatpush.bf16.msra.mxu0 %v3455
      %4615 = vmatpush.bf16.msra.mxu0 %v3451
      %4616 = vmatpush.bf16.msra.mxu0 %v3447
      %4617 = vmatpush.bf16.msra.mxu0 %v3443
      %4618 = vmatpush.bf16.msra.mxu0 %v3439
      %4619 = vmatmul.bf16.gmra.mxu0 %v1429
      %v4620 = vpop.f32.mrf.mxu0
      %v4621 = vadd.f32 %v4608, %v4620
      %v4622 = vpop.f32.mrf.mxu0
      %4623 = vdwg.mxu0
      %4624 = vmatpush.bf16.msra.mxu0 %v3499
      %4625 = vmatpush.bf16.msra.mxu0 %v3495
      %4626 = vmatpush.bf16.msra.mxu0 %v3491
      %4627 = vmatpush.bf16.msra.mxu0 %v3487
      %4628 = vmatpush.bf16.msra.mxu0 %v3483
      %4629 = vmatpush.bf16.msra.mxu0 %v3479
      %4630 = vmatpush.bf16.msra.mxu0 %v3475
      %4631 = vmatpush.bf16.msra.mxu0 %v3471
      %4632 = vmatmul.bf16.gmra.mxu0 %v1436
      %v4633 = vpop.f32.mrf.mxu0
      %v4634 = vadd.f32 %v4621, %v4633
      %v4635 = vpop.f32.mrf.mxu0
      %4636 = vdwg.mxu0
      %4637 = vmatpush.bf16.msra.mxu0 %v3020
      %4638 = vmatpush.bf16.msra.mxu0 %v3016
      %4639 = vmatpush.bf16.msra.mxu0 %v3012
      %4640 = vmatpush.bf16.msra.mxu0 %v3008
      %4641 = vmatpush.bf16.msra.mxu0 %v3004
      %4642 = vmatpush.bf16.msra.mxu0 %v3000
      %4643 = vmatpush.bf16.msra.mxu0 %v2996
      %4644 = vmatpush.bf16.msra.mxu0 %v2992
      %4645 = vmatmul.bf16.gmra.mxu0 %v1331
      %v4646 = vpop.f32.mrf.mxu0
      %v4647 = vadd.f32 0.0, %v4646
      %v4648 = vpop.f32.mrf.mxu0
      %4649 = vdwg.mxu0
      %4650 = vmatpush.bf16.msra.mxu0 %v3052
      %4651 = vmatpush.bf16.msra.mxu0 %v3048
      %4652 = vmatpush.bf16.msra.mxu0 %v3044
      %4653 = vmatpush.bf16.msra.mxu0 %v3040
      %4654 = vmatpush.bf16.msra.mxu0 %v3036
      %4655 = vmatpush.bf16.msra.mxu0 %v3032
      %4656 = vmatpush.bf16.msra.mxu0 %v3028
      %4657 = vmatpush.bf16.msra.mxu0 %v3024
      %4658 = vmatmul.bf16.gmra.mxu0 %v1338
      %v4659 = vpop.f32.mrf.mxu0
      %v4660 = vadd.f32 %v4647, %v4659
      %v4661 = vpop.f32.mrf.mxu0
      %4662 = vdwg.mxu0
      %4663 = vmatpush.bf16.msra.mxu0 %v3084
      %4664 = vmatpush.bf16.msra.mxu0 %v3080
      %4665 = vmatpush.bf16.msra.mxu0 %v3076
      %4666 = vmatpush.bf16.msra.mxu0 %v3072
      %4667 = vmatpush.bf16.msra.mxu0 %v3068
      %4668 = vmatpush.bf16.msra.mxu0 %v3064
      %4669 = vmatpush.bf16.msra.mxu0 %v3060
      %4670 = vmatpush.bf16.msra.mxu0 %v3056
      %4671 = vmatmul.bf16.gmra.mxu0 %v1345
      %v4672 = vpop.f32.mrf.mxu0
      %v4673 = vadd.f32 %v4660, %v4672
      %v4674 = vpop.f32.mrf.mxu0
      %4675 = vdwg.mxu0
      %4676 = vmatpush.bf16.msra.mxu0 %v3116
      %4677 = vmatpush.bf16.msra.mxu0 %v3112
      %4678 = vmatpush.bf16.msra.mxu0 %v3108
      %4679 = vmatpush.bf16.msra.mxu0 %v3104
      %4680 = vmatpush.bf16.msra.mxu0 %v3100
      %4681 = vmatpush.bf16.msra.mxu0 %v3096
      %4682 = vmatpush.bf16.msra.mxu0 %v3092
      %4683 = vmatpush.bf16.msra.mxu0 %v3088
      %4684 = vmatmul.bf16.gmra.mxu0 %v1352
      %v4685 = vpop.f32.mrf.mxu0
      %v4686 = vadd.f32 %v4673, %v4685
      %v4687 = vpop.f32.mrf.mxu0
      %4688 = vdwg.mxu0
      %4689 = vmatpush.bf16.msra.mxu0 %v3148
      %4690 = vmatpush.bf16.msra.mxu0 %v3144
      %4691 = vmatpush.bf16.msra.mxu0 %v3140
      %4692 = vmatpush.bf16.msra.mxu0 %v3136
      %4693 = vmatpush.bf16.msra.mxu0 %v3132
      %4694 = vmatpush.bf16.msra.mxu0 %v3128
      %4695 = vmatpush.bf16.msra.mxu0 %v3124
      %4696 = vmatpush.bf16.msra.mxu0 %v3120
      %4697 = vmatmul.bf16.gmra.mxu0 %v1359
      %v4698 = vpop.f32.mrf.mxu0
      %v4699 = vadd.f32 %v4686, %v4698
      %v4700 = vpop.f32.mrf.mxu0
      %4701 = vdwg.mxu0
      %4702 = vmatpush.bf16.msra.mxu0 %v3180
      %4703 = vmatpush.bf16.msra.mxu0 %v3176
      %4704 = vmatpush.bf16.msra.mxu0 %v3172
      %4705 = vmatpush.bf16.msra.mxu0 %v3168
      %4706 = vmatpush.bf16.msra.mxu0 %v3164
      %4707 = vmatpush.bf16.msra.mxu0 %v3160
      %4708 = vmatpush.bf16.msra.mxu0 %v3156
      %4709 = vmatpush.bf16.msra.mxu0 %v3152
      %4710 = vmatmul.bf16.gmra.mxu0 %v1366
      %v4711 = vpop.f32.mrf.mxu0
      %v4712 = vadd.f32 %v4699, %v4711
      %v4713 = vpop.f32.mrf.mxu0
      %4714 = vdwg.mxu0
      %4715 = vmatpush.bf16.msra.mxu0 %v3212
      %4716 = vmatpush.bf16.msra.mxu0 %v3208
      %4717 = vmatpush.bf16.msra.mxu0 %v3204
      %4718 = vmatpush.bf16.msra.mxu0 %v3200
      %4719 = vmatpush.bf16.msra.mxu0 %v3196
      %4720 = vmatpush.bf16.msra.mxu0 %v3192
      %4721 = vmatpush.bf16.msra.mxu0 %v3188
      %4722 = vmatpush.bf16.msra.mxu0 %v3184
      %4723 = vmatmul.bf16.gmra.mxu0 %v1373
      %v4724 = vpop.f32.mrf.mxu0
      %v4725 = vadd.f32 %v4712, %v4724
      %v4726 = vpop.f32.mrf.mxu0
      %4727 = vdwg.mxu0
      %4728 = vmatpush.bf16.msra.mxu0 %v3244
      %4729 = vmatpush.bf16.msra.mxu0 %v3240
      %4730 = vmatpush.bf16.msra.mxu0 %v3236
      %4731 = vmatpush.bf16.msra.mxu0 %v3232
      %4732 = vmatpush.bf16.msra.mxu0 %v3228
      %4733 = vmatpush.bf16.msra.mxu0 %v3224
      %4734 = vmatpush.bf16.msra.mxu0 %v3220
      %4735 = vmatpush.bf16.msra.mxu0 %v3216
      %4736 = vmatmul.bf16.gmra.mxu0 %v1380
      %v4737 = vpop.f32.mrf.mxu0
      %v4738 = vadd.f32 %v4725, %v4737
      %v4739 = vpop.f32.mrf.mxu0
      %4740 = vdwg.mxu0
      %4741 = vmatpush.bf16.msra.mxu0 %v3276
      %4742 = vmatpush.bf16.msra.mxu0 %v3272
      %4743 = vmatpush.bf16.msra.mxu0 %v3268
      %4744 = vmatpush.bf16.msra.mxu0 %v3264
      %4745 = vmatpush.bf16.msra.mxu0 %v3260
      %4746 = vmatpush.bf16.msra.mxu0 %v3256
      %4747 = vmatpush.bf16.msra.mxu0 %v3252
      %4748 = vmatpush.bf16.msra.mxu0 %v3248
      %4749 = vmatmul.bf16.gmra.mxu0 %v1387
      %v4750 = vpop.f32.mrf.mxu0
      %v4751 = vadd.f32 %v4738, %v4750
      %v4752 = vpop.f32.mrf.mxu0
      %4753 = vdwg.mxu0
      %4754 = vmatpush.bf16.msra.mxu0 %v3308
      %4755 = vmatpush.bf16.msra.mxu0 %v3304
      %4756 = vmatpush.bf16.msra.mxu0 %v3300
      %4757 = vmatpush.bf16.msra.mxu0 %v3296
      %4758 = vmatpush.bf16.msra.mxu0 %v3292
      %4759 = vmatpush.bf16.msra.mxu0 %v3288
      %4760 = vmatpush.bf16.msra.mxu0 %v3284
      %4761 = vmatpush.bf16.msra.mxu0 %v3280
      %4762 = vmatmul.bf16.gmra.mxu0 %v1394
      %v4763 = vpop.f32.mrf.mxu0
      %v4764 = vadd.f32 %v4751, %v4763
      %v4765 = vpop.f32.mrf.mxu0
      %4766 = vdwg.mxu0
      %4767 = vmatpush.bf16.msra.mxu0 %v3340
      %4768 = vmatpush.bf16.msra.mxu0 %v3336
      %4769 = vmatpush.bf16.msra.mxu0 %v3332
      %4770 = vmatpush.bf16.msra.mxu0 %v3328
      %4771 = vmatpush.bf16.msra.mxu0 %v3324
      %4772 = vmatpush.bf16.msra.mxu0 %v3320
      %4773 = vmatpush.bf16.msra.mxu0 %v3316
      %4774 = vmatpush.bf16.msra.mxu0 %v3312
      %4775 = vmatmul.bf16.gmra.mxu0 %v1401
      %v4776 = vpop.f32.mrf.mxu0
      %v4777 = vadd.f32 %v4764, %v4776
      %v4778 = vpop.f32.mrf.mxu0
      %4779 = vdwg.mxu0
      %4780 = vmatpush.bf16.msra.mxu0 %v3372
      %4781 = vmatpush.bf16.msra.mxu0 %v3368
      %4782 = vmatpush.bf16.msra.mxu0 %v3364
      %4783 = vmatpush.bf16.msra.mxu0 %v3360
      %4784 = vmatpush.bf16.msra.mxu0 %v3356
      %4785 = vmatpush.bf16.msra.mxu0 %v3352
      %4786 = vmatpush.bf16.msra.mxu0 %v3348
      %4787 = vmatpush.bf16.msra.mxu0 %v3344
      %4788 = vmatmul.bf16.gmra.mxu0 %v1408
      %v4789 = vpop.f32.mrf.mxu0
      %v4790 = vadd.f32 %v4777, %v4789
      %v4791 = vpop.f32.mrf.mxu0
      %4792 = vdwg.mxu0
      %4793 = vmatpush.bf16.msra.mxu0 %v3404
      %4794 = vmatpush.bf16.msra.mxu0 %v3400
      %4795 = vmatpush.bf16.msra.mxu0 %v3396
      %4796 = vmatpush.bf16.msra.mxu0 %v3392
      %4797 = vmatpush.bf16.msra.mxu0 %v3388
      %4798 = vmatpush.bf16.msra.mxu0 %v3384
      %4799 = vmatpush.bf16.msra.mxu0 %v3380
      %4800 = vmatpush.bf16.msra.mxu0 %v3376
      %4801 = vmatmul.bf16.gmra.mxu0 %v1415
      %v4802 = vpop.f32.mrf.mxu0
      %v4803 = vadd.f32 %v4790, %v4802
      %v4804 = vpop.f32.mrf.mxu0
      %4805 = vdwg.mxu0
      %4806 = vmatpush.bf16.msra.mxu0 %v3436
      %4807 = vmatpush.bf16.msra.mxu0 %v3432
      %4808 = vmatpush.bf16.msra.mxu0 %v3428
      %4809 = vmatpush.bf16.msra.mxu0 %v3424
      %4810 = vmatpush.bf16.msra.mxu0 %v3420
      %4811 = vmatpush.bf16.msra.mxu0 %v3416
      %4812 = vmatpush.bf16.msra.mxu0 %v3412
      %4813 = vmatpush.bf16.msra.mxu0 %v3408
      %4814 = vmatmul.bf16.gmra.mxu0 %v1422
      %v4815 = vpop.f32.mrf.mxu0
      %v4816 = vadd.f32 %v4803, %v4815
      %v4817 = vpop.f32.mrf.mxu0
      %4818 = vdwg.mxu0
      %4819 = vmatpush.bf16.msra.mxu0 %v3468
      %4820 = vmatpush.bf16.msra.mxu0 %v3464
      %4821 = vmatpush.bf16.msra.mxu0 %v3460
      %4822 = vmatpush.bf16.msra.mxu0 %v3456
      %4823 = vmatpush.bf16.msra.mxu0 %v3452
      %4824 = vmatpush.bf16.msra.mxu0 %v3448
      %4825 = vmatpush.bf16.msra.mxu0 %v3444
      %4826 = vmatpush.bf16.msra.mxu0 %v3440
      %4827 = vmatmul.bf16.gmra.mxu0 %v1429
      %v4828 = vpop.f32.mrf.mxu0
      %v4829 = vadd.f32 %v4816, %v4828
      %v4830 = vpop.f32.mrf.mxu0
      %4831 = vdwg.mxu0
      %4832 = vmatpush.bf16.msra.mxu0 %v3500
      %4833 = vmatpush.bf16.msra.mxu0 %v3496
      %4834 = vmatpush.bf16.msra.mxu0 %v3492
      %4835 = vmatpush.bf16.msra.mxu0 %v3488
      %4836 = vmatpush.bf16.msra.mxu0 %v3484
      %4837 = vmatpush.bf16.msra.mxu0 %v3480
      %4838 = vmatpush.bf16.msra.mxu0 %v3476
      %4839 = vmatpush.bf16.msra.mxu0 %v3472
      %4840 = vmatmul.bf16.gmra.mxu0 %v1436
      %v4841 = vpop.f32.mrf.mxu0
      %v4842 = vadd.f32 %v4829, %v4841
      %v4843 = vpop.f32.mrf.mxu0
      %4844 = vdwg.mxu0
      %v4845 = vpack.c.b16 %v1277, %v1277
      %v4846 = vpack.c.b16 %v1278, %v1278
      %v4847 = vpack.c.b16 %v1279, %v1279
      %v4848 = vpack.c.b16 %v1280, %v1280
      %v4849 = vpack.c.b16 %v1281, %v1281
      %v4850 = vpack.c.b16 %v1282, %v1282
      %v4851 = vpack.c.b16 %v1283, %v1283
      %v4852 = vpack.c.b16 %v1284, %v1284
      %v4853 = vpack.c.b16 %v1285, %v1285
      %v4854 = vpack.c.b16 %v1286, %v1286
      %v4855 = vpack.c.b16 %v1287, %v1287
      %v4856 = vpack.c.b16 %v1288, %v1288
      %v4857 = vpack.c.b16 %v1289, %v1289
      %v4858 = vpack.c.b16 %v1290, %v1290
      %v4859 = vpack.c.b16 %v1291, %v1291
      %v4860 = vpack.c.b16 %v1292, %v1292
      %v5389 = vunpack.c.l.b16 %v236
      %v5390 = vunpack.c.h.b16 %v236
      %v5391 = vunpack.c.l.b16 %v237
      %v5392 = vunpack.c.h.b16 %v237
      %v5393 = vunpack.c.l.b16 %v238
      %v5394 = vunpack.c.h.b16 %v238
      %v5395 = vunpack.c.l.b16 %v239
      %v5396 = vunpack.c.h.b16 %v239
      %v5397 = vunpack.c.l.b16 %v240
      %v5398 = vunpack.c.h.b16 %v240
      %v5399 = vunpack.c.l.b16 %v241
      %v5400 = vunpack.c.h.b16 %v241
      %v5401 = vunpack.c.l.b16 %v242
      %v5402 = vunpack.c.h.b16 %v242
      %v5403 = vunpack.c.l.b16 %v243
      %v5404 = vunpack.c.h.b16 %v243
      %v5405 = vunpack.c.l.b16 %v244
      %v5406 = vunpack.c.h.b16 %v244
      %v5407 = vunpack.c.l.b16 %v245
      %v5408 = vunpack.c.h.b16 %v245
      %v5409 = vunpack.c.l.b16 %v246
      %v5410 = vunpack.c.h.b16 %v246
      %v5411 = vunpack.c.l.b16 %v247
      %v5412 = vunpack.c.h.b16 %v247
      %v5413 = vunpack.c.l.b16 %v248
      %v5414 = vunpack.c.h.b16 %v248
      %v5415 = vunpack.c.l.b16 %v249
      %v5416 = vunpack.c.h.b16 %v249
      %v5417 = vunpack.c.l.b16 %v250
      %v5418 = vunpack.c.h.b16 %v250
      %v5419 = vunpack.c.l.b16 %v251
      %v5420 = vunpack.c.h.b16 %v251
      %v5421 = vunpack.c.l.b16 %v252
      %v5422 = vunpack.c.h.b16 %v252
      %v5423 = vunpack.c.l.b16 %v253
      %v5424 = vunpack.c.h.b16 %v253
      %v5425 = vunpack.c.l.b16 %v254
      %v5426 = vunpack.c.h.b16 %v254
      %v5427 = vunpack.c.l.b16 %v255
      %v5428 = vunpack.c.h.b16 %v255
      %v5429 = vunpack.c.l.b16 %v256
      %v5430 = vunpack.c.h.b16 %v256
      %v5431 = vunpack.c.l.b16 %v257
      %v5432 = vunpack.c.h.b16 %v257
      %v5433 = vunpack.c.l.b16 %v258
      %v5434 = vunpack.c.h.b16 %v258
      %v5435 = vunpack.c.l.b16 %v259
      %v5436 = vunpack.c.h.b16 %v259
      %v5437 = vunpack.c.l.b16 %v260
      %v5438 = vunpack.c.h.b16 %v260
      %v5439 = vunpack.c.l.b16 %v261
      %v5440 = vunpack.c.h.b16 %v261
      %v5441 = vunpack.c.l.b16 %v262
      %v5442 = vunpack.c.h.b16 %v262
      %v5443 = vunpack.c.l.b16 %v263
      %v5444 = vunpack.c.h.b16 %v263
      %v5445 = vunpack.c.l.b16 %v264
      %v5446 = vunpack.c.h.b16 %v264
      %v5447 = vunpack.c.l.b16 %v265
      %v5448 = vunpack.c.h.b16 %v265
      %v5449 = vunpack.c.l.b16 %v266
      %v5450 = vunpack.c.h.b16 %v266
      %v5451 = vunpack.c.l.b16 %v267
      %v5452 = vunpack.c.h.b16 %v267
      %v5453 = vunpack.c.l.b16 %v268
      %v5454 = vunpack.c.h.b16 %v268
      %v5455 = vunpack.c.l.b16 %v269
      %v5456 = vunpack.c.h.b16 %v269
      %v5457 = vunpack.c.l.b16 %v270
      %v5458 = vunpack.c.h.b16 %v270
      %v5459 = vunpack.c.l.b16 %v271
      %v5460 = vunpack.c.h.b16 %v271
      %v5461 = vunpack.c.l.b16 %v272
      %v5462 = vunpack.c.h.b16 %v272
      %v5463 = vunpack.c.l.b16 %v273
      %v5464 = vunpack.c.h.b16 %v273
      %v5465 = vunpack.c.l.b16 %v274
      %v5466 = vunpack.c.h.b16 %v274
      %v5467 = vunpack.c.l.b16 %v275
      %v5468 = vunpack.c.h.b16 %v275
      %v5469 = vunpack.c.l.b16 %v276
      %v5470 = vunpack.c.h.b16 %v276
      %v5471 = vunpack.c.l.b16 %v277
      %v5472 = vunpack.c.h.b16 %v277
      %v5473 = vunpack.c.l.b16 %v278
      %v5474 = vunpack.c.h.b16 %v278
      %v5475 = vunpack.c.l.b16 %v279
      %v5476 = vunpack.c.h.b16 %v279
      %v5477 = vunpack.c.l.b16 %v280
      %v5478 = vunpack.c.h.b16 %v280
      %v5479 = vunpack.c.l.b16 %v281
      %v5480 = vunpack.c.h.b16 %v281
      %v5481 = vunpack.c.l.b16 %v282
      %v5482 = vunpack.c.h.b16 %v282
      %v5483 = vunpack.c.l.b16 %v283
      %v5484 = vunpack.c.h.b16 %v283
      %v5485 = vunpack.c.l.b16 %v284
      %v5486 = vunpack.c.h.b16 %v284
      %v5487 = vunpack.c.l.b16 %v285
      %v5488 = vunpack.c.h.b16 %v285
      %v5489 = vunpack.c.l.b16 %v286
      %v5490 = vunpack.c.h.b16 %v286
      %v5491 = vunpack.c.l.b16 %v287
      %v5492 = vunpack.c.h.b16 %v287
      %v5493 = vunpack.c.l.b16 %v288
      %v5494 = vunpack.c.h.b16 %v288
      %v5495 = vunpack.c.l.b16 %v289
      %v5496 = vunpack.c.h.b16 %v289
      %v5497 = vunpack.c.l.b16 %v290
      %v5498 = vunpack.c.h.b16 %v290
      %v5499 = vunpack.c.l.b16 %v291
      %v5500 = vunpack.c.h.b16 %v291
      %v5501 = vunpack.c.l.b16 %v292
      %v5502 = vunpack.c.h.b16 %v292
      %v5503 = vunpack.c.l.b16 %v293
      %v5504 = vunpack.c.h.b16 %v293
      %v5505 = vunpack.c.l.b16 %v294
      %v5506 = vunpack.c.h.b16 %v294
      %v5507 = vunpack.c.l.b16 %v295
      %v5508 = vunpack.c.h.b16 %v295
      %v5509 = vunpack.c.l.b16 %v296
      %v5510 = vunpack.c.h.b16 %v296
      %v5511 = vunpack.c.l.b16 %v297
      %v5512 = vunpack.c.h.b16 %v297
      %v5513 = vunpack.c.l.b16 %v298
      %v5514 = vunpack.c.h.b16 %v298
      %v5515 = vunpack.c.l.b16 %v299
      %v5516 = vunpack.c.h.b16 %v299
      %v5517 = vunpack.c.l.b16 %v300
      %v5518 = vunpack.c.h.b16 %v300
      %v5519 = vunpack.c.l.b16 %v301
      %v5520 = vunpack.c.h.b16 %v301
      %v5521 = vunpack.c.l.b16 %v302
      %v5522 = vunpack.c.h.b16 %v302
      %v5523 = vunpack.c.l.b16 %v303
      %v5524 = vunpack.c.h.b16 %v303
      %v5525 = vunpack.c.l.b16 %v304
      %v5526 = vunpack.c.h.b16 %v304
      %v5527 = vunpack.c.l.b16 %v305
      %v5528 = vunpack.c.h.b16 %v305
      %v5529 = vunpack.c.l.b16 %v306
      %v5530 = vunpack.c.h.b16 %v306
      %v5531 = vunpack.c.l.b16 %v307
      %v5532 = vunpack.c.h.b16 %v307
      %v5533 = vunpack.c.l.b16 %v308
      %v5534 = vunpack.c.h.b16 %v308
      %v5535 = vunpack.c.l.b16 %v309
      %v5536 = vunpack.c.h.b16 %v309
      %v5537 = vunpack.c.l.b16 %v310
      %v5538 = vunpack.c.h.b16 %v310
      %v5539 = vunpack.c.l.b16 %v311
      %v5540 = vunpack.c.h.b16 %v311
      %v5541 = vunpack.c.l.b16 %v312
      %v5542 = vunpack.c.h.b16 %v312
      %v5543 = vunpack.c.l.b16 %v313
      %v5544 = vunpack.c.h.b16 %v313
      %v5545 = vunpack.c.l.b16 %v314
      %v5546 = vunpack.c.h.b16 %v314
      %v5547 = vunpack.c.l.b16 %v315
      %v5548 = vunpack.c.h.b16 %v315
      %v5549 = vunpack.c.l.b16 %v316
      %v5550 = vunpack.c.h.b16 %v316
      %v5551 = vunpack.c.l.b16 %v317
      %v5552 = vunpack.c.h.b16 %v317
      %v5553 = vunpack.c.l.b16 %v318
      %v5554 = vunpack.c.h.b16 %v318
      %v5555 = vunpack.c.l.b16 %v319
      %v5556 = vunpack.c.h.b16 %v319
      %v5557 = vunpack.c.l.b16 %v320
      %v5558 = vunpack.c.h.b16 %v320
      %v5559 = vunpack.c.l.b16 %v321
      %v5560 = vunpack.c.h.b16 %v321
      %v5561 = vunpack.c.l.b16 %v322
      %v5562 = vunpack.c.h.b16 %v322
      %v5563 = vunpack.c.l.b16 %v323
      %v5564 = vunpack.c.h.b16 %v323
      %v5565 = vunpack.c.l.b16 %v324
      %v5566 = vunpack.c.h.b16 %v324
      %v5567 = vunpack.c.l.b16 %v325
      %v5568 = vunpack.c.h.b16 %v325
      %v5569 = vunpack.c.l.b16 %v326
      %v5570 = vunpack.c.h.b16 %v326
      %v5571 = vunpack.c.l.b16 %v327
      %v5572 = vunpack.c.h.b16 %v327
      %v5573 = vunpack.c.l.b16 %v328
      %v5574 = vunpack.c.h.b16 %v328
      %v5575 = vunpack.c.l.b16 %v329
      %v5576 = vunpack.c.h.b16 %v329
      %v5577 = vunpack.c.l.b16 %v330
      %v5578 = vunpack.c.h.b16 %v330
      %v5579 = vunpack.c.l.b16 %v331
      %v5580 = vunpack.c.h.b16 %v331
      %v5581 = vunpack.c.l.b16 %v332
      %v5582 = vunpack.c.h.b16 %v332
      %v5583 = vunpack.c.l.b16 %v333
      %v5584 = vunpack.c.h.b16 %v333
      %v5585 = vunpack.c.l.b16 %v334
      %v5586 = vunpack.c.h.b16 %v334
      %v5587 = vunpack.c.l.b16 %v335
      %v5588 = vunpack.c.h.b16 %v335
      %v5589 = vunpack.c.l.b16 %v336
      %v5590 = vunpack.c.h.b16 %v336
      %v5591 = vunpack.c.l.b16 %v337
      %v5592 = vunpack.c.h.b16 %v337
      %v5593 = vunpack.c.l.b16 %v338
      %v5594 = vunpack.c.h.b16 %v338
      %v5595 = vunpack.c.l.b16 %v339
      %v5596 = vunpack.c.h.b16 %v339
      %v5597 = vunpack.c.l.b16 %v340
      %v5598 = vunpack.c.h.b16 %v340
      %v5599 = vunpack.c.l.b16 %v341
      %v5600 = vunpack.c.h.b16 %v341
      %v5601 = vunpack.c.l.b16 %v342
      %v5602 = vunpack.c.h.b16 %v342
      %v5603 = vunpack.c.l.b16 %v343
      %v5604 = vunpack.c.h.b16 %v343
      %v5605 = vunpack.c.l.b16 %v344
      %v5606 = vunpack.c.h.b16 %v344
      %v5607 = vunpack.c.l.b16 %v345
      %v5608 = vunpack.c.h.b16 %v345
      %v5609 = vunpack.c.l.b16 %v346
      %v5610 = vunpack.c.h.b16 %v346
      %v5611 = vunpack.c.l.b16 %v347
      %v5612 = vunpack.c.h.b16 %v347
      %v5613 = vunpack.c.l.b16 %v348
      %v5614 = vunpack.c.h.b16 %v348
      %v5615 = vunpack.c.l.b16 %v349
      %v5616 = vunpack.c.h.b16 %v349
      %v5617 = vunpack.c.l.b16 %v350
      %v5618 = vunpack.c.h.b16 %v350
      %v5619 = vunpack.c.l.b16 %v351
      %v5620 = vunpack.c.h.b16 %v351
      %v5621 = vunpack.c.l.b16 %v352
      %v5622 = vunpack.c.h.b16 %v352
      %v5623 = vunpack.c.l.b16 %v353
      %v5624 = vunpack.c.h.b16 %v353
      %v5625 = vunpack.c.l.b16 %v354
      %v5626 = vunpack.c.h.b16 %v354
      %v5627 = vunpack.c.l.b16 %v355
      %v5628 = vunpack.c.h.b16 %v355
      %v5629 = vunpack.c.l.b16 %v356
      %v5630 = vunpack.c.h.b16 %v356
      %v5631 = vunpack.c.l.b16 %v357
      %v5632 = vunpack.c.h.b16 %v357
      %v5633 = vunpack.c.l.b16 %v358
      %v5634 = vunpack.c.h.b16 %v358
      %v5635 = vunpack.c.l.b16 %v359
      %v5636 = vunpack.c.h.b16 %v359
      %v5637 = vunpack.c.l.b16 %v360
      %v5638 = vunpack.c.h.b16 %v360
      %v5639 = vunpack.c.l.b16 %v361
      %v5640 = vunpack.c.h.b16 %v361
      %v5641 = vunpack.c.l.b16 %v362
      %v5642 = vunpack.c.h.b16 %v362
      %v5643 = vunpack.c.l.b16 %v363
      %v5644 = vunpack.c.h.b16 %v363
      %v5645 = vunpack.c.l.b16 %v364
      %v5646 = vunpack.c.h.b16 %v364
      %v5647 = vunpack.c.l.b16 %v365
      %v5648 = vunpack.c.h.b16 %v365
      %v5649 = vunpack.c.l.b16 %v366
      %v5650 = vunpack.c.h.b16 %v366
      %v5651 = vunpack.c.l.b16 %v367
      %v5652 = vunpack.c.h.b16 %v367
      %v5653 = vunpack.c.l.b16 %v368
      %v5654 = vunpack.c.h.b16 %v368
      %v5655 = vunpack.c.l.b16 %v369
      %v5656 = vunpack.c.h.b16 %v369
      %v5657 = vunpack.c.l.b16 %v370
      %v5658 = vunpack.c.h.b16 %v370
      %v5659 = vunpack.c.l.b16 %v371
      %v5660 = vunpack.c.h.b16 %v371
      %v5661 = vunpack.c.l.b16 %v372
      %v5662 = vunpack.c.h.b16 %v372
      %v5663 = vunpack.c.l.b16 %v373
      %v5664 = vunpack.c.h.b16 %v373
      %v5665 = vunpack.c.l.b16 %v374
      %v5666 = vunpack.c.h.b16 %v374
      %v5667 = vunpack.c.l.b16 %v375
      %v5668 = vunpack.c.h.b16 %v375
      %v5669 = vunpack.c.l.b16 %v376
      %v5670 = vunpack.c.h.b16 %v376
      %v5671 = vunpack.c.l.b16 %v377
      %v5672 = vunpack.c.h.b16 %v377
      %v5673 = vunpack.c.l.b16 %v378
      %v5674 = vunpack.c.h.b16 %v378
      %v5675 = vunpack.c.l.b16 %v379
      %v5676 = vunpack.c.h.b16 %v379
      %v5677 = vunpack.c.l.b16 %v380
      %v5678 = vunpack.c.h.b16 %v380
      %v5679 = vunpack.c.l.b16 %v381
      %v5680 = vunpack.c.h.b16 %v381
      %v5681 = vunpack.c.l.b16 %v382
      %v5682 = vunpack.c.h.b16 %v382
      %v5683 = vunpack.c.l.b16 %v383
      %v5684 = vunpack.c.h.b16 %v383
      %v5685 = vunpack.c.l.b16 %v384
      %v5686 = vunpack.c.h.b16 %v384
      %v5687 = vunpack.c.l.b16 %v385
      %v5688 = vunpack.c.h.b16 %v385
      %v5689 = vunpack.c.l.b16 %v386
      %v5690 = vunpack.c.h.b16 %v386
      %v5691 = vunpack.c.l.b16 %v387
      %v5692 = vunpack.c.h.b16 %v387
      %v5693 = vunpack.c.l.b16 %v388
      %v5694 = vunpack.c.h.b16 %v388
      %v5695 = vunpack.c.l.b16 %v389
      %v5696 = vunpack.c.h.b16 %v389
      %v5697 = vunpack.c.l.b16 %v390
      %v5698 = vunpack.c.h.b16 %v390
      %v5699 = vunpack.c.l.b16 %v391
      %v5700 = vunpack.c.h.b16 %v391
      %v5701 = vunpack.c.l.b16 %v392
      %v5702 = vunpack.c.h.b16 %v392
      %v5703 = vunpack.c.l.b16 %v393
      %v5704 = vunpack.c.h.b16 %v393
      %v5705 = vunpack.c.l.b16 %v394
      %v5706 = vunpack.c.h.b16 %v394
      %v5707 = vunpack.c.l.b16 %v395
      %v5708 = vunpack.c.h.b16 %v395
      %v5709 = vunpack.c.l.b16 %v396
      %v5710 = vunpack.c.h.b16 %v396
      %v5711 = vunpack.c.l.b16 %v397
      %v5712 = vunpack.c.h.b16 %v397
      %v5713 = vunpack.c.l.b16 %v398
      %v5714 = vunpack.c.h.b16 %v398
      %v5715 = vunpack.c.l.b16 %v399
      %v5716 = vunpack.c.h.b16 %v399
      %v5717 = vunpack.c.l.b16 %v400
      %v5718 = vunpack.c.h.b16 %v400
      %v5719 = vunpack.c.l.b16 %v401
      %v5720 = vunpack.c.h.b16 %v401
      %v5721 = vunpack.c.l.b16 %v402
      %v5722 = vunpack.c.h.b16 %v402
      %v5723 = vunpack.c.l.b16 %v403
      %v5724 = vunpack.c.h.b16 %v403
      %v5725 = vunpack.c.l.b16 %v404
      %v5726 = vunpack.c.h.b16 %v404
      %v5727 = vunpack.c.l.b16 %v405
      %v5728 = vunpack.c.h.b16 %v405
      %v5729 = vunpack.c.l.b16 %v406
      %v5730 = vunpack.c.h.b16 %v406
      %v5731 = vunpack.c.l.b16 %v407
      %v5732 = vunpack.c.h.b16 %v407
      %v5733 = vunpack.c.l.b16 %v408
      %v5734 = vunpack.c.h.b16 %v408
      %v5735 = vunpack.c.l.b16 %v409
      %v5736 = vunpack.c.h.b16 %v409
      %v5737 = vunpack.c.l.b16 %v410
      %v5738 = vunpack.c.h.b16 %v410
      %v5739 = vunpack.c.l.b16 %v411
      %v5740 = vunpack.c.h.b16 %v411
      %v5741 = vunpack.c.l.b16 %v412
      %v5742 = vunpack.c.h.b16 %v412
      %v5743 = vunpack.c.l.b16 %v413
      %v5744 = vunpack.c.h.b16 %v413
      %v5745 = vunpack.c.l.b16 %v414
      %v5746 = vunpack.c.h.b16 %v414
      %v5747 = vunpack.c.l.b16 %v415
      %v5748 = vunpack.c.h.b16 %v415
      %v5749 = vunpack.c.l.b16 %v416
      %v5750 = vunpack.c.h.b16 %v416
      %v5751 = vunpack.c.l.b16 %v417
      %v5752 = vunpack.c.h.b16 %v417
      %v5753 = vunpack.c.l.b16 %v418
      %v5754 = vunpack.c.h.b16 %v418
      %v5755 = vunpack.c.l.b16 %v419
      %v5756 = vunpack.c.h.b16 %v419
      %v5757 = vunpack.c.l.b16 %v420
      %v5758 = vunpack.c.h.b16 %v420
      %v5759 = vunpack.c.l.b16 %v421
      %v5760 = vunpack.c.h.b16 %v421
      %v5761 = vunpack.c.l.b16 %v422
      %v5762 = vunpack.c.h.b16 %v422
      %v5763 = vunpack.c.l.b16 %v423
      %v5764 = vunpack.c.h.b16 %v423
      %v5765 = vunpack.c.l.b16 %v424
      %v5766 = vunpack.c.h.b16 %v424
      %v5767 = vunpack.c.l.b16 %v425
      %v5768 = vunpack.c.h.b16 %v425
      %v5769 = vunpack.c.l.b16 %v426
      %v5770 = vunpack.c.h.b16 %v426
      %v5771 = vunpack.c.l.b16 %v427
      %v5772 = vunpack.c.h.b16 %v427
      %v5773 = vunpack.c.l.b16 %v428
      %v5774 = vunpack.c.h.b16 %v428
      %v5775 = vunpack.c.l.b16 %v429
      %v5776 = vunpack.c.h.b16 %v429
      %v5777 = vunpack.c.l.b16 %v430
      %v5778 = vunpack.c.h.b16 %v430
      %v5779 = vunpack.c.l.b16 %v431
      %v5780 = vunpack.c.h.b16 %v431
      %v5781 = vunpack.c.l.b16 %v432
      %v5782 = vunpack.c.h.b16 %v432
      %v5783 = vunpack.c.l.b16 %v433
      %v5784 = vunpack.c.h.b16 %v433
      %v5785 = vunpack.c.l.b16 %v434
      %v5786 = vunpack.c.h.b16 %v434
      %v5787 = vunpack.c.l.b16 %v435
      %v5788 = vunpack.c.h.b16 %v435
      %v5789 = vunpack.c.l.b16 %v436
      %v5790 = vunpack.c.h.b16 %v436
      %v5791 = vunpack.c.l.b16 %v437
      %v5792 = vunpack.c.h.b16 %v437
      %v5793 = vunpack.c.l.b16 %v438
      %v5794 = vunpack.c.h.b16 %v438
      %v5795 = vunpack.c.l.b16 %v439
      %v5796 = vunpack.c.h.b16 %v439
      %v5797 = vunpack.c.l.b16 %v440
      %v5798 = vunpack.c.h.b16 %v440
      %v5799 = vunpack.c.l.b16 %v441
      %v5800 = vunpack.c.h.b16 %v441
      %v5801 = vunpack.c.l.b16 %v442
      %v5802 = vunpack.c.h.b16 %v442
      %v5803 = vunpack.c.l.b16 %v443
      %v5804 = vunpack.c.h.b16 %v443
      %v5805 = vunpack.c.l.b16 %v444
      %v5806 = vunpack.c.h.b16 %v444
      %v5807 = vunpack.c.l.b16 %v445
      %v5808 = vunpack.c.h.b16 %v445
      %v5809 = vunpack.c.l.b16 %v446
      %v5810 = vunpack.c.h.b16 %v446
      %v5811 = vunpack.c.l.b16 %v447
      %v5812 = vunpack.c.h.b16 %v447
      %v5813 = vunpack.c.l.b16 %v448
      %v5814 = vunpack.c.h.b16 %v448
      %v5815 = vunpack.c.l.b16 %v449
      %v5816 = vunpack.c.h.b16 %v449
      %v5817 = vunpack.c.l.b16 %v450
      %v5818 = vunpack.c.h.b16 %v450
      %v5819 = vunpack.c.l.b16 %v451
      %v5820 = vunpack.c.h.b16 %v451
      %v5821 = vunpack.c.l.b16 %v452
      %v5822 = vunpack.c.h.b16 %v452
      %v5823 = vunpack.c.l.b16 %v453
      %v5824 = vunpack.c.h.b16 %v453
      %v5825 = vunpack.c.l.b16 %v454
      %v5826 = vunpack.c.h.b16 %v454
      %v5827 = vunpack.c.l.b16 %v455
      %v5828 = vunpack.c.h.b16 %v455
      %v5829 = vunpack.c.l.b16 %v456
      %v5830 = vunpack.c.h.b16 %v456
      %v5831 = vunpack.c.l.b16 %v457
      %v5832 = vunpack.c.h.b16 %v457
      %v5833 = vunpack.c.l.b16 %v458
      %v5834 = vunpack.c.h.b16 %v458
      %v5835 = vunpack.c.l.b16 %v459
      %v5836 = vunpack.c.h.b16 %v459
      %v5837 = vunpack.c.l.b16 %v460
      %v5838 = vunpack.c.h.b16 %v460
      %v5839 = vunpack.c.l.b16 %v461
      %v5840 = vunpack.c.h.b16 %v461
      %v5841 = vunpack.c.l.b16 %v462
      %v5842 = vunpack.c.h.b16 %v462
      %v5843 = vunpack.c.l.b16 %v463
      %v5844 = vunpack.c.h.b16 %v463
      %v5845 = vunpack.c.l.b16 %v464
      %v5846 = vunpack.c.h.b16 %v464
      %v5847 = vunpack.c.l.b16 %v465
      %v5848 = vunpack.c.h.b16 %v465
      %v5849 = vunpack.c.l.b16 %v466
      %v5850 = vunpack.c.h.b16 %v466
      %v5851 = vunpack.c.l.b16 %v467
      %v5852 = vunpack.c.h.b16 %v467
      %v5853 = vunpack.c.l.b16 %v468
      %v5854 = vunpack.c.h.b16 %v468
      %v5855 = vunpack.c.l.b16 %v469
      %v5856 = vunpack.c.h.b16 %v469
      %v5857 = vunpack.c.l.b16 %v470
      %v5858 = vunpack.c.h.b16 %v470
      %v5859 = vunpack.c.l.b16 %v471
      %v5860 = vunpack.c.h.b16 %v471
      %v5861 = vunpack.c.l.b16 %v472
      %v5862 = vunpack.c.h.b16 %v472
      %v5863 = vunpack.c.l.b16 %v473
      %v5864 = vunpack.c.h.b16 %v473
      %v5865 = vunpack.c.l.b16 %v474
      %v5866 = vunpack.c.h.b16 %v474
      %v5867 = vunpack.c.l.b16 %v475
      %v5868 = vunpack.c.h.b16 %v475
      %v5869 = vunpack.c.l.b16 %v476
      %v5870 = vunpack.c.h.b16 %v476
      %v5871 = vunpack.c.l.b16 %v477
      %v5872 = vunpack.c.h.b16 %v477
      %v5873 = vunpack.c.l.b16 %v478
      %v5874 = vunpack.c.h.b16 %v478
      %v5875 = vunpack.c.l.b16 %v479
      %v5876 = vunpack.c.h.b16 %v479
      %v5877 = vunpack.c.l.b16 %v480
      %v5878 = vunpack.c.h.b16 %v480
      %v5879 = vunpack.c.l.b16 %v481
      %v5880 = vunpack.c.h.b16 %v481
      %v5881 = vunpack.c.l.b16 %v482
      %v5882 = vunpack.c.h.b16 %v482
      %v5883 = vunpack.c.l.b16 %v483
      %v5884 = vunpack.c.h.b16 %v483
      %v5885 = vunpack.c.l.b16 %v484
      %v5886 = vunpack.c.h.b16 %v484
      %v5887 = vunpack.c.l.b16 %v485
      %v5888 = vunpack.c.h.b16 %v485
      %v5889 = vunpack.c.l.b16 %v486
      %v5890 = vunpack.c.h.b16 %v486
      %v5891 = vunpack.c.l.b16 %v487
      %v5892 = vunpack.c.h.b16 %v487
      %v5893 = vunpack.c.l.b16 %v488
      %v5894 = vunpack.c.h.b16 %v488
      %v5895 = vunpack.c.l.b16 %v489
      %v5896 = vunpack.c.h.b16 %v489
      %v5897 = vunpack.c.l.b16 %v490
      %v5898 = vunpack.c.h.b16 %v490
      %v5899 = vunpack.c.l.b16 %v491
      %v5900 = vunpack.c.h.b16 %v491
      %v5901 = vunpack.c.l.b16 %v492
      %v5902 = vunpack.c.h.b16 %v492
      %v5903 = vunpack.c.l.b16 %v493
      %v5904 = vunpack.c.h.b16 %v493
      %v5905 = vunpack.c.l.b16 %v494
      %v5906 = vunpack.c.h.b16 %v494
      %v5907 = vunpack.c.l.b16 %v495
      %v5908 = vunpack.c.h.b16 %v495
      %v5909 = vunpack.c.l.b16 %v496
      %v5910 = vunpack.c.h.b16 %v496
      %v5911 = vunpack.c.l.b16 %v497
      %v5912 = vunpack.c.h.b16 %v497
      %v5913 = vunpack.c.l.b16 %v498
      %v5914 = vunpack.c.h.b16 %v498
      %v5915 = vunpack.c.l.b16 %v499
      %v5916 = vunpack.c.h.b16 %v499
      %v5917 = vunpack.c.l.b16 %v500
      %v5918 = vunpack.c.h.b16 %v500
      %v5919 = vunpack.c.l.b16 %v501
      %v5920 = vunpack.c.h.b16 %v501
      %v5921 = vunpack.c.l.b16 %v502
      %v5922 = vunpack.c.h.b16 %v502
      %v5923 = vunpack.c.l.b16 %v503
      %v5924 = vunpack.c.h.b16 %v503
      %v5925 = vunpack.c.l.b16 %v504
      %v5926 = vunpack.c.h.b16 %v504
      %v5927 = vunpack.c.l.b16 %v505
      %v5928 = vunpack.c.h.b16 %v505
      %v5929 = vunpack.c.l.b16 %v506
      %v5930 = vunpack.c.h.b16 %v506
      %v5931 = vunpack.c.l.b16 %v507
      %v5932 = vunpack.c.h.b16 %v507
      %v5933 = vunpack.c.l.b16 %v508
      %v5934 = vunpack.c.h.b16 %v508
      %v5935 = vunpack.c.l.b16 %v509
      %v5936 = vunpack.c.h.b16 %v509
      %v5937 = vunpack.c.l.b16 %v510
      %v5938 = vunpack.c.h.b16 %v510
      %v5939 = vunpack.c.l.b16 %v511
      %v5940 = vunpack.c.h.b16 %v511
      %v5941 = vunpack.c.l.b16 %v512
      %v5942 = vunpack.c.h.b16 %v512
      %v5943 = vunpack.c.l.b16 %v513
      %v5944 = vunpack.c.h.b16 %v513
      %v5945 = vunpack.c.l.b16 %v514
      %v5946 = vunpack.c.h.b16 %v514
      %v5947 = vunpack.c.l.b16 %v515
      %v5948 = vunpack.c.h.b16 %v515
      %v5949 = vunpack.c.l.b16 %v516
      %v5950 = vunpack.c.h.b16 %v516
      %v5951 = vunpack.c.l.b16 %v517
      %v5952 = vunpack.c.h.b16 %v517
      %v5953 = vunpack.c.l.b16 %v518
      %v5954 = vunpack.c.h.b16 %v518
      %v5955 = vunpack.c.l.b16 %v519
      %v5956 = vunpack.c.h.b16 %v519
      %v5957 = vunpack.c.l.b16 %v520
      %v5958 = vunpack.c.h.b16 %v520
      %v5959 = vunpack.c.l.b16 %v521
      %v5960 = vunpack.c.h.b16 %v521
      %v5961 = vunpack.c.l.b16 %v522
      %v5962 = vunpack.c.h.b16 %v522
      %v5963 = vunpack.c.l.b16 %v523
      %v5964 = vunpack.c.h.b16 %v523
      %v5965 = vunpack.c.l.b16 %v524
      %v5966 = vunpack.c.h.b16 %v524
      %v5967 = vunpack.c.l.b16 %v525
      %v5968 = vunpack.c.h.b16 %v525
      %v5969 = vunpack.c.l.b16 %v526
      %v5970 = vunpack.c.h.b16 %v526
      %v5971 = vunpack.c.l.b16 %v527
      %v5972 = vunpack.c.h.b16 %v527
      %v5973 = vunpack.c.l.b16 %v528
      %v5974 = vunpack.c.h.b16 %v528
      %v5975 = vunpack.c.l.b16 %v529
      %v5976 = vunpack.c.h.b16 %v529
      %v5977 = vunpack.c.l.b16 %v530
      %v5978 = vunpack.c.h.b16 %v530
      %v5979 = vunpack.c.l.b16 %v531
      %v5980 = vunpack.c.h.b16 %v531
      %v5981 = vunpack.c.l.b16 %v532
      %v5982 = vunpack.c.h.b16 %v532
      %v5983 = vunpack.c.l.b16 %v533
      %v5984 = vunpack.c.h.b16 %v533
      %v5985 = vunpack.c.l.b16 %v534
      %v5986 = vunpack.c.h.b16 %v534
      %v5987 = vunpack.c.l.b16 %v535
      %v5988 = vunpack.c.h.b16 %v535
      %v5989 = vunpack.c.l.b16 %v536
      %v5990 = vunpack.c.h.b16 %v536
      %v5991 = vunpack.c.l.b16 %v537
      %v5992 = vunpack.c.h.b16 %v537
      %v5993 = vunpack.c.l.b16 %v538
      %v5994 = vunpack.c.h.b16 %v538
      %v5995 = vunpack.c.l.b16 %v539
      %v5996 = vunpack.c.h.b16 %v539
      %v5997 = vunpack.c.l.b16 %v540
      %v5998 = vunpack.c.h.b16 %v540
      %v5999 = vunpack.c.l.b16 %v541
      %v6000 = vunpack.c.h.b16 %v541
      %v6001 = vunpack.c.l.b16 %v542
      %v6002 = vunpack.c.h.b16 %v542
      %v6003 = vunpack.c.l.b16 %v543
      %v6004 = vunpack.c.h.b16 %v543
      %v6005 = vunpack.c.l.b16 %v544
      %v6006 = vunpack.c.h.b16 %v544
      %v6007 = vunpack.c.l.b16 %v545
      %v6008 = vunpack.c.h.b16 %v545
      %v6009 = vunpack.c.l.b16 %v546
      %v6010 = vunpack.c.h.b16 %v546
      %v6011 = vunpack.c.l.b16 %v547
      %v6012 = vunpack.c.h.b16 %v547
      %v6013 = vunpack.c.l.b16 %v548
      %v6014 = vunpack.c.h.b16 %v548
      %v6015 = vunpack.c.l.b16 %v549
      %v6016 = vunpack.c.h.b16 %v549
      %v6017 = vunpack.c.l.b16 %v550
      %v6018 = vunpack.c.h.b16 %v550
      %v6019 = vunpack.c.l.b16 %v551
      %v6020 = vunpack.c.h.b16 %v551
      %v6021 = vunpack.c.l.b16 %v552
      %v6022 = vunpack.c.h.b16 %v552
      %v6023 = vunpack.c.l.b16 %v553
      %v6024 = vunpack.c.h.b16 %v553
      %v6025 = vunpack.c.l.b16 %v554
      %v6026 = vunpack.c.h.b16 %v554
      %v6027 = vunpack.c.l.b16 %v555
      %v6028 = vunpack.c.h.b16 %v555
      %v6029 = vunpack.c.l.b16 %v556
      %v6030 = vunpack.c.h.b16 %v556
      %v6031 = vunpack.c.l.b16 %v557
      %v6032 = vunpack.c.h.b16 %v557
      %v6033 = vunpack.c.l.b16 %v558
      %v6034 = vunpack.c.h.b16 %v558
      %v6035 = vunpack.c.l.b16 %v559
      %v6036 = vunpack.c.h.b16 %v559
      %v6037 = vunpack.c.l.b16 %v560
      %v6038 = vunpack.c.h.b16 %v560
      %v6039 = vunpack.c.l.b16 %v561
      %v6040 = vunpack.c.h.b16 %v561
      %v6041 = vunpack.c.l.b16 %v562
      %v6042 = vunpack.c.h.b16 %v562
      %v6043 = vunpack.c.l.b16 %v563
      %v6044 = vunpack.c.h.b16 %v563
      %v6045 = vunpack.c.l.b16 %v564
      %v6046 = vunpack.c.h.b16 %v564
      %v6047 = vunpack.c.l.b16 %v565
      %v6048 = vunpack.c.h.b16 %v565
      %v6049 = vunpack.c.l.b16 %v566
      %v6050 = vunpack.c.h.b16 %v566
      %v6051 = vunpack.c.l.b16 %v567
      %v6052 = vunpack.c.h.b16 %v567
      %v6053 = vunpack.c.l.b16 %v568
      %v6054 = vunpack.c.h.b16 %v568
      %v6055 = vunpack.c.l.b16 %v569
      %v6056 = vunpack.c.h.b16 %v569
      %v6057 = vunpack.c.l.b16 %v570
      %v6058 = vunpack.c.h.b16 %v570
      %v6059 = vunpack.c.l.b16 %v571
      %v6060 = vunpack.c.h.b16 %v571
      %v6061 = vunpack.c.l.b16 %v572
      %v6062 = vunpack.c.h.b16 %v572
      %v6063 = vunpack.c.l.b16 %v573
      %v6064 = vunpack.c.h.b16 %v573
      %v6065 = vunpack.c.l.b16 %v574
      %v6066 = vunpack.c.h.b16 %v574
      %v6067 = vunpack.c.l.b16 %v575
      %v6068 = vunpack.c.h.b16 %v575
      %v6069 = vunpack.c.l.b16 %v576
      %v6070 = vunpack.c.h.b16 %v576
      %v6071 = vunpack.c.l.b16 %v577
      %v6072 = vunpack.c.h.b16 %v577
      %v6073 = vunpack.c.l.b16 %v578
      %v6074 = vunpack.c.h.b16 %v578
      %v6075 = vunpack.c.l.b16 %v579
      %v6076 = vunpack.c.h.b16 %v579
      %v6077 = vunpack.c.l.b16 %v580
      %v6078 = vunpack.c.h.b16 %v580
      %v6079 = vunpack.c.l.b16 %v581
      %v6080 = vunpack.c.h.b16 %v581
      %v6081 = vunpack.c.l.b16 %v582
      %v6082 = vunpack.c.h.b16 %v582
      %v6083 = vunpack.c.l.b16 %v583
      %v6084 = vunpack.c.h.b16 %v583
      %v6085 = vunpack.c.l.b16 %v584
      %v6086 = vunpack.c.h.b16 %v584
      %v6087 = vunpack.c.l.b16 %v585
      %v6088 = vunpack.c.h.b16 %v585
      %v6089 = vunpack.c.l.b16 %v586
      %v6090 = vunpack.c.h.b16 %v586
      %v6091 = vunpack.c.l.b16 %v587
      %v6092 = vunpack.c.h.b16 %v587
      %v6093 = vunpack.c.l.b16 %v588
      %v6094 = vunpack.c.h.b16 %v588
      %v6095 = vunpack.c.l.b16 %v589
      %v6096 = vunpack.c.h.b16 %v589
      %v6097 = vunpack.c.l.b16 %v590
      %v6098 = vunpack.c.h.b16 %v590
      %v6099 = vunpack.c.l.b16 %v591
      %v6100 = vunpack.c.h.b16 %v591
      %v6101 = vunpack.c.l.b16 %v592
      %v6102 = vunpack.c.h.b16 %v592
      %v6103 = vunpack.c.l.b16 %v593
      %v6104 = vunpack.c.h.b16 %v593
      %v6105 = vunpack.c.l.b16 %v594
      %v6106 = vunpack.c.h.b16 %v594
      %v6107 = vunpack.c.l.b16 %v595
      %v6108 = vunpack.c.h.b16 %v595
      %v6109 = vunpack.c.l.b16 %v596
      %v6110 = vunpack.c.h.b16 %v596
      %v6111 = vunpack.c.l.b16 %v597
      %v6112 = vunpack.c.h.b16 %v597
      %v6113 = vunpack.c.l.b16 %v598
      %v6114 = vunpack.c.h.b16 %v598
      %v6115 = vunpack.c.l.b16 %v599
      %v6116 = vunpack.c.h.b16 %v599
      %v6117 = vunpack.c.l.b16 %v600
      %v6118 = vunpack.c.h.b16 %v600
      %v6119 = vunpack.c.l.b16 %v601
      %v6120 = vunpack.c.h.b16 %v601
      %v6121 = vunpack.c.l.b16 %v602
      %v6122 = vunpack.c.h.b16 %v602
      %v6123 = vunpack.c.l.b16 %v603
      %v6124 = vunpack.c.h.b16 %v603
      %v6125 = vunpack.c.l.b16 %v604
      %v6126 = vunpack.c.h.b16 %v604
      %v6127 = vunpack.c.l.b16 %v605
      %v6128 = vunpack.c.h.b16 %v605
      %v6129 = vunpack.c.l.b16 %v606
      %v6130 = vunpack.c.h.b16 %v606
      %v6131 = vunpack.c.l.b16 %v607
      %v6132 = vunpack.c.h.b16 %v607
      %v6133 = vunpack.c.l.b16 %v608
      %v6134 = vunpack.c.h.b16 %v608
      %v6135 = vunpack.c.l.b16 %v609
      %v6136 = vunpack.c.h.b16 %v609
      %v6137 = vunpack.c.l.b16 %v610
      %v6138 = vunpack.c.h.b16 %v610
      %v6139 = vunpack.c.l.b16 %v611
      %v6140 = vunpack.c.h.b16 %v611
      %v6141 = vunpack.c.l.b16 %v612
      %v6142 = vunpack.c.h.b16 %v612
      %v6143 = vunpack.c.l.b16 %v613
      %v6144 = vunpack.c.h.b16 %v613
      %v6145 = vunpack.c.l.b16 %v614
      %v6146 = vunpack.c.h.b16 %v614
      %v6147 = vunpack.c.l.b16 %v615
      %v6148 = vunpack.c.h.b16 %v615
      %v6149 = vunpack.c.l.b16 %v616
      %v6150 = vunpack.c.h.b16 %v616
      %v6151 = vunpack.c.l.b16 %v617
      %v6152 = vunpack.c.h.b16 %v617
      %v6153 = vunpack.c.l.b16 %v618
      %v6154 = vunpack.c.h.b16 %v618
      %v6155 = vunpack.c.l.b16 %v619
      %v6156 = vunpack.c.h.b16 %v619
      %v6157 = vunpack.c.l.b16 %v620
      %v6158 = vunpack.c.h.b16 %v620
      %v6159 = vunpack.c.l.b16 %v621
      %v6160 = vunpack.c.h.b16 %v621
      %v6161 = vunpack.c.l.b16 %v622
      %v6162 = vunpack.c.h.b16 %v622
      %v6163 = vunpack.c.l.b16 %v623
      %v6164 = vunpack.c.h.b16 %v623
      %v6165 = vunpack.c.l.b16 %v624
      %v6166 = vunpack.c.h.b16 %v624
      %v6167 = vunpack.c.l.b16 %v625
      %v6168 = vunpack.c.h.b16 %v625
      %v6169 = vunpack.c.l.b16 %v626
      %v6170 = vunpack.c.h.b16 %v626
      %v6171 = vunpack.c.l.b16 %v627
      %v6172 = vunpack.c.h.b16 %v627
      %v6173 = vunpack.c.l.b16 %v628
      %v6174 = vunpack.c.h.b16 %v628
      %v6175 = vunpack.c.l.b16 %v629
      %v6176 = vunpack.c.h.b16 %v629
      %v6177 = vunpack.c.l.b16 %v630
      %v6178 = vunpack.c.h.b16 %v630
      %v6179 = vunpack.c.l.b16 %v631
      %v6180 = vunpack.c.h.b16 %v631
      %v6181 = vunpack.c.l.b16 %v632
      %v6182 = vunpack.c.h.b16 %v632
      %v6183 = vunpack.c.l.b16 %v633
      %v6184 = vunpack.c.h.b16 %v633
      %v6185 = vunpack.c.l.b16 %v634
      %v6186 = vunpack.c.h.b16 %v634
      %v6187 = vunpack.c.l.b16 %v635
      %v6188 = vunpack.c.h.b16 %v635
      %v6189 = vunpack.c.l.b16 %v636
      %v6190 = vunpack.c.h.b16 %v636
      %v6191 = vunpack.c.l.b16 %v637
      %v6192 = vunpack.c.h.b16 %v637
      %v6193 = vunpack.c.l.b16 %v638
      %v6194 = vunpack.c.h.b16 %v638
      %v6195 = vunpack.c.l.b16 %v639
      %v6196 = vunpack.c.h.b16 %v639
      %v6197 = vunpack.c.l.b16 %v640
      %v6198 = vunpack.c.h.b16 %v640
      %v6199 = vunpack.c.l.b16 %v641
      %v6200 = vunpack.c.h.b16 %v641
      %v6201 = vunpack.c.l.b16 %v642
      %v6202 = vunpack.c.h.b16 %v642
      %v6203 = vunpack.c.l.b16 %v643
      %v6204 = vunpack.c.h.b16 %v643
      %v6205 = vunpack.c.l.b16 %v644
      %v6206 = vunpack.c.h.b16 %v644
      %v6207 = vunpack.c.l.b16 %v645
      %v6208 = vunpack.c.h.b16 %v645
      %v6209 = vunpack.c.l.b16 %v646
      %v6210 = vunpack.c.h.b16 %v646
      %v6211 = vunpack.c.l.b16 %v647
      %v6212 = vunpack.c.h.b16 %v647
      %v6213 = vunpack.c.l.b16 %v648
      %v6214 = vunpack.c.h.b16 %v648
      %v6215 = vunpack.c.l.b16 %v649
      %v6216 = vunpack.c.h.b16 %v649
      %v6217 = vunpack.c.l.b16 %v650
      %v6218 = vunpack.c.h.b16 %v650
      %v6219 = vunpack.c.l.b16 %v651
      %v6220 = vunpack.c.h.b16 %v651
      %v6221 = vunpack.c.l.b16 %v652
      %v6222 = vunpack.c.h.b16 %v652
      %v6223 = vunpack.c.l.b16 %v653
      %v6224 = vunpack.c.h.b16 %v653
      %v6225 = vunpack.c.l.b16 %v654
      %v6226 = vunpack.c.h.b16 %v654
      %v6227 = vunpack.c.l.b16 %v655
      %v6228 = vunpack.c.h.b16 %v655
      %v6229 = vunpack.c.l.b16 %v656
      %v6230 = vunpack.c.h.b16 %v656
      %v6231 = vunpack.c.l.b16 %v657
      %v6232 = vunpack.c.h.b16 %v657
      %v6233 = vunpack.c.l.b16 %v658
      %v6234 = vunpack.c.h.b16 %v658
      %v6235 = vunpack.c.l.b16 %v659
      %v6236 = vunpack.c.h.b16 %v659
      %v6237 = vunpack.c.l.b16 %v660
      %v6238 = vunpack.c.h.b16 %v660
      %v6239 = vunpack.c.l.b16 %v661
      %v6240 = vunpack.c.h.b16 %v661
      %v6241 = vunpack.c.l.b16 %v662
      %v6242 = vunpack.c.h.b16 %v662
      %v6243 = vunpack.c.l.b16 %v663
      %v6244 = vunpack.c.h.b16 %v663
      %v6245 = vunpack.c.l.b16 %v664
      %v6246 = vunpack.c.h.b16 %v664
      %v6247 = vunpack.c.l.b16 %v665
      %v6248 = vunpack.c.h.b16 %v665
      %v6249 = vunpack.c.l.b16 %v666
      %v6250 = vunpack.c.h.b16 %v666
      %v6251 = vunpack.c.l.b16 %v667
      %v6252 = vunpack.c.h.b16 %v667
      %v6253 = vunpack.c.l.b16 %v668
      %v6254 = vunpack.c.h.b16 %v668
      %v6255 = vunpack.c.l.b16 %v669
      %v6256 = vunpack.c.h.b16 %v669
      %v6257 = vunpack.c.l.b16 %v670
      %v6258 = vunpack.c.h.b16 %v670
      %v6259 = vunpack.c.l.b16 %v671
      %v6260 = vunpack.c.h.b16 %v671
      %v6261 = vunpack.c.l.b16 %v672
      %v6262 = vunpack.c.h.b16 %v672
      %v6263 = vunpack.c.l.b16 %v673
      %v6264 = vunpack.c.h.b16 %v673
      %v6265 = vunpack.c.l.b16 %v674
      %v6266 = vunpack.c.h.b16 %v674
      %v6267 = vunpack.c.l.b16 %v675
      %v6268 = vunpack.c.h.b16 %v675
      %v6269 = vunpack.c.l.b16 %v676
      %v6270 = vunpack.c.h.b16 %v676
      %v6271 = vunpack.c.l.b16 %v677
      %v6272 = vunpack.c.h.b16 %v677
      %v6273 = vunpack.c.l.b16 %v678
      %v6274 = vunpack.c.h.b16 %v678
      %v6275 = vunpack.c.l.b16 %v679
      %v6276 = vunpack.c.h.b16 %v679
      %v6277 = vunpack.c.l.b16 %v680
      %v6278 = vunpack.c.h.b16 %v680
      %v6279 = vunpack.c.l.b16 %v681
      %v6280 = vunpack.c.h.b16 %v681
      %v6281 = vunpack.c.l.b16 %v682
      %v6282 = vunpack.c.h.b16 %v682
      %v6283 = vunpack.c.l.b16 %v683
      %v6284 = vunpack.c.h.b16 %v683
      %v6285 = vunpack.c.l.b16 %v684
      %v6286 = vunpack.c.h.b16 %v684
      %v6287 = vunpack.c.l.b16 %v685
      %v6288 = vunpack.c.h.b16 %v685
      %v6289 = vunpack.c.l.b16 %v686
      %v6290 = vunpack.c.h.b16 %v686
      %v6291 = vunpack.c.l.b16 %v687
      %v6292 = vunpack.c.h.b16 %v687
      %v6293 = vunpack.c.l.b16 %v688
      %v6294 = vunpack.c.h.b16 %v688
      %v6295 = vunpack.c.l.b16 %v689
      %v6296 = vunpack.c.h.b16 %v689
      %v6297 = vunpack.c.l.b16 %v690
      %v6298 = vunpack.c.h.b16 %v690
      %v6299 = vunpack.c.l.b16 %v691
      %v6300 = vunpack.c.h.b16 %v691
      %v6301 = vunpack.c.l.b16 %v692
      %v6302 = vunpack.c.h.b16 %v692
      %v6303 = vunpack.c.l.b16 %v693
      %v6304 = vunpack.c.h.b16 %v693
      %v6305 = vunpack.c.l.b16 %v694
      %v6306 = vunpack.c.h.b16 %v694
      %v6307 = vunpack.c.l.b16 %v695
      %v6308 = vunpack.c.h.b16 %v695
      %v6309 = vunpack.c.l.b16 %v696
      %v6310 = vunpack.c.h.b16 %v696
      %v6311 = vunpack.c.l.b16 %v697
      %v6312 = vunpack.c.h.b16 %v697
      %v6313 = vunpack.c.l.b16 %v698
      %v6314 = vunpack.c.h.b16 %v698
      %v6315 = vunpack.c.l.b16 %v699
      %v6316 = vunpack.c.h.b16 %v699
      %v6317 = vunpack.c.l.b16 %v700
      %v6318 = vunpack.c.h.b16 %v700
      %v6319 = vunpack.c.l.b16 %v701
      %v6320 = vunpack.c.h.b16 %v701
      %v6321 = vunpack.c.l.b16 %v702
      %v6322 = vunpack.c.h.b16 %v702
      %v6323 = vunpack.c.l.b16 %v703
      %v6324 = vunpack.c.h.b16 %v703
      %v6325 = vunpack.c.l.b16 %v704
      %v6326 = vunpack.c.h.b16 %v704
      %v6327 = vunpack.c.l.b16 %v705
      %v6328 = vunpack.c.h.b16 %v705
      %v6329 = vunpack.c.l.b16 %v706
      %v6330 = vunpack.c.h.b16 %v706
      %v6331 = vunpack.c.l.b16 %v707
      %v6332 = vunpack.c.h.b16 %v707
      %v6333 = vunpack.c.l.b16 %v708
      %v6334 = vunpack.c.h.b16 %v708
      %v6335 = vunpack.c.l.b16 %v709
      %v6336 = vunpack.c.h.b16 %v709
      %v6337 = vunpack.c.l.b16 %v710
      %v6338 = vunpack.c.h.b16 %v710
      %v6339 = vunpack.c.l.b16 %v711
      %v6340 = vunpack.c.h.b16 %v711
      %v6341 = vunpack.c.l.b16 %v712
      %v6342 = vunpack.c.h.b16 %v712
      %v6343 = vunpack.c.l.b16 %v713
      %v6344 = vunpack.c.h.b16 %v713
      %v6345 = vunpack.c.l.b16 %v714
      %v6346 = vunpack.c.h.b16 %v714
      %v6347 = vunpack.c.l.b16 %v715
      %v6348 = vunpack.c.h.b16 %v715
      %v6349 = vunpack.c.l.b16 %v716
      %v6350 = vunpack.c.h.b16 %v716
      %v6351 = vunpack.c.l.b16 %v717
      %v6352 = vunpack.c.h.b16 %v717
      %v6353 = vunpack.c.l.b16 %v718
      %v6354 = vunpack.c.h.b16 %v718
      %v6355 = vunpack.c.l.b16 %v719
      %v6356 = vunpack.c.h.b16 %v719
      %v6357 = vunpack.c.l.b16 %v720
      %v6358 = vunpack.c.h.b16 %v720
      %v6359 = vunpack.c.l.b16 %v721
      %v6360 = vunpack.c.h.b16 %v721
      %v6361 = vunpack.c.l.b16 %v722
      %v6362 = vunpack.c.h.b16 %v722
      %v6363 = vunpack.c.l.b16 %v723
      %v6364 = vunpack.c.h.b16 %v723
      %v6365 = vunpack.c.l.b16 %v724
      %v6366 = vunpack.c.h.b16 %v724
      %v6367 = vunpack.c.l.b16 %v725
      %v6368 = vunpack.c.h.b16 %v725
      %v6369 = vunpack.c.l.b16 %v726
      %v6370 = vunpack.c.h.b16 %v726
      %v6371 = vunpack.c.l.b16 %v727
      %v6372 = vunpack.c.h.b16 %v727
      %v6373 = vunpack.c.l.b16 %v728
      %v6374 = vunpack.c.h.b16 %v728
      %v6375 = vunpack.c.l.b16 %v729
      %v6376 = vunpack.c.h.b16 %v729
      %v6377 = vunpack.c.l.b16 %v730
      %v6378 = vunpack.c.h.b16 %v730
      %v6379 = vunpack.c.l.b16 %v731
      %v6380 = vunpack.c.h.b16 %v731
      %v6381 = vunpack.c.l.b16 %v732
      %v6382 = vunpack.c.h.b16 %v732
      %v6383 = vunpack.c.l.b16 %v733
      %v6384 = vunpack.c.h.b16 %v733
      %v6385 = vunpack.c.l.b16 %v734
      %v6386 = vunpack.c.h.b16 %v734
      %v6387 = vunpack.c.l.b16 %v735
      %v6388 = vunpack.c.h.b16 %v735
      %v6389 = vunpack.c.l.b16 %v736
      %v6390 = vunpack.c.h.b16 %v736
      %v6391 = vunpack.c.l.b16 %v737
      %v6392 = vunpack.c.h.b16 %v737
      %v6393 = vunpack.c.l.b16 %v738
      %v6394 = vunpack.c.h.b16 %v738
      %v6395 = vunpack.c.l.b16 %v739
      %v6396 = vunpack.c.h.b16 %v739
      %v6397 = vunpack.c.l.b16 %v740
      %v6398 = vunpack.c.h.b16 %v740
      %v6399 = vunpack.c.l.b16 %v741
      %v6400 = vunpack.c.h.b16 %v741
      %v6401 = vunpack.c.l.b16 %v742
      %v6402 = vunpack.c.h.b16 %v742
      %v6403 = vunpack.c.l.b16 %v743
      %v6404 = vunpack.c.h.b16 %v743
      %v6405 = vunpack.c.l.b16 %v744
      %v6406 = vunpack.c.h.b16 %v744
      %v6407 = vunpack.c.l.b16 %v745
      %v6408 = vunpack.c.h.b16 %v745
      %v6409 = vunpack.c.l.b16 %v746
      %v6410 = vunpack.c.h.b16 %v746
      %v6411 = vunpack.c.l.b16 %v747
      %v6412 = vunpack.c.h.b16 %v747
      %v6413 = vpack.c.b16 %v5393, %v5389
      %v6414 = vpack.c.b16 %v5394, %v5390
      %v6415 = vpack.c.b16 %v5395, %v5391
      %v6416 = vpack.c.b16 %v5396, %v5392
      %v6417 = vpack.c.b16 %v5401, %v5397
      %v6418 = vpack.c.b16 %v5402, %v5398
      %v6419 = vpack.c.b16 %v5403, %v5399
      %v6420 = vpack.c.b16 %v5404, %v5400
      %v6421 = vpack.c.b16 %v5409, %v5405
      %v6422 = vpack.c.b16 %v5410, %v5406
      %v6423 = vpack.c.b16 %v5411, %v5407
      %v6424 = vpack.c.b16 %v5412, %v5408
      %v6425 = vpack.c.b16 %v5417, %v5413
      %v6426 = vpack.c.b16 %v5418, %v5414
      %v6427 = vpack.c.b16 %v5419, %v5415
      %v6428 = vpack.c.b16 %v5420, %v5416
      %v6429 = vpack.c.b16 %v5425, %v5421
      %v6430 = vpack.c.b16 %v5426, %v5422
      %v6431 = vpack.c.b16 %v5427, %v5423
      %v6432 = vpack.c.b16 %v5428, %v5424
      %v6433 = vpack.c.b16 %v5433, %v5429
      %v6434 = vpack.c.b16 %v5434, %v5430
      %v6435 = vpack.c.b16 %v5435, %v5431
      %v6436 = vpack.c.b16 %v5436, %v5432
      %v6437 = vpack.c.b16 %v5441, %v5437
      %v6438 = vpack.c.b16 %v5442, %v5438
      %v6439 = vpack.c.b16 %v5443, %v5439
      %v6440 = vpack.c.b16 %v5444, %v5440
      %v6441 = vpack.c.b16 %v5449, %v5445
      %v6442 = vpack.c.b16 %v5450, %v5446
      %v6443 = vpack.c.b16 %v5451, %v5447
      %v6444 = vpack.c.b16 %v5452, %v5448
      %v6445 = vpack.c.b16 %v5457, %v5453
      %v6446 = vpack.c.b16 %v5458, %v5454
      %v6447 = vpack.c.b16 %v5459, %v5455
      %v6448 = vpack.c.b16 %v5460, %v5456
      %v6449 = vpack.c.b16 %v5465, %v5461
      %v6450 = vpack.c.b16 %v5466, %v5462
      %v6451 = vpack.c.b16 %v5467, %v5463
      %v6452 = vpack.c.b16 %v5468, %v5464
      %v6453 = vpack.c.b16 %v5473, %v5469
      %v6454 = vpack.c.b16 %v5474, %v5470
      %v6455 = vpack.c.b16 %v5475, %v5471
      %v6456 = vpack.c.b16 %v5476, %v5472
      %v6457 = vpack.c.b16 %v5481, %v5477
      %v6458 = vpack.c.b16 %v5482, %v5478
      %v6459 = vpack.c.b16 %v5483, %v5479
      %v6460 = vpack.c.b16 %v5484, %v5480
      %v6461 = vpack.c.b16 %v5489, %v5485
      %v6462 = vpack.c.b16 %v5490, %v5486
      %v6463 = vpack.c.b16 %v5491, %v5487
      %v6464 = vpack.c.b16 %v5492, %v5488
      %v6465 = vpack.c.b16 %v5497, %v5493
      %v6466 = vpack.c.b16 %v5498, %v5494
      %v6467 = vpack.c.b16 %v5499, %v5495
      %v6468 = vpack.c.b16 %v5500, %v5496
      %v6469 = vpack.c.b16 %v5505, %v5501
      %v6470 = vpack.c.b16 %v5506, %v5502
      %v6471 = vpack.c.b16 %v5507, %v5503
      %v6472 = vpack.c.b16 %v5508, %v5504
      %v6473 = vpack.c.b16 %v5513, %v5509
      %v6474 = vpack.c.b16 %v5514, %v5510
      %v6475 = vpack.c.b16 %v5515, %v5511
      %v6476 = vpack.c.b16 %v5516, %v5512
      %v6477 = vpack.c.b16 %v5521, %v5517
      %v6478 = vpack.c.b16 %v5522, %v5518
      %v6479 = vpack.c.b16 %v5523, %v5519
      %v6480 = vpack.c.b16 %v5524, %v5520
      %v6481 = vpack.c.b16 %v5529, %v5525
      %v6482 = vpack.c.b16 %v5530, %v5526
      %v6483 = vpack.c.b16 %v5531, %v5527
      %v6484 = vpack.c.b16 %v5532, %v5528
      %v6485 = vpack.c.b16 %v5537, %v5533
      %v6486 = vpack.c.b16 %v5538, %v5534
      %v6487 = vpack.c.b16 %v5539, %v5535
      %v6488 = vpack.c.b16 %v5540, %v5536
      %v6489 = vpack.c.b16 %v5545, %v5541
      %v6490 = vpack.c.b16 %v5546, %v5542
      %v6491 = vpack.c.b16 %v5547, %v5543
      %v6492 = vpack.c.b16 %v5548, %v5544
      %v6493 = vpack.c.b16 %v5553, %v5549
      %v6494 = vpack.c.b16 %v5554, %v5550
      %v6495 = vpack.c.b16 %v5555, %v5551
      %v6496 = vpack.c.b16 %v5556, %v5552
      %v6497 = vpack.c.b16 %v5561, %v5557
      %v6498 = vpack.c.b16 %v5562, %v5558
      %v6499 = vpack.c.b16 %v5563, %v5559
      %v6500 = vpack.c.b16 %v5564, %v5560
      %v6501 = vpack.c.b16 %v5569, %v5565
      %v6502 = vpack.c.b16 %v5570, %v5566
      %v6503 = vpack.c.b16 %v5571, %v5567
      %v6504 = vpack.c.b16 %v5572, %v5568
      %v6505 = vpack.c.b16 %v5577, %v5573
      %v6506 = vpack.c.b16 %v5578, %v5574
      %v6507 = vpack.c.b16 %v5579, %v5575
      %v6508 = vpack.c.b16 %v5580, %v5576
      %v6509 = vpack.c.b16 %v5585, %v5581
      %v6510 = vpack.c.b16 %v5586, %v5582
      %v6511 = vpack.c.b16 %v5587, %v5583
      %v6512 = vpack.c.b16 %v5588, %v5584
      %v6513 = vpack.c.b16 %v5593, %v5589
      %v6514 = vpack.c.b16 %v5594, %v5590
      %v6515 = vpack.c.b16 %v5595, %v5591
      %v6516 = vpack.c.b16 %v5596, %v5592
      %v6517 = vpack.c.b16 %v5601, %v5597
      %v6518 = vpack.c.b16 %v5602, %v5598
      %v6519 = vpack.c.b16 %v5603, %v5599
      %v6520 = vpack.c.b16 %v5604, %v5600
      %v6521 = vpack.c.b16 %v5609, %v5605
      %v6522 = vpack.c.b16 %v5610, %v5606
      %v6523 = vpack.c.b16 %v5611, %v5607
      %v6524 = vpack.c.b16 %v5612, %v5608
      %v6525 = vpack.c.b16 %v5617, %v5613
      %v6526 = vpack.c.b16 %v5618, %v5614
      %v6527 = vpack.c.b16 %v5619, %v5615
      %v6528 = vpack.c.b16 %v5620, %v5616
      %v6529 = vpack.c.b16 %v5625, %v5621
      %v6530 = vpack.c.b16 %v5626, %v5622
      %v6531 = vpack.c.b16 %v5627, %v5623
      %v6532 = vpack.c.b16 %v5628, %v5624
      %v6533 = vpack.c.b16 %v5633, %v5629
      %v6534 = vpack.c.b16 %v5634, %v5630
      %v6535 = vpack.c.b16 %v5635, %v5631
      %v6536 = vpack.c.b16 %v5636, %v5632
      %v6537 = vpack.c.b16 %v5641, %v5637
      %v6538 = vpack.c.b16 %v5642, %v5638
      %v6539 = vpack.c.b16 %v5643, %v5639
      %v6540 = vpack.c.b16 %v5644, %v5640
      %v6541 = vpack.c.b16 %v5649, %v5645
      %v6542 = vpack.c.b16 %v5650, %v5646
      %v6543 = vpack.c.b16 %v5651, %v5647
      %v6544 = vpack.c.b16 %v5652, %v5648
      %v6545 = vpack.c.b16 %v5657, %v5653
      %v6546 = vpack.c.b16 %v5658, %v5654
      %v6547 = vpack.c.b16 %v5659, %v5655
      %v6548 = vpack.c.b16 %v5660, %v5656
      %v6549 = vpack.c.b16 %v5665, %v5661
      %v6550 = vpack.c.b16 %v5666, %v5662
      %v6551 = vpack.c.b16 %v5667, %v5663
      %v6552 = vpack.c.b16 %v5668, %v5664
      %v6553 = vpack.c.b16 %v5673, %v5669
      %v6554 = vpack.c.b16 %v5674, %v5670
      %v6555 = vpack.c.b16 %v5675, %v5671
      %v6556 = vpack.c.b16 %v5676, %v5672
      %v6557 = vpack.c.b16 %v5681, %v5677
      %v6558 = vpack.c.b16 %v5682, %v5678
      %v6559 = vpack.c.b16 %v5683, %v5679
      %v6560 = vpack.c.b16 %v5684, %v5680
      %v6561 = vpack.c.b16 %v5689, %v5685
      %v6562 = vpack.c.b16 %v5690, %v5686
      %v6563 = vpack.c.b16 %v5691, %v5687
      %v6564 = vpack.c.b16 %v5692, %v5688
      %v6565 = vpack.c.b16 %v5697, %v5693
      %v6566 = vpack.c.b16 %v5698, %v5694
      %v6567 = vpack.c.b16 %v5699, %v5695
      %v6568 = vpack.c.b16 %v5700, %v5696
      %v6569 = vpack.c.b16 %v5705, %v5701
      %v6570 = vpack.c.b16 %v5706, %v5702
      %v6571 = vpack.c.b16 %v5707, %v5703
      %v6572 = vpack.c.b16 %v5708, %v5704
      %v6573 = vpack.c.b16 %v5713, %v5709
      %v6574 = vpack.c.b16 %v5714, %v5710
      %v6575 = vpack.c.b16 %v5715, %v5711
      %v6576 = vpack.c.b16 %v5716, %v5712
      %v6577 = vpack.c.b16 %v5721, %v5717
      %v6578 = vpack.c.b16 %v5722, %v5718
      %v6579 = vpack.c.b16 %v5723, %v5719
      %v6580 = vpack.c.b16 %v5724, %v5720
      %v6581 = vpack.c.b16 %v5729, %v5725
      %v6582 = vpack.c.b16 %v5730, %v5726
      %v6583 = vpack.c.b16 %v5731, %v5727
      %v6584 = vpack.c.b16 %v5732, %v5728
      %v6585 = vpack.c.b16 %v5737, %v5733
      %v6586 = vpack.c.b16 %v5738, %v5734
      %v6587 = vpack.c.b16 %v5739, %v5735
      %v6588 = vpack.c.b16 %v5740, %v5736
      %v6589 = vpack.c.b16 %v5745, %v5741
      %v6590 = vpack.c.b16 %v5746, %v5742
      %v6591 = vpack.c.b16 %v5747, %v5743
      %v6592 = vpack.c.b16 %v5748, %v5744
      %v6593 = vpack.c.b16 %v5753, %v5749
      %v6594 = vpack.c.b16 %v5754, %v5750
      %v6595 = vpack.c.b16 %v5755, %v5751
      %v6596 = vpack.c.b16 %v5756, %v5752
      %v6597 = vpack.c.b16 %v5761, %v5757
      %v6598 = vpack.c.b16 %v5762, %v5758
      %v6599 = vpack.c.b16 %v5763, %v5759
      %v6600 = vpack.c.b16 %v5764, %v5760
      %v6601 = vpack.c.b16 %v5769, %v5765
      %v6602 = vpack.c.b16 %v5770, %v5766
      %v6603 = vpack.c.b16 %v5771, %v5767
      %v6604 = vpack.c.b16 %v5772, %v5768
      %v6605 = vpack.c.b16 %v5777, %v5773
      %v6606 = vpack.c.b16 %v5778, %v5774
      %v6607 = vpack.c.b16 %v5779, %v5775
      %v6608 = vpack.c.b16 %v5780, %v5776
      %v6609 = vpack.c.b16 %v5785, %v5781
      %v6610 = vpack.c.b16 %v5786, %v5782
      %v6611 = vpack.c.b16 %v5787, %v5783
      %v6612 = vpack.c.b16 %v5788, %v5784
      %v6613 = vpack.c.b16 %v5793, %v5789
      %v6614 = vpack.c.b16 %v5794, %v5790
      %v6615 = vpack.c.b16 %v5795, %v5791
      %v6616 = vpack.c.b16 %v5796, %v5792
      %v6617 = vpack.c.b16 %v5801, %v5797
      %v6618 = vpack.c.b16 %v5802, %v5798
      %v6619 = vpack.c.b16 %v5803, %v5799
      %v6620 = vpack.c.b16 %v5804, %v5800
      %v6621 = vpack.c.b16 %v5809, %v5805
      %v6622 = vpack.c.b16 %v5810, %v5806
      %v6623 = vpack.c.b16 %v5811, %v5807
      %v6624 = vpack.c.b16 %v5812, %v5808
      %v6625 = vpack.c.b16 %v5817, %v5813
      %v6626 = vpack.c.b16 %v5818, %v5814
      %v6627 = vpack.c.b16 %v5819, %v5815
      %v6628 = vpack.c.b16 %v5820, %v5816
      %v6629 = vpack.c.b16 %v5825, %v5821
      %v6630 = vpack.c.b16 %v5826, %v5822
      %v6631 = vpack.c.b16 %v5827, %v5823
      %v6632 = vpack.c.b16 %v5828, %v5824
      %v6633 = vpack.c.b16 %v5833, %v5829
      %v6634 = vpack.c.b16 %v5834, %v5830
      %v6635 = vpack.c.b16 %v5835, %v5831
      %v6636 = vpack.c.b16 %v5836, %v5832
      %v6637 = vpack.c.b16 %v5841, %v5837
      %v6638 = vpack.c.b16 %v5842, %v5838
      %v6639 = vpack.c.b16 %v5843, %v5839
      %v6640 = vpack.c.b16 %v5844, %v5840
      %v6641 = vpack.c.b16 %v5849, %v5845
      %v6642 = vpack.c.b16 %v5850, %v5846
      %v6643 = vpack.c.b16 %v5851, %v5847
      %v6644 = vpack.c.b16 %v5852, %v5848
      %v6645 = vpack.c.b16 %v5857, %v5853
      %v6646 = vpack.c.b16 %v5858, %v5854
      %v6647 = vpack.c.b16 %v5859, %v5855
      %v6648 = vpack.c.b16 %v5860, %v5856
      %v6649 = vpack.c.b16 %v5865, %v5861
      %v6650 = vpack.c.b16 %v5866, %v5862
      %v6651 = vpack.c.b16 %v5867, %v5863
      %v6652 = vpack.c.b16 %v5868, %v5864
      %v6653 = vpack.c.b16 %v5873, %v5869
      %v6654 = vpack.c.b16 %v5874, %v5870
      %v6655 = vpack.c.b16 %v5875, %v5871
      %v6656 = vpack.c.b16 %v5876, %v5872
      %v6657 = vpack.c.b16 %v5881, %v5877
      %v6658 = vpack.c.b16 %v5882, %v5878
      %v6659 = vpack.c.b16 %v5883, %v5879
      %v6660 = vpack.c.b16 %v5884, %v5880
      %v6661 = vpack.c.b16 %v5889, %v5885
      %v6662 = vpack.c.b16 %v5890, %v5886
      %v6663 = vpack.c.b16 %v5891, %v5887
      %v6664 = vpack.c.b16 %v5892, %v5888
      %v6665 = vpack.c.b16 %v5897, %v5893
      %v6666 = vpack.c.b16 %v5898, %v5894
      %v6667 = vpack.c.b16 %v5899, %v5895
      %v6668 = vpack.c.b16 %v5900, %v5896
      %v6669 = vpack.c.b16 %v5905, %v5901
      %v6670 = vpack.c.b16 %v5906, %v5902
      %v6671 = vpack.c.b16 %v5907, %v5903
      %v6672 = vpack.c.b16 %v5908, %v5904
      %v6673 = vpack.c.b16 %v5913, %v5909
      %v6674 = vpack.c.b16 %v5914, %v5910
      %v6675 = vpack.c.b16 %v5915, %v5911
      %v6676 = vpack.c.b16 %v5916, %v5912
      %v6677 = vpack.c.b16 %v5921, %v5917
      %v6678 = vpack.c.b16 %v5922, %v5918
      %v6679 = vpack.c.b16 %v5923, %v5919
      %v6680 = vpack.c.b16 %v5924, %v5920
      %v6681 = vpack.c.b16 %v5929, %v5925
      %v6682 = vpack.c.b16 %v5930, %v5926
      %v6683 = vpack.c.b16 %v5931, %v5927
      %v6684 = vpack.c.b16 %v5932, %v5928
      %v6685 = vpack.c.b16 %v5937, %v5933
      %v6686 = vpack.c.b16 %v5938, %v5934
      %v6687 = vpack.c.b16 %v5939, %v5935
      %v6688 = vpack.c.b16 %v5940, %v5936
      %v6689 = vpack.c.b16 %v5945, %v5941
      %v6690 = vpack.c.b16 %v5946, %v5942
      %v6691 = vpack.c.b16 %v5947, %v5943
      %v6692 = vpack.c.b16 %v5948, %v5944
      %v6693 = vpack.c.b16 %v5953, %v5949
      %v6694 = vpack.c.b16 %v5954, %v5950
      %v6695 = vpack.c.b16 %v5955, %v5951
      %v6696 = vpack.c.b16 %v5956, %v5952
      %v6697 = vpack.c.b16 %v5961, %v5957
      %v6698 = vpack.c.b16 %v5962, %v5958
      %v6699 = vpack.c.b16 %v5963, %v5959
      %v6700 = vpack.c.b16 %v5964, %v5960
      %v6701 = vpack.c.b16 %v5969, %v5965
      %v6702 = vpack.c.b16 %v5970, %v5966
      %v6703 = vpack.c.b16 %v5971, %v5967
      %v6704 = vpack.c.b16 %v5972, %v5968
      %v6705 = vpack.c.b16 %v5977, %v5973
      %v6706 = vpack.c.b16 %v5978, %v5974
      %v6707 = vpack.c.b16 %v5979, %v5975
      %v6708 = vpack.c.b16 %v5980, %v5976
      %v6709 = vpack.c.b16 %v5985, %v5981
      %v6710 = vpack.c.b16 %v5986, %v5982
      %v6711 = vpack.c.b16 %v5987, %v5983
      %v6712 = vpack.c.b16 %v5988, %v5984
      %v6713 = vpack.c.b16 %v5993, %v5989
      %v6714 = vpack.c.b16 %v5994, %v5990
      %v6715 = vpack.c.b16 %v5995, %v5991
      %v6716 = vpack.c.b16 %v5996, %v5992
      %v6717 = vpack.c.b16 %v6001, %v5997
      %v6718 = vpack.c.b16 %v6002, %v5998
      %v6719 = vpack.c.b16 %v6003, %v5999
      %v6720 = vpack.c.b16 %v6004, %v6000
      %v6721 = vpack.c.b16 %v6009, %v6005
      %v6722 = vpack.c.b16 %v6010, %v6006
      %v6723 = vpack.c.b16 %v6011, %v6007
      %v6724 = vpack.c.b16 %v6012, %v6008
      %v6725 = vpack.c.b16 %v6017, %v6013
      %v6726 = vpack.c.b16 %v6018, %v6014
      %v6727 = vpack.c.b16 %v6019, %v6015
      %v6728 = vpack.c.b16 %v6020, %v6016
      %v6729 = vpack.c.b16 %v6025, %v6021
      %v6730 = vpack.c.b16 %v6026, %v6022
      %v6731 = vpack.c.b16 %v6027, %v6023
      %v6732 = vpack.c.b16 %v6028, %v6024
      %v6733 = vpack.c.b16 %v6033, %v6029
      %v6734 = vpack.c.b16 %v6034, %v6030
      %v6735 = vpack.c.b16 %v6035, %v6031
      %v6736 = vpack.c.b16 %v6036, %v6032
      %v6737 = vpack.c.b16 %v6041, %v6037
      %v6738 = vpack.c.b16 %v6042, %v6038
      %v6739 = vpack.c.b16 %v6043, %v6039
      %v6740 = vpack.c.b16 %v6044, %v6040
      %v6741 = vpack.c.b16 %v6049, %v6045
      %v6742 = vpack.c.b16 %v6050, %v6046
      %v6743 = vpack.c.b16 %v6051, %v6047
      %v6744 = vpack.c.b16 %v6052, %v6048
      %v6745 = vpack.c.b16 %v6057, %v6053
      %v6746 = vpack.c.b16 %v6058, %v6054
      %v6747 = vpack.c.b16 %v6059, %v6055
      %v6748 = vpack.c.b16 %v6060, %v6056
      %v6749 = vpack.c.b16 %v6065, %v6061
      %v6750 = vpack.c.b16 %v6066, %v6062
      %v6751 = vpack.c.b16 %v6067, %v6063
      %v6752 = vpack.c.b16 %v6068, %v6064
      %v6753 = vpack.c.b16 %v6073, %v6069
      %v6754 = vpack.c.b16 %v6074, %v6070
      %v6755 = vpack.c.b16 %v6075, %v6071
      %v6756 = vpack.c.b16 %v6076, %v6072
      %v6757 = vpack.c.b16 %v6081, %v6077
      %v6758 = vpack.c.b16 %v6082, %v6078
      %v6759 = vpack.c.b16 %v6083, %v6079
      %v6760 = vpack.c.b16 %v6084, %v6080
      %v6761 = vpack.c.b16 %v6089, %v6085
      %v6762 = vpack.c.b16 %v6090, %v6086
      %v6763 = vpack.c.b16 %v6091, %v6087
      %v6764 = vpack.c.b16 %v6092, %v6088
      %v6765 = vpack.c.b16 %v6097, %v6093
      %v6766 = vpack.c.b16 %v6098, %v6094
      %v6767 = vpack.c.b16 %v6099, %v6095
      %v6768 = vpack.c.b16 %v6100, %v6096
      %v6769 = vpack.c.b16 %v6105, %v6101
      %v6770 = vpack.c.b16 %v6106, %v6102
      %v6771 = vpack.c.b16 %v6107, %v6103
      %v6772 = vpack.c.b16 %v6108, %v6104
      %v6773 = vpack.c.b16 %v6113, %v6109
      %v6774 = vpack.c.b16 %v6114, %v6110
      %v6775 = vpack.c.b16 %v6115, %v6111
      %v6776 = vpack.c.b16 %v6116, %v6112
      %v6777 = vpack.c.b16 %v6121, %v6117
      %v6778 = vpack.c.b16 %v6122, %v6118
      %v6779 = vpack.c.b16 %v6123, %v6119
      %v6780 = vpack.c.b16 %v6124, %v6120
      %v6781 = vpack.c.b16 %v6129, %v6125
      %v6782 = vpack.c.b16 %v6130, %v6126
      %v6783 = vpack.c.b16 %v6131, %v6127
      %v6784 = vpack.c.b16 %v6132, %v6128
      %v6785 = vpack.c.b16 %v6137, %v6133
      %v6786 = vpack.c.b16 %v6138, %v6134
      %v6787 = vpack.c.b16 %v6139, %v6135
      %v6788 = vpack.c.b16 %v6140, %v6136
      %v6789 = vpack.c.b16 %v6145, %v6141
      %v6790 = vpack.c.b16 %v6146, %v6142
      %v6791 = vpack.c.b16 %v6147, %v6143
      %v6792 = vpack.c.b16 %v6148, %v6144
      %v6793 = vpack.c.b16 %v6153, %v6149
      %v6794 = vpack.c.b16 %v6154, %v6150
      %v6795 = vpack.c.b16 %v6155, %v6151
      %v6796 = vpack.c.b16 %v6156, %v6152
      %v6797 = vpack.c.b16 %v6161, %v6157
      %v6798 = vpack.c.b16 %v6162, %v6158
      %v6799 = vpack.c.b16 %v6163, %v6159
      %v6800 = vpack.c.b16 %v6164, %v6160
      %v6801 = vpack.c.b16 %v6169, %v6165
      %v6802 = vpack.c.b16 %v6170, %v6166
      %v6803 = vpack.c.b16 %v6171, %v6167
      %v6804 = vpack.c.b16 %v6172, %v6168
      %v6805 = vpack.c.b16 %v6177, %v6173
      %v6806 = vpack.c.b16 %v6178, %v6174
      %v6807 = vpack.c.b16 %v6179, %v6175
      %v6808 = vpack.c.b16 %v6180, %v6176
      %v6809 = vpack.c.b16 %v6185, %v6181
      %v6810 = vpack.c.b16 %v6186, %v6182
      %v6811 = vpack.c.b16 %v6187, %v6183
      %v6812 = vpack.c.b16 %v6188, %v6184
      %v6813 = vpack.c.b16 %v6193, %v6189
      %v6814 = vpack.c.b16 %v6194, %v6190
      %v6815 = vpack.c.b16 %v6195, %v6191
      %v6816 = vpack.c.b16 %v6196, %v6192
      %v6817 = vpack.c.b16 %v6201, %v6197
      %v6818 = vpack.c.b16 %v6202, %v6198
      %v6819 = vpack.c.b16 %v6203, %v6199
      %v6820 = vpack.c.b16 %v6204, %v6200
      %v6821 = vpack.c.b16 %v6209, %v6205
      %v6822 = vpack.c.b16 %v6210, %v6206
      %v6823 = vpack.c.b16 %v6211, %v6207
      %v6824 = vpack.c.b16 %v6212, %v6208
      %v6825 = vpack.c.b16 %v6217, %v6213
      %v6826 = vpack.c.b16 %v6218, %v6214
      %v6827 = vpack.c.b16 %v6219, %v6215
      %v6828 = vpack.c.b16 %v6220, %v6216
      %v6829 = vpack.c.b16 %v6225, %v6221
      %v6830 = vpack.c.b16 %v6226, %v6222
      %v6831 = vpack.c.b16 %v6227, %v6223
      %v6832 = vpack.c.b16 %v6228, %v6224
      %v6833 = vpack.c.b16 %v6233, %v6229
      %v6834 = vpack.c.b16 %v6234, %v6230
      %v6835 = vpack.c.b16 %v6235, %v6231
      %v6836 = vpack.c.b16 %v6236, %v6232
      %v6837 = vpack.c.b16 %v6241, %v6237
      %v6838 = vpack.c.b16 %v6242, %v6238
      %v6839 = vpack.c.b16 %v6243, %v6239
      %v6840 = vpack.c.b16 %v6244, %v6240
      %v6841 = vpack.c.b16 %v6249, %v6245
      %v6842 = vpack.c.b16 %v6250, %v6246
      %v6843 = vpack.c.b16 %v6251, %v6247
      %v6844 = vpack.c.b16 %v6252, %v6248
      %v6845 = vpack.c.b16 %v6257, %v6253
      %v6846 = vpack.c.b16 %v6258, %v6254
      %v6847 = vpack.c.b16 %v6259, %v6255
      %v6848 = vpack.c.b16 %v6260, %v6256
      %v6849 = vpack.c.b16 %v6265, %v6261
      %v6850 = vpack.c.b16 %v6266, %v6262
      %v6851 = vpack.c.b16 %v6267, %v6263
      %v6852 = vpack.c.b16 %v6268, %v6264
      %v6853 = vpack.c.b16 %v6273, %v6269
      %v6854 = vpack.c.b16 %v6274, %v6270
      %v6855 = vpack.c.b16 %v6275, %v6271
      %v6856 = vpack.c.b16 %v6276, %v6272
      %v6857 = vpack.c.b16 %v6281, %v6277
      %v6858 = vpack.c.b16 %v6282, %v6278
      %v6859 = vpack.c.b16 %v6283, %v6279
      %v6860 = vpack.c.b16 %v6284, %v6280
      %v6861 = vpack.c.b16 %v6289, %v6285
      %v6862 = vpack.c.b16 %v6290, %v6286
      %v6863 = vpack.c.b16 %v6291, %v6287
      %v6864 = vpack.c.b16 %v6292, %v6288
      %v6865 = vpack.c.b16 %v6297, %v6293
      %v6866 = vpack.c.b16 %v6298, %v6294
      %v6867 = vpack.c.b16 %v6299, %v6295
      %v6868 = vpack.c.b16 %v6300, %v6296
      %v6869 = vpack.c.b16 %v6305, %v6301
      %v6870 = vpack.c.b16 %v6306, %v6302
      %v6871 = vpack.c.b16 %v6307, %v6303
      %v6872 = vpack.c.b16 %v6308, %v6304
      %v6873 = vpack.c.b16 %v6313, %v6309
      %v6874 = vpack.c.b16 %v6314, %v6310
      %v6875 = vpack.c.b16 %v6315, %v6311
      %v6876 = vpack.c.b16 %v6316, %v6312
      %v6877 = vpack.c.b16 %v6321, %v6317
      %v6878 = vpack.c.b16 %v6322, %v6318
      %v6879 = vpack.c.b16 %v6323, %v6319
      %v6880 = vpack.c.b16 %v6324, %v6320
      %v6881 = vpack.c.b16 %v6329, %v6325
      %v6882 = vpack.c.b16 %v6330, %v6326
      %v6883 = vpack.c.b16 %v6331, %v6327
      %v6884 = vpack.c.b16 %v6332, %v6328
      %v6885 = vpack.c.b16 %v6337, %v6333
      %v6886 = vpack.c.b16 %v6338, %v6334
      %v6887 = vpack.c.b16 %v6339, %v6335
      %v6888 = vpack.c.b16 %v6340, %v6336
      %v6889 = vpack.c.b16 %v6345, %v6341
      %v6890 = vpack.c.b16 %v6346, %v6342
      %v6891 = vpack.c.b16 %v6347, %v6343
      %v6892 = vpack.c.b16 %v6348, %v6344
      %v6893 = vpack.c.b16 %v6353, %v6349
      %v6894 = vpack.c.b16 %v6354, %v6350
      %v6895 = vpack.c.b16 %v6355, %v6351
      %v6896 = vpack.c.b16 %v6356, %v6352
      %v6897 = vpack.c.b16 %v6361, %v6357
      %v6898 = vpack.c.b16 %v6362, %v6358
      %v6899 = vpack.c.b16 %v6363, %v6359
      %v6900 = vpack.c.b16 %v6364, %v6360
      %v6901 = vpack.c.b16 %v6369, %v6365
      %v6902 = vpack.c.b16 %v6370, %v6366
      %v6903 = vpack.c.b16 %v6371, %v6367
      %v6904 = vpack.c.b16 %v6372, %v6368
      %v6905 = vpack.c.b16 %v6377, %v6373
      %v6906 = vpack.c.b16 %v6378, %v6374
      %v6907 = vpack.c.b16 %v6379, %v6375
      %v6908 = vpack.c.b16 %v6380, %v6376
      %v6909 = vpack.c.b16 %v6385, %v6381
      %v6910 = vpack.c.b16 %v6386, %v6382
      %v6911 = vpack.c.b16 %v6387, %v6383
      %v6912 = vpack.c.b16 %v6388, %v6384
      %v6913 = vpack.c.b16 %v6393, %v6389
      %v6914 = vpack.c.b16 %v6394, %v6390
      %v6915 = vpack.c.b16 %v6395, %v6391
      %v6916 = vpack.c.b16 %v6396, %v6392
      %v6917 = vpack.c.b16 %v6401, %v6397
      %v6918 = vpack.c.b16 %v6402, %v6398
      %v6919 = vpack.c.b16 %v6403, %v6399
      %v6920 = vpack.c.b16 %v6404, %v6400
      %v6921 = vpack.c.b16 %v6409, %v6405
      %v6922 = vpack.c.b16 %v6410, %v6406
      %v6923 = vpack.c.b16 %v6411, %v6407
      %v6924 = vpack.c.b16 %v6412, %v6408
      %7437 = vmatpush.bf16.msra.mxu0 %v6441
      %7438 = vmatpush.bf16.msra.mxu0 %v6437
      %7439 = vmatpush.bf16.msra.mxu0 %v6433
      %7440 = vmatpush.bf16.msra.mxu0 %v6429
      %7441 = vmatpush.bf16.msra.mxu0 %v6425
      %7442 = vmatpush.bf16.msra.mxu0 %v6421
      %7443 = vmatpush.bf16.msra.mxu0 %v6417
      %7444 = vmatpush.bf16.msra.mxu0 %v6413
      %7445 = vmatmul.bf16.gmra.mxu0 %v4845
      %v7446 = vpop.f32.mrf.mxu0
      %v7447 = vadd.f32 %v4218, %v7446
      %v7448 = vpop.f32.mrf.mxu0
      %7449 = vdwg.mxu0
      %7450 = vmatpush.bf16.msra.mxu0 %v6473
      %7451 = vmatpush.bf16.msra.mxu0 %v6469
      %7452 = vmatpush.bf16.msra.mxu0 %v6465
      %7453 = vmatpush.bf16.msra.mxu0 %v6461
      %7454 = vmatpush.bf16.msra.mxu0 %v6457
      %7455 = vmatpush.bf16.msra.mxu0 %v6453
      %7456 = vmatpush.bf16.msra.mxu0 %v6449
      %7457 = vmatpush.bf16.msra.mxu0 %v6445
      %7458 = vmatmul.bf16.gmra.mxu0 %v4846
      %v7459 = vpop.f32.mrf.mxu0
      %v7460 = vadd.f32 %v7447, %v7459
      %v7461 = vpop.f32.mrf.mxu0
      %7462 = vdwg.mxu0
      %7463 = vmatpush.bf16.msra.mxu0 %v6505
      %7464 = vmatpush.bf16.msra.mxu0 %v6501
      %7465 = vmatpush.bf16.msra.mxu0 %v6497
      %7466 = vmatpush.bf16.msra.mxu0 %v6493
      %7467 = vmatpush.bf16.msra.mxu0 %v6489
      %7468 = vmatpush.bf16.msra.mxu0 %v6485
      %7469 = vmatpush.bf16.msra.mxu0 %v6481
      %7470 = vmatpush.bf16.msra.mxu0 %v6477
      %7471 = vmatmul.bf16.gmra.mxu0 %v4847
      %v7472 = vpop.f32.mrf.mxu0
      %v7473 = vadd.f32 %v7460, %v7472
      %v7474 = vpop.f32.mrf.mxu0
      %7475 = vdwg.mxu0
      %7476 = vmatpush.bf16.msra.mxu0 %v6537
      %7477 = vmatpush.bf16.msra.mxu0 %v6533
      %7478 = vmatpush.bf16.msra.mxu0 %v6529
      %7479 = vmatpush.bf16.msra.mxu0 %v6525
      %7480 = vmatpush.bf16.msra.mxu0 %v6521
      %7481 = vmatpush.bf16.msra.mxu0 %v6517
      %7482 = vmatpush.bf16.msra.mxu0 %v6513
      %7483 = vmatpush.bf16.msra.mxu0 %v6509
      %7484 = vmatmul.bf16.gmra.mxu0 %v4848
      %v7485 = vpop.f32.mrf.mxu0
      %v7486 = vadd.f32 %v7473, %v7485
      %v7487 = vpop.f32.mrf.mxu0
      %7488 = vdwg.mxu0
      %7489 = vmatpush.bf16.msra.mxu0 %v6569
      %7490 = vmatpush.bf16.msra.mxu0 %v6565
      %7491 = vmatpush.bf16.msra.mxu0 %v6561
      %7492 = vmatpush.bf16.msra.mxu0 %v6557
      %7493 = vmatpush.bf16.msra.mxu0 %v6553
      %7494 = vmatpush.bf16.msra.mxu0 %v6549
      %7495 = vmatpush.bf16.msra.mxu0 %v6545
      %7496 = vmatpush.bf16.msra.mxu0 %v6541
      %7497 = vmatmul.bf16.gmra.mxu0 %v4849
      %v7498 = vpop.f32.mrf.mxu0
      %v7499 = vadd.f32 %v7486, %v7498
      %v7500 = vpop.f32.mrf.mxu0
      %7501 = vdwg.mxu0
      %7502 = vmatpush.bf16.msra.mxu0 %v6601
      %7503 = vmatpush.bf16.msra.mxu0 %v6597
      %7504 = vmatpush.bf16.msra.mxu0 %v6593
      %7505 = vmatpush.bf16.msra.mxu0 %v6589
      %7506 = vmatpush.bf16.msra.mxu0 %v6585
      %7507 = vmatpush.bf16.msra.mxu0 %v6581
      %7508 = vmatpush.bf16.msra.mxu0 %v6577
      %7509 = vmatpush.bf16.msra.mxu0 %v6573
      %7510 = vmatmul.bf16.gmra.mxu0 %v4850
      %v7511 = vpop.f32.mrf.mxu0
      %v7512 = vadd.f32 %v7499, %v7511
      %v7513 = vpop.f32.mrf.mxu0
      %7514 = vdwg.mxu0
      %7515 = vmatpush.bf16.msra.mxu0 %v6633
      %7516 = vmatpush.bf16.msra.mxu0 %v6629
      %7517 = vmatpush.bf16.msra.mxu0 %v6625
      %7518 = vmatpush.bf16.msra.mxu0 %v6621
      %7519 = vmatpush.bf16.msra.mxu0 %v6617
      %7520 = vmatpush.bf16.msra.mxu0 %v6613
      %7521 = vmatpush.bf16.msra.mxu0 %v6609
      %7522 = vmatpush.bf16.msra.mxu0 %v6605
      %7523 = vmatmul.bf16.gmra.mxu0 %v4851
      %v7524 = vpop.f32.mrf.mxu0
      %v7525 = vadd.f32 %v7512, %v7524
      %v7526 = vpop.f32.mrf.mxu0
      %7527 = vdwg.mxu0
      %7528 = vmatpush.bf16.msra.mxu0 %v6665
      %7529 = vmatpush.bf16.msra.mxu0 %v6661
      %7530 = vmatpush.bf16.msra.mxu0 %v6657
      %7531 = vmatpush.bf16.msra.mxu0 %v6653
      %7532 = vmatpush.bf16.msra.mxu0 %v6649
      %7533 = vmatpush.bf16.msra.mxu0 %v6645
      %7534 = vmatpush.bf16.msra.mxu0 %v6641
      %7535 = vmatpush.bf16.msra.mxu0 %v6637
      %7536 = vmatmul.bf16.gmra.mxu0 %v4852
      %v7537 = vpop.f32.mrf.mxu0
      %v7538 = vadd.f32 %v7525, %v7537
      %v7539 = vpop.f32.mrf.mxu0
      %7540 = vdwg.mxu0
      %7541 = vmatpush.bf16.msra.mxu0 %v6697
      %7542 = vmatpush.bf16.msra.mxu0 %v6693
      %7543 = vmatpush.bf16.msra.mxu0 %v6689
      %7544 = vmatpush.bf16.msra.mxu0 %v6685
      %7545 = vmatpush.bf16.msra.mxu0 %v6681
      %7546 = vmatpush.bf16.msra.mxu0 %v6677
      %7547 = vmatpush.bf16.msra.mxu0 %v6673
      %7548 = vmatpush.bf16.msra.mxu0 %v6669
      %7549 = vmatmul.bf16.gmra.mxu0 %v4853
      %v7550 = vpop.f32.mrf.mxu0
      %v7551 = vadd.f32 %v7538, %v7550
      %v7552 = vpop.f32.mrf.mxu0
      %7553 = vdwg.mxu0
      %7554 = vmatpush.bf16.msra.mxu0 %v6729
      %7555 = vmatpush.bf16.msra.mxu0 %v6725
      %7556 = vmatpush.bf16.msra.mxu0 %v6721
      %7557 = vmatpush.bf16.msra.mxu0 %v6717
      %7558 = vmatpush.bf16.msra.mxu0 %v6713
      %7559 = vmatpush.bf16.msra.mxu0 %v6709
      %7560 = vmatpush.bf16.msra.mxu0 %v6705
      %7561 = vmatpush.bf16.msra.mxu0 %v6701
      %7562 = vmatmul.bf16.gmra.mxu0 %v4854
      %v7563 = vpop.f32.mrf.mxu0
      %v7564 = vadd.f32 %v7551, %v7563
      %v7565 = vpop.f32.mrf.mxu0
      %7566 = vdwg.mxu0
      %7567 = vmatpush.bf16.msra.mxu0 %v6761
      %7568 = vmatpush.bf16.msra.mxu0 %v6757
      %7569 = vmatpush.bf16.msra.mxu0 %v6753
      %7570 = vmatpush.bf16.msra.mxu0 %v6749
      %7571 = vmatpush.bf16.msra.mxu0 %v6745
      %7572 = vmatpush.bf16.msra.mxu0 %v6741
      %7573 = vmatpush.bf16.msra.mxu0 %v6737
      %7574 = vmatpush.bf16.msra.mxu0 %v6733
      %7575 = vmatmul.bf16.gmra.mxu0 %v4855
      %v7576 = vpop.f32.mrf.mxu0
      %v7577 = vadd.f32 %v7564, %v7576
      %v7578 = vpop.f32.mrf.mxu0
      %7579 = vdwg.mxu0
      %7580 = vmatpush.bf16.msra.mxu0 %v6793
      %7581 = vmatpush.bf16.msra.mxu0 %v6789
      %7582 = vmatpush.bf16.msra.mxu0 %v6785
      %7583 = vmatpush.bf16.msra.mxu0 %v6781
      %7584 = vmatpush.bf16.msra.mxu0 %v6777
      %7585 = vmatpush.bf16.msra.mxu0 %v6773
      %7586 = vmatpush.bf16.msra.mxu0 %v6769
      %7587 = vmatpush.bf16.msra.mxu0 %v6765
      %7588 = vmatmul.bf16.gmra.mxu0 %v4856
      %v7589 = vpop.f32.mrf.mxu0
      %v7590 = vadd.f32 %v7577, %v7589
      %v7591 = vpop.f32.mrf.mxu0
      %7592 = vdwg.mxu0
      %7593 = vmatpush.bf16.msra.mxu0 %v6825
      %7594 = vmatpush.bf16.msra.mxu0 %v6821
      %7595 = vmatpush.bf16.msra.mxu0 %v6817
      %7596 = vmatpush.bf16.msra.mxu0 %v6813
      %7597 = vmatpush.bf16.msra.mxu0 %v6809
      %7598 = vmatpush.bf16.msra.mxu0 %v6805
      %7599 = vmatpush.bf16.msra.mxu0 %v6801
      %7600 = vmatpush.bf16.msra.mxu0 %v6797
      %7601 = vmatmul.bf16.gmra.mxu0 %v4857
      %v7602 = vpop.f32.mrf.mxu0
      %v7603 = vadd.f32 %v7590, %v7602
      %v7604 = vpop.f32.mrf.mxu0
      %7605 = vdwg.mxu0
      %7606 = vmatpush.bf16.msra.mxu0 %v6857
      %7607 = vmatpush.bf16.msra.mxu0 %v6853
      %7608 = vmatpush.bf16.msra.mxu0 %v6849
      %7609 = vmatpush.bf16.msra.mxu0 %v6845
      %7610 = vmatpush.bf16.msra.mxu0 %v6841
      %7611 = vmatpush.bf16.msra.mxu0 %v6837
      %7612 = vmatpush.bf16.msra.mxu0 %v6833
      %7613 = vmatpush.bf16.msra.mxu0 %v6829
      %7614 = vmatmul.bf16.gmra.mxu0 %v4858
      %v7615 = vpop.f32.mrf.mxu0
      %v7616 = vadd.f32 %v7603, %v7615
      %v7617 = vpop.f32.mrf.mxu0
      %7618 = vdwg.mxu0
      %7619 = vmatpush.bf16.msra.mxu0 %v6889
      %7620 = vmatpush.bf16.msra.mxu0 %v6885
      %7621 = vmatpush.bf16.msra.mxu0 %v6881
      %7622 = vmatpush.bf16.msra.mxu0 %v6877
      %7623 = vmatpush.bf16.msra.mxu0 %v6873
      %7624 = vmatpush.bf16.msra.mxu0 %v6869
      %7625 = vmatpush.bf16.msra.mxu0 %v6865
      %7626 = vmatpush.bf16.msra.mxu0 %v6861
      %7627 = vmatmul.bf16.gmra.mxu0 %v4859
      %v7628 = vpop.f32.mrf.mxu0
      %v7629 = vadd.f32 %v7616, %v7628
      %v7630 = vpop.f32.mrf.mxu0
      %7631 = vdwg.mxu0
      %7632 = vmatpush.bf16.msra.mxu0 %v6921
      %7633 = vmatpush.bf16.msra.mxu0 %v6917
      %7634 = vmatpush.bf16.msra.mxu0 %v6913
      %7635 = vmatpush.bf16.msra.mxu0 %v6909
      %7636 = vmatpush.bf16.msra.mxu0 %v6905
      %7637 = vmatpush.bf16.msra.mxu0 %v6901
      %7638 = vmatpush.bf16.msra.mxu0 %v6897
      %7639 = vmatpush.bf16.msra.mxu0 %v6893
      %7640 = vmatmul.bf16.gmra.mxu0 %v4860
      %v7641 = vpop.f32.mrf.mxu0
      %v7642 = vadd.f32 %v7629, %v7641
      %v7643 = vpop.f32.mrf.mxu0
      %7644 = vdwg.mxu0
      %7645 = vmatpush.bf16.msra.mxu0 %v6442
      %7646 = vmatpush.bf16.msra.mxu0 %v6438
      %7647 = vmatpush.bf16.msra.mxu0 %v6434
      %7648 = vmatpush.bf16.msra.mxu0 %v6430
      %7649 = vmatpush.bf16.msra.mxu0 %v6426
      %7650 = vmatpush.bf16.msra.mxu0 %v6422
      %7651 = vmatpush.bf16.msra.mxu0 %v6418
      %7652 = vmatpush.bf16.msra.mxu0 %v6414
      %7653 = vmatmul.bf16.gmra.mxu0 %v4845
      %v7654 = vpop.f32.mrf.mxu0
      %v7655 = vadd.f32 %v4426, %v7654
      %v7656 = vpop.f32.mrf.mxu0
      %7657 = vdwg.mxu0
      %7658 = vmatpush.bf16.msra.mxu0 %v6474
      %7659 = vmatpush.bf16.msra.mxu0 %v6470
      %7660 = vmatpush.bf16.msra.mxu0 %v6466
      %7661 = vmatpush.bf16.msra.mxu0 %v6462
      %7662 = vmatpush.bf16.msra.mxu0 %v6458
      %7663 = vmatpush.bf16.msra.mxu0 %v6454
      %7664 = vmatpush.bf16.msra.mxu0 %v6450
      %7665 = vmatpush.bf16.msra.mxu0 %v6446
      %7666 = vmatmul.bf16.gmra.mxu0 %v4846
      %v7667 = vpop.f32.mrf.mxu0
      %v7668 = vadd.f32 %v7655, %v7667
      %v7669 = vpop.f32.mrf.mxu0
      %7670 = vdwg.mxu0
      %7671 = vmatpush.bf16.msra.mxu0 %v6506
      %7672 = vmatpush.bf16.msra.mxu0 %v6502
      %7673 = vmatpush.bf16.msra.mxu0 %v6498
      %7674 = vmatpush.bf16.msra.mxu0 %v6494
      %7675 = vmatpush.bf16.msra.mxu0 %v6490
      %7676 = vmatpush.bf16.msra.mxu0 %v6486
      %7677 = vmatpush.bf16.msra.mxu0 %v6482
      %7678 = vmatpush.bf16.msra.mxu0 %v6478
      %7679 = vmatmul.bf16.gmra.mxu0 %v4847
      %v7680 = vpop.f32.mrf.mxu0
      %v7681 = vadd.f32 %v7668, %v7680
      %v7682 = vpop.f32.mrf.mxu0
      %7683 = vdwg.mxu0
      %7684 = vmatpush.bf16.msra.mxu0 %v6538
      %7685 = vmatpush.bf16.msra.mxu0 %v6534
      %7686 = vmatpush.bf16.msra.mxu0 %v6530
      %7687 = vmatpush.bf16.msra.mxu0 %v6526
      %7688 = vmatpush.bf16.msra.mxu0 %v6522
      %7689 = vmatpush.bf16.msra.mxu0 %v6518
      %7690 = vmatpush.bf16.msra.mxu0 %v6514
      %7691 = vmatpush.bf16.msra.mxu0 %v6510
      %7692 = vmatmul.bf16.gmra.mxu0 %v4848
      %v7693 = vpop.f32.mrf.mxu0
      %v7694 = vadd.f32 %v7681, %v7693
      %v7695 = vpop.f32.mrf.mxu0
      %7696 = vdwg.mxu0
      %7697 = vmatpush.bf16.msra.mxu0 %v6570
      %7698 = vmatpush.bf16.msra.mxu0 %v6566
      %7699 = vmatpush.bf16.msra.mxu0 %v6562
      %7700 = vmatpush.bf16.msra.mxu0 %v6558
      %7701 = vmatpush.bf16.msra.mxu0 %v6554
      %7702 = vmatpush.bf16.msra.mxu0 %v6550
      %7703 = vmatpush.bf16.msra.mxu0 %v6546
      %7704 = vmatpush.bf16.msra.mxu0 %v6542
      %7705 = vmatmul.bf16.gmra.mxu0 %v4849
      %v7706 = vpop.f32.mrf.mxu0
      %v7707 = vadd.f32 %v7694, %v7706
      %v7708 = vpop.f32.mrf.mxu0
      %7709 = vdwg.mxu0
      %7710 = vmatpush.bf16.msra.mxu0 %v6602
      %7711 = vmatpush.bf16.msra.mxu0 %v6598
      %7712 = vmatpush.bf16.msra.mxu0 %v6594
      %7713 = vmatpush.bf16.msra.mxu0 %v6590
      %7714 = vmatpush.bf16.msra.mxu0 %v6586
      %7715 = vmatpush.bf16.msra.mxu0 %v6582
      %7716 = vmatpush.bf16.msra.mxu0 %v6578
      %7717 = vmatpush.bf16.msra.mxu0 %v6574
      %7718 = vmatmul.bf16.gmra.mxu0 %v4850
      %v7719 = vpop.f32.mrf.mxu0
      %v7720 = vadd.f32 %v7707, %v7719
      %v7721 = vpop.f32.mrf.mxu0
      %7722 = vdwg.mxu0
      %7723 = vmatpush.bf16.msra.mxu0 %v6634
      %7724 = vmatpush.bf16.msra.mxu0 %v6630
      %7725 = vmatpush.bf16.msra.mxu0 %v6626
      %7726 = vmatpush.bf16.msra.mxu0 %v6622
      %7727 = vmatpush.bf16.msra.mxu0 %v6618
      %7728 = vmatpush.bf16.msra.mxu0 %v6614
      %7729 = vmatpush.bf16.msra.mxu0 %v6610
      %7730 = vmatpush.bf16.msra.mxu0 %v6606
      %7731 = vmatmul.bf16.gmra.mxu0 %v4851
      %v7732 = vpop.f32.mrf.mxu0
      %v7733 = vadd.f32 %v7720, %v7732
      %v7734 = vpop.f32.mrf.mxu0
      %7735 = vdwg.mxu0
      %7736 = vmatpush.bf16.msra.mxu0 %v6666
      %7737 = vmatpush.bf16.msra.mxu0 %v6662
      %7738 = vmatpush.bf16.msra.mxu0 %v6658
      %7739 = vmatpush.bf16.msra.mxu0 %v6654
      %7740 = vmatpush.bf16.msra.mxu0 %v6650
      %7741 = vmatpush.bf16.msra.mxu0 %v6646
      %7742 = vmatpush.bf16.msra.mxu0 %v6642
      %7743 = vmatpush.bf16.msra.mxu0 %v6638
      %7744 = vmatmul.bf16.gmra.mxu0 %v4852
      %v7745 = vpop.f32.mrf.mxu0
      %v7746 = vadd.f32 %v7733, %v7745
      %v7747 = vpop.f32.mrf.mxu0
      %7748 = vdwg.mxu0
      %7749 = vmatpush.bf16.msra.mxu0 %v6698
      %7750 = vmatpush.bf16.msra.mxu0 %v6694
      %7751 = vmatpush.bf16.msra.mxu0 %v6690
      %7752 = vmatpush.bf16.msra.mxu0 %v6686
      %7753 = vmatpush.bf16.msra.mxu0 %v6682
      %7754 = vmatpush.bf16.msra.mxu0 %v6678
      %7755 = vmatpush.bf16.msra.mxu0 %v6674
      %7756 = vmatpush.bf16.msra.mxu0 %v6670
      %7757 = vmatmul.bf16.gmra.mxu0 %v4853
      %v7758 = vpop.f32.mrf.mxu0
      %v7759 = vadd.f32 %v7746, %v7758
      %v7760 = vpop.f32.mrf.mxu0
      %7761 = vdwg.mxu0
      %7762 = vmatpush.bf16.msra.mxu0 %v6730
      %7763 = vmatpush.bf16.msra.mxu0 %v6726
      %7764 = vmatpush.bf16.msra.mxu0 %v6722
      %7765 = vmatpush.bf16.msra.mxu0 %v6718
      %7766 = vmatpush.bf16.msra.mxu0 %v6714
      %7767 = vmatpush.bf16.msra.mxu0 %v6710
      %7768 = vmatpush.bf16.msra.mxu0 %v6706
      %7769 = vmatpush.bf16.msra.mxu0 %v6702
      %7770 = vmatmul.bf16.gmra.mxu0 %v4854
      %v7771 = vpop.f32.mrf.mxu0
      %v7772 = vadd.f32 %v7759, %v7771
      %v7773 = vpop.f32.mrf.mxu0
      %7774 = vdwg.mxu0
      %7775 = vmatpush.bf16.msra.mxu0 %v6762
      %7776 = vmatpush.bf16.msra.mxu0 %v6758
      %7777 = vmatpush.bf16.msra.mxu0 %v6754
      %7778 = vmatpush.bf16.msra.mxu0 %v6750
      %7779 = vmatpush.bf16.msra.mxu0 %v6746
      %7780 = vmatpush.bf16.msra.mxu0 %v6742
      %7781 = vmatpush.bf16.msra.mxu0 %v6738
      %7782 = vmatpush.bf16.msra.mxu0 %v6734
      %7783 = vmatmul.bf16.gmra.mxu0 %v4855
      %v7784 = vpop.f32.mrf.mxu0
      %v7785 = vadd.f32 %v7772, %v7784
      %v7786 = vpop.f32.mrf.mxu0
      %7787 = vdwg.mxu0
      %7788 = vmatpush.bf16.msra.mxu0 %v6794
      %7789 = vmatpush.bf16.msra.mxu0 %v6790
      %7790 = vmatpush.bf16.msra.mxu0 %v6786
      %7791 = vmatpush.bf16.msra.mxu0 %v6782
      %7792 = vmatpush.bf16.msra.mxu0 %v6778
      %7793 = vmatpush.bf16.msra.mxu0 %v6774
      %7794 = vmatpush.bf16.msra.mxu0 %v6770
      %7795 = vmatpush.bf16.msra.mxu0 %v6766
      %7796 = vmatmul.bf16.gmra.mxu0 %v4856
      %v7797 = vpop.f32.mrf.mxu0
      %v7798 = vadd.f32 %v7785, %v7797
      %v7799 = vpop.f32.mrf.mxu0
      %7800 = vdwg.mxu0
      %7801 = vmatpush.bf16.msra.mxu0 %v6826
      %7802 = vmatpush.bf16.msra.mxu0 %v6822
      %7803 = vmatpush.bf16.msra.mxu0 %v6818
      %7804 = vmatpush.bf16.msra.mxu0 %v6814
      %7805 = vmatpush.bf16.msra.mxu0 %v6810
      %7806 = vmatpush.bf16.msra.mxu0 %v6806
      %7807 = vmatpush.bf16.msra.mxu0 %v6802
      %7808 = vmatpush.bf16.msra.mxu0 %v6798
      %7809 = vmatmul.bf16.gmra.mxu0 %v4857
      %v7810 = vpop.f32.mrf.mxu0
      %v7811 = vadd.f32 %v7798, %v7810
      %v7812 = vpop.f32.mrf.mxu0
      %7813 = vdwg.mxu0
      %7814 = vmatpush.bf16.msra.mxu0 %v6858
      %7815 = vmatpush.bf16.msra.mxu0 %v6854
      %7816 = vmatpush.bf16.msra.mxu0 %v6850
      %7817 = vmatpush.bf16.msra.mxu0 %v6846
      %7818 = vmatpush.bf16.msra.mxu0 %v6842
      %7819 = vmatpush.bf16.msra.mxu0 %v6838
      %7820 = vmatpush.bf16.msra.mxu0 %v6834
      %7821 = vmatpush.bf16.msra.mxu0 %v6830
      %7822 = vmatmul.bf16.gmra.mxu0 %v4858
      %v7823 = vpop.f32.mrf.mxu0
      %v7824 = vadd.f32 %v7811, %v7823
      %v7825 = vpop.f32.mrf.mxu0
      %7826 = vdwg.mxu0
      %7827 = vmatpush.bf16.msra.mxu0 %v6890
      %7828 = vmatpush.bf16.msra.mxu0 %v6886
      %7829 = vmatpush.bf16.msra.mxu0 %v6882
      %7830 = vmatpush.bf16.msra.mxu0 %v6878
      %7831 = vmatpush.bf16.msra.mxu0 %v6874
      %7832 = vmatpush.bf16.msra.mxu0 %v6870
      %7833 = vmatpush.bf16.msra.mxu0 %v6866
      %7834 = vmatpush.bf16.msra.mxu0 %v6862
      %7835 = vmatmul.bf16.gmra.mxu0 %v4859
      %v7836 = vpop.f32.mrf.mxu0
      %v7837 = vadd.f32 %v7824, %v7836
      %v7838 = vpop.f32.mrf.mxu0
      %7839 = vdwg.mxu0
      %7840 = vmatpush.bf16.msra.mxu0 %v6922
      %7841 = vmatpush.bf16.msra.mxu0 %v6918
      %7842 = vmatpush.bf16.msra.mxu0 %v6914
      %7843 = vmatpush.bf16.msra.mxu0 %v6910
      %7844 = vmatpush.bf16.msra.mxu0 %v6906
      %7845 = vmatpush.bf16.msra.mxu0 %v6902
      %7846 = vmatpush.bf16.msra.mxu0 %v6898
      %7847 = vmatpush.bf16.msra.mxu0 %v6894
      %7848 = vmatmul.bf16.gmra.mxu0 %v4860
      %v7849 = vpop.f32.mrf.mxu0
      %v7850 = vadd.f32 %v7837, %v7849
      %v7851 = vpop.f32.mrf.mxu0
      %7852 = vdwg.mxu0
      %7853 = vmatpush.bf16.msra.mxu0 %v6443
      %7854 = vmatpush.bf16.msra.mxu0 %v6439
      %7855 = vmatpush.bf16.msra.mxu0 %v6435
      %7856 = vmatpush.bf16.msra.mxu0 %v6431
      %7857 = vmatpush.bf16.msra.mxu0 %v6427
      %7858 = vmatpush.bf16.msra.mxu0 %v6423
      %7859 = vmatpush.bf16.msra.mxu0 %v6419
      %7860 = vmatpush.bf16.msra.mxu0 %v6415
      %7861 = vmatmul.bf16.gmra.mxu0 %v4845
      %v7862 = vpop.f32.mrf.mxu0
      %v7863 = vadd.f32 %v4634, %v7862
      %v7864 = vpop.f32.mrf.mxu0
      %7865 = vdwg.mxu0
      %7866 = vmatpush.bf16.msra.mxu0 %v6475
      %7867 = vmatpush.bf16.msra.mxu0 %v6471
      %7868 = vmatpush.bf16.msra.mxu0 %v6467
      %7869 = vmatpush.bf16.msra.mxu0 %v6463
      %7870 = vmatpush.bf16.msra.mxu0 %v6459
      %7871 = vmatpush.bf16.msra.mxu0 %v6455
      %7872 = vmatpush.bf16.msra.mxu0 %v6451
      %7873 = vmatpush.bf16.msra.mxu0 %v6447
      %7874 = vmatmul.bf16.gmra.mxu0 %v4846
      %v7875 = vpop.f32.mrf.mxu0
      %v7876 = vadd.f32 %v7863, %v7875
      %v7877 = vpop.f32.mrf.mxu0
      %7878 = vdwg.mxu0
      %7879 = vmatpush.bf16.msra.mxu0 %v6507
      %7880 = vmatpush.bf16.msra.mxu0 %v6503
      %7881 = vmatpush.bf16.msra.mxu0 %v6499
      %7882 = vmatpush.bf16.msra.mxu0 %v6495
      %7883 = vmatpush.bf16.msra.mxu0 %v6491
      %7884 = vmatpush.bf16.msra.mxu0 %v6487
      %7885 = vmatpush.bf16.msra.mxu0 %v6483
      %7886 = vmatpush.bf16.msra.mxu0 %v6479
      %7887 = vmatmul.bf16.gmra.mxu0 %v4847
      %v7888 = vpop.f32.mrf.mxu0
      %v7889 = vadd.f32 %v7876, %v7888
      %v7890 = vpop.f32.mrf.mxu0
      %7891 = vdwg.mxu0
      %7892 = vmatpush.bf16.msra.mxu0 %v6539
      %7893 = vmatpush.bf16.msra.mxu0 %v6535
      %7894 = vmatpush.bf16.msra.mxu0 %v6531
      %7895 = vmatpush.bf16.msra.mxu0 %v6527
      %7896 = vmatpush.bf16.msra.mxu0 %v6523
      %7897 = vmatpush.bf16.msra.mxu0 %v6519
      %7898 = vmatpush.bf16.msra.mxu0 %v6515
      %7899 = vmatpush.bf16.msra.mxu0 %v6511
      %7900 = vmatmul.bf16.gmra.mxu0 %v4848
      %v7901 = vpop.f32.mrf.mxu0
      %v7902 = vadd.f32 %v7889, %v7901
      %v7903 = vpop.f32.mrf.mxu0
      %7904 = vdwg.mxu0
      %7905 = vmatpush.bf16.msra.mxu0 %v6571
      %7906 = vmatpush.bf16.msra.mxu0 %v6567
      %7907 = vmatpush.bf16.msra.mxu0 %v6563
      %7908 = vmatpush.bf16.msra.mxu0 %v6559
      %7909 = vmatpush.bf16.msra.mxu0 %v6555
      %7910 = vmatpush.bf16.msra.mxu0 %v6551
      %7911 = vmatpush.bf16.msra.mxu0 %v6547
      %7912 = vmatpush.bf16.msra.mxu0 %v6543
      %7913 = vmatmul.bf16.gmra.mxu0 %v4849
      %v7914 = vpop.f32.mrf.mxu0
      %v7915 = vadd.f32 %v7902, %v7914
      %v7916 = vpop.f32.mrf.mxu0
      %7917 = vdwg.mxu0
      %7918 = vmatpush.bf16.msra.mxu0 %v6603
      %7919 = vmatpush.bf16.msra.mxu0 %v6599
      %7920 = vmatpush.bf16.msra.mxu0 %v6595
      %7921 = vmatpush.bf16.msra.mxu0 %v6591
      %7922 = vmatpush.bf16.msra.mxu0 %v6587
      %7923 = vmatpush.bf16.msra.mxu0 %v6583
      %7924 = vmatpush.bf16.msra.mxu0 %v6579
      %7925 = vmatpush.bf16.msra.mxu0 %v6575
      %7926 = vmatmul.bf16.gmra.mxu0 %v4850
      %v7927 = vpop.f32.mrf.mxu0
      %v7928 = vadd.f32 %v7915, %v7927
      %v7929 = vpop.f32.mrf.mxu0
      %7930 = vdwg.mxu0
      %7931 = vmatpush.bf16.msra.mxu0 %v6635
      %7932 = vmatpush.bf16.msra.mxu0 %v6631
      %7933 = vmatpush.bf16.msra.mxu0 %v6627
      %7934 = vmatpush.bf16.msra.mxu0 %v6623
      %7935 = vmatpush.bf16.msra.mxu0 %v6619
      %7936 = vmatpush.bf16.msra.mxu0 %v6615
      %7937 = vmatpush.bf16.msra.mxu0 %v6611
      %7938 = vmatpush.bf16.msra.mxu0 %v6607
      %7939 = vmatmul.bf16.gmra.mxu0 %v4851
      %v7940 = vpop.f32.mrf.mxu0
      %v7941 = vadd.f32 %v7928, %v7940
      %v7942 = vpop.f32.mrf.mxu0
      %7943 = vdwg.mxu0
      %7944 = vmatpush.bf16.msra.mxu0 %v6667
      %7945 = vmatpush.bf16.msra.mxu0 %v6663
      %7946 = vmatpush.bf16.msra.mxu0 %v6659
      %7947 = vmatpush.bf16.msra.mxu0 %v6655
      %7948 = vmatpush.bf16.msra.mxu0 %v6651
      %7949 = vmatpush.bf16.msra.mxu0 %v6647
      %7950 = vmatpush.bf16.msra.mxu0 %v6643
      %7951 = vmatpush.bf16.msra.mxu0 %v6639
      %7952 = vmatmul.bf16.gmra.mxu0 %v4852
      %v7953 = vpop.f32.mrf.mxu0
      %v7954 = vadd.f32 %v7941, %v7953
      %v7955 = vpop.f32.mrf.mxu0
      %7956 = vdwg.mxu0
      %7957 = vmatpush.bf16.msra.mxu0 %v6699
      %7958 = vmatpush.bf16.msra.mxu0 %v6695
      %7959 = vmatpush.bf16.msra.mxu0 %v6691
      %7960 = vmatpush.bf16.msra.mxu0 %v6687
      %7961 = vmatpush.bf16.msra.mxu0 %v6683
      %7962 = vmatpush.bf16.msra.mxu0 %v6679
      %7963 = vmatpush.bf16.msra.mxu0 %v6675
      %7964 = vmatpush.bf16.msra.mxu0 %v6671
      %7965 = vmatmul.bf16.gmra.mxu0 %v4853
      %v7966 = vpop.f32.mrf.mxu0
      %v7967 = vadd.f32 %v7954, %v7966
      %v7968 = vpop.f32.mrf.mxu0
      %7969 = vdwg.mxu0
      %7970 = vmatpush.bf16.msra.mxu0 %v6731
      %7971 = vmatpush.bf16.msra.mxu0 %v6727
      %7972 = vmatpush.bf16.msra.mxu0 %v6723
      %7973 = vmatpush.bf16.msra.mxu0 %v6719
      %7974 = vmatpush.bf16.msra.mxu0 %v6715
      %7975 = vmatpush.bf16.msra.mxu0 %v6711
      %7976 = vmatpush.bf16.msra.mxu0 %v6707
      %7977 = vmatpush.bf16.msra.mxu0 %v6703
      %7978 = vmatmul.bf16.gmra.mxu0 %v4854
      %v7979 = vpop.f32.mrf.mxu0
      %v7980 = vadd.f32 %v7967, %v7979
      %v7981 = vpop.f32.mrf.mxu0
      %7982 = vdwg.mxu0
      %7983 = vmatpush.bf16.msra.mxu0 %v6763
      %7984 = vmatpush.bf16.msra.mxu0 %v6759
      %7985 = vmatpush.bf16.msra.mxu0 %v6755
      %7986 = vmatpush.bf16.msra.mxu0 %v6751
      %7987 = vmatpush.bf16.msra.mxu0 %v6747
      %7988 = vmatpush.bf16.msra.mxu0 %v6743
      %7989 = vmatpush.bf16.msra.mxu0 %v6739
      %7990 = vmatpush.bf16.msra.mxu0 %v6735
      %7991 = vmatmul.bf16.gmra.mxu0 %v4855
      %v7992 = vpop.f32.mrf.mxu0
      %v7993 = vadd.f32 %v7980, %v7992
      %v7994 = vpop.f32.mrf.mxu0
      %7995 = vdwg.mxu0
      %7996 = vmatpush.bf16.msra.mxu0 %v6795
      %7997 = vmatpush.bf16.msra.mxu0 %v6791
      %7998 = vmatpush.bf16.msra.mxu0 %v6787
      %7999 = vmatpush.bf16.msra.mxu0 %v6783
      %8000 = vmatpush.bf16.msra.mxu0 %v6779
      %8001 = vmatpush.bf16.msra.mxu0 %v6775
      %8002 = vmatpush.bf16.msra.mxu0 %v6771
      %8003 = vmatpush.bf16.msra.mxu0 %v6767
      %8004 = vmatmul.bf16.gmra.mxu0 %v4856
      %v8005 = vpop.f32.mrf.mxu0
      %v8006 = vadd.f32 %v7993, %v8005
      %v8007 = vpop.f32.mrf.mxu0
      %8008 = vdwg.mxu0
      %8009 = vmatpush.bf16.msra.mxu0 %v6827
      %8010 = vmatpush.bf16.msra.mxu0 %v6823
      %8011 = vmatpush.bf16.msra.mxu0 %v6819
      %8012 = vmatpush.bf16.msra.mxu0 %v6815
      %8013 = vmatpush.bf16.msra.mxu0 %v6811
      %8014 = vmatpush.bf16.msra.mxu0 %v6807
      %8015 = vmatpush.bf16.msra.mxu0 %v6803
      %8016 = vmatpush.bf16.msra.mxu0 %v6799
      %8017 = vmatmul.bf16.gmra.mxu0 %v4857
      %v8018 = vpop.f32.mrf.mxu0
      %v8019 = vadd.f32 %v8006, %v8018
      %v8020 = vpop.f32.mrf.mxu0
      %8021 = vdwg.mxu0
      %8022 = vmatpush.bf16.msra.mxu0 %v6859
      %8023 = vmatpush.bf16.msra.mxu0 %v6855
      %8024 = vmatpush.bf16.msra.mxu0 %v6851
      %8025 = vmatpush.bf16.msra.mxu0 %v6847
      %8026 = vmatpush.bf16.msra.mxu0 %v6843
      %8027 = vmatpush.bf16.msra.mxu0 %v6839
      %8028 = vmatpush.bf16.msra.mxu0 %v6835
      %8029 = vmatpush.bf16.msra.mxu0 %v6831
      %8030 = vmatmul.bf16.gmra.mxu0 %v4858
      %v8031 = vpop.f32.mrf.mxu0
      %v8032 = vadd.f32 %v8019, %v8031
      %v8033 = vpop.f32.mrf.mxu0
      %8034 = vdwg.mxu0
      %8035 = vmatpush.bf16.msra.mxu0 %v6891
      %8036 = vmatpush.bf16.msra.mxu0 %v6887
      %8037 = vmatpush.bf16.msra.mxu0 %v6883
      %8038 = vmatpush.bf16.msra.mxu0 %v6879
      %8039 = vmatpush.bf16.msra.mxu0 %v6875
      %8040 = vmatpush.bf16.msra.mxu0 %v6871
      %8041 = vmatpush.bf16.msra.mxu0 %v6867
      %8042 = vmatpush.bf16.msra.mxu0 %v6863
      %8043 = vmatmul.bf16.gmra.mxu0 %v4859
      %v8044 = vpop.f32.mrf.mxu0
      %v8045 = vadd.f32 %v8032, %v8044
      %v8046 = vpop.f32.mrf.mxu0
      %8047 = vdwg.mxu0
      %8048 = vmatpush.bf16.msra.mxu0 %v6923
      %8049 = vmatpush.bf16.msra.mxu0 %v6919
      %8050 = vmatpush.bf16.msra.mxu0 %v6915
      %8051 = vmatpush.bf16.msra.mxu0 %v6911
      %8052 = vmatpush.bf16.msra.mxu0 %v6907
      %8053 = vmatpush.bf16.msra.mxu0 %v6903
      %8054 = vmatpush.bf16.msra.mxu0 %v6899
      %8055 = vmatpush.bf16.msra.mxu0 %v6895
      %8056 = vmatmul.bf16.gmra.mxu0 %v4860
      %v8057 = vpop.f32.mrf.mxu0
      %v8058 = vadd.f32 %v8045, %v8057
      %v8059 = vpop.f32.mrf.mxu0
      %8060 = vdwg.mxu0
      %8061 = vmatpush.bf16.msra.mxu0 %v6444
      %8062 = vmatpush.bf16.msra.mxu0 %v6440
      %8063 = vmatpush.bf16.msra.mxu0 %v6436
      %8064 = vmatpush.bf16.msra.mxu0 %v6432
      %8065 = vmatpush.bf16.msra.mxu0 %v6428
      %8066 = vmatpush.bf16.msra.mxu0 %v6424
      %8067 = vmatpush.bf16.msra.mxu0 %v6420
      %8068 = vmatpush.bf16.msra.mxu0 %v6416
      %8069 = vmatmul.bf16.gmra.mxu0 %v4845
      %v8070 = vpop.f32.mrf.mxu0
      %v8071 = vadd.f32 %v4842, %v8070
      %v8072 = vpop.f32.mrf.mxu0
      %8073 = vdwg.mxu0
      %8074 = vmatpush.bf16.msra.mxu0 %v6476
      %8075 = vmatpush.bf16.msra.mxu0 %v6472
      %8076 = vmatpush.bf16.msra.mxu0 %v6468
      %8077 = vmatpush.bf16.msra.mxu0 %v6464
      %8078 = vmatpush.bf16.msra.mxu0 %v6460
      %8079 = vmatpush.bf16.msra.mxu0 %v6456
      %8080 = vmatpush.bf16.msra.mxu0 %v6452
      %8081 = vmatpush.bf16.msra.mxu0 %v6448
      %8082 = vmatmul.bf16.gmra.mxu0 %v4846
      %v8083 = vpop.f32.mrf.mxu0
      %v8084 = vadd.f32 %v8071, %v8083
      %v8085 = vpop.f32.mrf.mxu0
      %8086 = vdwg.mxu0
      %8087 = vmatpush.bf16.msra.mxu0 %v6508
      %8088 = vmatpush.bf16.msra.mxu0 %v6504
      %8089 = vmatpush.bf16.msra.mxu0 %v6500
      %8090 = vmatpush.bf16.msra.mxu0 %v6496
      %8091 = vmatpush.bf16.msra.mxu0 %v6492
      %8092 = vmatpush.bf16.msra.mxu0 %v6488
      %8093 = vmatpush.bf16.msra.mxu0 %v6484
      %8094 = vmatpush.bf16.msra.mxu0 %v6480
      %8095 = vmatmul.bf16.gmra.mxu0 %v4847
      %v8096 = vpop.f32.mrf.mxu0
      %v8097 = vadd.f32 %v8084, %v8096
      %v8098 = vpop.f32.mrf.mxu0
      %8099 = vdwg.mxu0
      %8100 = vmatpush.bf16.msra.mxu0 %v6540
      %8101 = vmatpush.bf16.msra.mxu0 %v6536
      %8102 = vmatpush.bf16.msra.mxu0 %v6532
      %8103 = vmatpush.bf16.msra.mxu0 %v6528
      %8104 = vmatpush.bf16.msra.mxu0 %v6524
      %8105 = vmatpush.bf16.msra.mxu0 %v6520
      %8106 = vmatpush.bf16.msra.mxu0 %v6516
      %8107 = vmatpush.bf16.msra.mxu0 %v6512
      %8108 = vmatmul.bf16.gmra.mxu0 %v4848
      %v8109 = vpop.f32.mrf.mxu0
      %v8110 = vadd.f32 %v8097, %v8109
      %v8111 = vpop.f32.mrf.mxu0
      %8112 = vdwg.mxu0
      %8113 = vmatpush.bf16.msra.mxu0 %v6572
      %8114 = vmatpush.bf16.msra.mxu0 %v6568
      %8115 = vmatpush.bf16.msra.mxu0 %v6564
      %8116 = vmatpush.bf16.msra.mxu0 %v6560
      %8117 = vmatpush.bf16.msra.mxu0 %v6556
      %8118 = vmatpush.bf16.msra.mxu0 %v6552
      %8119 = vmatpush.bf16.msra.mxu0 %v6548
      %8120 = vmatpush.bf16.msra.mxu0 %v6544
      %8121 = vmatmul.bf16.gmra.mxu0 %v4849
      %v8122 = vpop.f32.mrf.mxu0
      %v8123 = vadd.f32 %v8110, %v8122
      %v8124 = vpop.f32.mrf.mxu0
      %8125 = vdwg.mxu0
      %8126 = vmatpush.bf16.msra.mxu0 %v6604
      %8127 = vmatpush.bf16.msra.mxu0 %v6600
      %8128 = vmatpush.bf16.msra.mxu0 %v6596
      %8129 = vmatpush.bf16.msra.mxu0 %v6592
      %8130 = vmatpush.bf16.msra.mxu0 %v6588
      %8131 = vmatpush.bf16.msra.mxu0 %v6584
      %8132 = vmatpush.bf16.msra.mxu0 %v6580
      %8133 = vmatpush.bf16.msra.mxu0 %v6576
      %8134 = vmatmul.bf16.gmra.mxu0 %v4850
      %v8135 = vpop.f32.mrf.mxu0
      %v8136 = vadd.f32 %v8123, %v8135
      %v8137 = vpop.f32.mrf.mxu0
      %8138 = vdwg.mxu0
      %8139 = vmatpush.bf16.msra.mxu0 %v6636
      %8140 = vmatpush.bf16.msra.mxu0 %v6632
      %8141 = vmatpush.bf16.msra.mxu0 %v6628
      %8142 = vmatpush.bf16.msra.mxu0 %v6624
      %8143 = vmatpush.bf16.msra.mxu0 %v6620
      %8144 = vmatpush.bf16.msra.mxu0 %v6616
      %8145 = vmatpush.bf16.msra.mxu0 %v6612
      %8146 = vmatpush.bf16.msra.mxu0 %v6608
      %8147 = vmatmul.bf16.gmra.mxu0 %v4851
      %v8148 = vpop.f32.mrf.mxu0
      %v8149 = vadd.f32 %v8136, %v8148
      %v8150 = vpop.f32.mrf.mxu0
      %8151 = vdwg.mxu0
      %8152 = vmatpush.bf16.msra.mxu0 %v6668
      %8153 = vmatpush.bf16.msra.mxu0 %v6664
      %8154 = vmatpush.bf16.msra.mxu0 %v6660
      %8155 = vmatpush.bf16.msra.mxu0 %v6656
      %8156 = vmatpush.bf16.msra.mxu0 %v6652
      %8157 = vmatpush.bf16.msra.mxu0 %v6648
      %8158 = vmatpush.bf16.msra.mxu0 %v6644
      %8159 = vmatpush.bf16.msra.mxu0 %v6640
      %8160 = vmatmul.bf16.gmra.mxu0 %v4852
      %v8161 = vpop.f32.mrf.mxu0
      %v8162 = vadd.f32 %v8149, %v8161
      %v8163 = vpop.f32.mrf.mxu0
      %8164 = vdwg.mxu0
      %8165 = vmatpush.bf16.msra.mxu0 %v6700
      %8166 = vmatpush.bf16.msra.mxu0 %v6696
      %8167 = vmatpush.bf16.msra.mxu0 %v6692
      %8168 = vmatpush.bf16.msra.mxu0 %v6688
      %8169 = vmatpush.bf16.msra.mxu0 %v6684
      %8170 = vmatpush.bf16.msra.mxu0 %v6680
      %8171 = vmatpush.bf16.msra.mxu0 %v6676
      %8172 = vmatpush.bf16.msra.mxu0 %v6672
      %8173 = vmatmul.bf16.gmra.mxu0 %v4853
      %v8174 = vpop.f32.mrf.mxu0
      %v8175 = vadd.f32 %v8162, %v8174
      %v8176 = vpop.f32.mrf.mxu0
      %8177 = vdwg.mxu0
      %8178 = vmatpush.bf16.msra.mxu0 %v6732
      %8179 = vmatpush.bf16.msra.mxu0 %v6728
      %8180 = vmatpush.bf16.msra.mxu0 %v6724
      %8181 = vmatpush.bf16.msra.mxu0 %v6720
      %8182 = vmatpush.bf16.msra.mxu0 %v6716
      %8183 = vmatpush.bf16.msra.mxu0 %v6712
      %8184 = vmatpush.bf16.msra.mxu0 %v6708
      %8185 = vmatpush.bf16.msra.mxu0 %v6704
      %8186 = vmatmul.bf16.gmra.mxu0 %v4854
      %v8187 = vpop.f32.mrf.mxu0
      %v8188 = vadd.f32 %v8175, %v8187
      %v8189 = vpop.f32.mrf.mxu0
      %8190 = vdwg.mxu0
      %8191 = vmatpush.bf16.msra.mxu0 %v6764
      %8192 = vmatpush.bf16.msra.mxu0 %v6760
      %8193 = vmatpush.bf16.msra.mxu0 %v6756
      %8194 = vmatpush.bf16.msra.mxu0 %v6752
      %8195 = vmatpush.bf16.msra.mxu0 %v6748
      %8196 = vmatpush.bf16.msra.mxu0 %v6744
      %8197 = vmatpush.bf16.msra.mxu0 %v6740
      %8198 = vmatpush.bf16.msra.mxu0 %v6736
      %8199 = vmatmul.bf16.gmra.mxu0 %v4855
      %v8200 = vpop.f32.mrf.mxu0
      %v8201 = vadd.f32 %v8188, %v8200
      %v8202 = vpop.f32.mrf.mxu0
      %8203 = vdwg.mxu0
      %8204 = vmatpush.bf16.msra.mxu0 %v6796
      %8205 = vmatpush.bf16.msra.mxu0 %v6792
      %8206 = vmatpush.bf16.msra.mxu0 %v6788
      %8207 = vmatpush.bf16.msra.mxu0 %v6784
      %8208 = vmatpush.bf16.msra.mxu0 %v6780
      %8209 = vmatpush.bf16.msra.mxu0 %v6776
      %8210 = vmatpush.bf16.msra.mxu0 %v6772
      %8211 = vmatpush.bf16.msra.mxu0 %v6768
      %8212 = vmatmul.bf16.gmra.mxu0 %v4856
      %v8213 = vpop.f32.mrf.mxu0
      %v8214 = vadd.f32 %v8201, %v8213
      %v8215 = vpop.f32.mrf.mxu0
      %8216 = vdwg.mxu0
      %8217 = vmatpush.bf16.msra.mxu0 %v6828
      %8218 = vmatpush.bf16.msra.mxu0 %v6824
      %8219 = vmatpush.bf16.msra.mxu0 %v6820
      %8220 = vmatpush.bf16.msra.mxu0 %v6816
      %8221 = vmatpush.bf16.msra.mxu0 %v6812
      %8222 = vmatpush.bf16.msra.mxu0 %v6808
      %8223 = vmatpush.bf16.msra.mxu0 %v6804
      %8224 = vmatpush.bf16.msra.mxu0 %v6800
      %8225 = vmatmul.bf16.gmra.mxu0 %v4857
      %v8226 = vpop.f32.mrf.mxu0
      %v8227 = vadd.f32 %v8214, %v8226
      %v8228 = vpop.f32.mrf.mxu0
      %8229 = vdwg.mxu0
      %8230 = vmatpush.bf16.msra.mxu0 %v6860
      %8231 = vmatpush.bf16.msra.mxu0 %v6856
      %8232 = vmatpush.bf16.msra.mxu0 %v6852
      %8233 = vmatpush.bf16.msra.mxu0 %v6848
      %8234 = vmatpush.bf16.msra.mxu0 %v6844
      %8235 = vmatpush.bf16.msra.mxu0 %v6840
      %8236 = vmatpush.bf16.msra.mxu0 %v6836
      %8237 = vmatpush.bf16.msra.mxu0 %v6832
      %8238 = vmatmul.bf16.gmra.mxu0 %v4858
      %v8239 = vpop.f32.mrf.mxu0
      %v8240 = vadd.f32 %v8227, %v8239
      %v8241 = vpop.f32.mrf.mxu0
      %8242 = vdwg.mxu0
      %8243 = vmatpush.bf16.msra.mxu0 %v6892
      %8244 = vmatpush.bf16.msra.mxu0 %v6888
      %8245 = vmatpush.bf16.msra.mxu0 %v6884
      %8246 = vmatpush.bf16.msra.mxu0 %v6880
      %8247 = vmatpush.bf16.msra.mxu0 %v6876
      %8248 = vmatpush.bf16.msra.mxu0 %v6872
      %8249 = vmatpush.bf16.msra.mxu0 %v6868
      %8250 = vmatpush.bf16.msra.mxu0 %v6864
      %8251 = vmatmul.bf16.gmra.mxu0 %v4859
      %v8252 = vpop.f32.mrf.mxu0
      %v8253 = vadd.f32 %v8240, %v8252
      %v8254 = vpop.f32.mrf.mxu0
      %8255 = vdwg.mxu0
      %8256 = vmatpush.bf16.msra.mxu0 %v6924
      %8257 = vmatpush.bf16.msra.mxu0 %v6920
      %8258 = vmatpush.bf16.msra.mxu0 %v6916
      %8259 = vmatpush.bf16.msra.mxu0 %v6912
      %8260 = vmatpush.bf16.msra.mxu0 %v6908
      %8261 = vmatpush.bf16.msra.mxu0 %v6904
      %8262 = vmatpush.bf16.msra.mxu0 %v6900
      %8263 = vmatpush.bf16.msra.mxu0 %v6896
      %8264 = vmatmul.bf16.gmra.mxu0 %v4860
      %v8265 = vpop.f32.mrf.mxu0
      %v8266 = vadd.f32 %v8253, %v8265
      %v8267 = vpop.f32.mrf.mxu0
      %8268 = vdwg.mxu0
      %v8269 = vld [vmem:[%s2] sm:$0xf]
      %v8271 = vperm.slane %v8269, 0
      %v8272 = vperm.slane %v8269, 1
      %v8273 = vperm.slane %v8269, 2
      %v8274 = vperm.slane %v8269, 3
      %v8279 = vmul.f32 %v7642, %v8271
      %v8280 = vmul.f32 %v7850, %v8272
      %v8281 = vmul.f32 %v8058, %v8273
      %v8282 = vmul.f32 %v8266, %v8274
      %v8283 = vld [vmem:[%s3] sm:$0xf]
      %v8285 = vperm.slane %v8283, 0
      %v8286 = vperm.slane %v8283, 1
      %v8287 = vperm.slane %v8283, 2
      %v8288 = vperm.slane %v8283, 3
      %v8293 = vadd.f32 %v8279, %v8285
      %v8294 = vadd.f32 %v8280, %v8286
      %v8295 = vadd.f32 %v8281, %v8287
      %v8296 = vadd.f32 %v8282, %v8288
      %vm8297 = vcmp.ge.f32.partialorder %v8293, 0.0
      %vm8298 = vcmp.ge.f32.partialorder %v8294, 0.0
      %vm8299 = vcmp.ge.f32.partialorder %v8295, 0.0
      %vm8300 = vcmp.ge.f32.partialorder %v8296, 0.0
      %v8301 = vmul.f32 %v8293, 0.2
      %v8302 = vmul.f32 %v8294, 0.2
      %v8303 = vmul.f32 %v8295, 0.2
      %v8304 = vmul.f32 %v8296, 0.2
      %v8305 = vsel %vm8297, %v8293, %v8301
      %v8306 = vsel %vm8298, %v8294, %v8302
      %v8307 = vsel %vm8299, %v8295, %v8303
      %v8308 = vsel %vm8300, %v8296, %v8304
      %v8309 = vpack.c.bf16 %v8306, %v8305
      %v8310 = vpack.c.bf16 %v8308, %v8307
      %8311 = vst [vmem:[%s219] sm:$0xff] %v8309
      %8312 = vst [vmem:[%s219 + $0x8] sm:$0xff] %v8310
      %p8313 = scmp.lt.s32.totalorder %s19, 1
      %s8314 = scalar_select %p8313, %s19, 1
      %p8315 = scmp.lt.s32.totalorder %s20, 0
      %s8316 = scalar_select %p8315, %s20, 0
      %s8317 = smul.addr %s8316, 4
      %s8318 = smul.addr %s8314, 4
      %s8319 = sadd.s32 %s8317, %s8318
      %s8320 = smul.addr %s8319, 4
      %s8321 = scalar_lea.vmem %s4, %s8320
      // Predicated region
      $region37: #{discriminator_forward.8} parent=35 // pred_check
        %p8322 = pneg %p136
      $region38: #{discriminator_forward.8} parent=35 // pred_check_branch
        %8324 = sbr.rel (%p8322) target = $region40
      $region39: #{discriminator_forward.8} parent=35 // pred_region
        _
      $region40: #{discriminator_forward.8} parent=35 // pred_fallthru
        _
    $region36: #{discriminator_forward.8} parent=5 // pred_fallthru
      _
    %p8325 = scmp.le.s32.totalorder 2, %s10
    // Predicated region
    $region41: #{discriminator_forward.8} parent=5 // pred_check
      %p8326 = pneg %p8325
    $region42: #{discriminator_forward.8} parent=5 // pred_check_branch
      %8328 = sbr.rel (%p8326) target = $region44
    $region43: #{discriminator_forward.8} parent=5 // pred_region
      %s8329 = ssub.s32 %s10, 2
      // Predicated region
      $region45: #{discriminator_forward.8} parent=43 // pred_check
        %p8330 = pneg %p142
      $region46: #{discriminator_forward.8} parent=43 // pred_check_branch
        %8332 = sbr.rel (%p8330) target = $region48
      $region47: #{discriminator_forward.8} parent=43 // pred_region
        %p8333 = scmp.lt.s32.totalorder %s21, 1
        %s8334 = scalar_select %p8333, %s21, 1
        %p8335 = scmp.lt.s32.totalorder %s22, 0
        %s8336 = scalar_select %p8335, %s22, 0
        %s8337 = smul.addr %s8336, 4
        %s8338 = smul.addr %s8334, 4
        %s8339 = sadd.s32 %s8337, %s8338
        %s8340 = smul.addr %s8339, 4
        %s8341 = scalar_lea.vmem %s4, %s8340
      $region48: #{discriminator_forward.8} parent=43 // pred_fallthru
        _
    $region44: #{discriminator_forward.8} parent=5 // pred_fallthru
      _
  $region6: #{discriminator_forward.8} parent=0 // loop_footer
    %s14 = sadd.s32 1, %s10
  $region7: #{discriminator_forward.8} parent=0 // loop_footer_branch
    %9 = sbr.rel target = $region3
  $region8: #{discriminator_forward.8} parent=0 // loop_exit
    _

</llo_original>
